<compile_context>
chip_gen: v5e
topology: v5e:2x2
jax: 0.10.0
libtpu: 0.0.40
codegen_flags: <defaults>
</compile_context>

<pallas_src>
import jax
import jax.numpy as jnp
import numpy as np
from jax.experimental import pallas as pl
from jax.experimental.pallas import tpu as pltpu


def bottleneck_kernel(x_ref, w1_ref, s1_ref, b1_ref,
                      w2_ref, s2_ref, b2_ref,
                      w3_ref, s3_ref, b3_ref,
                      o_ref, pad_ref):
    bn, H, W, Cin = x_ref.shape
    width = w1_ref.shape[1]
    Cout = w3_ref.shape[1]
    M = bn * H * W

    # ---- conv1 (1x1, bias=False) + bn1 + relu : one bf16 MXU matmul ----
    h1 = jnp.dot(x_ref[...].reshape(M, Cin), w1_ref[...],
                 preferred_element_type=jnp.float32)          # (M, width) f32
    h1 = jnp.maximum(h1 * s1_ref[...] + b1_ref[...], 0.0)

    # ---- conv2 (3x3, pad=1, stride=1) + bn2 + relu ----
    # Zero only the 1-pixel halo (per-step: megacore-safe), write the interior,
    # then accumulate 3 K-concatenated matmuls (one per kernel row).
    zero_row = jnp.zeros((bn, 1, W + 2, width), pad_ref.dtype)
    zero_col = jnp.zeros((bn, H, 1, width), pad_ref.dtype)
    pad_ref[:, 0:1, :, :] = zero_row
    pad_ref[:, H + 1:H + 2, :, :] = zero_row
    pad_ref[:, 1:H + 1, 0:1, :] = zero_col
    pad_ref[:, 1:H + 1, W + 1:W + 2, :] = zero_col
    pad_ref[:, 1:H + 1, 1:W + 1, :] = (
        h1.reshape(bn, H, W, width).astype(pad_ref.dtype))

    acc = jnp.zeros((M, width), jnp.float32)
    for dy in range(3):
        # (M, 3*width) bf16 window: dx = 0, 1, 2 shifts concatenated along K.
        win = jnp.concatenate(
            [pad_ref[:, dy:dy + H, dx:dx + W, :].reshape(M, width)
             for dx in range(3)],
            axis=-1)
        # Only one (3*width, width) weight tile live at a time (ref indexing).
        acc = acc + jnp.dot(win, w2_ref[dy],
                            preferred_element_type=jnp.float32)
    h2 = jnp.maximum(acc * s2_ref[...] + b2_ref[...], 0.0)

    # ---- conv3 (1x1) + bn3 + residual add + relu ----
    h3 = jnp.dot(h2.astype(jnp.bfloat16), w3_ref[...],
                 preferred_element_type=jnp.float32)          # (M, Cout) f32
    h3 = h3 * s3_ref[...] + b3_ref[...]
    # Re-read identity here (short live range) instead of holding it from conv1.
    xr = x_ref[...].reshape(M, Cout).astype(jnp.float32)
    out = jnp.maximum(h3 + xr, 0.0)
    o_ref[...] = out.reshape(bn, H, W, Cout).astype(o_ref.dtype)


def bottleneck_pallas(x_nchw, params, *, block_n=1):
    """x_nchw: (N, Cin, H, W) f32 with Cin == 4 * out_channel (downsample=None)."""
    x = jnp.transpose(x_nchw, (0, 2, 3, 1)).astype(jnp.bfloat16)   # NHWC, bf16
    N, H, W, Cin = x.shape

    w1 = params["w1"].astype(jnp.bfloat16)                    # (Cin,   width)
    w2 = params["w2"].astype(jnp.bfloat16)                    # (3, 3, width, width)
    w3 = params["w3"].astype(jnp.bfloat16)                    # (width, Cout)
    width = w1.shape[1]
    Cout = w3.shape[1]
    # Per-dy K-concat layout: row dy is a (3*width, width) matrix whose K axis
    # is [dx=0 | dx=1 | dx=2] x cin — matches the in-kernel window concat order.
    w2k = w2.reshape(3, 3 * width, width)

    assert Cin == Cout, "identity add requires in_channel == 4 * out_channel"
    assert N % block_n == 0, "batch must be divisible by block_n"

    def const_spec(shape):
        nd = len(shape)
        # Constant block index -> Pallas does not re-DMA these across steps.
        return pl.BlockSpec(shape, lambda n, _nd=nd: (0,) * _nd)

    bn = block_n
    out = pl.pallas_call(
        bottleneck_kernel,
        out_shape=jax.ShapeDtypeStruct((N, H, W, Cout), jnp.float32),
        grid_spec=pltpu.PrefetchScalarGridSpec(
            num_scalar_prefetch=0,
            grid=(N // bn,),                                  # bn images per step
            in_specs=[
                pl.BlockSpec((bn, H, W, Cin), lambda n: (n, 0, 0, 0)),
                const_spec(w1.shape),  const_spec((1, width)), const_spec((1, width)),
                const_spec(w2k.shape), const_spec((1, width)), const_spec((1, width)),
                const_spec(w3.shape),  const_spec((1, Cout)),  const_spec((1, Cout)),
            ],
            out_specs=pl.BlockSpec((bn, H, W, Cout), lambda n: (n, 0, 0, 0)),
            scratch_shapes=[pltpu.VMEM((bn, H + 2, W + 2, width), jnp.bfloat16)],
        ),
        compiler_params=pltpu.CompilerParams(
            dimension_semantics=("parallel",),
            # Explicit scoped-VMEM budget (raise if activation tiles are enlarged).
            vmem_limit_bytes=32 * 1024 * 1024),
    )(x, w1, params["s1"], params["b1"],
      w2k, params["s2"], params["b2"],
      w3, params["s3"], params["b3"])
    return jnp.transpose(out, (0, 3, 1, 2))                   # -> NCHW, f32


# ------------------------- pure-JAX reference (glue) -------------------------
def bottleneck_ref(x_nchw, p):
    """Mirrors the kernel's bf16 rounding points so tolerances stay tight."""
    bf = lambda a: a.astype(jnp.bfloat16).astype(jnp.float32)
    x = jnp.transpose(x_nchw, (0, 2, 3, 1))
    xb = bf(x)
    conv = lambda v, w, pad: jax.lax.conv_general_dilated(
        v, w, (1, 1), pad, dimension_numbers=("NHWC", "HWIO", "NHWC"))
    h = conv(xb, bf(p["w1_hwio"]), "VALID")
    h = jnp.maximum(h * p["s1"] + p["b1"], 0.0)
    h = conv(bf(h), bf(p["w2_hwio"]), [(1, 1), (1, 1)])
    h = jnp.maximum(h * p["s2"] + p["b2"], 0.0)
    h = conv(bf(h), bf(p["w3_hwio"]), "VALID")
    h = h * p["s3"] + p["b3"]
    h = jnp.maximum(h + xb, 0.0)
    return jnp.transpose(h, (0, 3, 1, 2))


def make_params(key, in_channel, out_channel, width_per_group=64, groups=1,
                eps=1e-5):
    width = int(out_channel * (width_per_group / 64.0)) * groups
    cout = out_channel * 4                                    # Bottleneck.expansion
    ks = jax.random.split(key, 15)

    w1_hwio = 0.1 * jax.random.normal(ks[0], (1, 1, in_channel, width), jnp.float32)
    w2_hwio = 0.1 * jax.random.normal(ks[1], (3, 3, width, width), jnp.float32)
    w3_hwio = 0.1 * jax.random.normal(ks[2], (1, 1, width, cout), jnp.float32)

    def bn(kg, kb, km, kv, c):
        gamma = jax.random.uniform(kg, (c,), jnp.float32, 0.5, 1.5)
        beta = 0.1 * jax.random.normal(kb, (c,), jnp.float32)
        mean = 0.1 * jax.random.normal(km, (c,), jnp.float32)
        var = jax.random.uniform(kv, (c,), jnp.float32, 0.5, 1.5)
        scale = gamma / jnp.sqrt(var + eps)
        shift = beta - mean * scale
        return scale.reshape(1, c), shift.reshape(1, c)

    s1, b1 = bn(ks[3], ks[4], ks[5], ks[6], width)
    s2, b2 = bn(ks[7], ks[8], ks[9], ks[10], width)
    s3, b3 = bn(ks[11], ks[12], ks[13], ks[14], cout)

    return dict(
        w1=w1_hwio[0, 0], w2=w2_hwio, w3=w3_hwio[0, 0],
        w1_hwio=w1_hwio, w2_hwio=w2_hwio, w3_hwio=w3_hwio,
        s1=s1, b1=b1, s2=s2, b2=b2, s3=s3, b3=b3,
    )


if __name__ == "__main__":
    key = jax.random.PRNGKey(0)
    k_x, k_p = jax.random.split(key)

    # ResNet-50 layer1-style block at reduced spatial size:
    # in_channel=256, out_channel=64 -> width=64, Cout=256 (downsample=None),
    # so the HBM-facing load/store channel dims are lane-dense (multiples of 128).
    N, in_channel, out_channel, H, W = 4, 256, 64, 16, 16
    params = make_params(k_p, in_channel, out_channel)
    x = jax.random.normal(k_x, (N, in_channel, H, W), jnp.float32)   # NCHW like PyTorch

    out = jax.block_until_ready(bottleneck_pallas(x, params, block_n=2))
    ref = jax.block_until_ready(bottleneck_ref(x, params))
    np.testing.assert_allclose(np.asarray(out), np.asarray(ref),
                               rtol=1e-2, atol=1e-2)
    print("KERNEL_OK")
</pallas_src>

<mosaic_0001>
module attributes {stable_mosaic.version = 11 : i64} {
  func.func @bottleneck_kernel(%arg0: i32, %arg1: memref<2x16x16x256xbf16, #tpu.memory_space<vmem>>, %arg2: memref<256x64xbf16, #tpu.memory_space<vmem>>, %arg3: memref<1x64xf32, #tpu.memory_space<vmem>>, %arg4: memref<1x64xf32, #tpu.memory_space<vmem>>, %arg5: memref<3x192x64xbf16, #tpu.memory_space<vmem>>, %arg6: memref<1x64xf32, #tpu.memory_space<vmem>>, %arg7: memref<1x64xf32, #tpu.memory_space<vmem>>, %arg8: memref<64x256xbf16, #tpu.memory_space<vmem>>, %arg9: memref<1x256xf32, #tpu.memory_space<vmem>>, %arg10: memref<1x256xf32, #tpu.memory_space<vmem>>, %arg11: memref<2x16x16x256xf32, #tpu.memory_space<vmem>>, %arg12: memref<2x18x18x64xbf16, #tpu.memory_space<vmem>>) attributes {dimension_semantics = [#tpu.dimension_semantics<parallel>], iteration_bounds = array<i64: 2>, scalar_prefetch = 0 : i64, scratch_operands = 1 : i64, tpu.core_type = #tpu.core_type<tc>, window_params = [{transform_indices = @transform_0, window_bounds = array<i64: 2, 16, 16, 256>}, {pipeline_mode = #tpu.pipeline_mode<synchronous>, transform_indices = @transform_1, window_bounds = array<i64: 256, 64>}, {pipeline_mode = #tpu.pipeline_mode<synchronous>, transform_indices = @transform_2, window_bounds = array<i64: 1, 64>}, {pipeline_mode = #tpu.pipeline_mode<synchronous>, transform_indices = @transform_3, window_bounds = array<i64: 1, 64>}, {pipeline_mode = #tpu.pipeline_mode<synchronous>, transform_indices = @transform_4, window_bounds = array<i64: 3, 192, 64>}, {pipeline_mode = #tpu.pipeline_mode<synchronous>, transform_indices = @transform_5, window_bounds = array<i64: 1, 64>}, {pipeline_mode = #tpu.pipeline_mode<synchronous>, transform_indices = @transform_6, window_bounds = array<i64: 1, 64>}, {pipeline_mode = #tpu.pipeline_mode<synchronous>, transform_indices = @transform_7, window_bounds = array<i64: 64, 256>}, {pipeline_mode = #tpu.pipeline_mode<synchronous>, transform_indices = @transform_8, window_bounds = array<i64: 1, 256>}, {pipeline_mode = #tpu.pipeline_mode<synchronous>, transform_indices = @transform_9, window_bounds = array<i64: 1, 256>}, {transform_indices = @transform_10, window_bounds = array<i64: 2, 16, 16, 256>}]} {
    %c0 = arith.constant 0 : index
    %c0_0 = arith.constant 0 : index
    %c0_1 = arith.constant 0 : index
    %c0_2 = arith.constant 0 : index
    %0 = vector.load %arg1[%c0, %c0_0, %c0_1, %c0_2] : memref<2x16x16x256xbf16, #tpu.memory_space<vmem>>, vector<2x16x16x256xbf16>
    %1 = vector.shape_cast %0 : vector<2x16x16x256xbf16> to vector<512x256xbf16>
    %c0_3 = arith.constant 0 : index
    %c0_4 = arith.constant 0 : index
    %2 = vector.load %arg2[%c0_3, %c0_4] : memref<256x64xbf16, #tpu.memory_space<vmem>>, vector<256x64xbf16>
    %cst = arith.constant dense<0.000000e+00> : vector<512x64xf32>
    %3 = tpu.matmul %1, %2, %cst {dimension_numbers = #tpu.dot_dimension_numbers<[1], [0], [0], [1], [0, 0, 1, 1], [], []>} : vector<512x256xbf16>, vector<256x64xbf16>, vector<512x64xf32> -> vector<512x64xf32>
    %c0_5 = arith.constant 0 : index
    %c0_6 = arith.constant 0 : index
    %4 = vector.load %arg3[%c0_5, %c0_6] : memref<1x64xf32, #tpu.memory_space<vmem>>, vector<1x64xf32>
    %5 = vector.broadcast %4 : vector<1x64xf32> to vector<512x64xf32>
    %6 = arith.mulf %3, %5 : vector<512x64xf32>
    %c0_7 = arith.constant 0 : index
    %c0_8 = arith.constant 0 : index
    %7 = vector.load %arg4[%c0_7, %c0_8] : memref<1x64xf32, #tpu.memory_space<vmem>>, vector<1x64xf32>
    %8 = vector.broadcast %7 : vector<1x64xf32> to vector<512x64xf32>
    %9 = arith.addf %6, %8 : vector<512x64xf32>
    %cst_9 = arith.constant 0.000000e+00 : f32
    %10 = vector.broadcast %cst_9 : f32 to vector<512x64xf32>
    %11 = arith.maximumf %9, %10 : vector<512x64xf32>
    %cst_10 = arith.constant 0.000000e+00 : bf16
    %12 = vector.broadcast %cst_10 : bf16 to vector<2x1x18x64xbf16>
    %cst_11 = arith.constant 0.000000e+00 : bf16
    %13 = vector.broadcast %cst_11 : bf16 to vector<2x16x1x64xbf16>
    %c0_12 = arith.constant 0 : index
    %c0_13 = arith.constant 0 : index
    %c0_14 = arith.constant 0 : index
    %c0_15 = arith.constant 0 : index
    %14 = vector.load %arg12[%c0_12, %c0_13, %c0_14, %c0_15] : memref<2x18x18x64xbf16, #tpu.memory_space<vmem>>, vector<2x1x18x64xbf16>
    tpu.vector_store %arg12[%c0_12, %c0_13, %c0_14, %c0_15], %12 {strides = array<i32>} : memref<2x18x18x64xbf16, #tpu.memory_space<vmem>>, vector<2x1x18x64xbf16>,
    %c0_16 = arith.constant 0 : index
    %c17 = arith.constant 17 : index
    %c0_17 = arith.constant 0 : index
    %c0_18 = arith.constant 0 : index
    %15 = vector.load %arg12[%c0_16, %c17, %c0_17, %c0_18] : memref<2x18x18x64xbf16, #tpu.memory_space<vmem>>, vector<2x1x18x64xbf16>
    tpu.vector_store %arg12[%c0_16, %c17, %c0_17, %c0_18], %12 {strides = array<i32>} : memref<2x18x18x64xbf16, #tpu.memory_space<vmem>>, vector<2x1x18x64xbf16>,
    %c0_19 = arith.constant 0 : index
    %c1 = arith.constant 1 : index
    %c0_20 = arith.constant 0 : index
    %c0_21 = arith.constant 0 : index
    %16 = vector.load %arg12[%c0_19, %c1, %c0_20, %c0_21] : memref<2x18x18x64xbf16, #tpu.memory_space<vmem>>, vector<2x16x1x64xbf16>
    tpu.vector_store %arg12[%c0_19, %c1, %c0_20, %c0_21], %13 {strides = array<i32>} : memref<2x18x18x64xbf16, #tpu.memory_space<vmem>>, vector<2x16x1x64xbf16>,
    %c0_22 = arith.constant 0 : index
    %c1_23 = arith.constant 1 : index
    %c17_24 = arith.constant 17 : index
    %c0_25 = arith.constant 0 : index
    %17 = vector.load %arg12[%c0_22, %c1_23, %c17_24, %c0_25] : memref<2x18x18x64xbf16, #tpu.memory_space<vmem>>, vector<2x16x1x64xbf16>
    tpu.vector_store %arg12[%c0_22, %c1_23, %c17_24, %c0_25], %13 {strides = array<i32>} : memref<2x18x18x64xbf16, #tpu.memory_space<vmem>>, vector<2x16x1x64xbf16>,
    %18 = vector.shape_cast %11 : vector<512x64xf32> to vector<2x16x16x64xf32>
    %19 = arith.truncf %18 : vector<2x16x16x64xf32> to vector<2x16x16x64xbf16>
    %c0_26 = arith.constant 0 : index
    %c1_27 = arith.constant 1 : index
    %c1_28 = arith.constant 1 : index
    %c0_29 = arith.constant 0 : index
    %20 = vector.load %arg12[%c0_26, %c1_27, %c1_28, %c0_29] : memref<2x18x18x64xbf16, #tpu.memory_space<vmem>>, vector<2x16x16x64xbf16>
    tpu.vector_store %arg12[%c0_26, %c1_27, %c1_28, %c0_29], %19 {strides = array<i32>} : memref<2x18x18x64xbf16, #tpu.memory_space<vmem>>, vector<2x16x16x64xbf16>,
    %cst_30 = arith.constant 0.000000e+00 : f32
    %21 = vector.broadcast %cst_30 : f32 to vector<512x64xf32>
    %c0_31 = arith.constant 0 : index
    %c0_32 = arith.constant 0 : index
    %c0_33 = arith.constant 0 : index
    %c0_34 = arith.constant 0 : index
    %22 = vector.load %arg12[%c0_31, %c0_32, %c0_33, %c0_34] : memref<2x18x18x64xbf16, #tpu.memory_space<vmem>>, vector<2x16x16x64xbf16>
    %23 = vector.shape_cast %22 : vector<2x16x16x64xbf16> to vector<512x64xbf16>
    %c0_35 = arith.constant 0 : index
    %c0_36 = arith.constant 0 : index
    %c1_37 = arith.constant 1 : index
    %c0_38 = arith.constant 0 : index
    %24 = vector.load %arg12[%c0_35, %c0_36, %c1_37, %c0_38] : memref<2x18x18x64xbf16, #tpu.memory_space<vmem>>, vector<2x16x16x64xbf16>
    %25 = vector.shape_cast %24 : vector<2x16x16x64xbf16> to vector<512x64xbf16>
    %c0_39 = arith.constant 0 : index
    %c0_40 = arith.constant 0 : index
    %c2 = arith.constant 2 : index
    %c0_41 = arith.constant 0 : index
    %26 = vector.load %arg12[%c0_39, %c0_40, %c2, %c0_41] : memref<2x18x18x64xbf16, #tpu.memory_space<vmem>>, vector<2x16x16x64xbf16>
    %27 = vector.shape_cast %26 : vector<2x16x16x64xbf16> to vector<512x64xbf16>
    %28 = tpu.concatenate %23, %25, %27 in 1 : vector<512x64xbf16>, vector<512x64xbf16>, vector<512x64xbf16> -> vector<512x192xbf16>
    %c0_42 = arith.constant 0 : index
    %c0_43 = arith.constant 0 : index
    %c0_44 = arith.constant 0 : index
    %29 = vector.load %arg5[%c0_42, %c0_43, %c0_44] : memref<3x192x64xbf16, #tpu.memory_space<vmem>>, vector<1x192x64xbf16>
    %30 = vector.shape_cast %29 : vector<1x192x64xbf16> to vector<192x64xbf16>
    %cst_45 = arith.constant dense<0.000000e+00> : vector<512x64xf32>
    %31 = tpu.matmul %28, %30, %cst_45 {dimension_numbers = #tpu.dot_dimension_numbers<[1], [0], [0], [1], [0, 0, 1, 1], [], []>} : vector<512x192xbf16>, vector<192x64xbf16>, vector<512x64xf32> -> vector<512x64xf32>
    %32 = arith.addf %21, %31 : vector<512x64xf32>
    %c0_46 = arith.constant 0 : index
    %c1_47 = arith.constant 1 : index
    %c0_48 = arith.constant 0 : index
    %c0_49 = arith.constant 0 : index
    %33 = vector.load %arg12[%c0_46, %c1_47, %c0_48, %c0_49] : memref<2x18x18x64xbf16, #tpu.memory_space<vmem>>, vector<2x16x16x64xbf16>
    %34 = vector.shape_cast %33 : vector<2x16x16x64xbf16> to vector<512x64xbf16>
    %c0_50 = arith.constant 0 : index
    %c1_51 = arith.constant 1 : index
    %c1_52 = arith.constant 1 : index
    %c0_53 = arith.constant 0 : index
    %35 = vector.load %arg12[%c0_50, %c1_51, %c1_52, %c0_53] : memref<2x18x18x64xbf16, #tpu.memory_space<vmem>>, vector<2x16x16x64xbf16>
    %36 = vector.shape_cast %35 : vector<2x16x16x64xbf16> to vector<512x64xbf16>
    %c0_54 = arith.constant 0 : index
    %c1_55 = arith.constant 1 : index
    %c2_56 = arith.constant 2 : index
    %c0_57 = arith.constant 0 : index
    %37 = vector.load %arg12[%c0_54, %c1_55, %c2_56, %c0_57] : memref<2x18x18x64xbf16, #tpu.memory_space<vmem>>, vector<2x16x16x64xbf16>
    %38 = vector.shape_cast %37 : vector<2x16x16x64xbf16> to vector<512x64xbf16>
    %39 = tpu.concatenate %34, %36, %38 in 1 : vector<512x64xbf16>, vector<512x64xbf16>, vector<512x64xbf16> -> vector<512x192xbf16>
    %c1_58 = arith.constant 1 : index
    %c0_59 = arith.constant 0 : index
    %c0_60 = arith.constant 0 : index
    %40 = vector.load %arg5[%c1_58, %c0_59, %c0_60] : memref<3x192x64xbf16, #tpu.memory_space<vmem>>, vector<1x192x64xbf16>
    %41 = vector.shape_cast %40 : vector<1x192x64xbf16> to vector<192x64xbf16>
    %cst_61 = arith.constant dense<0.000000e+00> : vector<512x64xf32>
    %42 = tpu.matmul %39, %41, %cst_61 {dimension_numbers = #tpu.dot_dimension_numbers<[1], [0], [0], [1], [0, 0, 1, 1], [], []>} : vector<512x192xbf16>, vector<192x64xbf16>, vector<512x64xf32> -> vector<512x64xf32>
    %43 = arith.addf %32, %42 : vector<512x64xf32>
    %c0_62 = arith.constant 0 : index
    %c2_63 = arith.constant 2 : index
    %c0_64 = arith.constant 0 : index
    %c0_65 = arith.constant 0 : index
    %44 = vector.load %arg12[%c0_62, %c2_63, %c0_64, %c0_65] : memref<2x18x18x64xbf16, #tpu.memory_space<vmem>>, vector<2x16x16x64xbf16>
    %45 = vector.shape_cast %44 : vector<2x16x16x64xbf16> to vector<512x64xbf16>
    %c0_66 = arith.constant 0 : index
    %c2_67 = arith.constant 2 : index
    %c1_68 = arith.constant 1 : index
    %c0_69 = arith.constant 0 : index
    %46 = vector.load %arg12[%c0_66, %c2_67, %c1_68, %c0_69] : memref<2x18x18x64xbf16, #tpu.memory_space<vmem>>, vector<2x16x16x64xbf16>
    %47 = vector.shape_cast %46 : vector<2x16x16x64xbf16> to vector<512x64xbf16>
    %c0_70 = arith.constant 0 : index
    %c2_71 = arith.constant 2 : index
    %c2_72 = arith.constant 2 : index
    %c0_73 = arith.constant 0 : index
    %48 = vector.load %arg12[%c0_70, %c2_71, %c2_72, %c0_73] : memref<2x18x18x64xbf16, #tpu.memory_space<vmem>>, vector<2x16x16x64xbf16>
    %49 = vector.shape_cast %48 : vector<2x16x16x64xbf16> to vector<512x64xbf16>
    %50 = tpu.concatenate %45, %47, %49 in 1 : vector<512x64xbf16>, vector<512x64xbf16>, vector<512x64xbf16> -> vector<512x192xbf16>
    %c2_74 = arith.constant 2 : index
    %c0_75 = arith.constant 0 : index
    %c0_76 = arith.constant 0 : index
    %51 = vector.load %arg5[%c2_74, %c0_75, %c0_76] : memref<3x192x64xbf16, #tpu.memory_space<vmem>>, vector<1x192x64xbf16>
    %52 = vector.shape_cast %51 : vector<1x192x64xbf16> to vector<192x64xbf16>
    %cst_77 = arith.constant dense<0.000000e+00> : vector<512x64xf32>
    %53 = tpu.matmul %50, %52, %cst_77 {dimension_numbers = #tpu.dot_dimension_numbers<[1], [0], [0], [1], [0, 0, 1, 1], [], []>} : vector<512x192xbf16>, vector<192x64xbf16>, vector<512x64xf32> -> vector<512x64xf32>
    %54 = arith.addf %43, %53 : vector<512x64xf32>
    %c0_78 = arith.constant 0 : index
    %c0_79 = arith.constant 0 : index
    %55 = vector.load %arg6[%c0_78, %c0_79] : memref<1x64xf32, #tpu.memory_space<vmem>>, vector<1x64xf32>
    %56 = vector.broadcast %55 : vector<1x64xf32> to vector<512x64xf32>
    %57 = arith.mulf %54, %56 : vector<512x64xf32>
    %c0_80 = arith.constant 0 : index
    %c0_81 = arith.constant 0 : index
    %58 = vector.load %arg7[%c0_80, %c0_81] : memref<1x64xf32, #tpu.memory_space<vmem>>, vector<1x64xf32>
    %59 = vector.broadcast %58 : vector<1x64xf32> to vector<512x64xf32>
    %60 = arith.addf %57, %59 : vector<512x64xf32>
    %cst_82 = arith.constant 0.000000e+00 : f32
    %61 = vector.broadcast %cst_82 : f32 to vector<512x64xf32>
    %62 = arith.maximumf %60, %61 : vector<512x64xf32>
    %63 = arith.truncf %62 : vector<512x64xf32> to vector<512x64xbf16>
    %c0_83 = arith.constant 0 : index
    %c0_84 = arith.constant 0 : index
    %64 = vector.load %arg8[%c0_83, %c0_84] : memref<64x256xbf16, #tpu.memory_space<vmem>>, vector<64x256xbf16>
    %cst_85 = arith.constant dense<0.000000e+00> : vector<512x256xf32>
    %65 = tpu.matmul %63, %64, %cst_85 {dimension_numbers = #tpu.dot_dimension_numbers<[1], [0], [0], [1], [0, 0, 1, 1], [], []>} : vector<512x64xbf16>, vector<64x256xbf16>, vector<512x256xf32> -> vector<512x256xf32>
    %c0_86 = arith.constant 0 : index
    %c0_87 = arith.constant 0 : index
    %66 = vector.load %arg9[%c0_86, %c0_87] : memref<1x256xf32, #tpu.memory_space<vmem>>, vector<1x256xf32>
    %67 = vector.broadcast %66 : vector<1x256xf32> to vector<512x256xf32>
    %68 = arith.mulf %65, %67 : vector<512x256xf32>
    %c0_88 = arith.constant 0 : index
    %c0_89 = arith.constant 0 : index
    %69 = vector.load %arg10[%c0_88, %c0_89] : memref<1x256xf32, #tpu.memory_space<vmem>>, vector<1x256xf32>
    %70 = vector.broadcast %69 : vector<1x256xf32> to vector<512x256xf32>
    %71 = arith.addf %68, %70 : vector<512x256xf32>
    %c0_90 = arith.constant 0 : index
    %c0_91 = arith.constant 0 : index
    %c0_92 = arith.constant 0 : index
    %c0_93 = arith.constant 0 : index
    %72 = vector.load %arg1[%c0_90, %c0_91, %c0_92, %c0_93] : memref<2x16x16x256xbf16, #tpu.memory_space<vmem>>, vector<2x16x16x256xbf16>
    %73 = vector.shape_cast %72 : vector<2x16x16x256xbf16> to vector<512x256xbf16>
    %74 = arith.extf %73 : vector<512x256xbf16> to vector<512x256xf32>
    %75 = arith.addf %71, %74 : vector<512x256xf32>
    %cst_94 = arith.constant 0.000000e+00 : f32
    %76 = vector.broadcast %cst_94 : f32 to vector<512x256xf32>
    %77 = arith.maximumf %75, %76 : vector<512x256xf32>
    %78 = vector.shape_cast %77 : vector<512x256xf32> to vector<2x16x16x256xf32>
    %c0_95 = arith.constant 0 : index
    %c0_96 = arith.constant 0 : index
    %c0_97 = arith.constant 0 : index
    %c0_98 = arith.constant 0 : index
    %79 = vector.load %arg11[%c0_95, %c0_96, %c0_97, %c0_98] : memref<2x16x16x256xf32, #tpu.memory_space<vmem>>, vector<2x16x16x256xf32>
    tpu.vector_store %arg11[%c0_95, %c0_96, %c0_97, %c0_98], %78 {strides = array<i32>} : memref<2x16x16x256xf32, #tpu.memory_space<vmem>>, vector<2x16x16x256xf32>,
    return
  }
  func.func @transform_0(%arg0: i32) -> (i32, i32, i32, i32) {
    %c0_i32 = arith.constant 0 : i32
    %c0_i32_0 = arith.constant 0 : i32
    %c0_i32_1 = arith.constant 0 : i32
    %c0_i32_2 = arith.constant 0 : i32
    return %arg0, %c0_i32, %c0_i32_0, %c0_i32_1 : i32, i32, i32, i32
  }
  func.func @transform_1(%arg0: i32) -> (i32, i32) {
    %c0_i32 = arith.constant 0 : i32
    %c0_i32_0 = arith.constant 0 : i32
    %c0_i32_1 = arith.constant 0 : i32
    return %c0_i32, %c0_i32_0 : i32, i32
  }
  func.func @transform_2(%arg0: i32) -> (i32, i32) {
    %c0_i32 = arith.constant 0 : i32
    %c0_i32_0 = arith.constant 0 : i32
    %c0_i32_1 = arith.constant 0 : i32
    return %c0_i32, %c0_i32_0 : i32, i32
  }
  func.func @transform_3(%arg0: i32) -> (i32, i32) {
    %c0_i32 = arith.constant 0 : i32
    %c0_i32_0 = arith.constant 0 : i32
    %c0_i32_1 = arith.constant 0 : i32
    return %c0_i32, %c0_i32_0 : i32, i32
  }
  func.func @transform_4(%arg0: i32) -> (i32, i32, i32) {
    %c0_i32 = arith.constant 0 : i32
    %c0_i32_0 = arith.constant 0 : i32
    %c0_i32_1 = arith.constant 0 : i32
    %c0_i32_2 = arith.constant 0 : i32
    return %c0_i32, %c0_i32_0, %c0_i32_1 : i32, i32, i32
  }
  func.func @transform_5(%arg0: i32) -> (i32, i32) {
    %c0_i32 = arith.constant 0 : i32
    %c0_i32_0 = arith.constant 0 : i32
    %c0_i32_1 = arith.constant 0 : i32
    return %c0_i32, %c0_i32_0 : i32, i32
  }
  func.func @transform_6(%arg0: i32) -> (i32, i32) {
    %c0_i32 = arith.constant 0 : i32
    %c0_i32_0 = arith.constant 0 : i32
    %c0_i32_1 = arith.constant 0 : i32
    return %c0_i32, %c0_i32_0 : i32, i32
  }
  func.func @transform_7(%arg0: i32) -> (i32, i32) {
    %c0_i32 = arith.constant 0 : i32
    %c0_i32_0 = arith.constant 0 : i32
    %c0_i32_1 = arith.constant 0 : i32
    return %c0_i32, %c0_i32_0 : i32, i32
  }
  func.func @transform_8(%arg0: i32) -> (i32, i32) {
    %c0_i32 = arith.constant 0 : i32
    %c0_i32_0 = arith.constant 0 : i32
    %c0_i32_1 = arith.constant 0 : i32
    return %c0_i32, %c0_i32_0 : i32, i32
  }
  func.func @transform_9(%arg0: i32) -> (i32, i32) {
    %c0_i32 = arith.constant 0 : i32
    %c0_i32_0 = arith.constant 0 : i32
    %c0_i32_1 = arith.constant 0 : i32
    return %c0_i32, %c0_i32_0 : i32, i32
  }
  func.func @transform_10(%arg0: i32) -> (i32, i32, i32, i32) {
    %c0_i32 = arith.constant 0 : i32
    %c0_i32_0 = arith.constant 0 : i32
    %c0_i32_1 = arith.constant 0 : i32
    %c0_i32_2 = arith.constant 0 : i32
    return %arg0, %c0_i32, %c0_i32_0, %c0_i32_1 : i32, i32, i32, i32
  }
}

</mosaic_0001>

<llo_original>
// kernel: tpu_custom_call.1
$region0: #{tpu_custom_call.1}
  #allocation0 [shape = 'u32[]', space=smem, size = 0x4, offset = 0x4, fixed_abs, tag = 'smem constant byte address 0x4 - core index']
  #allocation1 [shape = 'u32[72,128]{1,0:T(1,128)}', space=vmem, size = 0x9000, scoped, tag = 'internal scratch']
  #allocation2 [shape = 'bf16[2,18,18,64]{3,2,1,0:T(8,128)(2,1)}', space=vmem, size = 0x36000, scoped, tag = 'scratch operand']
  %s0 = inlined_call_operand.hbm [shape: bf16[4,16,16,256], index: 0, kind: input, shape index: {}]
  %s1 = inlined_call_operand.vmem [shape: bf16[256,64], index: 1, kind: input, shape index: {}]
  %s2 = inlined_call_operand.vmem [shape: f32[1,64], index: 2, kind: input, shape index: {}]
  %s3 = inlined_call_operand.vmem [shape: f32[1,64], index: 3, kind: input, shape index: {}]
  %s4 = inlined_call_operand.vmem [shape: bf16[3,192,64], index: 4, kind: input, shape index: {}]
  %s5 = inlined_call_operand.vmem [shape: f32[1,64], index: 5, kind: input, shape index: {}]
  %s6 = inlined_call_operand.vmem [shape: f32[1,64], index: 6, kind: input, shape index: {}]
  %s7 = inlined_call_operand.vmem [shape: bf16[64,256], index: 7, kind: input, shape index: {}]
  %s8 = inlined_call_operand.vmem [shape: f32[1,256], index: 8, kind: input, shape index: {}]
  %s9 = inlined_call_operand.vmem [shape: f32[1,256], index: 9, kind: input, shape index: {}]
  %s10 = inlined_call_operand.hbm [shape: f32[4,16,16,256], index: 10, kind: output, shape index: {}]
  %s11 = sld [smem:[#allocation0]]
  $region77: #{tpu_custom_call.1} parent=0
    _
  %s13 = ssub.s32 1, %s11
  %s14 = scalar_select 0, %s13, %s11
  $region1: #{tpu_custom_call.1} parent=0
    #allocation3 [shape = 'u8[524288]{0}', space=vmem, size = 0x80000, scoped, tag = 'input window, operand 0']
    #allocation4 [shape = 's32[2]{0}', space=sflag, size = 0x8, scoped, tag = 'scoped memory for tpu_custom_call.1']
    #allocation5 [shape = 's32[2]{0}', space=sflag, size = 0x8, scoped, tag = 'scoped memory for tpu_custom_call.1']
    #allocation6 [shape = 'u8[1048576]{0}', space=vmem, size = 0x100000, scoped, tag = 'output window, operand 0']
    %15 = vsyncpa [#allocation4], 0
    %s16 = scalar_lea.sflag [#allocation4], 1
    %17 = vsyncpa %s16, 0
    %18 = vsyncpa [#allocation5], 0
    %s19 = scalar_lea.sflag [#allocation5], 1
    %20 = vsyncpa %s19, 0
    loop: start=0, step=1, limit=4
    $region2: #{tpu_custom_call.1} parent=1 // loop_pre_header
      _
    $region3: #{tpu_custom_call.1} parent=1 // loop_header
      %s22 = sphi 0, %s26
      %p23 = scmp.ge.s32.totalorder %s22, 4
      %s32 = sphi 0, %s34
      %s35 = sphi 0, %s32
      %s36 = sphi 0, %s35
      %s52 = sphi 0, %s36
      %s56 = sphi 0, %s56
      %s58 = sphi 0, %s56
      %s59 = sphi 0, %s58
      %s73 = sphi 0, %s59
      %s77 = sphi 0, %s77
      %s79 = sphi 0, %s77
      %s80 = sphi 0, %s79
      %s94 = sphi 0, %s80
      %s98 = sphi 0, %s98
      %s100 = sphi 0, %s98
      %s101 = sphi 0, %s100
      %s115 = sphi 0, %s101
      %s119 = sphi 0, %s119
      %s121 = sphi 0, %s119
      %s122 = sphi 0, %s121
      %s136 = sphi 0, %s122
      %s140 = sphi 0, %s140
      %s142 = sphi 0, %s140
      %s143 = sphi 0, %s142
      %s157 = sphi 0, %s143
      %s161 = sphi 0, %s161
      %s163 = sphi 0, %s161
      %s164 = sphi 0, %s163
      %s178 = sphi 0, %s164
      %s182 = sphi 0, %s182
      %s184 = sphi 0, %s182
      %s185 = sphi 0, %s184
      %s199 = sphi 0, %s185
      %s203 = sphi 0, %s203
      %s205 = sphi 0, %s203
      %s206 = sphi 0, %s205
      %s220 = sphi 0, %s206
      %s224 = sphi 0, %s224
      %s226 = sphi 0, %s224
      %s227 = sphi 0, %s226
      %s241 = sphi 0, %s227
      %s247 = sphi 0, %s249
      %s250 = sphi 0, %s247
      %s251 = sphi 0, %s250
      %s267 = sphi 0, %s251
    $region4: #{tpu_custom_call.1} parent=1 // loop_header_branch
      %25 = sbr.rel (%p23) target = $region8
    $region5: #{tpu_custom_call.1} parent=1 // loop_body
      %s27 = ssub.s32 %s22, 1
      %s28 = ssub.s32 %s22, 2
      %s29 = sadd.s32 %s22, 1
      %s30 = ssub.s32 %s22, %s29
      %p31 = scmp.eq.s32.totalorder %s30, 0
      %s33 = sadd.s32 %s32, 1
      %s34 = scalar_select %p31, %s32, %s33
      %p37 = pneg %p31
      %p38 = scmp.eq.s32.totalorder %s22, 1
      %p39 = por %p37, %p38
      %p40 = scmp.ne.s32.totalorder %s32, %s35
      %p41 = scmp.eq.s32.totalorder %s22, 0
      %p42 = por %p40, %p41
      %p43 = scmp.ne.s32.totalorder %s32, %s35
      %p44 = scmp.eq.s32.totalorder %s27, 1
      %p45 = por %p43, %p44
      %p46 = scmp.ne.s32.totalorder %s35, %s36
      %p47 = scmp.eq.s32.totalorder %s27, 0
      %p48 = por %p46, %p47
      %p49 = scmp.ne.s32.totalorder %s35, %s36
      %p50 = scmp.eq.s32.totalorder %s28, 1
      %p51 = por %p49, %p50
      %p53 = scmp.ne.s32.totalorder %s36, %s52
      %p54 = scmp.eq.s32.totalorder %s28, 0
      %p55 = por %p53, %p54
      %s57 = sadd.s32 %s56, 1
      %p60 = scmp.eq.s32.totalorder %s22, 1
      %p61 = scmp.ne.s32.totalorder %s56, %s58
      %p62 = scmp.eq.s32.totalorder %s22, 0
      %p63 = por %p61, %p62
      %p64 = scmp.ne.s32.totalorder %s56, %s58
      %p65 = scmp.eq.s32.totalorder %s27, 1
      %p66 = por %p64, %p65
      %p67 = scmp.ne.s32.totalorder %s58, %s59
      %p68 = scmp.eq.s32.totalorder %s27, 0
      %p69 = por %p67, %p68
      %p70 = scmp.ne.s32.totalorder %s58, %s59
      %p71 = scmp.eq.s32.totalorder %s28, 1
      %p72 = por %p70, %p71
      %p74 = scmp.ne.s32.totalorder %s59, %s73
      %p75 = scmp.eq.s32.totalorder %s28, 0
      %p76 = por %p74, %p75
      %s78 = sadd.s32 %s77, 1
      %p81 = scmp.eq.s32.totalorder %s22, 1
      %p82 = scmp.ne.s32.totalorder %s77, %s79
      %p83 = scmp.eq.s32.totalorder %s22, 0
      %p84 = por %p82, %p83
      %p85 = scmp.ne.s32.totalorder %s77, %s79
      %p86 = scmp.eq.s32.totalorder %s27, 1
      %p87 = por %p85, %p86
      %p88 = scmp.ne.s32.totalorder %s79, %s80
      %p89 = scmp.eq.s32.totalorder %s27, 0
      %p90 = por %p88, %p89
      %p91 = scmp.ne.s32.totalorder %s79, %s80
      %p92 = scmp.eq.s32.totalorder %s28, 1
      %p93 = por %p91, %p92
      %p95 = scmp.ne.s32.totalorder %s80, %s94
      %p96 = scmp.eq.s32.totalorder %s28, 0
      %p97 = por %p95, %p96
      %s99 = sadd.s32 %s98, 1
      %p102 = scmp.eq.s32.totalorder %s22, 1
      %p103 = scmp.ne.s32.totalorder %s98, %s100
      %p104 = scmp.eq.s32.totalorder %s22, 0
      %p105 = por %p103, %p104
      %p106 = scmp.ne.s32.totalorder %s98, %s100
      %p107 = scmp.eq.s32.totalorder %s27, 1
      %p108 = por %p106, %p107
      %p109 = scmp.ne.s32.totalorder %s100, %s101
      %p110 = scmp.eq.s32.totalorder %s27, 0
      %p111 = por %p109, %p110
      %p112 = scmp.ne.s32.totalorder %s100, %s101
      %p113 = scmp.eq.s32.totalorder %s28, 1
      %p114 = por %p112, %p113
      %p116 = scmp.ne.s32.totalorder %s101, %s115
      %p117 = scmp.eq.s32.totalorder %s28, 0
      %p118 = por %p116, %p117
      %s120 = sadd.s32 %s119, 1
      %p123 = scmp.eq.s32.totalorder %s22, 1
      %p124 = scmp.ne.s32.totalorder %s119, %s121
      %p125 = scmp.eq.s32.totalorder %s22, 0
      %p126 = por %p124, %p125
      %p127 = scmp.ne.s32.totalorder %s119, %s121
      %p128 = scmp.eq.s32.totalorder %s27, 1
      %p129 = por %p127, %p128
      %p130 = scmp.ne.s32.totalorder %s121, %s122
      %p131 = scmp.eq.s32.totalorder %s27, 0
      %p132 = por %p130, %p131
      %p133 = scmp.ne.s32.totalorder %s121, %s122
      %p134 = scmp.eq.s32.totalorder %s28, 1
      %p135 = por %p133, %p134
      %p137 = scmp.ne.s32.totalorder %s122, %s136
      %p138 = scmp.eq.s32.totalorder %s28, 0
      %p139 = por %p137, %p138
      %s141 = sadd.s32 %s140, 1
      %p144 = scmp.eq.s32.totalorder %s22, 1
      %p145 = scmp.ne.s32.totalorder %s140, %s142
      %p146 = scmp.eq.s32.totalorder %s22, 0
      %p147 = por %p145, %p146
      %p148 = scmp.ne.s32.totalorder %s140, %s142
      %p149 = scmp.eq.s32.totalorder %s27, 1
      %p150 = por %p148, %p149
      %p151 = scmp.ne.s32.totalorder %s142, %s143
      %p152 = scmp.eq.s32.totalorder %s27, 0
      %p153 = por %p151, %p152
      %p154 = scmp.ne.s32.totalorder %s142, %s143
      %p155 = scmp.eq.s32.totalorder %s28, 1
      %p156 = por %p154, %p155
      %p158 = scmp.ne.s32.totalorder %s143, %s157
      %p159 = scmp.eq.s32.totalorder %s28, 0
      %p160 = por %p158, %p159
      %s162 = sadd.s32 %s161, 1
      %p165 = scmp.eq.s32.totalorder %s22, 1
      %p166 = scmp.ne.s32.totalorder %s161, %s163
      %p167 = scmp.eq.s32.totalorder %s22, 0
      %p168 = por %p166, %p167
      %p169 = scmp.ne.s32.totalorder %s161, %s163
      %p170 = scmp.eq.s32.totalorder %s27, 1
      %p171 = por %p169, %p170
      %p172 = scmp.ne.s32.totalorder %s163, %s164
      %p173 = scmp.eq.s32.totalorder %s27, 0
      %p174 = por %p172, %p173
      %p175 = scmp.ne.s32.totalorder %s163, %s164
      %p176 = scmp.eq.s32.totalorder %s28, 1
      %p177 = por %p175, %p176
      %p179 = scmp.ne.s32.totalorder %s164, %s178
      %p180 = scmp.eq.s32.totalorder %s28, 0
      %p181 = por %p179, %p180
      %s183 = sadd.s32 %s182, 1
      %p186 = scmp.eq.s32.totalorder %s22, 1
      %p187 = scmp.ne.s32.totalorder %s182, %s184
      %p188 = scmp.eq.s32.totalorder %s22, 0
      %p189 = por %p187, %p188
      %p190 = scmp.ne.s32.totalorder %s182, %s184
      %p191 = scmp.eq.s32.totalorder %s27, 1
      %p192 = por %p190, %p191
      %p193 = scmp.ne.s32.totalorder %s184, %s185
      %p194 = scmp.eq.s32.totalorder %s27, 0
      %p195 = por %p193, %p194
      %p196 = scmp.ne.s32.totalorder %s184, %s185
      %p197 = scmp.eq.s32.totalorder %s28, 1
      %p198 = por %p196, %p197
      %p200 = scmp.ne.s32.totalorder %s185, %s199
      %p201 = scmp.eq.s32.totalorder %s28, 0
      %p202 = por %p200, %p201
      %s204 = sadd.s32 %s203, 1
      %p207 = scmp.eq.s32.totalorder %s22, 1
      %p208 = scmp.ne.s32.totalorder %s203, %s205
      %p209 = scmp.eq.s32.totalorder %s22, 0
      %p210 = por %p208, %p209
      %p211 = scmp.ne.s32.totalorder %s203, %s205
      %p212 = scmp.eq.s32.totalorder %s27, 1
      %p213 = por %p211, %p212
      %p214 = scmp.ne.s32.totalorder %s205, %s206
      %p215 = scmp.eq.s32.totalorder %s27, 0
      %p216 = por %p214, %p215
      %p217 = scmp.ne.s32.totalorder %s205, %s206
      %p218 = scmp.eq.s32.totalorder %s28, 1
      %p219 = por %p217, %p218
      %p221 = scmp.ne.s32.totalorder %s206, %s220
      %p222 = scmp.eq.s32.totalorder %s28, 0
      %p223 = por %p221, %p222
      %s225 = sadd.s32 %s224, 1
      %p228 = scmp.eq.s32.totalorder %s22, 1
      %p229 = scmp.ne.s32.totalorder %s224, %s226
      %p230 = scmp.eq.s32.totalorder %s22, 0
      %p231 = por %p229, %p230
      %p232 = scmp.ne.s32.totalorder %s224, %s226
      %p233 = scmp.eq.s32.totalorder %s27, 1
      %p234 = por %p232, %p233
      %p235 = scmp.ne.s32.totalorder %s226, %s227
      %p236 = scmp.eq.s32.totalorder %s27, 0
      %p237 = por %p235, %p236
      %p238 = scmp.ne.s32.totalorder %s226, %s227
      %p239 = scmp.eq.s32.totalorder %s28, 1
      %p240 = por %p238, %p239
      %p242 = scmp.ne.s32.totalorder %s227, %s241
      %p243 = scmp.eq.s32.totalorder %s28, 0
      %p244 = por %p242, %p243
      %s245 = ssub.s32 %s22, %s29
      %p246 = scmp.eq.s32.totalorder %s245, 0
      %s248 = sadd.s32 %s247, 1
      %s249 = scalar_select %p246, %s247, %s248
      %p252 = pneg %p246
      %p253 = scmp.eq.s32.totalorder %s22, 1
      %p254 = por %p252, %p253
      %p255 = scmp.ne.s32.totalorder %s247, %s250
      %p256 = scmp.eq.s32.totalorder %s22, 0
      %p257 = por %p255, %p256
      %p258 = scmp.ne.s32.totalorder %s247, %s250
      %p259 = scmp.eq.s32.totalorder %s27, 1
      %p260 = por %p258, %p259
      %p261 = scmp.ne.s32.totalorder %s250, %s251
      %p262 = scmp.eq.s32.totalorder %s27, 0
      %p263 = por %p261, %p262
      %p264 = scmp.ne.s32.totalorder %s250, %s251
      %p265 = scmp.eq.s32.totalorder %s28, 1
      %p266 = por %p264, %p265
      %p268 = scmp.ne.s32.totalorder %s251, %s267
      %p269 = scmp.eq.s32.totalorder %s28, 0
      %p270 = por %p268, %p269
      %p271 = scmp.le.s32.totalorder 1, %s22
      %p272 = scmp.lt.s32.totalorder %s22, 3
      %p273 = pnand %p271, %p272
      %p274 = pneg %p273
      // Predicated region
      $region9: #{tpu_custom_call.1} parent=5 // pred_check
        _
      $region10: #{tpu_custom_call.1} parent=5 // pred_check_branch
        %276 = sbr.rel (%p273) target = $region12
      $region11: #{tpu_custom_call.1} parent=5 // pred_region
        %s277 = ssub.s32 %s22, 1
        // Predicated region
        $region13: #{tpu_custom_call.1} parent=11 // pred_check
          %p278 = pneg %p69
        $region14: #{tpu_custom_call.1} parent=11 // pred_check_branch
          %280 = sbr.rel (%p278) target = $region16
        $region15: #{tpu_custom_call.1} parent=11 // pred_region
          _
        $region16: #{tpu_custom_call.1} parent=11 // pred_fallthru
          _
        // Predicated region
        $region17: #{tpu_custom_call.1} parent=11 // pred_check
          %p281 = pneg %p90
        $region18: #{tpu_custom_call.1} parent=11 // pred_check_branch
          %283 = sbr.rel (%p281) target = $region20
        $region19: #{tpu_custom_call.1} parent=11 // pred_region
          _
        $region20: #{tpu_custom_call.1} parent=11 // pred_fallthru
          _
        // Predicated region
        $region21: #{tpu_custom_call.1} parent=11 // pred_check
          %p284 = pneg %p111
        $region22: #{tpu_custom_call.1} parent=11 // pred_check_branch
          %286 = sbr.rel (%p284) target = $region24
        $region23: #{tpu_custom_call.1} parent=11 // pred_region
          _
        $region24: #{tpu_custom_call.1} parent=11 // pred_fallthru
          _
        // Predicated region
        $region25: #{tpu_custom_call.1} parent=11 // pred_check
          %p287 = pneg %p132
        $region26: #{tpu_custom_call.1} parent=11 // pred_check_branch
          %289 = sbr.rel (%p287) target = $region28
        $region27: #{tpu_custom_call.1} parent=11 // pred_region
          _
        $region28: #{tpu_custom_call.1} parent=11 // pred_fallthru
          _
        // Predicated region
        $region29: #{tpu_custom_call.1} parent=11 // pred_check
          %p290 = pneg %p153
        $region30: #{tpu_custom_call.1} parent=11 // pred_check_branch
          %292 = sbr.rel (%p290) target = $region32
        $region31: #{tpu_custom_call.1} parent=11 // pred_region
          _
        $region32: #{tpu_custom_call.1} parent=11 // pred_fallthru
          _
        // Predicated region
        $region33: #{tpu_custom_call.1} parent=11 // pred_check
          %p293 = pneg %p174
        $region34: #{tpu_custom_call.1} parent=11 // pred_check_branch
          %295 = sbr.rel (%p293) target = $region36
        $region35: #{tpu_custom_call.1} parent=11 // pred_region
          _
        $region36: #{tpu_custom_call.1} parent=11 // pred_fallthru
          _
        // Predicated region
        $region37: #{tpu_custom_call.1} parent=11 // pred_check
          %p296 = pneg %p195
        $region38: #{tpu_custom_call.1} parent=11 // pred_check_branch
          %298 = sbr.rel (%p296) target = $region40
        $region39: #{tpu_custom_call.1} parent=11 // pred_region
          _
        $region40: #{tpu_custom_call.1} parent=11 // pred_fallthru
          _
        // Predicated region
        $region41: #{tpu_custom_call.1} parent=11 // pred_check
          %p299 = pneg %p216
        $region42: #{tpu_custom_call.1} parent=11 // pred_check_branch
          %301 = sbr.rel (%p299) target = $region44
        $region43: #{tpu_custom_call.1} parent=11 // pred_region
          _
        $region44: #{tpu_custom_call.1} parent=11 // pred_fallthru
          _
        // Predicated region
        $region45: #{tpu_custom_call.1} parent=11 // pred_check
          %p302 = pneg %p237
        $region46: #{tpu_custom_call.1} parent=11 // pred_check_branch
          %304 = sbr.rel (%p302) target = $region48
        $region47: #{tpu_custom_call.1} parent=11 // pred_region
          _
        $region48: #{tpu_custom_call.1} parent=11 // pred_fallthru
          _
      $region12: #{tpu_custom_call.1} parent=5 // pred_fallthru
        _
      %p305 = scmp.lt.s32.totalorder %s22, 2
      // Predicated region
      $region49: #{tpu_custom_call.1} parent=5 // pred_check
        %p306 = pneg %p305
      $region50: #{tpu_custom_call.1} parent=5 // pred_check_branch
        %308 = sbr.rel (%p306) target = $region52
      $region51: #{tpu_custom_call.1} parent=5 // pred_region
        // Predicated region
        $region53: #{tpu_custom_call.1} parent=51 // pred_check
          %p309 = pneg %p42
        $region54: #{tpu_custom_call.1} parent=51 // pred_check_branch
          %311 = sbr.rel (%p309) target = $region56
        $region55: #{tpu_custom_call.1} parent=51 // pred_region
          %s312 = sand.u32 %s32, 1
          %s313 = scalar_lea.sflag [#allocation4], %s312
          %s314 = sand.u32 %s32, 1
          %s315 = smul.addr %s314, 512
          %s316 = scalar_lea.vmem [#allocation3], %s315
          %s317 = smul.u32 2, %s22
          %319 = vsyncadd %s313, 0
          %s320 = smul.addr %s317, 64
          %s321 = smul.addr %s320, 4
          %s322 = scalar_lea.hbm %s0, %s321
          %s323 = sshll.u32 %s322, 4
          %s324 = int_to_ptr.hbm [resolvable:$true] %s323
          %s325 = sshll.u32 %s316, 4
          %s326 = int_to_ptr.vmem [resolvable:$true] %s325
          %331 = dma.hbm_to_vmem [thread:$0]  %s324, 8192, %s326, %s313, 128, 128, 8
        $region56: #{tpu_custom_call.1} parent=51 // pred_fallthru
          _
      $region52: #{tpu_custom_call.1} parent=5 // pred_fallthru
        _
      %p332 = scmp.le.s32.totalorder 1, %s22
      %p333 = scmp.lt.s32.totalorder %s22, 3
      %p334 = pnand %p332, %p333
      %p335 = pneg %p334
      // Predicated region
      $region57: #{tpu_custom_call.1} parent=5 // pred_check
        _
      $region58: #{tpu_custom_call.1} parent=5 // pred_check_branch
        %337 = sbr.rel (%p334) target = $region60
      $region59: #{tpu_custom_call.1} parent=5 // pred_region
        %s338 = ssub.s32 %s22, 1
        %s339 = sand.u32 %s35, 1
        %s340 = scalar_lea.sflag [#allocation4], %s339
        %s341 = sand.u32 %s35, 1
        %s342 = smul.addr %s341, 512
        %s343 = scalar_lea.vmem [#allocation3], %s342
        // Predicated region
        $region61: #{tpu_custom_call.1} parent=59 // pred_check
          %p344 = pneg %p48
        $region62: #{tpu_custom_call.1} parent=59 // pred_check_branch
          %346 = sbr.rel (%p344) target = $region64
        $region63: #{tpu_custom_call.1} parent=59 // pred_region
          %348 = dma.done %s340, 8192
        $region64: #{tpu_custom_call.1} parent=59 // pred_fallthru
          _
        %s349 = sand.u32 %s35, 1
        %s350 = scalar_lea.sflag [#allocation4], %s349
        %s351 = sand.u32 %s35, 1
        %s352 = smul.addr %s351, 512
        %s353 = scalar_lea.vmem [#allocation3], %s352
        %p354 = pneg %p48
        %p355 = pneg %p45
        %p356 = pneg %p69
        %p357 = pneg %p66
        %p358 = pneg %p90
        %p359 = pneg %p87
        %p360 = pneg %p111
        %p361 = pneg %p108
        %p362 = pneg %p132
        %p363 = pneg %p129
        %p364 = pneg %p153
        %p365 = pneg %p150
        %p366 = pneg %p174
        %p367 = pneg %p171
        %p368 = pneg %p195
        %p369 = pneg %p192
        %p370 = pneg %p216
        %p371 = pneg %p213
        %p372 = pneg %p237
        %p373 = pneg %p234
        %p374 = pneg %p263
        %p375 = pneg %p260
        %s376 = sand.u32 %s250, 1
        %s377 = scalar_lea.sflag [#allocation5], %s376
        %s378 = sand.u32 %s250, 1
        %s379 = smul.addr %s378, 1024
        %s380 = scalar_lea.vmem [#allocation6], %s379
        %s381 = smul.u32 2, %s27
        %s382 = smul.u32 2, %s27
        %v384 = vld [vmem:[%s343] sm:$0xff]
        %v385 = vld [vmem:[%s343 + $0x8] sm:$0xff]
        %v386 = vld [vmem:[%s343 + $0x10] sm:$0xff]
        %v387 = vld [vmem:[%s343 + $0x18] sm:$0xff]
        %v388 = vld [vmem:[%s343 + $0x20] sm:$0xff]
        %v389 = vld [vmem:[%s343 + $0x28] sm:$0xff]
        %v390 = vld [vmem:[%s343 + $0x30] sm:$0xff]
        %v391 = vld [vmem:[%s343 + $0x38] sm:$0xff]
        %v392 = vld [vmem:[%s343 + $0x40] sm:$0xff]
        %v393 = vld [vmem:[%s343 + $0x48] sm:$0xff]
        %v394 = vld [vmem:[%s343 + $0x50] sm:$0xff]
        %v395 = vld [vmem:[%s343 + $0x58] sm:$0xff]
        %v396 = vld [vmem:[%s343 + $0x60] sm:$0xff]
        %v397 = vld [vmem:[%s343 + $0x68] sm:$0xff]
        %v398 = vld [vmem:[%s343 + $0x70] sm:$0xff]
        %v399 = vld [vmem:[%s343 + $0x78] sm:$0xff]
        %v400 = vld [vmem:[%s343 + $0x80] sm:$0xff]
        %v401 = vld [vmem:[%s343 + $0x88] sm:$0xff]
        %v402 = vld [vmem:[%s343 + $0x90] sm:$0xff]
        %v403 = vld [vmem:[%s343 + $0x98] sm:$0xff]
        %v404 = vld [vmem:[%s343 + $0xa0] sm:$0xff]
        %v405 = vld [vmem:[%s343 + $0xa8] sm:$0xff]
        %v406 = vld [vmem:[%s343 + $0xb0] sm:$0xff]
        %v407 = vld [vmem:[%s343 + $0xb8] sm:$0xff]
        %v408 = vld [vmem:[%s343 + $0xc0] sm:$0xff]
        %v409 = vld [vmem:[%s343 + $0xc8] sm:$0xff]
        %v410 = vld [vmem:[%s343 + $0xd0] sm:$0xff]
        %v411 = vld [vmem:[%s343 + $0xd8] sm:$0xff]
        %v412 = vld [vmem:[%s343 + $0xe0] sm:$0xff]
        %v413 = vld [vmem:[%s343 + $0xe8] sm:$0xff]
        %v414 = vld [vmem:[%s343 + $0xf0] sm:$0xff]
        %v415 = vld [vmem:[%s343 + $0xf8] sm:$0xff]
        %v416 = vld [vmem:[%s343 + $0x100] sm:$0xff]
        %v417 = vld [vmem:[%s343 + $0x108] sm:$0xff]
        %v418 = vld [vmem:[%s343 + $0x110] sm:$0xff]
        %v419 = vld [vmem:[%s343 + $0x118] sm:$0xff]
        %v420 = vld [vmem:[%s343 + $0x120] sm:$0xff]
        %v421 = vld [vmem:[%s343 + $0x128] sm:$0xff]
        %v422 = vld [vmem:[%s343 + $0x130] sm:$0xff]
        %v423 = vld [vmem:[%s343 + $0x138] sm:$0xff]
        %v424 = vld [vmem:[%s343 + $0x140] sm:$0xff]
        %v425 = vld [vmem:[%s343 + $0x148] sm:$0xff]
        %v426 = vld [vmem:[%s343 + $0x150] sm:$0xff]
        %v427 = vld [vmem:[%s343 + $0x158] sm:$0xff]
        %v428 = vld [vmem:[%s343 + $0x160] sm:$0xff]
        %v429 = vld [vmem:[%s343 + $0x168] sm:$0xff]
        %v430 = vld [vmem:[%s343 + $0x170] sm:$0xff]
        %v431 = vld [vmem:[%s343 + $0x178] sm:$0xff]
        %v432 = vld [vmem:[%s343 + $0x180] sm:$0xff]
        %v433 = vld [vmem:[%s343 + $0x188] sm:$0xff]
        %v434 = vld [vmem:[%s343 + $0x190] sm:$0xff]
        %v435 = vld [vmem:[%s343 + $0x198] sm:$0xff]
        %v436 = vld [vmem:[%s343 + $0x1a0] sm:$0xff]
        %v437 = vld [vmem:[%s343 + $0x1a8] sm:$0xff]
        %v438 = vld [vmem:[%s343 + $0x1b0] sm:$0xff]
        %v439 = vld [vmem:[%s343 + $0x1b8] sm:$0xff]
        %v440 = vld [vmem:[%s343 + $0x1c0] sm:$0xff]
        %v441 = vld [vmem:[%s343 + $0x1c8] sm:$0xff]
        %v442 = vld [vmem:[%s343 + $0x1d0] sm:$0xff]
        %v443 = vld [vmem:[%s343 + $0x1d8] sm:$0xff]
        %v444 = vld [vmem:[%s343 + $0x1e0] sm:$0xff]
        %v445 = vld [vmem:[%s343 + $0x1e8] sm:$0xff]
        %v446 = vld [vmem:[%s343 + $0x1f0] sm:$0xff]
        %v447 = vld [vmem:[%s343 + $0x1f8] sm:$0xff]
        %v448 = vld [vmem:[%s1] sm:$0xf]
        %v449 = vld [vmem:[%s1 + $0x4] sm:$0xf]
        %v450 = vld [vmem:[%s1 + $0x8] sm:$0xf]
        %v451 = vld [vmem:[%s1 + $0xc] sm:$0xf]
        %v452 = vld [vmem:[%s1 + $0x10] sm:$0xf]
        %v453 = vld [vmem:[%s1 + $0x14] sm:$0xf]
        %v454 = vld [vmem:[%s1 + $0x18] sm:$0xf]
        %v455 = vld [vmem:[%s1 + $0x1c] sm:$0xf]
        %v456 = vld [vmem:[%s1 + $0x20] sm:$0xf]
        %v457 = vld [vmem:[%s1 + $0x24] sm:$0xf]
        %v458 = vld [vmem:[%s1 + $0x28] sm:$0xf]
        %v459 = vld [vmem:[%s1 + $0x2c] sm:$0xf]
        %v460 = vld [vmem:[%s1 + $0x30] sm:$0xf]
        %v461 = vld [vmem:[%s1 + $0x34] sm:$0xf]
        %v462 = vld [vmem:[%s1 + $0x38] sm:$0xf]
        %v463 = vld [vmem:[%s1 + $0x3c] sm:$0xf]
        %v464 = vld [vmem:[%s1 + $0x40] sm:$0xf]
        %v465 = vld [vmem:[%s1 + $0x44] sm:$0xf]
        %v466 = vld [vmem:[%s1 + $0x48] sm:$0xf]
        %v467 = vld [vmem:[%s1 + $0x4c] sm:$0xf]
        %v468 = vld [vmem:[%s1 + $0x50] sm:$0xf]
        %v469 = vld [vmem:[%s1 + $0x54] sm:$0xf]
        %v470 = vld [vmem:[%s1 + $0x58] sm:$0xf]
        %v471 = vld [vmem:[%s1 + $0x5c] sm:$0xf]
        %v472 = vld [vmem:[%s1 + $0x60] sm:$0xf]
        %v473 = vld [vmem:[%s1 + $0x64] sm:$0xf]
        %v474 = vld [vmem:[%s1 + $0x68] sm:$0xf]
        %v475 = vld [vmem:[%s1 + $0x6c] sm:$0xf]
        %v476 = vld [vmem:[%s1 + $0x70] sm:$0xf]
        %v477 = vld [vmem:[%s1 + $0x74] sm:$0xf]
        %v478 = vld [vmem:[%s1 + $0x78] sm:$0xf]
        %v479 = vld [vmem:[%s1 + $0x7c] sm:$0xf]
        %v544 = vunpack.c.l.b16 %v384
        %v545 = vunpack.c.h.b16 %v384
        %v546 = vunpack.c.l.b16 %v385
        %v547 = vunpack.c.h.b16 %v385
        %v548 = vunpack.c.l.b16 %v386
        %v549 = vunpack.c.h.b16 %v386
        %v550 = vunpack.c.l.b16 %v387
        %v551 = vunpack.c.h.b16 %v387
        %v552 = vunpack.c.l.b16 %v388
        %v553 = vunpack.c.h.b16 %v388
        %v554 = vunpack.c.l.b16 %v389
        %v555 = vunpack.c.h.b16 %v389
        %v556 = vunpack.c.l.b16 %v390
        %v557 = vunpack.c.h.b16 %v390
        %v558 = vunpack.c.l.b16 %v391
        %v559 = vunpack.c.h.b16 %v391
        %v560 = vunpack.c.l.b16 %v392
        %v561 = vunpack.c.h.b16 %v392
        %v562 = vunpack.c.l.b16 %v393
        %v563 = vunpack.c.h.b16 %v393
        %v564 = vunpack.c.l.b16 %v394
        %v565 = vunpack.c.h.b16 %v394
        %v566 = vunpack.c.l.b16 %v395
        %v567 = vunpack.c.h.b16 %v395
        %v568 = vunpack.c.l.b16 %v396
        %v569 = vunpack.c.h.b16 %v396
        %v570 = vunpack.c.l.b16 %v397
        %v571 = vunpack.c.h.b16 %v397
        %v572 = vunpack.c.l.b16 %v398
        %v573 = vunpack.c.h.b16 %v398
        %v574 = vunpack.c.l.b16 %v399
        %v575 = vunpack.c.h.b16 %v399
        %v576 = vunpack.c.l.b16 %v400
        %v577 = vunpack.c.h.b16 %v400
        %v578 = vunpack.c.l.b16 %v401
        %v579 = vunpack.c.h.b16 %v401
        %v580 = vunpack.c.l.b16 %v402
        %v581 = vunpack.c.h.b16 %v402
        %v582 = vunpack.c.l.b16 %v403
        %v583 = vunpack.c.h.b16 %v403
        %v584 = vunpack.c.l.b16 %v404
        %v585 = vunpack.c.h.b16 %v404
        %v586 = vunpack.c.l.b16 %v405
        %v587 = vunpack.c.h.b16 %v405
        %v588 = vunpack.c.l.b16 %v406
        %v589 = vunpack.c.h.b16 %v406
        %v590 = vunpack.c.l.b16 %v407
        %v591 = vunpack.c.h.b16 %v407
        %v592 = vunpack.c.l.b16 %v408
        %v593 = vunpack.c.h.b16 %v408
        %v594 = vunpack.c.l.b16 %v409
        %v595 = vunpack.c.h.b16 %v409
        %v596 = vunpack.c.l.b16 %v410
        %v597 = vunpack.c.h.b16 %v410
        %v598 = vunpack.c.l.b16 %v411
        %v599 = vunpack.c.h.b16 %v411
        %v600 = vunpack.c.l.b16 %v412
        %v601 = vunpack.c.h.b16 %v412
        %v602 = vunpack.c.l.b16 %v413
        %v603 = vunpack.c.h.b16 %v413
        %v604 = vunpack.c.l.b16 %v414
        %v605 = vunpack.c.h.b16 %v414
        %v606 = vunpack.c.l.b16 %v415
        %v607 = vunpack.c.h.b16 %v415
        %v608 = vunpack.c.l.b16 %v416
        %v609 = vunpack.c.h.b16 %v416
        %v610 = vunpack.c.l.b16 %v417
        %v611 = vunpack.c.h.b16 %v417
        %v612 = vunpack.c.l.b16 %v418
        %v613 = vunpack.c.h.b16 %v418
        %v614 = vunpack.c.l.b16 %v419
        %v615 = vunpack.c.h.b16 %v419
        %v616 = vunpack.c.l.b16 %v420
        %v617 = vunpack.c.h.b16 %v420
        %v618 = vunpack.c.l.b16 %v421
        %v619 = vunpack.c.h.b16 %v421
        %v620 = vunpack.c.l.b16 %v422
        %v621 = vunpack.c.h.b16 %v422
        %v622 = vunpack.c.l.b16 %v423
        %v623 = vunpack.c.h.b16 %v423
        %v624 = vunpack.c.l.b16 %v424
        %v625 = vunpack.c.h.b16 %v424
        %v626 = vunpack.c.l.b16 %v425
        %v627 = vunpack.c.h.b16 %v425
        %v628 = vunpack.c.l.b16 %v426
        %v629 = vunpack.c.h.b16 %v426
        %v630 = vunpack.c.l.b16 %v427
        %v631 = vunpack.c.h.b16 %v427
        %v632 = vunpack.c.l.b16 %v428
        %v633 = vunpack.c.h.b16 %v428
        %v634 = vunpack.c.l.b16 %v429
        %v635 = vunpack.c.h.b16 %v429
        %v636 = vunpack.c.l.b16 %v430
        %v637 = vunpack.c.h.b16 %v430
        %v638 = vunpack.c.l.b16 %v431
        %v639 = vunpack.c.h.b16 %v431
        %v640 = vunpack.c.l.b16 %v432
        %v641 = vunpack.c.h.b16 %v432
        %v642 = vunpack.c.l.b16 %v433
        %v643 = vunpack.c.h.b16 %v433
        %v644 = vunpack.c.l.b16 %v434
        %v645 = vunpack.c.h.b16 %v434
        %v646 = vunpack.c.l.b16 %v435
        %v647 = vunpack.c.h.b16 %v435
        %v648 = vunpack.c.l.b16 %v436
        %v649 = vunpack.c.h.b16 %v436
        %v650 = vunpack.c.l.b16 %v437
        %v651 = vunpack.c.h.b16 %v437
        %v652 = vunpack.c.l.b16 %v438
        %v653 = vunpack.c.h.b16 %v438
        %v654 = vunpack.c.l.b16 %v439
        %v655 = vunpack.c.h.b16 %v439
        %v656 = vunpack.c.l.b16 %v440
        %v657 = vunpack.c.h.b16 %v440
        %v658 = vunpack.c.l.b16 %v441
        %v659 = vunpack.c.h.b16 %v441
        %v660 = vunpack.c.l.b16 %v442
        %v661 = vunpack.c.h.b16 %v442
        %v662 = vunpack.c.l.b16 %v443
        %v663 = vunpack.c.h.b16 %v443
        %v664 = vunpack.c.l.b16 %v444
        %v665 = vunpack.c.h.b16 %v444
        %v666 = vunpack.c.l.b16 %v445
        %v667 = vunpack.c.h.b16 %v445
        %v668 = vunpack.c.l.b16 %v446
        %v669 = vunpack.c.h.b16 %v446
        %v670 = vunpack.c.l.b16 %v447
        %v671 = vunpack.c.h.b16 %v447
        %v672 = vpack.c.b16 %v546, %v544
        %v673 = vpack.c.b16 %v547, %v545
        %v674 = vpack.c.b16 %v550, %v548
        %v675 = vpack.c.b16 %v551, %v549
        %v676 = vpack.c.b16 %v554, %v552
        %v677 = vpack.c.b16 %v555, %v553
        %v678 = vpack.c.b16 %v558, %v556
        %v679 = vpack.c.b16 %v559, %v557
        %v680 = vpack.c.b16 %v562, %v560
        %v681 = vpack.c.b16 %v563, %v561
        %v682 = vpack.c.b16 %v566, %v564
        %v683 = vpack.c.b16 %v567, %v565
        %v684 = vpack.c.b16 %v570, %v568
        %v685 = vpack.c.b16 %v571, %v569
        %v686 = vpack.c.b16 %v574, %v572
        %v687 = vpack.c.b16 %v575, %v573
        %v688 = vpack.c.b16 %v578, %v576
        %v689 = vpack.c.b16 %v579, %v577
        %v690 = vpack.c.b16 %v582, %v580
        %v691 = vpack.c.b16 %v583, %v581
        %v692 = vpack.c.b16 %v586, %v584
        %v693 = vpack.c.b16 %v587, %v585
        %v694 = vpack.c.b16 %v590, %v588
        %v695 = vpack.c.b16 %v591, %v589
        %v696 = vpack.c.b16 %v594, %v592
        %v697 = vpack.c.b16 %v595, %v593
        %v698 = vpack.c.b16 %v598, %v596
        %v699 = vpack.c.b16 %v599, %v597
        %v700 = vpack.c.b16 %v602, %v600
        %v701 = vpack.c.b16 %v603, %v601
        %v702 = vpack.c.b16 %v606, %v604
        %v703 = vpack.c.b16 %v607, %v605
        %v704 = vpack.c.b16 %v610, %v608
        %v705 = vpack.c.b16 %v611, %v609
        %v706 = vpack.c.b16 %v614, %v612
        %v707 = vpack.c.b16 %v615, %v613
        %v708 = vpack.c.b16 %v618, %v616
        %v709 = vpack.c.b16 %v619, %v617
        %v710 = vpack.c.b16 %v622, %v620
        %v711 = vpack.c.b16 %v623, %v621
        %v712 = vpack.c.b16 %v626, %v624
        %v713 = vpack.c.b16 %v627, %v625
        %v714 = vpack.c.b16 %v630, %v628
        %v715 = vpack.c.b16 %v631, %v629
        %v716 = vpack.c.b16 %v634, %v632
        %v717 = vpack.c.b16 %v635, %v633
        %v718 = vpack.c.b16 %v638, %v636
        %v719 = vpack.c.b16 %v639, %v637
        %v720 = vpack.c.b16 %v642, %v640
        %v721 = vpack.c.b16 %v643, %v641
        %v722 = vpack.c.b16 %v646, %v644
        %v723 = vpack.c.b16 %v647, %v645
        %v724 = vpack.c.b16 %v650, %v648
        %v725 = vpack.c.b16 %v651, %v649
        %v726 = vpack.c.b16 %v654, %v652
        %v727 = vpack.c.b16 %v655, %v653
        %v728 = vpack.c.b16 %v658, %v656
        %v729 = vpack.c.b16 %v659, %v657
        %v730 = vpack.c.b16 %v662, %v660
        %v731 = vpack.c.b16 %v663, %v661
        %v732 = vpack.c.b16 %v666, %v664
        %v733 = vpack.c.b16 %v667, %v665
        %v734 = vpack.c.b16 %v670, %v668
        %v735 = vpack.c.b16 %v671, %v669
        %v832 = vunpack.c.l.b16 %v448
        %v833 = vunpack.c.l.b16 %v449
        %v834 = vunpack.c.l.b16 %v450
        %v835 = vunpack.c.l.b16 %v451
        %v836 = vunpack.c.l.b16 %v452
        %v837 = vunpack.c.l.b16 %v453
        %v838 = vunpack.c.l.b16 %v454
        %v839 = vunpack.c.l.b16 %v455
        %v840 = vunpack.c.l.b16 %v456
        %v841 = vunpack.c.l.b16 %v457
        %v842 = vunpack.c.l.b16 %v458
        %v843 = vunpack.c.l.b16 %v459
        %v844 = vunpack.c.l.b16 %v460
        %v845 = vunpack.c.l.b16 %v461
        %v846 = vunpack.c.l.b16 %v462
        %v847 = vunpack.c.l.b16 %v463
        %v848 = vunpack.c.l.b16 %v464
        %v849 = vunpack.c.l.b16 %v465
        %v850 = vunpack.c.l.b16 %v466
        %v851 = vunpack.c.l.b16 %v467
        %v852 = vunpack.c.l.b16 %v468
        %v853 = vunpack.c.l.b16 %v469
        %v854 = vunpack.c.l.b16 %v470
        %v855 = vunpack.c.l.b16 %v471
        %v856 = vunpack.c.l.b16 %v472
        %v857 = vunpack.c.l.b16 %v473
        %v858 = vunpack.c.l.b16 %v474
        %v859 = vunpack.c.l.b16 %v475
        %v860 = vunpack.c.l.b16 %v476
        %v861 = vunpack.c.l.b16 %v477
        %v862 = vunpack.c.l.b16 %v478
        %v863 = vunpack.c.l.b16 %v479
        %v864 = vpack.c.b16 %v833, %v832
        %v865 = vpack.c.b16 %v835, %v834
        %v866 = vpack.c.b16 %v837, %v836
        %v867 = vpack.c.b16 %v839, %v838
        %v868 = vpack.c.b16 %v841, %v840
        %v869 = vpack.c.b16 %v843, %v842
        %v870 = vpack.c.b16 %v845, %v844
        %v871 = vpack.c.b16 %v847, %v846
        %v872 = vpack.c.b16 %v849, %v848
        %v873 = vpack.c.b16 %v851, %v850
        %v874 = vpack.c.b16 %v853, %v852
        %v875 = vpack.c.b16 %v855, %v854
        %v876 = vpack.c.b16 %v857, %v856
        %v877 = vpack.c.b16 %v859, %v858
        %v878 = vpack.c.b16 %v861, %v860
        %v879 = vpack.c.b16 %v863, %v862
        %896 = vmatpush.bf16.msra.mxu0 %v871
        %897 = vmatpush.bf16.msra.mxu0 %v870
        %898 = vmatpush.bf16.msra.mxu0 %v869
        %899 = vmatpush.bf16.msra.mxu0 %v868
        %900 = vmatpush.bf16.msra.mxu0 %v867
        %901 = vmatpush.bf16.msra.mxu0 %v866
        %902 = vmatpush.bf16.msra.mxu0 %v865
        %903 = vmatpush.bf16.msra.mxu0 %v864
        %904 = vmatmul.bf16.gmra.mxu0 %v672
        %v905 = vpop.f32.mrf.mxu0
        %v906 = vadd.f32 0.0, %v905
        %v907 = vpop.f32.mrf.mxu0
        %v908 = vadd.f32 0.0, %v907
        %909 = vmatmul.bf16.gmra.mxu0 %v674
        %v910 = vpop.f32.mrf.mxu0
        %v911 = vadd.f32 0.0, %v910
        %v912 = vpop.f32.mrf.mxu0
        %v913 = vadd.f32 0.0, %v912
        %914 = vmatmul.bf16.gmra.mxu0 %v676
        %v915 = vpop.f32.mrf.mxu0
        %v916 = vadd.f32 0.0, %v915
        %v917 = vpop.f32.mrf.mxu0
        %v918 = vadd.f32 0.0, %v917
        %919 = vmatmul.bf16.gmra.mxu0 %v678
        %v920 = vpop.f32.mrf.mxu0
        %v921 = vadd.f32 0.0, %v920
        %v922 = vpop.f32.mrf.mxu0
        %v923 = vadd.f32 0.0, %v922
        %924 = vmatmul.bf16.gmra.mxu0 %v680
        %v925 = vpop.f32.mrf.mxu0
        %v926 = vadd.f32 0.0, %v925
        %v927 = vpop.f32.mrf.mxu0
        %v928 = vadd.f32 0.0, %v927
        %929 = vmatmul.bf16.gmra.mxu0 %v682
        %v930 = vpop.f32.mrf.mxu0
        %v931 = vadd.f32 0.0, %v930
        %v932 = vpop.f32.mrf.mxu0
        %v933 = vadd.f32 0.0, %v932
        %934 = vmatmul.bf16.gmra.mxu0 %v684
        %v935 = vpop.f32.mrf.mxu0
        %v936 = vadd.f32 0.0, %v935
        %v937 = vpop.f32.mrf.mxu0
        %v938 = vadd.f32 0.0, %v937
        %939 = vmatmul.bf16.gmra.mxu0 %v686
        %v940 = vpop.f32.mrf.mxu0
        %v941 = vadd.f32 0.0, %v940
        %v942 = vpop.f32.mrf.mxu0
        %v943 = vadd.f32 0.0, %v942
        %944 = vmatmul.bf16.gmra.mxu0 %v688
        %v945 = vpop.f32.mrf.mxu0
        %v946 = vadd.f32 0.0, %v945
        %v947 = vpop.f32.mrf.mxu0
        %v948 = vadd.f32 0.0, %v947
        %949 = vmatmul.bf16.gmra.mxu0 %v690
        %v950 = vpop.f32.mrf.mxu0
        %v951 = vadd.f32 0.0, %v950
        %v952 = vpop.f32.mrf.mxu0
        %v953 = vadd.f32 0.0, %v952
        %954 = vmatmul.bf16.gmra.mxu0 %v692
        %v955 = vpop.f32.mrf.mxu0
        %v956 = vadd.f32 0.0, %v955
        %v957 = vpop.f32.mrf.mxu0
        %v958 = vadd.f32 0.0, %v957
        %959 = vmatmul.bf16.gmra.mxu0 %v694
        %v960 = vpop.f32.mrf.mxu0
        %v961 = vadd.f32 0.0, %v960
        %v962 = vpop.f32.mrf.mxu0
        %v963 = vadd.f32 0.0, %v962
        %964 = vmatmul.bf16.gmra.mxu0 %v696
        %v965 = vpop.f32.mrf.mxu0
        %v966 = vadd.f32 0.0, %v965
        %v967 = vpop.f32.mrf.mxu0
        %v968 = vadd.f32 0.0, %v967
        %969 = vmatmul.bf16.gmra.mxu0 %v698
        %v970 = vpop.f32.mrf.mxu0
        %v971 = vadd.f32 0.0, %v970
        %v972 = vpop.f32.mrf.mxu0
        %v973 = vadd.f32 0.0, %v972
        %974 = vmatmul.bf16.gmra.mxu0 %v700
        %v975 = vpop.f32.mrf.mxu0
        %v976 = vadd.f32 0.0, %v975
        %v977 = vpop.f32.mrf.mxu0
        %v978 = vadd.f32 0.0, %v977
        %979 = vmatmul.bf16.gmra.mxu0 %v702
        %v980 = vpop.f32.mrf.mxu0
        %v981 = vadd.f32 0.0, %v980
        %v982 = vpop.f32.mrf.mxu0
        %v983 = vadd.f32 0.0, %v982
        %984 = vmatmul.bf16.gmra.mxu0 %v704
        %v985 = vpop.f32.mrf.mxu0
        %v986 = vadd.f32 0.0, %v985
        %v987 = vpop.f32.mrf.mxu0
        %v988 = vadd.f32 0.0, %v987
        %989 = vmatmul.bf16.gmra.mxu0 %v706
        %v990 = vpop.f32.mrf.mxu0
        %v991 = vadd.f32 0.0, %v990
        %v992 = vpop.f32.mrf.mxu0
        %v993 = vadd.f32 0.0, %v992
        %994 = vmatmul.bf16.gmra.mxu0 %v708
        %v995 = vpop.f32.mrf.mxu0
        %v996 = vadd.f32 0.0, %v995
        %v997 = vpop.f32.mrf.mxu0
        %v998 = vadd.f32 0.0, %v997
        %999 = vmatmul.bf16.gmra.mxu0 %v710
        %v1000 = vpop.f32.mrf.mxu0
        %v1001 = vadd.f32 0.0, %v1000
        %v1002 = vpop.f32.mrf.mxu0
        %v1003 = vadd.f32 0.0, %v1002
        %1004 = vmatmul.bf16.gmra.mxu0 %v712
        %v1005 = vpop.f32.mrf.mxu0
        %v1006 = vadd.f32 0.0, %v1005
        %v1007 = vpop.f32.mrf.mxu0
        %v1008 = vadd.f32 0.0, %v1007
        %1009 = vmatmul.bf16.gmra.mxu0 %v714
        %v1010 = vpop.f32.mrf.mxu0
        %v1011 = vadd.f32 0.0, %v1010
        %v1012 = vpop.f32.mrf.mxu0
        %v1013 = vadd.f32 0.0, %v1012
        %1014 = vmatmul.bf16.gmra.mxu0 %v716
        %v1015 = vpop.f32.mrf.mxu0
        %v1016 = vadd.f32 0.0, %v1015
        %v1017 = vpop.f32.mrf.mxu0
        %v1018 = vadd.f32 0.0, %v1017
        %1019 = vmatmul.bf16.gmra.mxu0 %v718
        %v1020 = vpop.f32.mrf.mxu0
        %v1021 = vadd.f32 0.0, %v1020
        %v1022 = vpop.f32.mrf.mxu0
        %v1023 = vadd.f32 0.0, %v1022
        %1024 = vmatmul.bf16.gmra.mxu0 %v720
        %v1025 = vpop.f32.mrf.mxu0
        %v1026 = vadd.f32 0.0, %v1025
        %v1027 = vpop.f32.mrf.mxu0
        %v1028 = vadd.f32 0.0, %v1027
        %1029 = vmatmul.bf16.gmra.mxu0 %v722
        %v1030 = vpop.f32.mrf.mxu0
        %v1031 = vadd.f32 0.0, %v1030
        %v1032 = vpop.f32.mrf.mxu0
        %v1033 = vadd.f32 0.0, %v1032
        %1034 = vmatmul.bf16.gmra.mxu0 %v724
        %v1035 = vpop.f32.mrf.mxu0
        %v1036 = vadd.f32 0.0, %v1035
        %v1037 = vpop.f32.mrf.mxu0
        %v1038 = vadd.f32 0.0, %v1037
        %1039 = vmatmul.bf16.gmra.mxu0 %v726
        %v1040 = vpop.f32.mrf.mxu0
        %v1041 = vadd.f32 0.0, %v1040
        %v1042 = vpop.f32.mrf.mxu0
        %v1043 = vadd.f32 0.0, %v1042
        %1044 = vmatmul.bf16.gmra.mxu0 %v728
        %v1045 = vpop.f32.mrf.mxu0
        %v1046 = vadd.f32 0.0, %v1045
        %v1047 = vpop.f32.mrf.mxu0
        %v1048 = vadd.f32 0.0, %v1047
        %1049 = vmatmul.bf16.gmra.mxu0 %v730
        %v1050 = vpop.f32.mrf.mxu0
        %v1051 = vadd.f32 0.0, %v1050
        %v1052 = vpop.f32.mrf.mxu0
        %v1053 = vadd.f32 0.0, %v1052
        %1054 = vmatmul.bf16.gmra.mxu0 %v732
        %v1055 = vpop.f32.mrf.mxu0
        %v1056 = vadd.f32 0.0, %v1055
        %v1057 = vpop.f32.mrf.mxu0
        %v1058 = vadd.f32 0.0, %v1057
        %1059 = vmatmul.bf16.gmra.mxu0 %v734
        %v1060 = vpop.f32.mrf.mxu0
        %v1061 = vadd.f32 0.0, %v1060
        %v1062 = vpop.f32.mrf.mxu0
        %v1063 = vadd.f32 0.0, %v1062
        %1064 = vdwg.mxu0
        %1065 = vmatpush.bf16.msra.mxu0 %v879
        %1066 = vmatpush.bf16.msra.mxu0 %v878
        %1067 = vmatpush.bf16.msra.mxu0 %v877
        %1068 = vmatpush.bf16.msra.mxu0 %v876
        %1069 = vmatpush.bf16.msra.mxu0 %v875
        %1070 = vmatpush.bf16.msra.mxu0 %v874
        %1071 = vmatpush.bf16.msra.mxu0 %v873
        %1072 = vmatpush.bf16.msra.mxu0 %v872
        %1073 = vmatmul.bf16.gmra.mxu0 %v673
        %v1074 = vpop.f32.mrf.mxu0
        %v1075 = vadd.f32 %v906, %v1074
        %v1076 = vpop.f32.mrf.mxu0
        %v1077 = vadd.f32 %v908, %v1076
        %1078 = vmatmul.bf16.gmra.mxu0 %v675
        %v1079 = vpop.f32.mrf.mxu0
        %v1080 = vadd.f32 %v911, %v1079
        %v1081 = vpop.f32.mrf.mxu0
        %v1082 = vadd.f32 %v913, %v1081
        %1083 = vmatmul.bf16.gmra.mxu0 %v677
        %v1084 = vpop.f32.mrf.mxu0
        %v1085 = vadd.f32 %v916, %v1084
        %v1086 = vpop.f32.mrf.mxu0
        %v1087 = vadd.f32 %v918, %v1086
        %1088 = vmatmul.bf16.gmra.mxu0 %v679
        %v1089 = vpop.f32.mrf.mxu0
        %v1090 = vadd.f32 %v921, %v1089
        %v1091 = vpop.f32.mrf.mxu0
        %v1092 = vadd.f32 %v923, %v1091
        %1093 = vmatmul.bf16.gmra.mxu0 %v681
        %v1094 = vpop.f32.mrf.mxu0
        %v1095 = vadd.f32 %v926, %v1094
        %v1096 = vpop.f32.mrf.mxu0
        %v1097 = vadd.f32 %v928, %v1096
        %1098 = vmatmul.bf16.gmra.mxu0 %v683
        %v1099 = vpop.f32.mrf.mxu0
        %v1100 = vadd.f32 %v931, %v1099
        %v1101 = vpop.f32.mrf.mxu0
        %v1102 = vadd.f32 %v933, %v1101
        %1103 = vmatmul.bf16.gmra.mxu0 %v685
        %v1104 = vpop.f32.mrf.mxu0
        %v1105 = vadd.f32 %v936, %v1104
        %v1106 = vpop.f32.mrf.mxu0
        %v1107 = vadd.f32 %v938, %v1106
        %1108 = vmatmul.bf16.gmra.mxu0 %v687
        %v1109 = vpop.f32.mrf.mxu0
        %v1110 = vadd.f32 %v941, %v1109
        %v1111 = vpop.f32.mrf.mxu0
        %v1112 = vadd.f32 %v943, %v1111
        %1113 = vmatmul.bf16.gmra.mxu0 %v689
        %v1114 = vpop.f32.mrf.mxu0
        %v1115 = vadd.f32 %v946, %v1114
        %v1116 = vpop.f32.mrf.mxu0
        %v1117 = vadd.f32 %v948, %v1116
        %1118 = vmatmul.bf16.gmra.mxu0 %v691
        %v1119 = vpop.f32.mrf.mxu0
        %v1120 = vadd.f32 %v951, %v1119
        %v1121 = vpop.f32.mrf.mxu0
        %v1122 = vadd.f32 %v953, %v1121
        %1123 = vmatmul.bf16.gmra.mxu0 %v693
        %v1124 = vpop.f32.mrf.mxu0
        %v1125 = vadd.f32 %v956, %v1124
        %v1126 = vpop.f32.mrf.mxu0
        %v1127 = vadd.f32 %v958, %v1126
        %1128 = vmatmul.bf16.gmra.mxu0 %v695
        %v1129 = vpop.f32.mrf.mxu0
        %v1130 = vadd.f32 %v961, %v1129
        %v1131 = vpop.f32.mrf.mxu0
        %v1132 = vadd.f32 %v963, %v1131
        %1133 = vmatmul.bf16.gmra.mxu0 %v697
        %v1134 = vpop.f32.mrf.mxu0
        %v1135 = vadd.f32 %v966, %v1134
        %v1136 = vpop.f32.mrf.mxu0
        %v1137 = vadd.f32 %v968, %v1136
        %1138 = vmatmul.bf16.gmra.mxu0 %v699
        %v1139 = vpop.f32.mrf.mxu0
        %v1140 = vadd.f32 %v971, %v1139
        %v1141 = vpop.f32.mrf.mxu0
        %v1142 = vadd.f32 %v973, %v1141
        %1143 = vmatmul.bf16.gmra.mxu0 %v701
        %v1144 = vpop.f32.mrf.mxu0
        %v1145 = vadd.f32 %v976, %v1144
        %v1146 = vpop.f32.mrf.mxu0
        %v1147 = vadd.f32 %v978, %v1146
        %1148 = vmatmul.bf16.gmra.mxu0 %v703
        %v1149 = vpop.f32.mrf.mxu0
        %v1150 = vadd.f32 %v981, %v1149
        %v1151 = vpop.f32.mrf.mxu0
        %v1152 = vadd.f32 %v983, %v1151
        %1153 = vmatmul.bf16.gmra.mxu0 %v705
        %v1154 = vpop.f32.mrf.mxu0
        %v1155 = vadd.f32 %v986, %v1154
        %v1156 = vpop.f32.mrf.mxu0
        %v1157 = vadd.f32 %v988, %v1156
        %1158 = vmatmul.bf16.gmra.mxu0 %v707
        %v1159 = vpop.f32.mrf.mxu0
        %v1160 = vadd.f32 %v991, %v1159
        %v1161 = vpop.f32.mrf.mxu0
        %v1162 = vadd.f32 %v993, %v1161
        %1163 = vmatmul.bf16.gmra.mxu0 %v709
        %v1164 = vpop.f32.mrf.mxu0
        %v1165 = vadd.f32 %v996, %v1164
        %v1166 = vpop.f32.mrf.mxu0
        %v1167 = vadd.f32 %v998, %v1166
        %1168 = vmatmul.bf16.gmra.mxu0 %v711
        %v1169 = vpop.f32.mrf.mxu0
        %v1170 = vadd.f32 %v1001, %v1169
        %v1171 = vpop.f32.mrf.mxu0
        %v1172 = vadd.f32 %v1003, %v1171
        %1173 = vmatmul.bf16.gmra.mxu0 %v713
        %v1174 = vpop.f32.mrf.mxu0
        %v1175 = vadd.f32 %v1006, %v1174
        %v1176 = vpop.f32.mrf.mxu0
        %v1177 = vadd.f32 %v1008, %v1176
        %1178 = vmatmul.bf16.gmra.mxu0 %v715
        %v1179 = vpop.f32.mrf.mxu0
        %v1180 = vadd.f32 %v1011, %v1179
        %v1181 = vpop.f32.mrf.mxu0
        %v1182 = vadd.f32 %v1013, %v1181
        %1183 = vmatmul.bf16.gmra.mxu0 %v717
        %v1184 = vpop.f32.mrf.mxu0
        %v1185 = vadd.f32 %v1016, %v1184
        %v1186 = vpop.f32.mrf.mxu0
        %v1187 = vadd.f32 %v1018, %v1186
        %1188 = vmatmul.bf16.gmra.mxu0 %v719
        %v1189 = vpop.f32.mrf.mxu0
        %v1190 = vadd.f32 %v1021, %v1189
        %v1191 = vpop.f32.mrf.mxu0
        %v1192 = vadd.f32 %v1023, %v1191
        %1193 = vmatmul.bf16.gmra.mxu0 %v721
        %v1194 = vpop.f32.mrf.mxu0
        %v1195 = vadd.f32 %v1026, %v1194
        %v1196 = vpop.f32.mrf.mxu0
        %v1197 = vadd.f32 %v1028, %v1196
        %1198 = vmatmul.bf16.gmra.mxu0 %v723
        %v1199 = vpop.f32.mrf.mxu0
        %v1200 = vadd.f32 %v1031, %v1199
        %v1201 = vpop.f32.mrf.mxu0
        %v1202 = vadd.f32 %v1033, %v1201
        %1203 = vmatmul.bf16.gmra.mxu0 %v725
        %v1204 = vpop.f32.mrf.mxu0
        %v1205 = vadd.f32 %v1036, %v1204
        %v1206 = vpop.f32.mrf.mxu0
        %v1207 = vadd.f32 %v1038, %v1206
        %1208 = vmatmul.bf16.gmra.mxu0 %v727
        %v1209 = vpop.f32.mrf.mxu0
        %v1210 = vadd.f32 %v1041, %v1209
        %v1211 = vpop.f32.mrf.mxu0
        %v1212 = vadd.f32 %v1043, %v1211
        %1213 = vmatmul.bf16.gmra.mxu0 %v729
        %v1214 = vpop.f32.mrf.mxu0
        %v1215 = vadd.f32 %v1046, %v1214
        %v1216 = vpop.f32.mrf.mxu0
        %v1217 = vadd.f32 %v1048, %v1216
        %1218 = vmatmul.bf16.gmra.mxu0 %v731
        %v1219 = vpop.f32.mrf.mxu0
        %v1220 = vadd.f32 %v1051, %v1219
        %v1221 = vpop.f32.mrf.mxu0
        %v1222 = vadd.f32 %v1053, %v1221
        %1223 = vmatmul.bf16.gmra.mxu0 %v733
        %v1224 = vpop.f32.mrf.mxu0
        %v1225 = vadd.f32 %v1056, %v1224
        %v1226 = vpop.f32.mrf.mxu0
        %v1227 = vadd.f32 %v1058, %v1226
        %1228 = vmatmul.bf16.gmra.mxu0 %v735
        %v1229 = vpop.f32.mrf.mxu0
        %v1230 = vadd.f32 %v1061, %v1229
        %v1231 = vpop.f32.mrf.mxu0
        %v1232 = vadd.f32 %v1063, %v1231
        %1233 = vdwg.mxu0
        %v1234 = vld [vmem:[%s2] sm:$0x1]
        %v1236 = vperm.slane %v1234, 0
        %v1238 = vmul.f32 %v1075, %v1236
        %v1239 = vmul.f32 %v1077, %v1236
        %v1240 = vmul.f32 %v1080, %v1236
        %v1241 = vmul.f32 %v1082, %v1236
        %v1242 = vmul.f32 %v1085, %v1236
        %v1243 = vmul.f32 %v1087, %v1236
        %v1244 = vmul.f32 %v1090, %v1236
        %v1245 = vmul.f32 %v1092, %v1236
        %v1246 = vmul.f32 %v1095, %v1236
        %v1247 = vmul.f32 %v1097, %v1236
        %v1248 = vmul.f32 %v1100, %v1236
        %v1249 = vmul.f32 %v1102, %v1236
        %v1250 = vmul.f32 %v1105, %v1236
        %v1251 = vmul.f32 %v1107, %v1236
        %v1252 = vmul.f32 %v1110, %v1236
        %v1253 = vmul.f32 %v1112, %v1236
        %v1254 = vmul.f32 %v1115, %v1236
        %v1255 = vmul.f32 %v1117, %v1236
        %v1256 = vmul.f32 %v1120, %v1236
        %v1257 = vmul.f32 %v1122, %v1236
        %v1258 = vmul.f32 %v1125, %v1236
        %v1259 = vmul.f32 %v1127, %v1236
        %v1260 = vmul.f32 %v1130, %v1236
        %v1261 = vmul.f32 %v1132, %v1236
        %v1262 = vmul.f32 %v1135, %v1236
        %v1263 = vmul.f32 %v1137, %v1236
        %v1264 = vmul.f32 %v1140, %v1236
        %v1265 = vmul.f32 %v1142, %v1236
        %v1266 = vmul.f32 %v1145, %v1236
        %v1267 = vmul.f32 %v1147, %v1236
        %v1268 = vmul.f32 %v1150, %v1236
        %v1269 = vmul.f32 %v1152, %v1236
        %v1270 = vmul.f32 %v1155, %v1236
        %v1271 = vmul.f32 %v1157, %v1236
        %v1272 = vmul.f32 %v1160, %v1236
        %v1273 = vmul.f32 %v1162, %v1236
        %v1274 = vmul.f32 %v1165, %v1236
        %v1275 = vmul.f32 %v1167, %v1236
        %v1276 = vmul.f32 %v1170, %v1236
        %v1277 = vmul.f32 %v1172, %v1236
        %v1278 = vmul.f32 %v1175, %v1236
        %v1279 = vmul.f32 %v1177, %v1236
        %v1280 = vmul.f32 %v1180, %v1236
        %v1281 = vmul.f32 %v1182, %v1236
        %v1282 = vmul.f32 %v1185, %v1236
        %v1283 = vmul.f32 %v1187, %v1236
        %v1284 = vmul.f32 %v1190, %v1236
        %v1285 = vmul.f32 %v1192, %v1236
        %v1286 = vmul.f32 %v1195, %v1236
        %v1287 = vmul.f32 %v1197, %v1236
        %v1288 = vmul.f32 %v1200, %v1236
        %v1289 = vmul.f32 %v1202, %v1236
        %v1290 = vmul.f32 %v1205, %v1236
        %v1291 = vmul.f32 %v1207, %v1236
        %v1292 = vmul.f32 %v1210, %v1236
        %v1293 = vmul.f32 %v1212, %v1236
        %v1294 = vmul.f32 %v1215, %v1236
        %v1295 = vmul.f32 %v1217, %v1236
        %v1296 = vmul.f32 %v1220, %v1236
        %v1297 = vmul.f32 %v1222, %v1236
        %v1298 = vmul.f32 %v1225, %v1236
        %v1299 = vmul.f32 %v1227, %v1236
        %v1300 = vmul.f32 %v1230, %v1236
        %v1301 = vmul.f32 %v1232, %v1236
        %v1302 = vld [vmem:[%s3] sm:$0x1]
        %v1304 = vperm.slane %v1302, 0
        %v1306 = vadd.f32 %v1238, %v1304
        %v1307 = vadd.f32 %v1239, %v1304
        %v1308 = vadd.f32 %v1240, %v1304
        %v1309 = vadd.f32 %v1241, %v1304
        %v1310 = vadd.f32 %v1242, %v1304
        %v1311 = vadd.f32 %v1243, %v1304
        %v1312 = vadd.f32 %v1244, %v1304
        %v1313 = vadd.f32 %v1245, %v1304
        %v1314 = vadd.f32 %v1246, %v1304
        %v1315 = vadd.f32 %v1247, %v1304
        %v1316 = vadd.f32 %v1248, %v1304
        %v1317 = vadd.f32 %v1249, %v1304
        %v1318 = vadd.f32 %v1250, %v1304
        %v1319 = vadd.f32 %v1251, %v1304
        %v1320 = vadd.f32 %v1252, %v1304
        %v1321 = vadd.f32 %v1253, %v1304
        %v1322 = vadd.f32 %v1254, %v1304
        %v1323 = vadd.f32 %v1255, %v1304
        %v1324 = vadd.f32 %v1256, %v1304
        %v1325 = vadd.f32 %v1257, %v1304
        %v1326 = vadd.f32 %v1258, %v1304
        %v1327 = vadd.f32 %v1259, %v1304
        %v1328 = vadd.f32 %v1260, %v1304
        %v1329 = vadd.f32 %v1261, %v1304
        %v1330 = vadd.f32 %v1262, %v1304
        %v1331 = vadd.f32 %v1263, %v1304
        %v1332 = vadd.f32 %v1264, %v1304
        %v1333 = vadd.f32 %v1265, %v1304
        %v1334 = vadd.f32 %v1266, %v1304
        %v1335 = vadd.f32 %v1267, %v1304
        %v1336 = vadd.f32 %v1268, %v1304
        %v1337 = vadd.f32 %v1269, %v1304
        %v1338 = vadd.f32 %v1270, %v1304
        %v1339 = vadd.f32 %v1271, %v1304
        %v1340 = vadd.f32 %v1272, %v1304
        %v1341 = vadd.f32 %v1273, %v1304
        %v1342 = vadd.f32 %v1274, %v1304
        %v1343 = vadd.f32 %v1275, %v1304
        %v1344 = vadd.f32 %v1276, %v1304
        %v1345 = vadd.f32 %v1277, %v1304
        %v1346 = vadd.f32 %v1278, %v1304
        %v1347 = vadd.f32 %v1279, %v1304
        %v1348 = vadd.f32 %v1280, %v1304
        %v1349 = vadd.f32 %v1281, %v1304
        %v1350 = vadd.f32 %v1282, %v1304
        %v1351 = vadd.f32 %v1283, %v1304
        %v1352 = vadd.f32 %v1284, %v1304
        %v1353 = vadd.f32 %v1285, %v1304
        %v1354 = vadd.f32 %v1286, %v1304
        %v1355 = vadd.f32 %v1287, %v1304
        %v1356 = vadd.f32 %v1288, %v1304
        %v1357 = vadd.f32 %v1289, %v1304
        %v1358 = vadd.f32 %v1290, %v1304
        %v1359 = vadd.f32 %v1291, %v1304
        %v1360 = vadd.f32 %v1292, %v1304
        %v1361 = vadd.f32 %v1293, %v1304
        %v1362 = vadd.f32 %v1294, %v1304
        %v1363 = vadd.f32 %v1295, %v1304
        %v1364 = vadd.f32 %v1296, %v1304
        %v1365 = vadd.f32 %v1297, %v1304
        %v1366 = vadd.f32 %v1298, %v1304
        %v1367 = vadd.f32 %v1299, %v1304
        %v1368 = vadd.f32 %v1300, %v1304
        %v1369 = vadd.f32 %v1301, %v1304
        %v1370 = vmax.f32 %v1306, 0.0
        %v1371 = vmax.f32 %v1307, 0.0
        %v1372 = vmax.f32 %v1308, 0.0
        %v1373 = vmax.f32 %v1309, 0.0
        %v1374 = vmax.f32 %v1310, 0.0
        %v1375 = vmax.f32 %v1311, 0.0
        %v1376 = vmax.f32 %v1312, 0.0
        %v1377 = vmax.f32 %v1313, 0.0
        %v1378 = vmax.f32 %v1314, 0.0
        %v1379 = vmax.f32 %v1315, 0.0
        %v1380 = vmax.f32 %v1316, 0.0
        %v1381 = vmax.f32 %v1317, 0.0
        %v1382 = vmax.f32 %v1318, 0.0
        %v1383 = vmax.f32 %v1319, 0.0
        %v1384 = vmax.f32 %v1320, 0.0
        %v1385 = vmax.f32 %v1321, 0.0
        %v1386 = vmax.f32 %v1322, 0.0
        %v1387 = vmax.f32 %v1323, 0.0
        %v1388 = vmax.f32 %v1324, 0.0
        %v1389 = vmax.f32 %v1325, 0.0
        %v1390 = vmax.f32 %v1326, 0.0
        %v1391 = vmax.f32 %v1327, 0.0
        %v1392 = vmax.f32 %v1328, 0.0
        %v1393 = vmax.f32 %v1329, 0.0
        %v1394 = vmax.f32 %v1330, 0.0
        %v1395 = vmax.f32 %v1331, 0.0
        %v1396 = vmax.f32 %v1332, 0.0
        %v1397 = vmax.f32 %v1333, 0.0
        %v1398 = vmax.f32 %v1334, 0.0
        %v1399 = vmax.f32 %v1335, 0.0
        %v1400 = vmax.f32 %v1336, 0.0
        %v1401 = vmax.f32 %v1337, 0.0
        %v1402 = vmax.f32 %v1338, 0.0
        %v1403 = vmax.f32 %v1339, 0.0
        %v1404 = vmax.f32 %v1340, 0.0
        %v1405 = vmax.f32 %v1341, 0.0
        %v1406 = vmax.f32 %v1342, 0.0
        %v1407 = vmax.f32 %v1343, 0.0
        %v1408 = vmax.f32 %v1344, 0.0
        %v1409 = vmax.f32 %v1345, 0.0
        %v1410 = vmax.f32 %v1346, 0.0
        %v1411 = vmax.f32 %v1347, 0.0
        %v1412 = vmax.f32 %v1348, 0.0
        %v1413 = vmax.f32 %v1349, 0.0
        %v1414 = vmax.f32 %v1350, 0.0
        %v1415 = vmax.f32 %v1351, 0.0
        %v1416 = vmax.f32 %v1352, 0.0
        %v1417 = vmax.f32 %v1353, 0.0
        %v1418 = vmax.f32 %v1354, 0.0
        %v1419 = vmax.f32 %v1355, 0.0
        %v1420 = vmax.f32 %v1356, 0.0
        %v1421 = vmax.f32 %v1357, 0.0
        %v1422 = vmax.f32 %v1358, 0.0
        %v1423 = vmax.f32 %v1359, 0.0
        %v1424 = vmax.f32 %v1360, 0.0
        %v1425 = vmax.f32 %v1361, 0.0
        %v1426 = vmax.f32 %v1362, 0.0
        %v1427 = vmax.f32 %v1363, 0.0
        %v1428 = vmax.f32 %v1364, 0.0
        %v1429 = vmax.f32 %v1365, 0.0
        %v1430 = vmax.f32 %v1366, 0.0
        %v1431 = vmax.f32 %v1367, 0.0
        %v1432 = vmax.f32 %v1368, 0.0
        %v1433 = vmax.f32 %v1369, 0.0
        %vm1434 = vcmask 519168
        %1435 = vst.msk [vmem:[#allocation2] sm:$0xf] %vm1434, 0
        %1436 = vst.msk [vmem:[#allocation2 + $0x4] sm:$0xf] %vm1434, 0
        %vm1437 = vcmask 516096
        %1438 = vst.msk [vmem:[#allocation2 + $0x8] sm:$0x1] %vm1437, 0
        %1439 = vst.msk [vmem:[#allocation2 + $0xd8] sm:$0xf] %vm1434, 0
        %1440 = vst.msk [vmem:[#allocation2 + $0xdc] sm:$0xf] %vm1434, 0
        %1441 = vst.msk [vmem:[#allocation2 + $0xe0] sm:$0x1] %vm1437, 0
        %s1442 = scalar_lea.vmem [#allocation2], 204
        %1443 = vst.msk [vmem:[%s1442] sm:$0xf] %vm1434, 0
        %1444 = vst.msk [vmem:[%s1442 + $0x4] sm:$0xf] %vm1434, 0
        %1445 = vst.msk [vmem:[%s1442 + $0x8] sm:$0x1] %vm1437, 0
        %1446 = vst.msk [vmem:[%s1442 + $0xd8] sm:$0xf] %vm1434, 0
        %1447 = vst.msk [vmem:[%s1442 + $0xdc] sm:$0xf] %vm1434, 0
        %1448 = vst.msk [vmem:[%s1442 + $0xe0] sm:$0x1] %vm1437, 0
        %s1449 = scalar_lea.vmem [#allocation2], 12
        %vm1450 = vcmask 516096
        %vm1451 = vsmask.f32 256
        %vm1452 = vmand %vm1450, %vm1451
        %v1453 = vld [vmem:[%s1449] sm:$0x1]
        %v1454 = vsel %vm1452, 0, %v1453
        %1455 = vst [vmem:[%s1449] sm:$0x1] %v1454
        %v1456 = vld [vmem:[%s1449 + $0xc] sm:$0x1]
        %v1457 = vsel %vm1452, 0, %v1456
        %1458 = vst [vmem:[%s1449 + $0xc] sm:$0x1] %v1457
        %v1459 = vld [vmem:[%s1449 + $0x18] sm:$0x1]
        %v1460 = vsel %vm1452, 0, %v1459
        %1461 = vst [vmem:[%s1449 + $0x18] sm:$0x1] %v1460
        %v1462 = vld [vmem:[%s1449 + $0x24] sm:$0x1]
        %v1463 = vsel %vm1452, 0, %v1462
        %1464 = vst [vmem:[%s1449 + $0x24] sm:$0x1] %v1463
        %v1465 = vld [vmem:[%s1449 + $0x30] sm:$0x1]
        %v1466 = vsel %vm1452, 0, %v1465
        %1467 = vst [vmem:[%s1449 + $0x30] sm:$0x1] %v1466
        %v1468 = vld [vmem:[%s1449 + $0x3c] sm:$0x1]
        %v1469 = vsel %vm1452, 0, %v1468
        %1470 = vst [vmem:[%s1449 + $0x3c] sm:$0x1] %v1469
        %v1471 = vld [vmem:[%s1449 + $0x48] sm:$0x1]
        %v1472 = vsel %vm1452, 0, %v1471
        %1473 = vst [vmem:[%s1449 + $0x48] sm:$0x1] %v1472
        %v1474 = vld [vmem:[%s1449 + $0x54] sm:$0x1]
        %v1475 = vsel %vm1452, 0, %v1474
        %1476 = vst [vmem:[%s1449 + $0x54] sm:$0x1] %v1475
        %v1477 = vld [vmem:[%s1449 + $0x60] sm:$0x1]
        %v1478 = vsel %vm1452, 0, %v1477
        %1479 = vst [vmem:[%s1449 + $0x60] sm:$0x1] %v1478
        %v1480 = vld [vmem:[%s1449 + $0x6c] sm:$0x1]
        %v1481 = vsel %vm1452, 0, %v1480
        %1482 = vst [vmem:[%s1449 + $0x6c] sm:$0x1] %v1481
        %v1483 = vld [vmem:[%s1449 + $0x78] sm:$0x1]
        %v1484 = vsel %vm1452, 0, %v1483
        %1485 = vst [vmem:[%s1449 + $0x78] sm:$0x1] %v1484
        %v1486 = vld [vmem:[%s1449 + $0x84] sm:$0x1]
        %v1487 = vsel %vm1452, 0, %v1486
        %1488 = vst [vmem:[%s1449 + $0x84] sm:$0x1] %v1487
        %v1489 = vld [vmem:[%s1449 + $0x90] sm:$0x1]
        %v1490 = vsel %vm1452, 0, %v1489
        %1491 = vst [vmem:[%s1449 + $0x90] sm:$0x1] %v1490
        %v1492 = vld [vmem:[%s1449 + $0x9c] sm:$0x1]
        %v1493 = vsel %vm1452, 0, %v1492
        %1494 = vst [vmem:[%s1449 + $0x9c] sm:$0x1] %v1493
        %v1495 = vld [vmem:[%s1449 + $0xa8] sm:$0x1]
        %v1496 = vsel %vm1452, 0, %v1495
        %1497 = vst [vmem:[%s1449 + $0xa8] sm:$0x1] %v1496
        %v1498 = vld [vmem:[%s1449 + $0xb4] sm:$0x1]
        %v1499 = vsel %vm1452, 0, %v1498
        %1500 = vst [vmem:[%s1449 + $0xb4] sm:$0x1] %v1499
        %v1501 = vld [vmem:[%s1449 + $0xd8] sm:$0x1]
        %v1502 = vsel %vm1452, 0, %v1501
        %1503 = vst [vmem:[%s1449 + $0xd8] sm:$0x1] %v1502
        %v1504 = vld [vmem:[%s1449 + $0xe4] sm:$0x1]
        %v1505 = vsel %vm1452, 0, %v1504
        %1506 = vst [vmem:[%s1449 + $0xe4] sm:$0x1] %v1505
        %v1507 = vld [vmem:[%s1449 + $0xf0] sm:$0x1]
        %v1508 = vsel %vm1452, 0, %v1507
        %1509 = vst [vmem:[%s1449 + $0xf0] sm:$0x1] %v1508
        %v1510 = vld [vmem:[%s1449 + $0xfc] sm:$0x1]
        %v1511 = vsel %vm1452, 0, %v1510
        %1512 = vst [vmem:[%s1449 + $0xfc] sm:$0x1] %v1511
        %v1513 = vld [vmem:[%s1449 + $0x108] sm:$0x1]
        %v1514 = vsel %vm1452, 0, %v1513
        %1515 = vst [vmem:[%s1449 + $0x108] sm:$0x1] %v1514
        %v1516 = vld [vmem:[%s1449 + $0x114] sm:$0x1]
        %v1517 = vsel %vm1452, 0, %v1516
        %1518 = vst [vmem:[%s1449 + $0x114] sm:$0x1] %v1517
        %v1519 = vld [vmem:[%s1449 + $0x120] sm:$0x1]
        %v1520 = vsel %vm1452, 0, %v1519
        %1521 = vst [vmem:[%s1449 + $0x120] sm:$0x1] %v1520
        %v1522 = vld [vmem:[%s1449 + $0x12c] sm:$0x1]
        %v1523 = vsel %vm1452, 0, %v1522
        %1524 = vst [vmem:[%s1449 + $0x12c] sm:$0x1] %v1523
        %v1525 = vld [vmem:[%s1449 + $0x138] sm:$0x1]
        %v1526 = vsel %vm1452, 0, %v1525
        %1527 = vst [vmem:[%s1449 + $0x138] sm:$0x1] %v1526
        %v1528 = vld [vmem:[%s1449 + $0x144] sm:$0x1]
        %v1529 = vsel %vm1452, 0, %v1528
        %1530 = vst [vmem:[%s1449 + $0x144] sm:$0x1] %v1529
        %v1531 = vld [vmem:[%s1449 + $0x150] sm:$0x1]
        %v1532 = vsel %vm1452, 0, %v1531
        %1533 = vst [vmem:[%s1449 + $0x150] sm:$0x1] %v1532
        %v1534 = vld [vmem:[%s1449 + $0x15c] sm:$0x1]
        %v1535 = vsel %vm1452, 0, %v1534
        %1536 = vst [vmem:[%s1449 + $0x15c] sm:$0x1] %v1535
        %v1537 = vld [vmem:[%s1449 + $0x168] sm:$0x1]
        %v1538 = vsel %vm1452, 0, %v1537
        %1539 = vst [vmem:[%s1449 + $0x168] sm:$0x1] %v1538
        %v1540 = vld [vmem:[%s1449 + $0x174] sm:$0x1]
        %v1541 = vsel %vm1452, 0, %v1540
        %1542 = vst [vmem:[%s1449 + $0x174] sm:$0x1] %v1541
        %v1543 = vld [vmem:[%s1449 + $0x180] sm:$0x1]
        %v1544 = vsel %vm1452, 0, %v1543
        %1545 = vst [vmem:[%s1449 + $0x180] sm:$0x1] %v1544
        %v1546 = vld [vmem:[%s1449 + $0x18c] sm:$0x1]
        %v1547 = vsel %vm1452, 0, %v1546
        %1548 = vst [vmem:[%s1449 + $0x18c] sm:$0x1] %v1547
        %vm1549 = vsmask.f32 7938
        %vm1550 = vmand %vm1450, %vm1549
        %v1551 = vld [vmem:[%s1449 + $0x8] sm:$0x1]
        %v1552 = vsel %vm1550, 0, %v1551
        %1553 = vst [vmem:[%s1449 + $0x8] sm:$0x1] %v1552
        %v1554 = vld [vmem:[%s1449 + $0x14] sm:$0x1]
        %v1555 = vsel %vm1550, 0, %v1554
        %1556 = vst [vmem:[%s1449 + $0x14] sm:$0x1] %v1555
        %v1557 = vld [vmem:[%s1449 + $0x20] sm:$0x1]
        %v1558 = vsel %vm1550, 0, %v1557
        %1559 = vst [vmem:[%s1449 + $0x20] sm:$0x1] %v1558
        %v1560 = vld [vmem:[%s1449 + $0x2c] sm:$0x1]
        %v1561 = vsel %vm1550, 0, %v1560
        %1562 = vst [vmem:[%s1449 + $0x2c] sm:$0x1] %v1561
        %v1563 = vld [vmem:[%s1449 + $0x38] sm:$0x1]
        %v1564 = vsel %vm1550, 0, %v1563
        %1565 = vst [vmem:[%s1449 + $0x38] sm:$0x1] %v1564
        %v1566 = vld [vmem:[%s1449 + $0x44] sm:$0x1]
        %v1567 = vsel %vm1550, 0, %v1566
        %1568 = vst [vmem:[%s1449 + $0x44] sm:$0x1] %v1567
        %v1569 = vld [vmem:[%s1449 + $0x50] sm:$0x1]
        %v1570 = vsel %vm1550, 0, %v1569
        %1571 = vst [vmem:[%s1449 + $0x50] sm:$0x1] %v1570
        %v1572 = vld [vmem:[%s1449 + $0x5c] sm:$0x1]
        %v1573 = vsel %vm1550, 0, %v1572
        %1574 = vst [vmem:[%s1449 + $0x5c] sm:$0x1] %v1573
        %v1575 = vld [vmem:[%s1449 + $0x68] sm:$0x1]
        %v1576 = vsel %vm1550, 0, %v1575
        %1577 = vst [vmem:[%s1449 + $0x68] sm:$0x1] %v1576
        %v1578 = vld [vmem:[%s1449 + $0x74] sm:$0x1]
        %v1579 = vsel %vm1550, 0, %v1578
        %1580 = vst [vmem:[%s1449 + $0x74] sm:$0x1] %v1579
        %v1581 = vld [vmem:[%s1449 + $0x80] sm:$0x1]
        %v1582 = vsel %vm1550, 0, %v1581
        %1583 = vst [vmem:[%s1449 + $0x80] sm:$0x1] %v1582
        %v1584 = vld [vmem:[%s1449 + $0x8c] sm:$0x1]
        %v1585 = vsel %vm1550, 0, %v1584
        %1586 = vst [vmem:[%s1449 + $0x8c] sm:$0x1] %v1585
        %v1587 = vld [vmem:[%s1449 + $0x98] sm:$0x1]
        %v1588 = vsel %vm1550, 0, %v1587
        %1589 = vst [vmem:[%s1449 + $0x98] sm:$0x1] %v1588
        %v1590 = vld [vmem:[%s1449 + $0xa4] sm:$0x1]
        %v1591 = vsel %vm1550, 0, %v1590
        %1592 = vst [vmem:[%s1449 + $0xa4] sm:$0x1] %v1591
        %v1593 = vld [vmem:[%s1449 + $0xb0] sm:$0x1]
        %v1594 = vsel %vm1550, 0, %v1593
        %1595 = vst [vmem:[%s1449 + $0xb0] sm:$0x1] %v1594
        %v1596 = vld [vmem:[%s1449 + $0xbc] sm:$0x1]
        %v1597 = vsel %vm1550, 0, %v1596
        %1598 = vst [vmem:[%s1449 + $0xbc] sm:$0x1] %v1597
        %v1599 = vld [vmem:[%s1449 + $0xe0] sm:$0x1]
        %v1600 = vsel %vm1550, 0, %v1599
        %1601 = vst [vmem:[%s1449 + $0xe0] sm:$0x1] %v1600
        %v1602 = vld [vmem:[%s1449 + $0xec] sm:$0x1]
        %v1603 = vsel %vm1550, 0, %v1602
        %1604 = vst [vmem:[%s1449 + $0xec] sm:$0x1] %v1603
        %v1605 = vld [vmem:[%s1449 + $0xf8] sm:$0x1]
        %v1606 = vsel %vm1550, 0, %v1605
        %1607 = vst [vmem:[%s1449 + $0xf8] sm:$0x1] %v1606
        %v1608 = vld [vmem:[%s1449 + $0x104] sm:$0x1]
        %v1609 = vsel %vm1550, 0, %v1608
        %1610 = vst [vmem:[%s1449 + $0x104] sm:$0x1] %v1609
        %v1611 = vld [vmem:[%s1449 + $0x110] sm:$0x1]
        %v1612 = vsel %vm1550, 0, %v1611
        %1613 = vst [vmem:[%s1449 + $0x110] sm:$0x1] %v1612
        %v1614 = vld [vmem:[%s1449 + $0x11c] sm:$0x1]
        %v1615 = vsel %vm1550, 0, %v1614
        %1616 = vst [vmem:[%s1449 + $0x11c] sm:$0x1] %v1615
        %v1617 = vld [vmem:[%s1449 + $0x128] sm:$0x1]
        %v1618 = vsel %vm1550, 0, %v1617
        %1619 = vst [vmem:[%s1449 + $0x128] sm:$0x1] %v1618
        %v1620 = vld [vmem:[%s1449 + $0x134] sm:$0x1]
        %v1621 = vsel %vm1550, 0, %v1620
        %1622 = vst [vmem:[%s1449 + $0x134] sm:$0x1] %v1621
        %v1623 = vld [vmem:[%s1449 + $0x140] sm:$0x1]
        %v1624 = vsel %vm1550, 0, %v1623
        %1625 = vst [vmem:[%s1449 + $0x140] sm:$0x1] %v1624
        %v1626 = vld [vmem:[%s1449 + $0x14c] sm:$0x1]
        %v1627 = vsel %vm1550, 0, %v1626
        %1628 = vst [vmem:[%s1449 + $0x14c] sm:$0x1] %v1627
        %v1629 = vld [vmem:[%s1449 + $0x158] sm:$0x1]
        %v1630 = vsel %vm1550, 0, %v1629
        %1631 = vst [vmem:[%s1449 + $0x158] sm:$0x1] %v1630
        %v1632 = vld [vmem:[%s1449 + $0x164] sm:$0x1]
        %v1633 = vsel %vm1550, 0, %v1632
        %1634 = vst [vmem:[%s1449 + $0x164] sm:$0x1] %v1633
        %v1635 = vld [vmem:[%s1449 + $0x170] sm:$0x1]
        %v1636 = vsel %vm1550, 0, %v1635
        %1637 = vst [vmem:[%s1449 + $0x170] sm:$0x1] %v1636
        %v1638 = vld [vmem:[%s1449 + $0x17c] sm:$0x1]
        %v1639 = vsel %vm1550, 0, %v1638
        %1640 = vst [vmem:[%s1449 + $0x17c] sm:$0x1] %v1639
        %v1641 = vld [vmem:[%s1449 + $0x188] sm:$0x1]
        %v1642 = vsel %vm1550, 0, %v1641
        %1643 = vst [vmem:[%s1449 + $0x188] sm:$0x1] %v1642
        %v1644 = vld [vmem:[%s1449 + $0x194] sm:$0x1]
        %v1645 = vsel %vm1550, 0, %v1644
        %1646 = vst [vmem:[%s1449 + $0x194] sm:$0x1] %v1645
        %v1647 = vpack.c.bf16 %v1370, %v1370
        %v1648 = vpack.c.bf16 %v1371, %v1371
        %v1649 = vpack.c.bf16 %v1372, %v1372
        %v1650 = vpack.c.bf16 %v1373, %v1373
        %v1651 = vpack.c.bf16 %v1374, %v1374
        %v1652 = vpack.c.bf16 %v1375, %v1375
        %v1653 = vpack.c.bf16 %v1376, %v1376
        %v1654 = vpack.c.bf16 %v1377, %v1377
        %v1655 = vpack.c.bf16 %v1378, %v1378
        %v1656 = vpack.c.bf16 %v1379, %v1379
        %v1657 = vpack.c.bf16 %v1380, %v1380
        %v1658 = vpack.c.bf16 %v1381, %v1381
        %v1659 = vpack.c.bf16 %v1382, %v1382
        %v1660 = vpack.c.bf16 %v1383, %v1383
        %v1661 = vpack.c.bf16 %v1384, %v1384
        %v1662 = vpack.c.bf16 %v1385, %v1385
        %v1663 = vpack.c.bf16 %v1386, %v1386
        %v1664 = vpack.c.bf16 %v1387, %v1387
        %v1665 = vpack.c.bf16 %v1388, %v1388
        %v1666 = vpack.c.bf16 %v1389, %v1389
        %v1667 = vpack.c.bf16 %v1390, %v1390
        %v1668 = vpack.c.bf16 %v1391, %v1391
        %v1669 = vpack.c.bf16 %v1392, %v1392
        %v1670 = vpack.c.bf16 %v1393, %v1393
        %v1671 = vpack.c.bf16 %v1394, %v1394
        %v1672 = vpack.c.bf16 %v1395, %v1395
        %v1673 = vpack.c.bf16 %v1396, %v1396
        %v1674 = vpack.c.bf16 %v1397, %v1397
        %v1675 = vpack.c.bf16 %v1398, %v1398
        %v1676 = vpack.c.bf16 %v1399, %v1399
        %v1677 = vpack.c.bf16 %v1400, %v1400
        %v1678 = vpack.c.bf16 %v1401, %v1401
        %v1679 = vpack.c.bf16 %v1402, %v1402
        %v1680 = vpack.c.bf16 %v1403, %v1403
        %v1681 = vpack.c.bf16 %v1404, %v1404
        %v1682 = vpack.c.bf16 %v1405, %v1405
        %v1683 = vpack.c.bf16 %v1406, %v1406
        %v1684 = vpack.c.bf16 %v1407, %v1407
        %v1685 = vpack.c.bf16 %v1408, %v1408
        %v1686 = vpack.c.bf16 %v1409, %v1409
        %v1687 = vpack.c.bf16 %v1410, %v1410
        %v1688 = vpack.c.bf16 %v1411, %v1411
        %v1689 = vpack.c.bf16 %v1412, %v1412
        %v1690 = vpack.c.bf16 %v1413, %v1413
        %v1691 = vpack.c.bf16 %v1414, %v1414
        %v1692 = vpack.c.bf16 %v1415, %v1415
        %v1693 = vpack.c.bf16 %v1416, %v1416
        %v1694 = vpack.c.bf16 %v1417, %v1417
        %v1695 = vpack.c.bf16 %v1418, %v1418
        %v1696 = vpack.c.bf16 %v1419, %v1419
        %v1697 = vpack.c.bf16 %v1420, %v1420
        %v1698 = vpack.c.bf16 %v1421, %v1421
        %v1699 = vpack.c.bf16 %v1422, %v1422
        %v1700 = vpack.c.bf16 %v1423, %v1423
        %v1701 = vpack.c.bf16 %v1424, %v1424
        %v1702 = vpack.c.bf16 %v1425, %v1425
        %v1703 = vpack.c.bf16 %v1426, %v1426
        %v1704 = vpack.c.bf16 %v1427, %v1427
        %v1705 = vpack.c.bf16 %v1428, %v1428
        %v1706 = vpack.c.bf16 %v1429, %v1429
        %v1707 = vpack.c.bf16 %v1430, %v1430
        %v1708 = vpack.c.bf16 %v1431, %v1431
        %v1709 = vpack.c.bf16 %v1432, %v1432
        %v1710 = vpack.c.bf16 %v1433, %v1433
        %vm1711 = vsmask.f32 4368
        %vm1712 = vmor %vm1451, %vm1711
        %v1714 = vshrl.u32 %v1647, 16
        %v1716 = vrot.slane %v1714, 7
        %v1717 = vshll.u32 %v1647, 16
        %v1719 = vor.u32 %v1716, %v1717
        %v1720 = vrot.slane %v1716, 4
        %v1722 = vshrl.u32 %v1648, 16
        %v1724 = vrot.slane %v1722, 7
        %v1725 = vshll.u32 %v1648, 16
        %v1727 = vor.u32 %v1724, %v1725
        %v1728 = vsel %vm1712, %v1720, %v1727
        %v1729 = vrot.slane %v1724, 4
        %v1731 = vshrl.u32 %v1649, 16
        %v1733 = vrot.slane %v1731, 7
        %v1734 = vshll.u32 %v1649, 16
        %v1736 = vor.u32 %v1733, %v1734
        %v1737 = vrot.slane %v1733, 4
        %v1739 = vshrl.u32 %v1650, 16
        %v1741 = vrot.slane %v1739, 7
        %v1742 = vshll.u32 %v1650, 16
        %v1744 = vor.u32 %v1741, %v1742
        %v1745 = vsel %vm1712, %v1737, %v1744
        %v1746 = vrot.slane %v1741, 4
        %v1748 = vshrl.u32 %v1651, 16
        %v1750 = vrot.slane %v1748, 7
        %v1751 = vshll.u32 %v1651, 16
        %v1753 = vor.u32 %v1750, %v1751
        %v1754 = vrot.slane %v1750, 4
        %v1756 = vshrl.u32 %v1652, 16
        %v1758 = vrot.slane %v1756, 7
        %v1759 = vshll.u32 %v1652, 16
        %v1761 = vor.u32 %v1758, %v1759
        %v1762 = vsel %vm1712, %v1754, %v1761
        %v1763 = vrot.slane %v1758, 4
        %v1765 = vshrl.u32 %v1653, 16
        %v1767 = vrot.slane %v1765, 7
        %v1768 = vshll.u32 %v1653, 16
        %v1770 = vor.u32 %v1767, %v1768
        %v1771 = vrot.slane %v1767, 4
        %v1773 = vshrl.u32 %v1654, 16
        %v1775 = vrot.slane %v1773, 7
        %v1776 = vshll.u32 %v1654, 16
        %v1778 = vor.u32 %v1775, %v1776
        %v1779 = vsel %vm1712, %v1771, %v1778
        %v1780 = vrot.slane %v1775, 4
        %v1782 = vshrl.u32 %v1655, 16
        %v1784 = vrot.slane %v1782, 7
        %v1785 = vshll.u32 %v1655, 16
        %v1787 = vor.u32 %v1784, %v1785
        %v1788 = vrot.slane %v1784, 4
        %v1790 = vshrl.u32 %v1656, 16
        %v1792 = vrot.slane %v1790, 7
        %v1793 = vshll.u32 %v1656, 16
        %v1795 = vor.u32 %v1792, %v1793
        %v1796 = vsel %vm1712, %v1788, %v1795
        %v1797 = vrot.slane %v1792, 4
        %v1799 = vshrl.u32 %v1657, 16
        %v1801 = vrot.slane %v1799, 7
        %v1802 = vshll.u32 %v1657, 16
        %v1804 = vor.u32 %v1801, %v1802
        %v1805 = vrot.slane %v1801, 4
        %v1807 = vshrl.u32 %v1658, 16
        %v1809 = vrot.slane %v1807, 7
        %v1810 = vshll.u32 %v1658, 16
        %v1812 = vor.u32 %v1809, %v1810
        %v1813 = vsel %vm1712, %v1805, %v1812
        %v1814 = vrot.slane %v1809, 4
        %v1816 = vshrl.u32 %v1659, 16
        %v1818 = vrot.slane %v1816, 7
        %v1819 = vshll.u32 %v1659, 16
        %v1821 = vor.u32 %v1818, %v1819
        %v1822 = vrot.slane %v1818, 4
        %v1824 = vshrl.u32 %v1660, 16
        %v1826 = vrot.slane %v1824, 7
        %v1827 = vshll.u32 %v1660, 16
        %v1829 = vor.u32 %v1826, %v1827
        %v1830 = vsel %vm1712, %v1822, %v1829
        %v1831 = vrot.slane %v1826, 4
        %v1833 = vshrl.u32 %v1661, 16
        %v1835 = vrot.slane %v1833, 7
        %v1836 = vshll.u32 %v1661, 16
        %v1838 = vor.u32 %v1835, %v1836
        %v1839 = vrot.slane %v1835, 4
        %v1841 = vshrl.u32 %v1662, 16
        %v1843 = vrot.slane %v1841, 7
        %v1844 = vshll.u32 %v1662, 16
        %v1846 = vor.u32 %v1843, %v1844
        %v1847 = vsel %vm1712, %v1839, %v1846
        %v1848 = vrot.slane %v1843, 4
        %v1850 = vshrl.u32 %v1663, 16
        %v1852 = vrot.slane %v1850, 7
        %v1853 = vshll.u32 %v1663, 16
        %v1855 = vor.u32 %v1852, %v1853
        %v1856 = vrot.slane %v1852, 4
        %v1858 = vshrl.u32 %v1664, 16
        %v1860 = vrot.slane %v1858, 7
        %v1861 = vshll.u32 %v1664, 16
        %v1863 = vor.u32 %v1860, %v1861
        %v1864 = vsel %vm1712, %v1856, %v1863
        %v1865 = vrot.slane %v1860, 4
        %v1867 = vshrl.u32 %v1665, 16
        %v1869 = vrot.slane %v1867, 7
        %v1870 = vshll.u32 %v1665, 16
        %v1872 = vor.u32 %v1869, %v1870
        %v1873 = vrot.slane %v1869, 4
        %v1875 = vshrl.u32 %v1666, 16
        %v1877 = vrot.slane %v1875, 7
        %v1878 = vshll.u32 %v1666, 16
        %v1880 = vor.u32 %v1877, %v1878
        %v1881 = vsel %vm1712, %v1873, %v1880
        %v1882 = vrot.slane %v1877, 4
        %v1884 = vshrl.u32 %v1667, 16
        %v1886 = vrot.slane %v1884, 7
        %v1887 = vshll.u32 %v1667, 16
        %v1889 = vor.u32 %v1886, %v1887
        %v1890 = vrot.slane %v1886, 4
        %v1892 = vshrl.u32 %v1668, 16
        %v1894 = vrot.slane %v1892, 7
        %v1895 = vshll.u32 %v1668, 16
        %v1897 = vor.u32 %v1894, %v1895
        %v1898 = vsel %vm1712, %v1890, %v1897
        %v1899 = vrot.slane %v1894, 4
        %v1901 = vshrl.u32 %v1669, 16
        %v1903 = vrot.slane %v1901, 7
        %v1904 = vshll.u32 %v1669, 16
        %v1906 = vor.u32 %v1903, %v1904
        %v1907 = vrot.slane %v1903, 4
        %v1909 = vshrl.u32 %v1670, 16
        %v1911 = vrot.slane %v1909, 7
        %v1912 = vshll.u32 %v1670, 16
        %v1914 = vor.u32 %v1911, %v1912
        %v1915 = vsel %vm1712, %v1907, %v1914
        %v1916 = vrot.slane %v1911, 4
        %v1918 = vshrl.u32 %v1671, 16
        %v1920 = vrot.slane %v1918, 7
        %v1921 = vshll.u32 %v1671, 16
        %v1923 = vor.u32 %v1920, %v1921
        %v1924 = vrot.slane %v1920, 4
        %v1926 = vshrl.u32 %v1672, 16
        %v1928 = vrot.slane %v1926, 7
        %v1929 = vshll.u32 %v1672, 16
        %v1931 = vor.u32 %v1928, %v1929
        %v1932 = vsel %vm1712, %v1924, %v1931
        %v1933 = vrot.slane %v1928, 4
        %v1935 = vshrl.u32 %v1673, 16
        %v1937 = vrot.slane %v1935, 7
        %v1938 = vshll.u32 %v1673, 16
        %v1940 = vor.u32 %v1937, %v1938
        %v1941 = vrot.slane %v1937, 4
        %v1943 = vshrl.u32 %v1674, 16
        %v1945 = vrot.slane %v1943, 7
        %v1946 = vshll.u32 %v1674, 16
        %v1948 = vor.u32 %v1945, %v1946
        %v1949 = vsel %vm1712, %v1941, %v1948
        %v1950 = vrot.slane %v1945, 4
        %v1952 = vshrl.u32 %v1675, 16
        %v1954 = vrot.slane %v1952, 7
        %v1955 = vshll.u32 %v1675, 16
        %v1957 = vor.u32 %v1954, %v1955
        %v1958 = vrot.slane %v1954, 4
        %v1960 = vshrl.u32 %v1676, 16
        %v1962 = vrot.slane %v1960, 7
        %v1963 = vshll.u32 %v1676, 16
        %v1965 = vor.u32 %v1962, %v1963
        %v1966 = vsel %vm1712, %v1958, %v1965
        %v1967 = vrot.slane %v1962, 4
        %v1969 = vshrl.u32 %v1677, 16
        %v1971 = vrot.slane %v1969, 7
        %v1972 = vshll.u32 %v1677, 16
        %v1974 = vor.u32 %v1971, %v1972
        %v1975 = vrot.slane %v1971, 4
        %v1977 = vshrl.u32 %v1678, 16
        %v1979 = vrot.slane %v1977, 7
        %v1980 = vshll.u32 %v1678, 16
        %v1982 = vor.u32 %v1979, %v1980
        %v1983 = vsel %vm1712, %v1975, %v1982
        %v1984 = vrot.slane %v1979, 4
        %v1986 = vshrl.u32 %v1679, 16
        %v1988 = vrot.slane %v1986, 7
        %v1989 = vshll.u32 %v1679, 16
        %v1991 = vor.u32 %v1988, %v1989
        %v1992 = vrot.slane %v1988, 4
        %v1994 = vshrl.u32 %v1680, 16
        %v1996 = vrot.slane %v1994, 7
        %v1997 = vshll.u32 %v1680, 16
        %v1999 = vor.u32 %v1996, %v1997
        %v2000 = vsel %vm1712, %v1992, %v1999
        %v2001 = vrot.slane %v1996, 4
        %v2003 = vshrl.u32 %v1681, 16
        %v2005 = vrot.slane %v2003, 7
        %v2006 = vshll.u32 %v1681, 16
        %v2008 = vor.u32 %v2005, %v2006
        %v2009 = vrot.slane %v2005, 4
        %v2011 = vshrl.u32 %v1682, 16
        %v2013 = vrot.slane %v2011, 7
        %v2014 = vshll.u32 %v1682, 16
        %v2016 = vor.u32 %v2013, %v2014
        %v2017 = vsel %vm1712, %v2009, %v2016
        %v2018 = vrot.slane %v2013, 4
        %v2020 = vshrl.u32 %v1683, 16
        %v2022 = vrot.slane %v2020, 7
        %v2023 = vshll.u32 %v1683, 16
        %v2025 = vor.u32 %v2022, %v2023
        %v2026 = vrot.slane %v2022, 4
        %v2028 = vshrl.u32 %v1684, 16
        %v2030 = vrot.slane %v2028, 7
        %v2031 = vshll.u32 %v1684, 16
        %v2033 = vor.u32 %v2030, %v2031
        %v2034 = vsel %vm1712, %v2026, %v2033
        %v2035 = vrot.slane %v2030, 4
        %v2037 = vshrl.u32 %v1685, 16
        %v2039 = vrot.slane %v2037, 7
        %v2040 = vshll.u32 %v1685, 16
        %v2042 = vor.u32 %v2039, %v2040
        %v2043 = vrot.slane %v2039, 4
        %v2045 = vshrl.u32 %v1686, 16
        %v2047 = vrot.slane %v2045, 7
        %v2048 = vshll.u32 %v1686, 16
        %v2050 = vor.u32 %v2047, %v2048
        %v2051 = vsel %vm1712, %v2043, %v2050
        %v2052 = vrot.slane %v2047, 4
        %v2054 = vshrl.u32 %v1687, 16
        %v2056 = vrot.slane %v2054, 7
        %v2057 = vshll.u32 %v1687, 16
        %v2059 = vor.u32 %v2056, %v2057
        %v2060 = vrot.slane %v2056, 4
        %v2062 = vshrl.u32 %v1688, 16
        %v2064 = vrot.slane %v2062, 7
        %v2065 = vshll.u32 %v1688, 16
        %v2067 = vor.u32 %v2064, %v2065
        %v2068 = vsel %vm1712, %v2060, %v2067
        %v2069 = vrot.slane %v2064, 4
        %v2071 = vshrl.u32 %v1689, 16
        %v2073 = vrot.slane %v2071, 7
        %v2074 = vshll.u32 %v1689, 16
        %v2076 = vor.u32 %v2073, %v2074
        %v2077 = vrot.slane %v2073, 4
        %v2079 = vshrl.u32 %v1690, 16
        %v2081 = vrot.slane %v2079, 7
        %v2082 = vshll.u32 %v1690, 16
        %v2084 = vor.u32 %v2081, %v2082
        %v2085 = vsel %vm1712, %v2077, %v2084
        %v2086 = vrot.slane %v2081, 4
        %v2088 = vshrl.u32 %v1691, 16
        %v2090 = vrot.slane %v2088, 7
        %v2091 = vshll.u32 %v1691, 16
        %v2093 = vor.u32 %v2090, %v2091
        %v2094 = vrot.slane %v2090, 4
        %v2096 = vshrl.u32 %v1692, 16
        %v2098 = vrot.slane %v2096, 7
        %v2099 = vshll.u32 %v1692, 16
        %v2101 = vor.u32 %v2098, %v2099
        %v2102 = vsel %vm1712, %v2094, %v2101
        %v2103 = vrot.slane %v2098, 4
        %v2105 = vshrl.u32 %v1693, 16
        %v2107 = vrot.slane %v2105, 7
        %v2108 = vshll.u32 %v1693, 16
        %v2110 = vor.u32 %v2107, %v2108
        %v2111 = vrot.slane %v2107, 4
        %v2113 = vshrl.u32 %v1694, 16
        %v2115 = vrot.slane %v2113, 7
        %v2116 = vshll.u32 %v1694, 16
        %v2118 = vor.u32 %v2115, %v2116
        %v2119 = vsel %vm1712, %v2111, %v2118
        %v2120 = vrot.slane %v2115, 4
        %v2122 = vshrl.u32 %v1695, 16
        %v2124 = vrot.slane %v2122, 7
        %v2125 = vshll.u32 %v1695, 16
        %v2127 = vor.u32 %v2124, %v2125
        %v2128 = vrot.slane %v2124, 4
        %v2130 = vshrl.u32 %v1696, 16
        %v2132 = vrot.slane %v2130, 7
        %v2133 = vshll.u32 %v1696, 16
        %v2135 = vor.u32 %v2132, %v2133
        %v2136 = vsel %vm1712, %v2128, %v2135
        %v2137 = vrot.slane %v2132, 4
        %v2139 = vshrl.u32 %v1697, 16
        %v2141 = vrot.slane %v2139, 7
        %v2142 = vshll.u32 %v1697, 16
        %v2144 = vor.u32 %v2141, %v2142
        %v2145 = vrot.slane %v2141, 4
        %v2147 = vshrl.u32 %v1698, 16
        %v2149 = vrot.slane %v2147, 7
        %v2150 = vshll.u32 %v1698, 16
        %v2152 = vor.u32 %v2149, %v2150
        %v2153 = vsel %vm1712, %v2145, %v2152
        %v2154 = vrot.slane %v2149, 4
        %v2156 = vshrl.u32 %v1699, 16
        %v2158 = vrot.slane %v2156, 7
        %v2159 = vshll.u32 %v1699, 16
        %v2161 = vor.u32 %v2158, %v2159
        %v2162 = vrot.slane %v2158, 4
        %v2164 = vshrl.u32 %v1700, 16
        %v2166 = vrot.slane %v2164, 7
        %v2167 = vshll.u32 %v1700, 16
        %v2169 = vor.u32 %v2166, %v2167
        %v2170 = vsel %vm1712, %v2162, %v2169
        %v2171 = vrot.slane %v2166, 4
        %v2173 = vshrl.u32 %v1701, 16
        %v2175 = vrot.slane %v2173, 7
        %v2176 = vshll.u32 %v1701, 16
        %v2178 = vor.u32 %v2175, %v2176
        %v2179 = vrot.slane %v2175, 4
        %v2181 = vshrl.u32 %v1702, 16
        %v2183 = vrot.slane %v2181, 7
        %v2184 = vshll.u32 %v1702, 16
        %v2186 = vor.u32 %v2183, %v2184
        %v2187 = vsel %vm1712, %v2179, %v2186
        %v2188 = vrot.slane %v2183, 4
        %v2190 = vshrl.u32 %v1703, 16
        %v2192 = vrot.slane %v2190, 7
        %v2193 = vshll.u32 %v1703, 16
        %v2195 = vor.u32 %v2192, %v2193
        %v2196 = vrot.slane %v2192, 4
        %v2198 = vshrl.u32 %v1704, 16
        %v2200 = vrot.slane %v2198, 7
        %v2201 = vshll.u32 %v1704, 16
        %v2203 = vor.u32 %v2200, %v2201
        %v2204 = vsel %vm1712, %v2196, %v2203
        %v2205 = vrot.slane %v2200, 4
        %v2207 = vshrl.u32 %v1705, 16
        %v2209 = vrot.slane %v2207, 7
        %v2210 = vshll.u32 %v1705, 16
        %v2212 = vor.u32 %v2209, %v2210
        %v2213 = vrot.slane %v2209, 4
        %v2215 = vshrl.u32 %v1706, 16
        %v2217 = vrot.slane %v2215, 7
        %v2218 = vshll.u32 %v1706, 16
        %v2220 = vor.u32 %v2217, %v2218
        %v2221 = vsel %vm1712, %v2213, %v2220
        %v2222 = vrot.slane %v2217, 4
        %v2224 = vshrl.u32 %v1707, 16
        %v2226 = vrot.slane %v2224, 7
        %v2227 = vshll.u32 %v1707, 16
        %v2229 = vor.u32 %v2226, %v2227
        %v2230 = vrot.slane %v2226, 4
        %v2232 = vshrl.u32 %v1708, 16
        %v2234 = vrot.slane %v2232, 7
        %v2235 = vshll.u32 %v1708, 16
        %v2237 = vor.u32 %v2234, %v2235
        %v2238 = vsel %vm1712, %v2230, %v2237
        %v2239 = vrot.slane %v2234, 4
        %v2241 = vshrl.u32 %v1709, 16
        %v2243 = vrot.slane %v2241, 7
        %v2244 = vshll.u32 %v1709, 16
        %v2246 = vor.u32 %v2243, %v2244
        %v2247 = vrot.slane %v2243, 4
        %v2249 = vshrl.u32 %v1710, 16
        %v2251 = vrot.slane %v2249, 7
        %v2252 = vshll.u32 %v1710, 16
        %v2254 = vor.u32 %v2251, %v2252
        %v2255 = vsel %vm1712, %v2247, %v2254
        %v2256 = vrot.slane %v2251, 4
        %vm2353 = vcmask 519168
        %vm2354 = vmand %vm2353, %vm1549
        %v2355 = vld [vmem:[%s1449] sm:$0xf]
        %v2356 = vsel %vm2354, %v1719, %v2355
        %2357 = vst [vmem:[%s1449] sm:$0xf] %v2356
        %2358 = vst.msk [vmem:[%s1449 + $0x4] sm:$0xf] %vm1434, %v1728
        %v2359 = vld [vmem:[%s1449 + $0x8] sm:$0x1]
        %v2360 = vsel %vm1452, %v1729, %v2359
        %2361 = vst [vmem:[%s1449 + $0x8] sm:$0x1] %v2360
        %v2362 = vld [vmem:[%s1449 + $0xc] sm:$0xf]
        %v2363 = vsel %vm2354, %v1736, %v2362
        %2364 = vst [vmem:[%s1449 + $0xc] sm:$0xf] %v2363
        %2365 = vst.msk [vmem:[%s1449 + $0x10] sm:$0xf] %vm1434, %v1745
        %v2366 = vld [vmem:[%s1449 + $0x14] sm:$0x1]
        %v2367 = vsel %vm1452, %v1746, %v2366
        %2368 = vst [vmem:[%s1449 + $0x14] sm:$0x1] %v2367
        %v2369 = vld [vmem:[%s1449 + $0x18] sm:$0xf]
        %v2370 = vsel %vm2354, %v1753, %v2369
        %2371 = vst [vmem:[%s1449 + $0x18] sm:$0xf] %v2370
        %2372 = vst.msk [vmem:[%s1449 + $0x1c] sm:$0xf] %vm1434, %v1762
        %v2373 = vld [vmem:[%s1449 + $0x20] sm:$0x1]
        %v2374 = vsel %vm1452, %v1763, %v2373
        %2375 = vst [vmem:[%s1449 + $0x20] sm:$0x1] %v2374
        %v2376 = vld [vmem:[%s1449 + $0x24] sm:$0xf]
        %v2377 = vsel %vm2354, %v1770, %v2376
        %2378 = vst [vmem:[%s1449 + $0x24] sm:$0xf] %v2377
        %2379 = vst.msk [vmem:[%s1449 + $0x28] sm:$0xf] %vm1434, %v1779
        %v2380 = vld [vmem:[%s1449 + $0x2c] sm:$0x1]
        %v2381 = vsel %vm1452, %v1780, %v2380
        %2382 = vst [vmem:[%s1449 + $0x2c] sm:$0x1] %v2381
        %v2383 = vld [vmem:[%s1449 + $0x30] sm:$0xf]
        %v2384 = vsel %vm2354, %v1787, %v2383
        %2385 = vst [vmem:[%s1449 + $0x30] sm:$0xf] %v2384
        %2386 = vst.msk [vmem:[%s1449 + $0x34] sm:$0xf] %vm1434, %v1796
        %v2387 = vld [vmem:[%s1449 + $0x38] sm:$0x1]
        %v2388 = vsel %vm1452, %v1797, %v2387
        %2389 = vst [vmem:[%s1449 + $0x38] sm:$0x1] %v2388
        %v2390 = vld [vmem:[%s1449 + $0x3c] sm:$0xf]
        %v2391 = vsel %vm2354, %v1804, %v2390
        %2392 = vst [vmem:[%s1449 + $0x3c] sm:$0xf] %v2391
        %2393 = vst.msk [vmem:[%s1449 + $0x40] sm:$0xf] %vm1434, %v1813
        %v2394 = vld [vmem:[%s1449 + $0x44] sm:$0x1]
        %v2395 = vsel %vm1452, %v1814, %v2394
        %2396 = vst [vmem:[%s1449 + $0x44] sm:$0x1] %v2395
        %v2397 = vld [vmem:[%s1449 + $0x48] sm:$0xf]
        %v2398 = vsel %vm2354, %v1821, %v2397
        %2399 = vst [vmem:[%s1449 + $0x48] sm:$0xf] %v2398
        %2400 = vst.msk [vmem:[%s1449 + $0x4c] sm:$0xf] %vm1434, %v1830
        %v2401 = vld [vmem:[%s1449 + $0x50] sm:$0x1]
        %v2402 = vsel %vm1452, %v1831, %v2401
        %2403 = vst [vmem:[%s1449 + $0x50] sm:$0x1] %v2402
        %v2404 = vld [vmem:[%s1449 + $0x54] sm:$0xf]
        %v2405 = vsel %vm2354, %v1838, %v2404
        %2406 = vst [vmem:[%s1449 + $0x54] sm:$0xf] %v2405
        %2407 = vst.msk [vmem:[%s1449 + $0x58] sm:$0xf] %vm1434, %v1847
        %v2408 = vld [vmem:[%s1449 + $0x5c] sm:$0x1]
        %v2409 = vsel %vm1452, %v1848, %v2408
        %2410 = vst [vmem:[%s1449 + $0x5c] sm:$0x1] %v2409
        %v2411 = vld [vmem:[%s1449 + $0x60] sm:$0xf]
        %v2412 = vsel %vm2354, %v1855, %v2411
        %2413 = vst [vmem:[%s1449 + $0x60] sm:$0xf] %v2412
        %2414 = vst.msk [vmem:[%s1449 + $0x64] sm:$0xf] %vm1434, %v1864
        %v2415 = vld [vmem:[%s1449 + $0x68] sm:$0x1]
        %v2416 = vsel %vm1452, %v1865, %v2415
        %2417 = vst [vmem:[%s1449 + $0x68] sm:$0x1] %v2416
        %v2418 = vld [vmem:[%s1449 + $0x6c] sm:$0xf]
        %v2419 = vsel %vm2354, %v1872, %v2418
        %2420 = vst [vmem:[%s1449 + $0x6c] sm:$0xf] %v2419
        %2421 = vst.msk [vmem:[%s1449 + $0x70] sm:$0xf] %vm1434, %v1881
        %v2422 = vld [vmem:[%s1449 + $0x74] sm:$0x1]
        %v2423 = vsel %vm1452, %v1882, %v2422
        %2424 = vst [vmem:[%s1449 + $0x74] sm:$0x1] %v2423
        %v2425 = vld [vmem:[%s1449 + $0x78] sm:$0xf]
        %v2426 = vsel %vm2354, %v1889, %v2425
        %2427 = vst [vmem:[%s1449 + $0x78] sm:$0xf] %v2426
        %2428 = vst.msk [vmem:[%s1449 + $0x7c] sm:$0xf] %vm1434, %v1898
        %v2429 = vld [vmem:[%s1449 + $0x80] sm:$0x1]
        %v2430 = vsel %vm1452, %v1899, %v2429
        %2431 = vst [vmem:[%s1449 + $0x80] sm:$0x1] %v2430
        %v2432 = vld [vmem:[%s1449 + $0x84] sm:$0xf]
        %v2433 = vsel %vm2354, %v1906, %v2432
        %2434 = vst [vmem:[%s1449 + $0x84] sm:$0xf] %v2433
        %2435 = vst.msk [vmem:[%s1449 + $0x88] sm:$0xf] %vm1434, %v1915
        %v2436 = vld [vmem:[%s1449 + $0x8c] sm:$0x1]
        %v2437 = vsel %vm1452, %v1916, %v2436
        %2438 = vst [vmem:[%s1449 + $0x8c] sm:$0x1] %v2437
        %v2439 = vld [vmem:[%s1449 + $0x90] sm:$0xf]
        %v2440 = vsel %vm2354, %v1923, %v2439
        %2441 = vst [vmem:[%s1449 + $0x90] sm:$0xf] %v2440
        %2442 = vst.msk [vmem:[%s1449 + $0x94] sm:$0xf] %vm1434, %v1932
        %v2443 = vld [vmem:[%s1449 + $0x98] sm:$0x1]
        %v2444 = vsel %vm1452, %v1933, %v2443
        %2445 = vst [vmem:[%s1449 + $0x98] sm:$0x1] %v2444
        %v2446 = vld [vmem:[%s1449 + $0x9c] sm:$0xf]
        %v2447 = vsel %vm2354, %v1940, %v2446
        %2448 = vst [vmem:[%s1449 + $0x9c] sm:$0xf] %v2447
        %2449 = vst.msk [vmem:[%s1449 + $0xa0] sm:$0xf] %vm1434, %v1949
        %v2450 = vld [vmem:[%s1449 + $0xa4] sm:$0x1]
        %v2451 = vsel %vm1452, %v1950, %v2450
        %2452 = vst [vmem:[%s1449 + $0xa4] sm:$0x1] %v2451
        %v2453 = vld [vmem:[%s1449 + $0xa8] sm:$0xf]
        %v2454 = vsel %vm2354, %v1957, %v2453
        %2455 = vst [vmem:[%s1449 + $0xa8] sm:$0xf] %v2454
        %2456 = vst.msk [vmem:[%s1449 + $0xac] sm:$0xf] %vm1434, %v1966
        %v2457 = vld [vmem:[%s1449 + $0xb0] sm:$0x1]
        %v2458 = vsel %vm1452, %v1967, %v2457
        %2459 = vst [vmem:[%s1449 + $0xb0] sm:$0x1] %v2458
        %v2460 = vld [vmem:[%s1449 + $0xb4] sm:$0xf]
        %v2461 = vsel %vm2354, %v1974, %v2460
        %2462 = vst [vmem:[%s1449 + $0xb4] sm:$0xf] %v2461
        %2463 = vst.msk [vmem:[%s1449 + $0xb8] sm:$0xf] %vm1434, %v1983
        %v2464 = vld [vmem:[%s1449 + $0xbc] sm:$0x1]
        %v2465 = vsel %vm1452, %v1984, %v2464
        %2466 = vst [vmem:[%s1449 + $0xbc] sm:$0x1] %v2465
        %v2467 = vld [vmem:[%s1449 + $0xd8] sm:$0xf]
        %v2468 = vsel %vm2354, %v1991, %v2467
        %2469 = vst [vmem:[%s1449 + $0xd8] sm:$0xf] %v2468
        %2470 = vst.msk [vmem:[%s1449 + $0xdc] sm:$0xf] %vm1434, %v2000
        %v2471 = vld [vmem:[%s1449 + $0xe0] sm:$0x1]
        %v2472 = vsel %vm1452, %v2001, %v2471
        %2473 = vst [vmem:[%s1449 + $0xe0] sm:$0x1] %v2472
        %v2474 = vld [vmem:[%s1449 + $0xe4] sm:$0xf]
        %v2475 = vsel %vm2354, %v2008, %v2474
        %2476 = vst [vmem:[%s1449 + $0xe4] sm:$0xf] %v2475
        %2477 = vst.msk [vmem:[%s1449 + $0xe8] sm:$0xf] %vm1434, %v2017
        %v2478 = vld [vmem:[%s1449 + $0xec] sm:$0x1]
        %v2479 = vsel %vm1452, %v2018, %v2478
        %2480 = vst [vmem:[%s1449 + $0xec] sm:$0x1] %v2479
        %v2481 = vld [vmem:[%s1449 + $0xf0] sm:$0xf]
        %v2482 = vsel %vm2354, %v2025, %v2481
        %2483 = vst [vmem:[%s1449 + $0xf0] sm:$0xf] %v2482
        %2484 = vst.msk [vmem:[%s1449 + $0xf4] sm:$0xf] %vm1434, %v2034
        %v2485 = vld [vmem:[%s1449 + $0xf8] sm:$0x1]
        %v2486 = vsel %vm1452, %v2035, %v2485
        %2487 = vst [vmem:[%s1449 + $0xf8] sm:$0x1] %v2486
        %v2488 = vld [vmem:[%s1449 + $0xfc] sm:$0xf]
        %v2489 = vsel %vm2354, %v2042, %v2488
        %2490 = vst [vmem:[%s1449 + $0xfc] sm:$0xf] %v2489
        %2491 = vst.msk [vmem:[%s1449 + $0x100] sm:$0xf] %vm1434, %v2051
        %v2492 = vld [vmem:[%s1449 + $0x104] sm:$0x1]
        %v2493 = vsel %vm1452, %v2052, %v2492
        %2494 = vst [vmem:[%s1449 + $0x104] sm:$0x1] %v2493
        %v2495 = vld [vmem:[%s1449 + $0x108] sm:$0xf]
        %v2496 = vsel %vm2354, %v2059, %v2495
        %2497 = vst [vmem:[%s1449 + $0x108] sm:$0xf] %v2496
        %2498 = vst.msk [vmem:[%s1449 + $0x10c] sm:$0xf] %vm1434, %v2068
        %v2499 = vld [vmem:[%s1449 + $0x110] sm:$0x1]
        %v2500 = vsel %vm1452, %v2069, %v2499
        %2501 = vst [vmem:[%s1449 + $0x110] sm:$0x1] %v2500
        %v2502 = vld [vmem:[%s1449 + $0x114] sm:$0xf]
        %v2503 = vsel %vm2354, %v2076, %v2502
        %2504 = vst [vmem:[%s1449 + $0x114] sm:$0xf] %v2503
        %2505 = vst.msk [vmem:[%s1449 + $0x118] sm:$0xf] %vm1434, %v2085
        %v2506 = vld [vmem:[%s1449 + $0x11c] sm:$0x1]
        %v2507 = vsel %vm1452, %v2086, %v2506
        %2508 = vst [vmem:[%s1449 + $0x11c] sm:$0x1] %v2507
        %v2509 = vld [vmem:[%s1449 + $0x120] sm:$0xf]
        %v2510 = vsel %vm2354, %v2093, %v2509
        %2511 = vst [vmem:[%s1449 + $0x120] sm:$0xf] %v2510
        %2512 = vst.msk [vmem:[%s1449 + $0x124] sm:$0xf] %vm1434, %v2102
        %v2513 = vld [vmem:[%s1449 + $0x128] sm:$0x1]
        %v2514 = vsel %vm1452, %v2103, %v2513
        %2515 = vst [vmem:[%s1449 + $0x128] sm:$0x1] %v2514
        %v2516 = vld [vmem:[%s1449 + $0x12c] sm:$0xf]
        %v2517 = vsel %vm2354, %v2110, %v2516
        %2518 = vst [vmem:[%s1449 + $0x12c] sm:$0xf] %v2517
        %2519 = vst.msk [vmem:[%s1449 + $0x130] sm:$0xf] %vm1434, %v2119
        %v2520 = vld [vmem:[%s1449 + $0x134] sm:$0x1]
        %v2521 = vsel %vm1452, %v2120, %v2520
        %2522 = vst [vmem:[%s1449 + $0x134] sm:$0x1] %v2521
        %v2523 = vld [vmem:[%s1449 + $0x138] sm:$0xf]
        %v2524 = vsel %vm2354, %v2127, %v2523
        %2525 = vst [vmem:[%s1449 + $0x138] sm:$0xf] %v2524
        %2526 = vst.msk [vmem:[%s1449 + $0x13c] sm:$0xf] %vm1434, %v2136
        %v2527 = vld [vmem:[%s1449 + $0x140] sm:$0x1]
        %v2528 = vsel %vm1452, %v2137, %v2527
        %2529 = vst [vmem:[%s1449 + $0x140] sm:$0x1] %v2528
        %v2530 = vld [vmem:[%s1449 + $0x144] sm:$0xf]
        %v2531 = vsel %vm2354, %v2144, %v2530
        %2532 = vst [vmem:[%s1449 + $0x144] sm:$0xf] %v2531
        %2533 = vst.msk [vmem:[%s1449 + $0x148] sm:$0xf] %vm1434, %v2153
        %v2534 = vld [vmem:[%s1449 + $0x14c] sm:$0x1]
        %v2535 = vsel %vm1452, %v2154, %v2534
        %2536 = vst [vmem:[%s1449 + $0x14c] sm:$0x1] %v2535
        %v2537 = vld [vmem:[%s1449 + $0x150] sm:$0xf]
        %v2538 = vsel %vm2354, %v2161, %v2537
        %2539 = vst [vmem:[%s1449 + $0x150] sm:$0xf] %v2538
        %2540 = vst.msk [vmem:[%s1449 + $0x154] sm:$0xf] %vm1434, %v2170
        %v2541 = vld [vmem:[%s1449 + $0x158] sm:$0x1]
        %v2542 = vsel %vm1452, %v2171, %v2541
        %2543 = vst [vmem:[%s1449 + $0x158] sm:$0x1] %v2542
        %v2544 = vld [vmem:[%s1449 + $0x15c] sm:$0xf]
        %v2545 = vsel %vm2354, %v2178, %v2544
        %2546 = vst [vmem:[%s1449 + $0x15c] sm:$0xf] %v2545
        %2547 = vst.msk [vmem:[%s1449 + $0x160] sm:$0xf] %vm1434, %v2187
        %v2548 = vld [vmem:[%s1449 + $0x164] sm:$0x1]
        %v2549 = vsel %vm1452, %v2188, %v2548
        %2550 = vst [vmem:[%s1449 + $0x164] sm:$0x1] %v2549
        %v2551 = vld [vmem:[%s1449 + $0x168] sm:$0xf]
        %v2552 = vsel %vm2354, %v2195, %v2551
        %2553 = vst [vmem:[%s1449 + $0x168] sm:$0xf] %v2552
        %2554 = vst.msk [vmem:[%s1449 + $0x16c] sm:$0xf] %vm1434, %v2204
        %v2555 = vld [vmem:[%s1449 + $0x170] sm:$0x1]
        %v2556 = vsel %vm1452, %v2205, %v2555
        %2557 = vst [vmem:[%s1449 + $0x170] sm:$0x1] %v2556
        %v2558 = vld [vmem:[%s1449 + $0x174] sm:$0xf]
        %v2559 = vsel %vm2354, %v2212, %v2558
        %2560 = vst [vmem:[%s1449 + $0x174] sm:$0xf] %v2559
        %2561 = vst.msk [vmem:[%s1449 + $0x178] sm:$0xf] %vm1434, %v2221
        %v2562 = vld [vmem:[%s1449 + $0x17c] sm:$0x1]
        %v2563 = vsel %vm1452, %v2222, %v2562
        %2564 = vst [vmem:[%s1449 + $0x17c] sm:$0x1] %v2563
        %v2565 = vld [vmem:[%s1449 + $0x180] sm:$0xf]
        %v2566 = vsel %vm2354, %v2229, %v2565
        %2567 = vst [vmem:[%s1449 + $0x180] sm:$0xf] %v2566
        %2568 = vst.msk [vmem:[%s1449 + $0x184] sm:$0xf] %vm1434, %v2238
        %v2569 = vld [vmem:[%s1449 + $0x188] sm:$0x1]
        %v2570 = vsel %vm1452, %v2239, %v2569
        %2571 = vst [vmem:[%s1449 + $0x188] sm:$0x1] %v2570
        %v2572 = vld [vmem:[%s1449 + $0x18c] sm:$0xf]
        %v2573 = vsel %vm2354, %v2246, %v2572
        %2574 = vst [vmem:[%s1449 + $0x18c] sm:$0xf] %v2573
        %2575 = vst.msk [vmem:[%s1449 + $0x190] sm:$0xf] %vm1434, %v2255
        %v2576 = vld [vmem:[%s1449 + $0x194] sm:$0x1]
        %v2577 = vsel %vm1452, %v2256, %v2576
        %2578 = vst [vmem:[%s1449 + $0x194] sm:$0x1] %v2577
        %v2579 = vld [vmem:[#allocation2] sm:$0xf]
        %v2580 = vld [vmem:[#allocation2 + $0x4] sm:$0xf]
        %v2581 = vld [vmem:[#allocation2 + $0xc] sm:$0xf]
        %v2582 = vld [vmem:[#allocation2 + $0x10] sm:$0xf]
        %v2583 = vld [vmem:[#allocation2 + $0x18] sm:$0xf]
        %v2584 = vld [vmem:[#allocation2 + $0x1c] sm:$0xf]
        %v2585 = vld [vmem:[#allocation2 + $0x24] sm:$0xf]
        %v2586 = vld [vmem:[#allocation2 + $0x28] sm:$0xf]
        %v2587 = vld [vmem:[#allocation2 + $0x30] sm:$0xf]
        %v2588 = vld [vmem:[#allocation2 + $0x34] sm:$0xf]
        %v2589 = vld [vmem:[#allocation2 + $0x3c] sm:$0xf]
        %v2590 = vld [vmem:[#allocation2 + $0x40] sm:$0xf]
        %v2591 = vld [vmem:[#allocation2 + $0x48] sm:$0xf]
        %v2592 = vld [vmem:[#allocation2 + $0x4c] sm:$0xf]
        %v2593 = vld [vmem:[#allocation2 + $0x54] sm:$0xf]
        %v2594 = vld [vmem:[#allocation2 + $0x58] sm:$0xf]
        %v2595 = vld [vmem:[#allocation2 + $0x60] sm:$0xf]
        %v2596 = vld [vmem:[#allocation2 + $0x64] sm:$0xf]
        %v2597 = vld [vmem:[#allocation2 + $0x6c] sm:$0xf]
        %v2598 = vld [vmem:[#allocation2 + $0x70] sm:$0xf]
        %v2599 = vld [vmem:[#allocation2 + $0x78] sm:$0xf]
        %v2600 = vld [vmem:[#allocation2 + $0x7c] sm:$0xf]
        %v2601 = vld [vmem:[#allocation2 + $0x84] sm:$0xf]
        %v2602 = vld [vmem:[#allocation2 + $0x88] sm:$0xf]
        %v2603 = vld [vmem:[#allocation2 + $0x90] sm:$0xf]
        %v2604 = vld [vmem:[#allocation2 + $0x94] sm:$0xf]
        %v2605 = vld [vmem:[#allocation2 + $0x9c] sm:$0xf]
        %v2606 = vld [vmem:[#allocation2 + $0xa0] sm:$0xf]
        %v2607 = vld [vmem:[#allocation2 + $0xa8] sm:$0xf]
        %v2608 = vld [vmem:[#allocation2 + $0xac] sm:$0xf]
        %v2609 = vld [vmem:[#allocation2 + $0xb4] sm:$0xf]
        %v2610 = vld [vmem:[#allocation2 + $0xb8] sm:$0xf]
        %v2611 = vld [vmem:[#allocation2 + $0xd8] sm:$0xf]
        %v2612 = vld [vmem:[#allocation2 + $0xdc] sm:$0xf]
        %v2613 = vld [vmem:[#allocation2 + $0xe4] sm:$0xf]
        %v2614 = vld [vmem:[#allocation2 + $0xe8] sm:$0xf]
        %v2615 = vld [vmem:[#allocation2 + $0xf0] sm:$0xf]
        %v2616 = vld [vmem:[#allocation2 + $0xf4] sm:$0xf]
        %v2617 = vld [vmem:[#allocation2 + $0xfc] sm:$0xf]
        %v2618 = vld [vmem:[#allocation2 + $0x100] sm:$0xf]
        %v2619 = vld [vmem:[#allocation2 + $0x108] sm:$0xf]
        %v2620 = vld [vmem:[#allocation2 + $0x10c] sm:$0xf]
        %v2621 = vld [vmem:[#allocation2 + $0x114] sm:$0xf]
        %v2622 = vld [vmem:[#allocation2 + $0x118] sm:$0xf]
        %v2623 = vld [vmem:[#allocation2 + $0x120] sm:$0xf]
        %v2624 = vld [vmem:[#allocation2 + $0x124] sm:$0xf]
        %v2625 = vld [vmem:[#allocation2 + $0x12c] sm:$0xf]
        %v2626 = vld [vmem:[#allocation2 + $0x130] sm:$0xf]
        %v2627 = vld [vmem:[#allocation2 + $0x138] sm:$0xf]
        %v2628 = vld [vmem:[#allocation2 + $0x13c] sm:$0xf]
        %v2629 = vld [vmem:[#allocation2 + $0x144] sm:$0xf]
        %v2630 = vld [vmem:[#allocation2 + $0x148] sm:$0xf]
        %v2631 = vld [vmem:[#allocation2 + $0x150] sm:$0xf]
        %v2632 = vld [vmem:[#allocation2 + $0x154] sm:$0xf]
        %v2633 = vld [vmem:[#allocation2 + $0x15c] sm:$0xf]
        %v2634 = vld [vmem:[#allocation2 + $0x160] sm:$0xf]
        %v2635 = vld [vmem:[#allocation2 + $0x168] sm:$0xf]
        %v2636 = vld [vmem:[#allocation2 + $0x16c] sm:$0xf]
        %v2637 = vld [vmem:[#allocation2 + $0x174] sm:$0xf]
        %v2638 = vld [vmem:[#allocation2 + $0x178] sm:$0xf]
        %v2639 = vld [vmem:[#allocation2 + $0x180] sm:$0xf]
        %v2640 = vld [vmem:[#allocation2 + $0x184] sm:$0xf]
        %v2641 = vld [vmem:[#allocation2 + $0x18c] sm:$0xf]
        %v2642 = vld [vmem:[#allocation2 + $0x190] sm:$0xf]
        %v2643 = vld [vmem:[#allocation2 + $0x8] sm:$0x1]
        %v2644 = vld [vmem:[#allocation2 + $0x14] sm:$0x1]
        %v2645 = vld [vmem:[#allocation2 + $0x20] sm:$0x1]
        %v2646 = vld [vmem:[#allocation2 + $0x2c] sm:$0x1]
        %v2647 = vld [vmem:[#allocation2 + $0x38] sm:$0x1]
        %v2648 = vld [vmem:[#allocation2 + $0x44] sm:$0x1]
        %v2649 = vld [vmem:[#allocation2 + $0x50] sm:$0x1]
        %v2650 = vld [vmem:[#allocation2 + $0x5c] sm:$0x1]
        %v2651 = vld [vmem:[#allocation2 + $0x68] sm:$0x1]
        %v2652 = vld [vmem:[#allocation2 + $0x74] sm:$0x1]
        %v2653 = vld [vmem:[#allocation2 + $0x80] sm:$0x1]
        %v2654 = vld [vmem:[#allocation2 + $0x8c] sm:$0x1]
        %v2655 = vld [vmem:[#allocation2 + $0x98] sm:$0x1]
        %v2656 = vld [vmem:[#allocation2 + $0xa4] sm:$0x1]
        %v2657 = vld [vmem:[#allocation2 + $0xb0] sm:$0x1]
        %v2658 = vld [vmem:[#allocation2 + $0xbc] sm:$0x1]
        %v2659 = vld [vmem:[#allocation2 + $0xe0] sm:$0x1]
        %v2660 = vld [vmem:[#allocation2 + $0xec] sm:$0x1]
        %v2661 = vld [vmem:[#allocation2 + $0xf8] sm:$0x1]
        %v2662 = vld [vmem:[#allocation2 + $0x104] sm:$0x1]
        %v2663 = vld [vmem:[#allocation2 + $0x110] sm:$0x1]
        %v2664 = vld [vmem:[#allocation2 + $0x11c] sm:$0x1]
        %v2665 = vld [vmem:[#allocation2 + $0x128] sm:$0x1]
        %v2666 = vld [vmem:[#allocation2 + $0x134] sm:$0x1]
        %v2667 = vld [vmem:[#allocation2 + $0x140] sm:$0x1]
        %v2668 = vld [vmem:[#allocation2 + $0x14c] sm:$0x1]
        %v2669 = vld [vmem:[#allocation2 + $0x158] sm:$0x1]
        %v2670 = vld [vmem:[#allocation2 + $0x164] sm:$0x1]
        %v2671 = vld [vmem:[#allocation2 + $0x170] sm:$0x1]
        %v2672 = vld [vmem:[#allocation2 + $0x17c] sm:$0x1]
        %v2673 = vld [vmem:[#allocation2 + $0x188] sm:$0x1]
        %v2674 = vld [vmem:[#allocation2 + $0x194] sm:$0x1]
        %vm2675 = vsmask.f32 3328
        %vm2676 = vsmask.f32 7440
        %vm2677 = vmor %vm2675, %vm2676
        %v2679 = vshrl.u32 %v2579, 16
        %v2681 = vrot.slane %v2679, 4
        %v2682 = vshll.u32 %v2579, 16
        %v2684 = vrot.slane %v2682, 5
        %v2685 = vor.u32 %v2681, %v2684
        %v2686 = vrot.slane %v2685, 4
        %v2688 = vshll.u32 %v2580, 16
        %v2690 = vrot.slane %v2688, 5
        %v2691 = vsel %vm2677, %v2686, %v2690
        %v2692 = vshrl.u32 %v2580, 16
        %v2694 = vrot.slane %v2692, 4
        %v2695 = vor.u32 %v2694, %v2690
        %v2696 = vrot.slane %v2695, 4
        %v2698 = vshll.u32 %v2643, 16
        %v2700 = vrot.slane %v2698, 5
        %v2701 = vsel %vm2677, %v2696, %v2700
        %v2703 = vshrl.u32 %v2581, 16
        %v2705 = vrot.slane %v2703, 4
        %v2706 = vshll.u32 %v2581, 16
        %v2708 = vrot.slane %v2706, 5
        %v2709 = vor.u32 %v2705, %v2708
        %v2710 = vrot.slane %v2709, 4
        %v2712 = vshll.u32 %v2582, 16
        %v2714 = vrot.slane %v2712, 5
        %v2715 = vsel %vm2677, %v2710, %v2714
        %v2716 = vshrl.u32 %v2582, 16
        %v2718 = vrot.slane %v2716, 4
        %v2719 = vor.u32 %v2718, %v2714
        %v2720 = vrot.slane %v2719, 4
        %v2722 = vshll.u32 %v2644, 16
        %v2724 = vrot.slane %v2722, 5
        %v2725 = vsel %vm2677, %v2720, %v2724
        %v2727 = vshrl.u32 %v2583, 16
        %v2729 = vrot.slane %v2727, 4
        %v2730 = vshll.u32 %v2583, 16
        %v2732 = vrot.slane %v2730, 5
        %v2733 = vor.u32 %v2729, %v2732
        %v2734 = vrot.slane %v2733, 4
        %v2736 = vshll.u32 %v2584, 16
        %v2738 = vrot.slane %v2736, 5
        %v2739 = vsel %vm2677, %v2734, %v2738
        %v2740 = vshrl.u32 %v2584, 16
        %v2742 = vrot.slane %v2740, 4
        %v2743 = vor.u32 %v2742, %v2738
        %v2744 = vrot.slane %v2743, 4
        %v2746 = vshll.u32 %v2645, 16
        %v2748 = vrot.slane %v2746, 5
        %v2749 = vsel %vm2677, %v2744, %v2748
        %v2751 = vshrl.u32 %v2585, 16
        %v2753 = vrot.slane %v2751, 4
        %v2754 = vshll.u32 %v2585, 16
        %v2756 = vrot.slane %v2754, 5
        %v2757 = vor.u32 %v2753, %v2756
        %v2758 = vrot.slane %v2757, 4
        %v2760 = vshll.u32 %v2586, 16
        %v2762 = vrot.slane %v2760, 5
        %v2763 = vsel %vm2677, %v2758, %v2762
        %v2764 = vshrl.u32 %v2586, 16
        %v2766 = vrot.slane %v2764, 4
        %v2767 = vor.u32 %v2766, %v2762
        %v2768 = vrot.slane %v2767, 4
        %v2770 = vshll.u32 %v2646, 16
        %v2772 = vrot.slane %v2770, 5
        %v2773 = vsel %vm2677, %v2768, %v2772
        %v2775 = vshrl.u32 %v2587, 16
        %v2777 = vrot.slane %v2775, 4
        %v2778 = vshll.u32 %v2587, 16
        %v2780 = vrot.slane %v2778, 5
        %v2781 = vor.u32 %v2777, %v2780
        %v2782 = vrot.slane %v2781, 4
        %v2784 = vshll.u32 %v2588, 16
        %v2786 = vrot.slane %v2784, 5
        %v2787 = vsel %vm2677, %v2782, %v2786
        %v2788 = vshrl.u32 %v2588, 16
        %v2790 = vrot.slane %v2788, 4
        %v2791 = vor.u32 %v2790, %v2786
        %v2792 = vrot.slane %v2791, 4
        %v2794 = vshll.u32 %v2647, 16
        %v2796 = vrot.slane %v2794, 5
        %v2797 = vsel %vm2677, %v2792, %v2796
        %v2799 = vshrl.u32 %v2589, 16
        %v2801 = vrot.slane %v2799, 4
        %v2802 = vshll.u32 %v2589, 16
        %v2804 = vrot.slane %v2802, 5
        %v2805 = vor.u32 %v2801, %v2804
        %v2806 = vrot.slane %v2805, 4
        %v2808 = vshll.u32 %v2590, 16
        %v2810 = vrot.slane %v2808, 5
        %v2811 = vsel %vm2677, %v2806, %v2810
        %v2812 = vshrl.u32 %v2590, 16
        %v2814 = vrot.slane %v2812, 4
        %v2815 = vor.u32 %v2814, %v2810
        %v2816 = vrot.slane %v2815, 4
        %v2818 = vshll.u32 %v2648, 16
        %v2820 = vrot.slane %v2818, 5
        %v2821 = vsel %vm2677, %v2816, %v2820
        %v2823 = vshrl.u32 %v2591, 16
        %v2825 = vrot.slane %v2823, 4
        %v2826 = vshll.u32 %v2591, 16
        %v2828 = vrot.slane %v2826, 5
        %v2829 = vor.u32 %v2825, %v2828
        %v2830 = vrot.slane %v2829, 4
        %v2832 = vshll.u32 %v2592, 16
        %v2834 = vrot.slane %v2832, 5
        %v2835 = vsel %vm2677, %v2830, %v2834
        %v2836 = vshrl.u32 %v2592, 16
        %v2838 = vrot.slane %v2836, 4
        %v2839 = vor.u32 %v2838, %v2834
        %v2840 = vrot.slane %v2839, 4
        %v2842 = vshll.u32 %v2649, 16
        %v2844 = vrot.slane %v2842, 5
        %v2845 = vsel %vm2677, %v2840, %v2844
        %v2847 = vshrl.u32 %v2593, 16
        %v2849 = vrot.slane %v2847, 4
        %v2850 = vshll.u32 %v2593, 16
        %v2852 = vrot.slane %v2850, 5
        %v2853 = vor.u32 %v2849, %v2852
        %v2854 = vrot.slane %v2853, 4
        %v2856 = vshll.u32 %v2594, 16
        %v2858 = vrot.slane %v2856, 5
        %v2859 = vsel %vm2677, %v2854, %v2858
        %v2860 = vshrl.u32 %v2594, 16
        %v2862 = vrot.slane %v2860, 4
        %v2863 = vor.u32 %v2862, %v2858
        %v2864 = vrot.slane %v2863, 4
        %v2866 = vshll.u32 %v2650, 16
        %v2868 = vrot.slane %v2866, 5
        %v2869 = vsel %vm2677, %v2864, %v2868
        %v2871 = vshrl.u32 %v2595, 16
        %v2873 = vrot.slane %v2871, 4
        %v2874 = vshll.u32 %v2595, 16
        %v2876 = vrot.slane %v2874, 5
        %v2877 = vor.u32 %v2873, %v2876
        %v2878 = vrot.slane %v2877, 4
        %v2880 = vshll.u32 %v2596, 16
        %v2882 = vrot.slane %v2880, 5
        %v2883 = vsel %vm2677, %v2878, %v2882
        %v2884 = vshrl.u32 %v2596, 16
        %v2886 = vrot.slane %v2884, 4
        %v2887 = vor.u32 %v2886, %v2882
        %v2888 = vrot.slane %v2887, 4
        %v2890 = vshll.u32 %v2651, 16
        %v2892 = vrot.slane %v2890, 5
        %v2893 = vsel %vm2677, %v2888, %v2892
        %v2895 = vshrl.u32 %v2597, 16
        %v2897 = vrot.slane %v2895, 4
        %v2898 = vshll.u32 %v2597, 16
        %v2900 = vrot.slane %v2898, 5
        %v2901 = vor.u32 %v2897, %v2900
        %v2902 = vrot.slane %v2901, 4
        %v2904 = vshll.u32 %v2598, 16
        %v2906 = vrot.slane %v2904, 5
        %v2907 = vsel %vm2677, %v2902, %v2906
        %v2908 = vshrl.u32 %v2598, 16
        %v2910 = vrot.slane %v2908, 4
        %v2911 = vor.u32 %v2910, %v2906
        %v2912 = vrot.slane %v2911, 4
        %v2914 = vshll.u32 %v2652, 16
        %v2916 = vrot.slane %v2914, 5
        %v2917 = vsel %vm2677, %v2912, %v2916
        %v2919 = vshrl.u32 %v2599, 16
        %v2921 = vrot.slane %v2919, 4
        %v2922 = vshll.u32 %v2599, 16
        %v2924 = vrot.slane %v2922, 5
        %v2925 = vor.u32 %v2921, %v2924
        %v2926 = vrot.slane %v2925, 4
        %v2928 = vshll.u32 %v2600, 16
        %v2930 = vrot.slane %v2928, 5
        %v2931 = vsel %vm2677, %v2926, %v2930
        %v2932 = vshrl.u32 %v2600, 16
        %v2934 = vrot.slane %v2932, 4
        %v2935 = vor.u32 %v2934, %v2930
        %v2936 = vrot.slane %v2935, 4
        %v2938 = vshll.u32 %v2653, 16
        %v2940 = vrot.slane %v2938, 5
        %v2941 = vsel %vm2677, %v2936, %v2940
        %v2943 = vshrl.u32 %v2601, 16
        %v2945 = vrot.slane %v2943, 4
        %v2946 = vshll.u32 %v2601, 16
        %v2948 = vrot.slane %v2946, 5
        %v2949 = vor.u32 %v2945, %v2948
        %v2950 = vrot.slane %v2949, 4
        %v2952 = vshll.u32 %v2602, 16
        %v2954 = vrot.slane %v2952, 5
        %v2955 = vsel %vm2677, %v2950, %v2954
        %v2956 = vshrl.u32 %v2602, 16
        %v2958 = vrot.slane %v2956, 4
        %v2959 = vor.u32 %v2958, %v2954
        %v2960 = vrot.slane %v2959, 4
        %v2962 = vshll.u32 %v2654, 16
        %v2964 = vrot.slane %v2962, 5
        %v2965 = vsel %vm2677, %v2960, %v2964
        %v2967 = vshrl.u32 %v2603, 16
        %v2969 = vrot.slane %v2967, 4
        %v2970 = vshll.u32 %v2603, 16
        %v2972 = vrot.slane %v2970, 5
        %v2973 = vor.u32 %v2969, %v2972
        %v2974 = vrot.slane %v2973, 4
        %v2976 = vshll.u32 %v2604, 16
        %v2978 = vrot.slane %v2976, 5
        %v2979 = vsel %vm2677, %v2974, %v2978
        %v2980 = vshrl.u32 %v2604, 16
        %v2982 = vrot.slane %v2980, 4
        %v2983 = vor.u32 %v2982, %v2978
        %v2984 = vrot.slane %v2983, 4
        %v2986 = vshll.u32 %v2655, 16
        %v2988 = vrot.slane %v2986, 5
        %v2989 = vsel %vm2677, %v2984, %v2988
        %v2991 = vshrl.u32 %v2605, 16
        %v2993 = vrot.slane %v2991, 4
        %v2994 = vshll.u32 %v2605, 16
        %v2996 = vrot.slane %v2994, 5
        %v2997 = vor.u32 %v2993, %v2996
        %v2998 = vrot.slane %v2997, 4
        %v3000 = vshll.u32 %v2606, 16
        %v3002 = vrot.slane %v3000, 5
        %v3003 = vsel %vm2677, %v2998, %v3002
        %v3004 = vshrl.u32 %v2606, 16
        %v3006 = vrot.slane %v3004, 4
        %v3007 = vor.u32 %v3006, %v3002
        %v3008 = vrot.slane %v3007, 4
        %v3010 = vshll.u32 %v2656, 16
        %v3012 = vrot.slane %v3010, 5
        %v3013 = vsel %vm2677, %v3008, %v3012
        %v3015 = vshrl.u32 %v2607, 16
        %v3017 = vrot.slane %v3015, 4
        %v3018 = vshll.u32 %v2607, 16
        %v3020 = vrot.slane %v3018, 5
        %v3021 = vor.u32 %v3017, %v3020
        %v3022 = vrot.slane %v3021, 4
        %v3024 = vshll.u32 %v2608, 16
        %v3026 = vrot.slane %v3024, 5
        %v3027 = vsel %vm2677, %v3022, %v3026
        %v3028 = vshrl.u32 %v2608, 16
        %v3030 = vrot.slane %v3028, 4
        %v3031 = vor.u32 %v3030, %v3026
        %v3032 = vrot.slane %v3031, 4
        %v3034 = vshll.u32 %v2657, 16
        %v3036 = vrot.slane %v3034, 5
        %v3037 = vsel %vm2677, %v3032, %v3036
        %v3039 = vshrl.u32 %v2609, 16
        %v3041 = vrot.slane %v3039, 4
        %v3042 = vshll.u32 %v2609, 16
        %v3044 = vrot.slane %v3042, 5
        %v3045 = vor.u32 %v3041, %v3044
        %v3046 = vrot.slane %v3045, 4
        %v3048 = vshll.u32 %v2610, 16
        %v3050 = vrot.slane %v3048, 5
        %v3051 = vsel %vm2677, %v3046, %v3050
        %v3052 = vshrl.u32 %v2610, 16
        %v3054 = vrot.slane %v3052, 4
        %v3055 = vor.u32 %v3054, %v3050
        %v3056 = vrot.slane %v3055, 4
        %v3058 = vshll.u32 %v2658, 16
        %v3060 = vrot.slane %v3058, 5
        %v3061 = vsel %vm2677, %v3056, %v3060
        %v3063 = vshrl.u32 %v2611, 16
        %v3065 = vrot.slane %v3063, 4
        %v3066 = vshll.u32 %v2611, 16
        %v3068 = vrot.slane %v3066, 5
        %v3069 = vor.u32 %v3065, %v3068
        %v3070 = vrot.slane %v3069, 4
        %v3072 = vshll.u32 %v2612, 16
        %v3074 = vrot.slane %v3072, 5
        %v3075 = vsel %vm2677, %v3070, %v3074
        %v3076 = vshrl.u32 %v2612, 16
        %v3078 = vrot.slane %v3076, 4
        %v3079 = vor.u32 %v3078, %v3074
        %v3080 = vrot.slane %v3079, 4
        %v3082 = vshll.u32 %v2659, 16
        %v3084 = vrot.slane %v3082, 5
        %v3085 = vsel %vm2677, %v3080, %v3084
        %v3087 = vshrl.u32 %v2613, 16
        %v3089 = vrot.slane %v3087, 4
        %v3090 = vshll.u32 %v2613, 16
        %v3092 = vrot.slane %v3090, 5
        %v3093 = vor.u32 %v3089, %v3092
        %v3094 = vrot.slane %v3093, 4
        %v3096 = vshll.u32 %v2614, 16
        %v3098 = vrot.slane %v3096, 5
        %v3099 = vsel %vm2677, %v3094, %v3098
        %v3100 = vshrl.u32 %v2614, 16
        %v3102 = vrot.slane %v3100, 4
        %v3103 = vor.u32 %v3102, %v3098
        %v3104 = vrot.slane %v3103, 4
        %v3106 = vshll.u32 %v2660, 16
        %v3108 = vrot.slane %v3106, 5
        %v3109 = vsel %vm2677, %v3104, %v3108
        %v3111 = vshrl.u32 %v2615, 16
        %v3113 = vrot.slane %v3111, 4
        %v3114 = vshll.u32 %v2615, 16
        %v3116 = vrot.slane %v3114, 5
        %v3117 = vor.u32 %v3113, %v3116
        %v3118 = vrot.slane %v3117, 4
        %v3120 = vshll.u32 %v2616, 16
        %v3122 = vrot.slane %v3120, 5
        %v3123 = vsel %vm2677, %v3118, %v3122
        %v3124 = vshrl.u32 %v2616, 16
        %v3126 = vrot.slane %v3124, 4
        %v3127 = vor.u32 %v3126, %v3122
        %v3128 = vrot.slane %v3127, 4
        %v3130 = vshll.u32 %v2661, 16
        %v3132 = vrot.slane %v3130, 5
        %v3133 = vsel %vm2677, %v3128, %v3132
        %v3135 = vshrl.u32 %v2617, 16
        %v3137 = vrot.slane %v3135, 4
        %v3138 = vshll.u32 %v2617, 16
        %v3140 = vrot.slane %v3138, 5
        %v3141 = vor.u32 %v3137, %v3140
        %v3142 = vrot.slane %v3141, 4
        %v3144 = vshll.u32 %v2618, 16
        %v3146 = vrot.slane %v3144, 5
        %v3147 = vsel %vm2677, %v3142, %v3146
        %v3148 = vshrl.u32 %v2618, 16
        %v3150 = vrot.slane %v3148, 4
        %v3151 = vor.u32 %v3150, %v3146
        %v3152 = vrot.slane %v3151, 4
        %v3154 = vshll.u32 %v2662, 16
        %v3156 = vrot.slane %v3154, 5
        %v3157 = vsel %vm2677, %v3152, %v3156
        %v3159 = vshrl.u32 %v2619, 16
        %v3161 = vrot.slane %v3159, 4
        %v3162 = vshll.u32 %v2619, 16
        %v3164 = vrot.slane %v3162, 5
        %v3165 = vor.u32 %v3161, %v3164
        %v3166 = vrot.slane %v3165, 4
        %v3168 = vshll.u32 %v2620, 16
        %v3170 = vrot.slane %v3168, 5
        %v3171 = vsel %vm2677, %v3166, %v3170
        %v3172 = vshrl.u32 %v2620, 16
        %v3174 = vrot.slane %v3172, 4
        %v3175 = vor.u32 %v3174, %v3170
        %v3176 = vrot.slane %v3175, 4
        %v3178 = vshll.u32 %v2663, 16
        %v3180 = vrot.slane %v3178, 5
        %v3181 = vsel %vm2677, %v3176, %v3180
        %v3183 = vshrl.u32 %v2621, 16
        %v3185 = vrot.slane %v3183, 4
        %v3186 = vshll.u32 %v2621, 16
        %v3188 = vrot.slane %v3186, 5
        %v3189 = vor.u32 %v3185, %v3188
        %v3190 = vrot.slane %v3189, 4
        %v3192 = vshll.u32 %v2622, 16
        %v3194 = vrot.slane %v3192, 5
        %v3195 = vsel %vm2677, %v3190, %v3194
        %v3196 = vshrl.u32 %v2622, 16
        %v3198 = vrot.slane %v3196, 4
        %v3199 = vor.u32 %v3198, %v3194
        %v3200 = vrot.slane %v3199, 4
        %v3202 = vshll.u32 %v2664, 16
        %v3204 = vrot.slane %v3202, 5
        %v3205 = vsel %vm2677, %v3200, %v3204
        %v3207 = vshrl.u32 %v2623, 16
        %v3209 = vrot.slane %v3207, 4
        %v3210 = vshll.u32 %v2623, 16
        %v3212 = vrot.slane %v3210, 5
        %v3213 = vor.u32 %v3209, %v3212
        %v3214 = vrot.slane %v3213, 4
        %v3216 = vshll.u32 %v2624, 16
        %v3218 = vrot.slane %v3216, 5
        %v3219 = vsel %vm2677, %v3214, %v3218
        %v3220 = vshrl.u32 %v2624, 16
        %v3222 = vrot.slane %v3220, 4
        %v3223 = vor.u32 %v3222, %v3218
        %v3224 = vrot.slane %v3223, 4
        %v3226 = vshll.u32 %v2665, 16
        %v3228 = vrot.slane %v3226, 5
        %v3229 = vsel %vm2677, %v3224, %v3228
        %v3231 = vshrl.u32 %v2625, 16
        %v3233 = vrot.slane %v3231, 4
        %v3234 = vshll.u32 %v2625, 16
        %v3236 = vrot.slane %v3234, 5
        %v3237 = vor.u32 %v3233, %v3236
        %v3238 = vrot.slane %v3237, 4
        %v3240 = vshll.u32 %v2626, 16
        %v3242 = vrot.slane %v3240, 5
        %v3243 = vsel %vm2677, %v3238, %v3242
        %v3244 = vshrl.u32 %v2626, 16
        %v3246 = vrot.slane %v3244, 4
        %v3247 = vor.u32 %v3246, %v3242
        %v3248 = vrot.slane %v3247, 4
        %v3250 = vshll.u32 %v2666, 16
        %v3252 = vrot.slane %v3250, 5
        %v3253 = vsel %vm2677, %v3248, %v3252
        %v3255 = vshrl.u32 %v2627, 16
        %v3257 = vrot.slane %v3255, 4
        %v3258 = vshll.u32 %v2627, 16
        %v3260 = vrot.slane %v3258, 5
        %v3261 = vor.u32 %v3257, %v3260
        %v3262 = vrot.slane %v3261, 4
        %v3264 = vshll.u32 %v2628, 16
        %v3266 = vrot.slane %v3264, 5
        %v3267 = vsel %vm2677, %v3262, %v3266
        %v3268 = vshrl.u32 %v2628, 16
        %v3270 = vrot.slane %v3268, 4
        %v3271 = vor.u32 %v3270, %v3266
        %v3272 = vrot.slane %v3271, 4
        %v3274 = vshll.u32 %v2667, 16
        %v3276 = vrot.slane %v3274, 5
        %v3277 = vsel %vm2677, %v3272, %v3276
        %v3279 = vshrl.u32 %v2629, 16
        %v3281 = vrot.slane %v3279, 4
        %v3282 = vshll.u32 %v2629, 16
        %v3284 = vrot.slane %v3282, 5
        %v3285 = vor.u32 %v3281, %v3284
        %v3286 = vrot.slane %v3285, 4
        %v3288 = vshll.u32 %v2630, 16
        %v3290 = vrot.slane %v3288, 5
        %v3291 = vsel %vm2677, %v3286, %v3290
        %v3292 = vshrl.u32 %v2630, 16
        %v3294 = vrot.slane %v3292, 4
        %v3295 = vor.u32 %v3294, %v3290
        %v3296 = vrot.slane %v3295, 4
        %v3298 = vshll.u32 %v2668, 16
        %v3300 = vrot.slane %v3298, 5
        %v3301 = vsel %vm2677, %v3296, %v3300
        %v3303 = vshrl.u32 %v2631, 16
        %v3305 = vrot.slane %v3303, 4
        %v3306 = vshll.u32 %v2631, 16
        %v3308 = vrot.slane %v3306, 5
        %v3309 = vor.u32 %v3305, %v3308
        %v3310 = vrot.slane %v3309, 4
        %v3312 = vshll.u32 %v2632, 16
        %v3314 = vrot.slane %v3312, 5
        %v3315 = vsel %vm2677, %v3310, %v3314
        %v3316 = vshrl.u32 %v2632, 16
        %v3318 = vrot.slane %v3316, 4
        %v3319 = vor.u32 %v3318, %v3314
        %v3320 = vrot.slane %v3319, 4
        %v3322 = vshll.u32 %v2669, 16
        %v3324 = vrot.slane %v3322, 5
        %v3325 = vsel %vm2677, %v3320, %v3324
        %v3327 = vshrl.u32 %v2633, 16
        %v3329 = vrot.slane %v3327, 4
        %v3330 = vshll.u32 %v2633, 16
        %v3332 = vrot.slane %v3330, 5
        %v3333 = vor.u32 %v3329, %v3332
        %v3334 = vrot.slane %v3333, 4
        %v3336 = vshll.u32 %v2634, 16
        %v3338 = vrot.slane %v3336, 5
        %v3339 = vsel %vm2677, %v3334, %v3338
        %v3340 = vshrl.u32 %v2634, 16
        %v3342 = vrot.slane %v3340, 4
        %v3343 = vor.u32 %v3342, %v3338
        %v3344 = vrot.slane %v3343, 4
        %v3346 = vshll.u32 %v2670, 16
        %v3348 = vrot.slane %v3346, 5
        %v3349 = vsel %vm2677, %v3344, %v3348
        %v3351 = vshrl.u32 %v2635, 16
        %v3353 = vrot.slane %v3351, 4
        %v3354 = vshll.u32 %v2635, 16
        %v3356 = vrot.slane %v3354, 5
        %v3357 = vor.u32 %v3353, %v3356
        %v3358 = vrot.slane %v3357, 4
        %v3360 = vshll.u32 %v2636, 16
        %v3362 = vrot.slane %v3360, 5
        %v3363 = vsel %vm2677, %v3358, %v3362
        %v3364 = vshrl.u32 %v2636, 16
        %v3366 = vrot.slane %v3364, 4
        %v3367 = vor.u32 %v3366, %v3362
        %v3368 = vrot.slane %v3367, 4
        %v3370 = vshll.u32 %v2671, 16
        %v3372 = vrot.slane %v3370, 5
        %v3373 = vsel %vm2677, %v3368, %v3372
        %v3375 = vshrl.u32 %v2637, 16
        %v3377 = vrot.slane %v3375, 4
        %v3378 = vshll.u32 %v2637, 16
        %v3380 = vrot.slane %v3378, 5
        %v3381 = vor.u32 %v3377, %v3380
        %v3382 = vrot.slane %v3381, 4
        %v3384 = vshll.u32 %v2638, 16
        %v3386 = vrot.slane %v3384, 5
        %v3387 = vsel %vm2677, %v3382, %v3386
        %v3388 = vshrl.u32 %v2638, 16
        %v3390 = vrot.slane %v3388, 4
        %v3391 = vor.u32 %v3390, %v3386
        %v3392 = vrot.slane %v3391, 4
        %v3394 = vshll.u32 %v2672, 16
        %v3396 = vrot.slane %v3394, 5
        %v3397 = vsel %vm2677, %v3392, %v3396
        %v3399 = vshrl.u32 %v2639, 16
        %v3401 = vrot.slane %v3399, 4
        %v3402 = vshll.u32 %v2639, 16
        %v3404 = vrot.slane %v3402, 5
        %v3405 = vor.u32 %v3401, %v3404
        %v3406 = vrot.slane %v3405, 4
        %v3408 = vshll.u32 %v2640, 16
        %v3410 = vrot.slane %v3408, 5
        %v3411 = vsel %vm2677, %v3406, %v3410
        %v3412 = vshrl.u32 %v2640, 16
        %v3414 = vrot.slane %v3412, 4
        %v3415 = vor.u32 %v3414, %v3410
        %v3416 = vrot.slane %v3415, 4
        %v3418 = vshll.u32 %v2673, 16
        %v3420 = vrot.slane %v3418, 5
        %v3421 = vsel %vm2677, %v3416, %v3420
        %v3423 = vshrl.u32 %v2641, 16
        %v3425 = vrot.slane %v3423, 4
        %v3426 = vshll.u32 %v2641, 16
        %v3428 = vrot.slane %v3426, 5
        %v3429 = vor.u32 %v3425, %v3428
        %v3430 = vrot.slane %v3429, 4
        %v3432 = vshll.u32 %v2642, 16
        %v3434 = vrot.slane %v3432, 5
        %v3435 = vsel %vm2677, %v3430, %v3434
        %v3436 = vshrl.u32 %v2642, 16
        %v3438 = vrot.slane %v3436, 4
        %v3439 = vor.u32 %v3438, %v3434
        %v3440 = vrot.slane %v3439, 4
        %v3442 = vshll.u32 %v2674, 16
        %v3444 = vrot.slane %v3442, 5
        %v3445 = vsel %vm2677, %v3440, %v3444
        %v3446 = vld [vmem:[#allocation2] sm:$0xe]
        %v3447 = vld [vmem:[#allocation2 + $0xc] sm:$0xe]
        %v3448 = vld [vmem:[#allocation2 + $0x18] sm:$0xe]
        %v3449 = vld [vmem:[#allocation2 + $0x24] sm:$0xe]
        %v3450 = vld [vmem:[#allocation2 + $0x30] sm:$0xe]
        %v3451 = vld [vmem:[#allocation2 + $0x3c] sm:$0xe]
        %v3452 = vld [vmem:[#allocation2 + $0x48] sm:$0xe]
        %v3453 = vld [vmem:[#allocation2 + $0x54] sm:$0xe]
        %v3454 = vld [vmem:[#allocation2 + $0x60] sm:$0xe]
        %v3455 = vld [vmem:[#allocation2 + $0x6c] sm:$0xe]
        %v3456 = vld [vmem:[#allocation2 + $0x78] sm:$0xe]
        %v3457 = vld [vmem:[#allocation2 + $0x84] sm:$0xe]
        %v3458 = vld [vmem:[#allocation2 + $0x90] sm:$0xe]
        %v3459 = vld [vmem:[#allocation2 + $0x9c] sm:$0xe]
        %v3460 = vld [vmem:[#allocation2 + $0xa8] sm:$0xe]
        %v3461 = vld [vmem:[#allocation2 + $0xb4] sm:$0xe]
        %v3462 = vld [vmem:[#allocation2 + $0xd8] sm:$0xe]
        %v3463 = vld [vmem:[#allocation2 + $0xe4] sm:$0xe]
        %v3464 = vld [vmem:[#allocation2 + $0xf0] sm:$0xe]
        %v3465 = vld [vmem:[#allocation2 + $0xfc] sm:$0xe]
        %v3466 = vld [vmem:[#allocation2 + $0x108] sm:$0xe]
        %v3467 = vld [vmem:[#allocation2 + $0x114] sm:$0xe]
        %v3468 = vld [vmem:[#allocation2 + $0x120] sm:$0xe]
        %v3469 = vld [vmem:[#allocation2 + $0x12c] sm:$0xe]
        %v3470 = vld [vmem:[#allocation2 + $0x138] sm:$0xe]
        %v3471 = vld [vmem:[#allocation2 + $0x144] sm:$0xe]
        %v3472 = vld [vmem:[#allocation2 + $0x150] sm:$0xe]
        %v3473 = vld [vmem:[#allocation2 + $0x15c] sm:$0xe]
        %v3474 = vld [vmem:[#allocation2 + $0x168] sm:$0xe]
        %v3475 = vld [vmem:[#allocation2 + $0x174] sm:$0xe]
        %v3476 = vld [vmem:[#allocation2 + $0x180] sm:$0xe]
        %v3477 = vld [vmem:[#allocation2 + $0x18c] sm:$0xe]
        %vm3574 = vcmask 1042432
        %vm3575 = vcmask 1046532
        %vm3576 = vmor %vm3574, %vm3575
        %v3577 = vrot.slane %v3446, 5
        %v3578 = vrot.slane %v3577, 4
        %v3579 = vrot.slane %v2580, 5
        %v3580 = vsel %vm3576, %v3578, %v3579
        %v3581 = vrot.slane %v3579, 4
        %v3582 = vrot.slane %v2643, 5
        %v3583 = vsel %vm3576, %v3581, %v3582
        %v3584 = vrot.slane %v3447, 5
        %v3585 = vrot.slane %v3584, 4
        %v3586 = vrot.slane %v2582, 5
        %v3587 = vsel %vm3576, %v3585, %v3586
        %v3588 = vrot.slane %v3586, 4
        %v3589 = vrot.slane %v2644, 5
        %v3590 = vsel %vm3576, %v3588, %v3589
        %v3591 = vrot.slane %v3448, 5
        %v3592 = vrot.slane %v3591, 4
        %v3593 = vrot.slane %v2584, 5
        %v3594 = vsel %vm3576, %v3592, %v3593
        %v3595 = vrot.slane %v3593, 4
        %v3596 = vrot.slane %v2645, 5
        %v3597 = vsel %vm3576, %v3595, %v3596
        %v3598 = vrot.slane %v3449, 5
        %v3599 = vrot.slane %v3598, 4
        %v3600 = vrot.slane %v2586, 5
        %v3601 = vsel %vm3576, %v3599, %v3600
        %v3602 = vrot.slane %v3600, 4
        %v3603 = vrot.slane %v2646, 5
        %v3604 = vsel %vm3576, %v3602, %v3603
        %v3605 = vrot.slane %v3450, 5
        %v3606 = vrot.slane %v3605, 4
        %v3607 = vrot.slane %v2588, 5
        %v3608 = vsel %vm3576, %v3606, %v3607
        %v3609 = vrot.slane %v3607, 4
        %v3610 = vrot.slane %v2647, 5
        %v3611 = vsel %vm3576, %v3609, %v3610
        %v3612 = vrot.slane %v3451, 5
        %v3613 = vrot.slane %v3612, 4
        %v3614 = vrot.slane %v2590, 5
        %v3615 = vsel %vm3576, %v3613, %v3614
        %v3616 = vrot.slane %v3614, 4
        %v3617 = vrot.slane %v2648, 5
        %v3618 = vsel %vm3576, %v3616, %v3617
        %v3619 = vrot.slane %v3452, 5
        %v3620 = vrot.slane %v3619, 4
        %v3621 = vrot.slane %v2592, 5
        %v3622 = vsel %vm3576, %v3620, %v3621
        %v3623 = vrot.slane %v3621, 4
        %v3624 = vrot.slane %v2649, 5
        %v3625 = vsel %vm3576, %v3623, %v3624
        %v3626 = vrot.slane %v3453, 5
        %v3627 = vrot.slane %v3626, 4
        %v3628 = vrot.slane %v2594, 5
        %v3629 = vsel %vm3576, %v3627, %v3628
        %v3630 = vrot.slane %v3628, 4
        %v3631 = vrot.slane %v2650, 5
        %v3632 = vsel %vm3576, %v3630, %v3631
        %v3633 = vrot.slane %v3454, 5
        %v3634 = vrot.slane %v3633, 4
        %v3635 = vrot.slane %v2596, 5
        %v3636 = vsel %vm3576, %v3634, %v3635
        %v3637 = vrot.slane %v3635, 4
        %v3638 = vrot.slane %v2651, 5
        %v3639 = vsel %vm3576, %v3637, %v3638
        %v3640 = vrot.slane %v3455, 5
        %v3641 = vrot.slane %v3640, 4
        %v3642 = vrot.slane %v2598, 5
        %v3643 = vsel %vm3576, %v3641, %v3642
        %v3644 = vrot.slane %v3642, 4
        %v3645 = vrot.slane %v2652, 5
        %v3646 = vsel %vm3576, %v3644, %v3645
        %v3647 = vrot.slane %v3456, 5
        %v3648 = vrot.slane %v3647, 4
        %v3649 = vrot.slane %v2600, 5
        %v3650 = vsel %vm3576, %v3648, %v3649
        %v3651 = vrot.slane %v3649, 4
        %v3652 = vrot.slane %v2653, 5
        %v3653 = vsel %vm3576, %v3651, %v3652
        %v3654 = vrot.slane %v3457, 5
        %v3655 = vrot.slane %v3654, 4
        %v3656 = vrot.slane %v2602, 5
        %v3657 = vsel %vm3576, %v3655, %v3656
        %v3658 = vrot.slane %v3656, 4
        %v3659 = vrot.slane %v2654, 5
        %v3660 = vsel %vm3576, %v3658, %v3659
        %v3661 = vrot.slane %v3458, 5
        %v3662 = vrot.slane %v3661, 4
        %v3663 = vrot.slane %v2604, 5
        %v3664 = vsel %vm3576, %v3662, %v3663
        %v3665 = vrot.slane %v3663, 4
        %v3666 = vrot.slane %v2655, 5
        %v3667 = vsel %vm3576, %v3665, %v3666
        %v3668 = vrot.slane %v3459, 5
        %v3669 = vrot.slane %v3668, 4
        %v3670 = vrot.slane %v2606, 5
        %v3671 = vsel %vm3576, %v3669, %v3670
        %v3672 = vrot.slane %v3670, 4
        %v3673 = vrot.slane %v2656, 5
        %v3674 = vsel %vm3576, %v3672, %v3673
        %v3675 = vrot.slane %v3460, 5
        %v3676 = vrot.slane %v3675, 4
        %v3677 = vrot.slane %v2608, 5
        %v3678 = vsel %vm3576, %v3676, %v3677
        %v3679 = vrot.slane %v3677, 4
        %v3680 = vrot.slane %v2657, 5
        %v3681 = vsel %vm3576, %v3679, %v3680
        %v3682 = vrot.slane %v3461, 5
        %v3683 = vrot.slane %v3682, 4
        %v3684 = vrot.slane %v2610, 5
        %v3685 = vsel %vm3576, %v3683, %v3684
        %v3686 = vrot.slane %v3684, 4
        %v3687 = vrot.slane %v2658, 5
        %v3688 = vsel %vm3576, %v3686, %v3687
        %v3689 = vrot.slane %v3462, 5
        %v3690 = vrot.slane %v3689, 4
        %v3691 = vrot.slane %v2612, 5
        %v3692 = vsel %vm3576, %v3690, %v3691
        %v3693 = vrot.slane %v3691, 4
        %v3694 = vrot.slane %v2659, 5
        %v3695 = vsel %vm3576, %v3693, %v3694
        %v3696 = vrot.slane %v3463, 5
        %v3697 = vrot.slane %v3696, 4
        %v3698 = vrot.slane %v2614, 5
        %v3699 = vsel %vm3576, %v3697, %v3698
        %v3700 = vrot.slane %v3698, 4
        %v3701 = vrot.slane %v2660, 5
        %v3702 = vsel %vm3576, %v3700, %v3701
        %v3703 = vrot.slane %v3464, 5
        %v3704 = vrot.slane %v3703, 4
        %v3705 = vrot.slane %v2616, 5
        %v3706 = vsel %vm3576, %v3704, %v3705
        %v3707 = vrot.slane %v3705, 4
        %v3708 = vrot.slane %v2661, 5
        %v3709 = vsel %vm3576, %v3707, %v3708
        %v3710 = vrot.slane %v3465, 5
        %v3711 = vrot.slane %v3710, 4
        %v3712 = vrot.slane %v2618, 5
        %v3713 = vsel %vm3576, %v3711, %v3712
        %v3714 = vrot.slane %v3712, 4
        %v3715 = vrot.slane %v2662, 5
        %v3716 = vsel %vm3576, %v3714, %v3715
        %v3717 = vrot.slane %v3466, 5
        %v3718 = vrot.slane %v3717, 4
        %v3719 = vrot.slane %v2620, 5
        %v3720 = vsel %vm3576, %v3718, %v3719
        %v3721 = vrot.slane %v3719, 4
        %v3722 = vrot.slane %v2663, 5
        %v3723 = vsel %vm3576, %v3721, %v3722
        %v3724 = vrot.slane %v3467, 5
        %v3725 = vrot.slane %v3724, 4
        %v3726 = vrot.slane %v2622, 5
        %v3727 = vsel %vm3576, %v3725, %v3726
        %v3728 = vrot.slane %v3726, 4
        %v3729 = vrot.slane %v2664, 5
        %v3730 = vsel %vm3576, %v3728, %v3729
        %v3731 = vrot.slane %v3468, 5
        %v3732 = vrot.slane %v3731, 4
        %v3733 = vrot.slane %v2624, 5
        %v3734 = vsel %vm3576, %v3732, %v3733
        %v3735 = vrot.slane %v3733, 4
        %v3736 = vrot.slane %v2665, 5
        %v3737 = vsel %vm3576, %v3735, %v3736
        %v3738 = vrot.slane %v3469, 5
        %v3739 = vrot.slane %v3738, 4
        %v3740 = vrot.slane %v2626, 5
        %v3741 = vsel %vm3576, %v3739, %v3740
        %v3742 = vrot.slane %v3740, 4
        %v3743 = vrot.slane %v2666, 5
        %v3744 = vsel %vm3576, %v3742, %v3743
        %v3745 = vrot.slane %v3470, 5
        %v3746 = vrot.slane %v3745, 4
        %v3747 = vrot.slane %v2628, 5
        %v3748 = vsel %vm3576, %v3746, %v3747
        %v3749 = vrot.slane %v3747, 4
        %v3750 = vrot.slane %v2667, 5
        %v3751 = vsel %vm3576, %v3749, %v3750
        %v3752 = vrot.slane %v3471, 5
        %v3753 = vrot.slane %v3752, 4
        %v3754 = vrot.slane %v2630, 5
        %v3755 = vsel %vm3576, %v3753, %v3754
        %v3756 = vrot.slane %v3754, 4
        %v3757 = vrot.slane %v2668, 5
        %v3758 = vsel %vm3576, %v3756, %v3757
        %v3759 = vrot.slane %v3472, 5
        %v3760 = vrot.slane %v3759, 4
        %v3761 = vrot.slane %v2632, 5
        %v3762 = vsel %vm3576, %v3760, %v3761
        %v3763 = vrot.slane %v3761, 4
        %v3764 = vrot.slane %v2669, 5
        %v3765 = vsel %vm3576, %v3763, %v3764
        %v3766 = vrot.slane %v3473, 5
        %v3767 = vrot.slane %v3766, 4
        %v3768 = vrot.slane %v2634, 5
        %v3769 = vsel %vm3576, %v3767, %v3768
        %v3770 = vrot.slane %v3768, 4
        %v3771 = vrot.slane %v2670, 5
        %v3772 = vsel %vm3576, %v3770, %v3771
        %v3773 = vrot.slane %v3474, 5
        %v3774 = vrot.slane %v3773, 4
        %v3775 = vrot.slane %v2636, 5
        %v3776 = vsel %vm3576, %v3774, %v3775
        %v3777 = vrot.slane %v3775, 4
        %v3778 = vrot.slane %v2671, 5
        %v3779 = vsel %vm3576, %v3777, %v3778
        %v3780 = vrot.slane %v3475, 5
        %v3781 = vrot.slane %v3780, 4
        %v3782 = vrot.slane %v2638, 5
        %v3783 = vsel %vm3576, %v3781, %v3782
        %v3784 = vrot.slane %v3782, 4
        %v3785 = vrot.slane %v2672, 5
        %v3786 = vsel %vm3576, %v3784, %v3785
        %v3787 = vrot.slane %v3476, 5
        %v3788 = vrot.slane %v3787, 4
        %v3789 = vrot.slane %v2640, 5
        %v3790 = vsel %vm3576, %v3788, %v3789
        %v3791 = vrot.slane %v3789, 4
        %v3792 = vrot.slane %v2673, 5
        %v3793 = vsel %vm3576, %v3791, %v3792
        %v3794 = vrot.slane %v3477, 5
        %v3795 = vrot.slane %v3794, 4
        %v3796 = vrot.slane %v2642, 5
        %v3797 = vsel %vm3576, %v3795, %v3796
        %v3798 = vrot.slane %v3796, 4
        %v3799 = vrot.slane %v2674, 5
        %v3800 = vsel %vm3576, %v3798, %v3799
        %v3833 = vunpack.c.l.b16 %v2579
        %v3834 = vunpack.c.l.b16 %v2580
        %v3835 = vunpack.c.l.b16 %v2581
        %v3836 = vunpack.c.l.b16 %v2582
        %v3837 = vunpack.c.l.b16 %v2583
        %v3838 = vunpack.c.l.b16 %v2584
        %v3839 = vunpack.c.l.b16 %v2585
        %v3840 = vunpack.c.l.b16 %v2586
        %v3841 = vunpack.c.l.b16 %v2587
        %v3842 = vunpack.c.l.b16 %v2588
        %v3843 = vunpack.c.l.b16 %v2589
        %v3844 = vunpack.c.l.b16 %v2590
        %v3845 = vunpack.c.l.b16 %v2591
        %v3846 = vunpack.c.l.b16 %v2592
        %v3847 = vunpack.c.l.b16 %v2593
        %v3848 = vunpack.c.l.b16 %v2594
        %v3849 = vunpack.c.l.b16 %v2595
        %v3850 = vunpack.c.l.b16 %v2596
        %v3851 = vunpack.c.l.b16 %v2597
        %v3852 = vunpack.c.l.b16 %v2598
        %v3853 = vunpack.c.l.b16 %v2599
        %v3854 = vunpack.c.l.b16 %v2600
        %v3855 = vunpack.c.l.b16 %v2601
        %v3856 = vunpack.c.l.b16 %v2602
        %v3857 = vunpack.c.l.b16 %v2603
        %v3858 = vunpack.c.l.b16 %v2604
        %v3859 = vunpack.c.l.b16 %v2605
        %v3860 = vunpack.c.l.b16 %v2606
        %v3861 = vunpack.c.l.b16 %v2607
        %v3862 = vunpack.c.l.b16 %v2608
        %v3863 = vunpack.c.l.b16 %v2609
        %v3864 = vunpack.c.l.b16 %v2610
        %v3865 = vunpack.c.l.b16 %v2611
        %v3866 = vunpack.c.l.b16 %v2612
        %v3867 = vunpack.c.l.b16 %v2613
        %v3868 = vunpack.c.l.b16 %v2614
        %v3869 = vunpack.c.l.b16 %v2615
        %v3870 = vunpack.c.l.b16 %v2616
        %v3871 = vunpack.c.l.b16 %v2617
        %v3872 = vunpack.c.l.b16 %v2618
        %v3873 = vunpack.c.l.b16 %v2619
        %v3874 = vunpack.c.l.b16 %v2620
        %v3875 = vunpack.c.l.b16 %v2621
        %v3876 = vunpack.c.l.b16 %v2622
        %v3877 = vunpack.c.l.b16 %v2623
        %v3878 = vunpack.c.l.b16 %v2624
        %v3879 = vunpack.c.l.b16 %v2625
        %v3880 = vunpack.c.l.b16 %v2626
        %v3881 = vunpack.c.l.b16 %v2627
        %v3882 = vunpack.c.l.b16 %v2628
        %v3883 = vunpack.c.l.b16 %v2629
        %v3884 = vunpack.c.l.b16 %v2630
        %v3885 = vunpack.c.l.b16 %v2631
        %v3886 = vunpack.c.l.b16 %v2632
        %v3887 = vunpack.c.l.b16 %v2633
        %v3888 = vunpack.c.l.b16 %v2634
        %v3889 = vunpack.c.l.b16 %v2635
        %v3890 = vunpack.c.l.b16 %v2636
        %v3891 = vunpack.c.l.b16 %v2637
        %v3892 = vunpack.c.l.b16 %v2638
        %v3893 = vunpack.c.l.b16 %v2639
        %v3894 = vunpack.c.l.b16 %v2640
        %v3895 = vunpack.c.l.b16 %v2641
        %v3896 = vunpack.c.l.b16 %v2642
        %v3897 = vpack.c.b16 %v3834, %v3833
        %v3898 = vpack.c.b16 %v3836, %v3835
        %v3899 = vpack.c.b16 %v3838, %v3837
        %v3900 = vpack.c.b16 %v3840, %v3839
        %v3901 = vpack.c.b16 %v3842, %v3841
        %v3902 = vpack.c.b16 %v3844, %v3843
        %v3903 = vpack.c.b16 %v3846, %v3845
        %v3904 = vpack.c.b16 %v3848, %v3847
        %v3905 = vpack.c.b16 %v3850, %v3849
        %v3906 = vpack.c.b16 %v3852, %v3851
        %v3907 = vpack.c.b16 %v3854, %v3853
        %v3908 = vpack.c.b16 %v3856, %v3855
        %v3909 = vpack.c.b16 %v3858, %v3857
        %v3910 = vpack.c.b16 %v3860, %v3859
        %v3911 = vpack.c.b16 %v3862, %v3861
        %v3912 = vpack.c.b16 %v3864, %v3863
        %v3913 = vpack.c.b16 %v3866, %v3865
        %v3914 = vpack.c.b16 %v3868, %v3867
        %v3915 = vpack.c.b16 %v3870, %v3869
        %v3916 = vpack.c.b16 %v3872, %v3871
        %v3917 = vpack.c.b16 %v3874, %v3873
        %v3918 = vpack.c.b16 %v3876, %v3875
        %v3919 = vpack.c.b16 %v3878, %v3877
        %v3920 = vpack.c.b16 %v3880, %v3879
        %v3921 = vpack.c.b16 %v3882, %v3881
        %v3922 = vpack.c.b16 %v3884, %v3883
        %v3923 = vpack.c.b16 %v3886, %v3885
        %v3924 = vpack.c.b16 %v3888, %v3887
        %v3925 = vpack.c.b16 %v3890, %v3889
        %v3926 = vpack.c.b16 %v3892, %v3891
        %v3927 = vpack.c.b16 %v3894, %v3893
        %v3928 = vpack.c.b16 %v3896, %v3895
        %v3929 = vunpack.c.l.b16 %v2691
        %v3930 = vunpack.c.l.b16 %v2701
        %v3931 = vunpack.c.l.b16 %v2715
        %v3932 = vunpack.c.l.b16 %v2725
        %v3933 = vunpack.c.l.b16 %v2739
        %v3934 = vunpack.c.l.b16 %v2749
        %v3935 = vunpack.c.l.b16 %v2763
        %v3936 = vunpack.c.l.b16 %v2773
        %v3937 = vunpack.c.l.b16 %v2787
        %v3938 = vunpack.c.l.b16 %v2797
        %v3939 = vunpack.c.l.b16 %v2811
        %v3940 = vunpack.c.l.b16 %v2821
        %v3941 = vunpack.c.l.b16 %v2835
        %v3942 = vunpack.c.l.b16 %v2845
        %v3943 = vunpack.c.l.b16 %v2859
        %v3944 = vunpack.c.l.b16 %v2869
        %v3945 = vunpack.c.l.b16 %v2883
        %v3946 = vunpack.c.l.b16 %v2893
        %v3947 = vunpack.c.l.b16 %v2907
        %v3948 = vunpack.c.l.b16 %v2917
        %v3949 = vunpack.c.l.b16 %v2931
        %v3950 = vunpack.c.l.b16 %v2941
        %v3951 = vunpack.c.l.b16 %v2955
        %v3952 = vunpack.c.l.b16 %v2965
        %v3953 = vunpack.c.l.b16 %v2979
        %v3954 = vunpack.c.l.b16 %v2989
        %v3955 = vunpack.c.l.b16 %v3003
        %v3956 = vunpack.c.l.b16 %v3013
        %v3957 = vunpack.c.l.b16 %v3027
        %v3958 = vunpack.c.l.b16 %v3037
        %v3959 = vunpack.c.l.b16 %v3051
        %v3960 = vunpack.c.l.b16 %v3061
        %v3961 = vunpack.c.l.b16 %v3075
        %v3962 = vunpack.c.l.b16 %v3085
        %v3963 = vunpack.c.l.b16 %v3099
        %v3964 = vunpack.c.l.b16 %v3109
        %v3965 = vunpack.c.l.b16 %v3123
        %v3966 = vunpack.c.l.b16 %v3133
        %v3967 = vunpack.c.l.b16 %v3147
        %v3968 = vunpack.c.l.b16 %v3157
        %v3969 = vunpack.c.l.b16 %v3171
        %v3970 = vunpack.c.l.b16 %v3181
        %v3971 = vunpack.c.l.b16 %v3195
        %v3972 = vunpack.c.l.b16 %v3205
        %v3973 = vunpack.c.l.b16 %v3219
        %v3974 = vunpack.c.l.b16 %v3229
        %v3975 = vunpack.c.l.b16 %v3243
        %v3976 = vunpack.c.l.b16 %v3253
        %v3977 = vunpack.c.l.b16 %v3267
        %v3978 = vunpack.c.l.b16 %v3277
        %v3979 = vunpack.c.l.b16 %v3291
        %v3980 = vunpack.c.l.b16 %v3301
        %v3981 = vunpack.c.l.b16 %v3315
        %v3982 = vunpack.c.l.b16 %v3325
        %v3983 = vunpack.c.l.b16 %v3339
        %v3984 = vunpack.c.l.b16 %v3349
        %v3985 = vunpack.c.l.b16 %v3363
        %v3986 = vunpack.c.l.b16 %v3373
        %v3987 = vunpack.c.l.b16 %v3387
        %v3988 = vunpack.c.l.b16 %v3397
        %v3989 = vunpack.c.l.b16 %v3411
        %v3990 = vunpack.c.l.b16 %v3421
        %v3991 = vunpack.c.l.b16 %v3435
        %v3992 = vunpack.c.l.b16 %v3445
        %v3993 = vpack.c.b16 %v3930, %v3929
        %v3994 = vpack.c.b16 %v3932, %v3931
        %v3995 = vpack.c.b16 %v3934, %v3933
        %v3996 = vpack.c.b16 %v3936, %v3935
        %v3997 = vpack.c.b16 %v3938, %v3937
        %v3998 = vpack.c.b16 %v3940, %v3939
        %v3999 = vpack.c.b16 %v3942, %v3941
        %v4000 = vpack.c.b16 %v3944, %v3943
        %v4001 = vpack.c.b16 %v3946, %v3945
        %v4002 = vpack.c.b16 %v3948, %v3947
        %v4003 = vpack.c.b16 %v3950, %v3949
        %v4004 = vpack.c.b16 %v3952, %v3951
        %v4005 = vpack.c.b16 %v3954, %v3953
        %v4006 = vpack.c.b16 %v3956, %v3955
        %v4007 = vpack.c.b16 %v3958, %v3957
        %v4008 = vpack.c.b16 %v3960, %v3959
        %v4009 = vpack.c.b16 %v3962, %v3961
        %v4010 = vpack.c.b16 %v3964, %v3963
        %v4011 = vpack.c.b16 %v3966, %v3965
        %v4012 = vpack.c.b16 %v3968, %v3967
        %v4013 = vpack.c.b16 %v3970, %v3969
        %v4014 = vpack.c.b16 %v3972, %v3971
        %v4015 = vpack.c.b16 %v3974, %v3973
        %v4016 = vpack.c.b16 %v3976, %v3975
        %v4017 = vpack.c.b16 %v3978, %v3977
        %v4018 = vpack.c.b16 %v3980, %v3979
        %v4019 = vpack.c.b16 %v3982, %v3981
        %v4020 = vpack.c.b16 %v3984, %v3983
        %v4021 = vpack.c.b16 %v3986, %v3985
        %v4022 = vpack.c.b16 %v3988, %v3987
        %v4023 = vpack.c.b16 %v3990, %v3989
        %v4024 = vpack.c.b16 %v3992, %v3991
        %4025 = vrot.lane.b32.xlu0 %v3993, 64
        %v4026 = vpop.permute.xlu0 %4025
        %4027 = vrot.lane.b32.xlu0 %v3994, 64
        %v4028 = vpop.permute.xlu0 %4027
        %4029 = vrot.lane.b32.xlu0 %v3995, 64
        %v4030 = vpop.permute.xlu0 %4029
        %4031 = vrot.lane.b32.xlu0 %v3996, 64
        %v4032 = vpop.permute.xlu0 %4031
        %4033 = vrot.lane.b32.xlu0 %v3997, 64
        %v4034 = vpop.permute.xlu0 %4033
        %4035 = vrot.lane.b32.xlu0 %v3998, 64
        %v4036 = vpop.permute.xlu0 %4035
        %4037 = vrot.lane.b32.xlu0 %v3999, 64
        %v4038 = vpop.permute.xlu0 %4037
        %4039 = vrot.lane.b32.xlu0 %v4000, 64
        %v4040 = vpop.permute.xlu0 %4039
        %4041 = vrot.lane.b32.xlu0 %v4001, 64
        %v4042 = vpop.permute.xlu0 %4041
        %4043 = vrot.lane.b32.xlu0 %v4002, 64
        %v4044 = vpop.permute.xlu0 %4043
        %4045 = vrot.lane.b32.xlu0 %v4003, 64
        %v4046 = vpop.permute.xlu0 %4045
        %4047 = vrot.lane.b32.xlu0 %v4004, 64
        %v4048 = vpop.permute.xlu0 %4047
        %4049 = vrot.lane.b32.xlu0 %v4005, 64
        %v4050 = vpop.permute.xlu0 %4049
        %4051 = vrot.lane.b32.xlu0 %v4006, 64
        %v4052 = vpop.permute.xlu0 %4051
        %4053 = vrot.lane.b32.xlu0 %v4007, 64
        %v4054 = vpop.permute.xlu0 %4053
        %4055 = vrot.lane.b32.xlu0 %v4008, 64
        %v4056 = vpop.permute.xlu0 %4055
        %4057 = vrot.lane.b32.xlu0 %v4009, 64
        %v4058 = vpop.permute.xlu0 %4057
        %4059 = vrot.lane.b32.xlu0 %v4010, 64
        %v4060 = vpop.permute.xlu0 %4059
        %4061 = vrot.lane.b32.xlu0 %v4011, 64
        %v4062 = vpop.permute.xlu0 %4061
        %4063 = vrot.lane.b32.xlu0 %v4012, 64
        %v4064 = vpop.permute.xlu0 %4063
        %4065 = vrot.lane.b32.xlu0 %v4013, 64
        %v4066 = vpop.permute.xlu0 %4065
        %4067 = vrot.lane.b32.xlu0 %v4014, 64
        %v4068 = vpop.permute.xlu0 %4067
        %4069 = vrot.lane.b32.xlu0 %v4015, 64
        %v4070 = vpop.permute.xlu0 %4069
        %4071 = vrot.lane.b32.xlu0 %v4016, 64
        %v4072 = vpop.permute.xlu0 %4071
        %4073 = vrot.lane.b32.xlu0 %v4017, 64
        %v4074 = vpop.permute.xlu0 %4073
        %4075 = vrot.lane.b32.xlu0 %v4018, 64
        %v4076 = vpop.permute.xlu0 %4075
        %4077 = vrot.lane.b32.xlu0 %v4019, 64
        %v4078 = vpop.permute.xlu0 %4077
        %4079 = vrot.lane.b32.xlu0 %v4020, 64
        %v4080 = vpop.permute.xlu0 %4079
        %4081 = vrot.lane.b32.xlu0 %v4021, 64
        %v4082 = vpop.permute.xlu0 %4081
        %4083 = vrot.lane.b32.xlu0 %v4022, 64
        %v4084 = vpop.permute.xlu0 %4083
        %4085 = vrot.lane.b32.xlu0 %v4023, 64
        %v4086 = vpop.permute.xlu0 %4085
        %4087 = vrot.lane.b32.xlu0 %v4024, 64
        %v4088 = vpop.permute.xlu0 %4087
        %v4089 = vunpack.c.l.b16 %v3580
        %v4090 = vunpack.c.l.b16 %v3583
        %v4091 = vunpack.c.l.b16 %v3587
        %v4092 = vunpack.c.l.b16 %v3590
        %v4093 = vunpack.c.l.b16 %v3594
        %v4094 = vunpack.c.l.b16 %v3597
        %v4095 = vunpack.c.l.b16 %v3601
        %v4096 = vunpack.c.l.b16 %v3604
        %v4097 = vunpack.c.l.b16 %v3608
        %v4098 = vunpack.c.l.b16 %v3611
        %v4099 = vunpack.c.l.b16 %v3615
        %v4100 = vunpack.c.l.b16 %v3618
        %v4101 = vunpack.c.l.b16 %v3622
        %v4102 = vunpack.c.l.b16 %v3625
        %v4103 = vunpack.c.l.b16 %v3629
        %v4104 = vunpack.c.l.b16 %v3632
        %v4105 = vunpack.c.l.b16 %v3636
        %v4106 = vunpack.c.l.b16 %v3639
        %v4107 = vunpack.c.l.b16 %v3643
        %v4108 = vunpack.c.l.b16 %v3646
        %v4109 = vunpack.c.l.b16 %v3650
        %v4110 = vunpack.c.l.b16 %v3653
        %v4111 = vunpack.c.l.b16 %v3657
        %v4112 = vunpack.c.l.b16 %v3660
        %v4113 = vunpack.c.l.b16 %v3664
        %v4114 = vunpack.c.l.b16 %v3667
        %v4115 = vunpack.c.l.b16 %v3671
        %v4116 = vunpack.c.l.b16 %v3674
        %v4117 = vunpack.c.l.b16 %v3678
        %v4118 = vunpack.c.l.b16 %v3681
        %v4119 = vunpack.c.l.b16 %v3685
        %v4120 = vunpack.c.l.b16 %v3688
        %v4121 = vunpack.c.l.b16 %v3692
        %v4122 = vunpack.c.l.b16 %v3695
        %v4123 = vunpack.c.l.b16 %v3699
        %v4124 = vunpack.c.l.b16 %v3702
        %v4125 = vunpack.c.l.b16 %v3706
        %v4126 = vunpack.c.l.b16 %v3709
        %v4127 = vunpack.c.l.b16 %v3713
        %v4128 = vunpack.c.l.b16 %v3716
        %v4129 = vunpack.c.l.b16 %v3720
        %v4130 = vunpack.c.l.b16 %v3723
        %v4131 = vunpack.c.l.b16 %v3727
        %v4132 = vunpack.c.l.b16 %v3730
        %v4133 = vunpack.c.l.b16 %v3734
        %v4134 = vunpack.c.l.b16 %v3737
        %v4135 = vunpack.c.l.b16 %v3741
        %v4136 = vunpack.c.l.b16 %v3744
        %v4137 = vunpack.c.l.b16 %v3748
        %v4138 = vunpack.c.l.b16 %v3751
        %v4139 = vunpack.c.l.b16 %v3755
        %v4140 = vunpack.c.l.b16 %v3758
        %v4141 = vunpack.c.l.b16 %v3762
        %v4142 = vunpack.c.l.b16 %v3765
        %v4143 = vunpack.c.l.b16 %v3769
        %v4144 = vunpack.c.l.b16 %v3772
        %v4145 = vunpack.c.l.b16 %v3776
        %v4146 = vunpack.c.l.b16 %v3779
        %v4147 = vunpack.c.l.b16 %v3783
        %v4148 = vunpack.c.l.b16 %v3786
        %v4149 = vunpack.c.l.b16 %v3790
        %v4150 = vunpack.c.l.b16 %v3793
        %v4151 = vunpack.c.l.b16 %v3797
        %v4152 = vunpack.c.l.b16 %v3800
        %v4153 = vpack.c.b16 %v4090, %v4089
        %v4154 = vpack.c.b16 %v4092, %v4091
        %v4155 = vpack.c.b16 %v4094, %v4093
        %v4156 = vpack.c.b16 %v4096, %v4095
        %v4157 = vpack.c.b16 %v4098, %v4097
        %v4158 = vpack.c.b16 %v4100, %v4099
        %v4159 = vpack.c.b16 %v4102, %v4101
        %v4160 = vpack.c.b16 %v4104, %v4103
        %v4161 = vpack.c.b16 %v4106, %v4105
        %v4162 = vpack.c.b16 %v4108, %v4107
        %v4163 = vpack.c.b16 %v4110, %v4109
        %v4164 = vpack.c.b16 %v4112, %v4111
        %v4165 = vpack.c.b16 %v4114, %v4113
        %v4166 = vpack.c.b16 %v4116, %v4115
        %v4167 = vpack.c.b16 %v4118, %v4117
        %v4168 = vpack.c.b16 %v4120, %v4119
        %v4169 = vpack.c.b16 %v4122, %v4121
        %v4170 = vpack.c.b16 %v4124, %v4123
        %v4171 = vpack.c.b16 %v4126, %v4125
        %v4172 = vpack.c.b16 %v4128, %v4127
        %v4173 = vpack.c.b16 %v4130, %v4129
        %v4174 = vpack.c.b16 %v4132, %v4131
        %v4175 = vpack.c.b16 %v4134, %v4133
        %v4176 = vpack.c.b16 %v4136, %v4135
        %v4177 = vpack.c.b16 %v4138, %v4137
        %v4178 = vpack.c.b16 %v4140, %v4139
        %v4179 = vpack.c.b16 %v4142, %v4141
        %v4180 = vpack.c.b16 %v4144, %v4143
        %v4181 = vpack.c.b16 %v4146, %v4145
        %v4182 = vpack.c.b16 %v4148, %v4147
        %v4183 = vpack.c.b16 %v4150, %v4149
        %v4184 = vpack.c.b16 %v4152, %v4151
        %vm4185 = vcmask 523264
        %v4188 = vsel %vm4185, %v3897, %v4026
        %v4192 = vsel %vm4185, %v3898, %v4028
        %v4196 = vsel %vm4185, %v3899, %v4030
        %v4200 = vsel %vm4185, %v3900, %v4032
        %v4204 = vsel %vm4185, %v3901, %v4034
        %v4208 = vsel %vm4185, %v3902, %v4036
        %v4212 = vsel %vm4185, %v3903, %v4038
        %v4216 = vsel %vm4185, %v3904, %v4040
        %v4220 = vsel %vm4185, %v3905, %v4042
        %v4224 = vsel %vm4185, %v3906, %v4044
        %v4228 = vsel %vm4185, %v3907, %v4046
        %v4232 = vsel %vm4185, %v3908, %v4048
        %v4236 = vsel %vm4185, %v3909, %v4050
        %v4240 = vsel %vm4185, %v3910, %v4052
        %v4244 = vsel %vm4185, %v3911, %v4054
        %v4248 = vsel %vm4185, %v3912, %v4056
        %v4252 = vsel %vm4185, %v3913, %v4058
        %v4256 = vsel %vm4185, %v3914, %v4060
        %v4260 = vsel %vm4185, %v3915, %v4062
        %v4264 = vsel %vm4185, %v3916, %v4064
        %v4268 = vsel %vm4185, %v3917, %v4066
        %v4272 = vsel %vm4185, %v3918, %v4068
        %v4276 = vsel %vm4185, %v3919, %v4070
        %v4280 = vsel %vm4185, %v3920, %v4072
        %v4284 = vsel %vm4185, %v3921, %v4074
        %v4288 = vsel %vm4185, %v3922, %v4076
        %v4292 = vsel %vm4185, %v3923, %v4078
        %v4296 = vsel %vm4185, %v3924, %v4080
        %v4300 = vsel %vm4185, %v3925, %v4082
        %v4304 = vsel %vm4185, %v3926, %v4084
        %v4308 = vsel %vm4185, %v3927, %v4086
        %v4312 = vsel %vm4185, %v3928, %v4088
        %v4314 = vld [vmem:[%s4] sm:$0xf]
        %v4315 = vld [vmem:[%s4 + $0x4] sm:$0xf]
        %v4316 = vld [vmem:[%s4 + $0x8] sm:$0xf]
        %v4317 = vld [vmem:[%s4 + $0xc] sm:$0xf]
        %v4318 = vld [vmem:[%s4 + $0x10] sm:$0xf]
        %v4319 = vld [vmem:[%s4 + $0x14] sm:$0xf]
        %v4320 = vld [vmem:[%s4 + $0x18] sm:$0xf]
        %v4321 = vld [vmem:[%s4 + $0x1c] sm:$0xf]
        %v4322 = vld [vmem:[%s4 + $0x20] sm:$0xf]
        %v4323 = vld [vmem:[%s4 + $0x24] sm:$0xf]
        %v4324 = vld [vmem:[%s4 + $0x28] sm:$0xf]
        %v4325 = vld [vmem:[%s4 + $0x2c] sm:$0xf]
        %v4326 = vld [vmem:[%s4 + $0x30] sm:$0xf]
        %v4327 = vld [vmem:[%s4 + $0x34] sm:$0xf]
        %v4328 = vld [vmem:[%s4 + $0x38] sm:$0xf]
        %v4329 = vld [vmem:[%s4 + $0x3c] sm:$0xf]
        %v4330 = vld [vmem:[%s4 + $0x40] sm:$0xf]
        %v4331 = vld [vmem:[%s4 + $0x44] sm:$0xf]
        %v4332 = vld [vmem:[%s4 + $0x48] sm:$0xf]
        %v4333 = vld [vmem:[%s4 + $0x4c] sm:$0xf]
        %v4334 = vld [vmem:[%s4 + $0x50] sm:$0xf]
        %v4335 = vld [vmem:[%s4 + $0x54] sm:$0xf]
        %v4336 = vld [vmem:[%s4 + $0x58] sm:$0xf]
        %v4337 = vld [vmem:[%s4 + $0x5c] sm:$0xf]
        %v4338 = vld [vmem:[%s1449] sm:$0xf]
        %v4339 = vld [vmem:[%s1449 + $0x4] sm:$0xf]
        %v4340 = vld [vmem:[%s1449 + $0xc] sm:$0xf]
        %v4341 = vld [vmem:[%s1449 + $0x10] sm:$0xf]
        %v4342 = vld [vmem:[%s1449 + $0x18] sm:$0xf]
        %v4343 = vld [vmem:[%s1449 + $0x1c] sm:$0xf]
        %v4344 = vld [vmem:[%s1449 + $0x24] sm:$0xf]
        %v4345 = vld [vmem:[%s1449 + $0x28] sm:$0xf]
        %v4346 = vld [vmem:[%s1449 + $0x30] sm:$0xf]
        %v4347 = vld [vmem:[%s1449 + $0x34] sm:$0xf]
        %v4348 = vld [vmem:[%s1449 + $0x3c] sm:$0xf]
        %v4349 = vld [vmem:[%s1449 + $0x40] sm:$0xf]
        %v4350 = vld [vmem:[%s1449 + $0x48] sm:$0xf]
        %v4351 = vld [vmem:[%s1449 + $0x4c] sm:$0xf]
        %v4352 = vld [vmem:[%s1449 + $0x54] sm:$0xf]
        %v4353 = vld [vmem:[%s1449 + $0x58] sm:$0xf]
        %v4354 = vld [vmem:[%s1449 + $0x60] sm:$0xf]
        %v4355 = vld [vmem:[%s1449 + $0x64] sm:$0xf]
        %v4356 = vld [vmem:[%s1449 + $0x6c] sm:$0xf]
        %v4357 = vld [vmem:[%s1449 + $0x70] sm:$0xf]
        %v4358 = vld [vmem:[%s1449 + $0x78] sm:$0xf]
        %v4359 = vld [vmem:[%s1449 + $0x7c] sm:$0xf]
        %v4360 = vld [vmem:[%s1449 + $0x84] sm:$0xf]
        %v4361 = vld [vmem:[%s1449 + $0x88] sm:$0xf]
        %v4362 = vld [vmem:[%s1449 + $0x90] sm:$0xf]
        %v4363 = vld [vmem:[%s1449 + $0x94] sm:$0xf]
        %v4364 = vld [vmem:[%s1449 + $0x9c] sm:$0xf]
        %v4365 = vld [vmem:[%s1449 + $0xa0] sm:$0xf]
        %v4366 = vld [vmem:[%s1449 + $0xa8] sm:$0xf]
        %v4367 = vld [vmem:[%s1449 + $0xac] sm:$0xf]
        %v4368 = vld [vmem:[%s1449 + $0xb4] sm:$0xf]
        %v4369 = vld [vmem:[%s1449 + $0xb8] sm:$0xf]
        %v4370 = vld [vmem:[%s1449 + $0xd8] sm:$0xf]
        %v4371 = vld [vmem:[%s1449 + $0xdc] sm:$0xf]
        %v4372 = vld [vmem:[%s1449 + $0xe4] sm:$0xf]
        %v4373 = vld [vmem:[%s1449 + $0xe8] sm:$0xf]
        %v4374 = vld [vmem:[%s1449 + $0xf0] sm:$0xf]
        %v4375 = vld [vmem:[%s1449 + $0xf4] sm:$0xf]
        %v4376 = vld [vmem:[%s1449 + $0xfc] sm:$0xf]
        %v4377 = vld [vmem:[%s1449 + $0x100] sm:$0xf]
        %v4378 = vld [vmem:[%s1449 + $0x108] sm:$0xf]
        %v4379 = vld [vmem:[%s1449 + $0x10c] sm:$0xf]
        %v4380 = vld [vmem:[%s1449 + $0x114] sm:$0xf]
        %v4381 = vld [vmem:[%s1449 + $0x118] sm:$0xf]
        %v4382 = vld [vmem:[%s1449 + $0x120] sm:$0xf]
        %v4383 = vld [vmem:[%s1449 + $0x124] sm:$0xf]
        %v4384 = vld [vmem:[%s1449 + $0x12c] sm:$0xf]
        %v4385 = vld [vmem:[%s1449 + $0x130] sm:$0xf]
        %v4386 = vld [vmem:[%s1449 + $0x138] sm:$0xf]
        %v4387 = vld [vmem:[%s1449 + $0x13c] sm:$0xf]
        %v4388 = vld [vmem:[%s1449 + $0x144] sm:$0xf]
        %v4389 = vld [vmem:[%s1449 + $0x148] sm:$0xf]
        %v4390 = vld [vmem:[%s1449 + $0x150] sm:$0xf]
        %v4391 = vld [vmem:[%s1449 + $0x154] sm:$0xf]
        %v4392 = vld [vmem:[%s1449 + $0x15c] sm:$0xf]
        %v4393 = vld [vmem:[%s1449 + $0x160] sm:$0xf]
        %v4394 = vld [vmem:[%s1449 + $0x168] sm:$0xf]
        %v4395 = vld [vmem:[%s1449 + $0x16c] sm:$0xf]
        %v4396 = vld [vmem:[%s1449 + $0x174] sm:$0xf]
        %v4397 = vld [vmem:[%s1449 + $0x178] sm:$0xf]
        %v4398 = vld [vmem:[%s1449 + $0x180] sm:$0xf]
        %v4399 = vld [vmem:[%s1449 + $0x184] sm:$0xf]
        %v4400 = vld [vmem:[%s1449 + $0x18c] sm:$0xf]
        %v4401 = vld [vmem:[%s1449 + $0x190] sm:$0xf]
        %v4402 = vld [vmem:[%s1449 + $0x8] sm:$0x1]
        %v4403 = vld [vmem:[%s1449 + $0x14] sm:$0x1]
        %v4404 = vld [vmem:[%s1449 + $0x20] sm:$0x1]
        %v4405 = vld [vmem:[%s1449 + $0x2c] sm:$0x1]
        %v4406 = vld [vmem:[%s1449 + $0x38] sm:$0x1]
        %v4407 = vld [vmem:[%s1449 + $0x44] sm:$0x1]
        %v4408 = vld [vmem:[%s1449 + $0x50] sm:$0x1]
        %v4409 = vld [vmem:[%s1449 + $0x5c] sm:$0x1]
        %v4410 = vld [vmem:[%s1449 + $0x68] sm:$0x1]
        %v4411 = vld [vmem:[%s1449 + $0x74] sm:$0x1]
        %v4412 = vld [vmem:[%s1449 + $0x80] sm:$0x1]
        %v4413 = vld [vmem:[%s1449 + $0x8c] sm:$0x1]
        %v4414 = vld [vmem:[%s1449 + $0x98] sm:$0x1]
        %v4415 = vld [vmem:[%s1449 + $0xa4] sm:$0x1]
        %v4416 = vld [vmem:[%s1449 + $0xb0] sm:$0x1]
        %v4417 = vld [vmem:[%s1449 + $0xbc] sm:$0x1]
        %v4418 = vld [vmem:[%s1449 + $0xe0] sm:$0x1]
        %v4419 = vld [vmem:[%s1449 + $0xec] sm:$0x1]
        %v4420 = vld [vmem:[%s1449 + $0xf8] sm:$0x1]
        %v4421 = vld [vmem:[%s1449 + $0x104] sm:$0x1]
        %v4422 = vld [vmem:[%s1449 + $0x110] sm:$0x1]
        %v4423 = vld [vmem:[%s1449 + $0x11c] sm:$0x1]
        %v4424 = vld [vmem:[%s1449 + $0x128] sm:$0x1]
        %v4425 = vld [vmem:[%s1449 + $0x134] sm:$0x1]
        %v4426 = vld [vmem:[%s1449 + $0x140] sm:$0x1]
        %v4427 = vld [vmem:[%s1449 + $0x14c] sm:$0x1]
        %v4428 = vld [vmem:[%s1449 + $0x158] sm:$0x1]
        %v4429 = vld [vmem:[%s1449 + $0x164] sm:$0x1]
        %v4430 = vld [vmem:[%s1449 + $0x170] sm:$0x1]
        %v4431 = vld [vmem:[%s1449 + $0x17c] sm:$0x1]
        %v4432 = vld [vmem:[%s1449 + $0x188] sm:$0x1]
        %v4433 = vld [vmem:[%s1449 + $0x194] sm:$0x1]
        %v4435 = vshrl.u32 %v4338, 16
        %v4437 = vrot.slane %v4435, 4
        %v4438 = vshll.u32 %v4338, 16
        %v4440 = vrot.slane %v4438, 5
        %v4441 = vor.u32 %v4437, %v4440
        %v4442 = vrot.slane %v4441, 4
        %v4444 = vshll.u32 %v4339, 16
        %v4446 = vrot.slane %v4444, 5
        %v4447 = vsel %vm2677, %v4442, %v4446
        %v4448 = vshrl.u32 %v4339, 16
        %v4450 = vrot.slane %v4448, 4
        %v4451 = vor.u32 %v4450, %v4446
        %v4452 = vrot.slane %v4451, 4
        %v4454 = vshll.u32 %v4402, 16
        %v4456 = vrot.slane %v4454, 5
        %v4457 = vsel %vm2677, %v4452, %v4456
        %v4459 = vshrl.u32 %v4340, 16
        %v4461 = vrot.slane %v4459, 4
        %v4462 = vshll.u32 %v4340, 16
        %v4464 = vrot.slane %v4462, 5
        %v4465 = vor.u32 %v4461, %v4464
        %v4466 = vrot.slane %v4465, 4
        %v4468 = vshll.u32 %v4341, 16
        %v4470 = vrot.slane %v4468, 5
        %v4471 = vsel %vm2677, %v4466, %v4470
        %v4472 = vshrl.u32 %v4341, 16
        %v4474 = vrot.slane %v4472, 4
        %v4475 = vor.u32 %v4474, %v4470
        %v4476 = vrot.slane %v4475, 4
        %v4478 = vshll.u32 %v4403, 16
        %v4480 = vrot.slane %v4478, 5
        %v4481 = vsel %vm2677, %v4476, %v4480
        %v4483 = vshrl.u32 %v4342, 16
        %v4485 = vrot.slane %v4483, 4
        %v4486 = vshll.u32 %v4342, 16
        %v4488 = vrot.slane %v4486, 5
        %v4489 = vor.u32 %v4485, %v4488
        %v4490 = vrot.slane %v4489, 4
        %v4492 = vshll.u32 %v4343, 16
        %v4494 = vrot.slane %v4492, 5
        %v4495 = vsel %vm2677, %v4490, %v4494
        %v4496 = vshrl.u32 %v4343, 16
        %v4498 = vrot.slane %v4496, 4
        %v4499 = vor.u32 %v4498, %v4494
        %v4500 = vrot.slane %v4499, 4
        %v4502 = vshll.u32 %v4404, 16
        %v4504 = vrot.slane %v4502, 5
        %v4505 = vsel %vm2677, %v4500, %v4504
        %v4507 = vshrl.u32 %v4344, 16
        %v4509 = vrot.slane %v4507, 4
        %v4510 = vshll.u32 %v4344, 16
        %v4512 = vrot.slane %v4510, 5
        %v4513 = vor.u32 %v4509, %v4512
        %v4514 = vrot.slane %v4513, 4
        %v4516 = vshll.u32 %v4345, 16
        %v4518 = vrot.slane %v4516, 5
        %v4519 = vsel %vm2677, %v4514, %v4518
        %v4520 = vshrl.u32 %v4345, 16
        %v4522 = vrot.slane %v4520, 4
        %v4523 = vor.u32 %v4522, %v4518
        %v4524 = vrot.slane %v4523, 4
        %v4526 = vshll.u32 %v4405, 16
        %v4528 = vrot.slane %v4526, 5
        %v4529 = vsel %vm2677, %v4524, %v4528
        %v4531 = vshrl.u32 %v4346, 16
        %v4533 = vrot.slane %v4531, 4
        %v4534 = vshll.u32 %v4346, 16
        %v4536 = vrot.slane %v4534, 5
        %v4537 = vor.u32 %v4533, %v4536
        %v4538 = vrot.slane %v4537, 4
        %v4540 = vshll.u32 %v4347, 16
        %v4542 = vrot.slane %v4540, 5
        %v4543 = vsel %vm2677, %v4538, %v4542
        %v4544 = vshrl.u32 %v4347, 16
        %v4546 = vrot.slane %v4544, 4
        %v4547 = vor.u32 %v4546, %v4542
        %v4548 = vrot.slane %v4547, 4
        %v4550 = vshll.u32 %v4406, 16
        %v4552 = vrot.slane %v4550, 5
        %v4553 = vsel %vm2677, %v4548, %v4552
        %v4555 = vshrl.u32 %v4348, 16
        %v4557 = vrot.slane %v4555, 4
        %v4558 = vshll.u32 %v4348, 16
        %v4560 = vrot.slane %v4558, 5
        %v4561 = vor.u32 %v4557, %v4560
        %v4562 = vrot.slane %v4561, 4
        %v4564 = vshll.u32 %v4349, 16
        %v4566 = vrot.slane %v4564, 5
        %v4567 = vsel %vm2677, %v4562, %v4566
        %v4568 = vshrl.u32 %v4349, 16
        %v4570 = vrot.slane %v4568, 4
        %v4571 = vor.u32 %v4570, %v4566
        %v4572 = vrot.slane %v4571, 4
        %v4574 = vshll.u32 %v4407, 16
        %v4576 = vrot.slane %v4574, 5
        %v4577 = vsel %vm2677, %v4572, %v4576
        %v4579 = vshrl.u32 %v4350, 16
        %v4581 = vrot.slane %v4579, 4
        %v4582 = vshll.u32 %v4350, 16
        %v4584 = vrot.slane %v4582, 5
        %v4585 = vor.u32 %v4581, %v4584
        %v4586 = vrot.slane %v4585, 4
        %v4588 = vshll.u32 %v4351, 16
        %v4590 = vrot.slane %v4588, 5
        %v4591 = vsel %vm2677, %v4586, %v4590
        %v4592 = vshrl.u32 %v4351, 16
        %v4594 = vrot.slane %v4592, 4
        %v4595 = vor.u32 %v4594, %v4590
        %v4596 = vrot.slane %v4595, 4
        %v4598 = vshll.u32 %v4408, 16
        %v4600 = vrot.slane %v4598, 5
        %v4601 = vsel %vm2677, %v4596, %v4600
        %v4603 = vshrl.u32 %v4352, 16
        %v4605 = vrot.slane %v4603, 4
        %v4606 = vshll.u32 %v4352, 16
        %v4608 = vrot.slane %v4606, 5
        %v4609 = vor.u32 %v4605, %v4608
        %v4610 = vrot.slane %v4609, 4
        %v4612 = vshll.u32 %v4353, 16
        %v4614 = vrot.slane %v4612, 5
        %v4615 = vsel %vm2677, %v4610, %v4614
        %v4616 = vshrl.u32 %v4353, 16
        %v4618 = vrot.slane %v4616, 4
        %v4619 = vor.u32 %v4618, %v4614
        %v4620 = vrot.slane %v4619, 4
        %v4622 = vshll.u32 %v4409, 16
        %v4624 = vrot.slane %v4622, 5
        %v4625 = vsel %vm2677, %v4620, %v4624
        %v4627 = vshrl.u32 %v4354, 16
        %v4629 = vrot.slane %v4627, 4
        %v4630 = vshll.u32 %v4354, 16
        %v4632 = vrot.slane %v4630, 5
        %v4633 = vor.u32 %v4629, %v4632
        %v4634 = vrot.slane %v4633, 4
        %v4636 = vshll.u32 %v4355, 16
        %v4638 = vrot.slane %v4636, 5
        %v4639 = vsel %vm2677, %v4634, %v4638
        %v4640 = vshrl.u32 %v4355, 16
        %v4642 = vrot.slane %v4640, 4
        %v4643 = vor.u32 %v4642, %v4638
        %v4644 = vrot.slane %v4643, 4
        %v4646 = vshll.u32 %v4410, 16
        %v4648 = vrot.slane %v4646, 5
        %v4649 = vsel %vm2677, %v4644, %v4648
        %v4651 = vshrl.u32 %v4356, 16
        %v4653 = vrot.slane %v4651, 4
        %v4654 = vshll.u32 %v4356, 16
        %v4656 = vrot.slane %v4654, 5
        %v4657 = vor.u32 %v4653, %v4656
        %v4658 = vrot.slane %v4657, 4
        %v4660 = vshll.u32 %v4357, 16
        %v4662 = vrot.slane %v4660, 5
        %v4663 = vsel %vm2677, %v4658, %v4662
        %v4664 = vshrl.u32 %v4357, 16
        %v4666 = vrot.slane %v4664, 4
        %v4667 = vor.u32 %v4666, %v4662
        %v4668 = vrot.slane %v4667, 4
        %v4670 = vshll.u32 %v4411, 16
        %v4672 = vrot.slane %v4670, 5
        %v4673 = vsel %vm2677, %v4668, %v4672
        %v4675 = vshrl.u32 %v4358, 16
        %v4677 = vrot.slane %v4675, 4
        %v4678 = vshll.u32 %v4358, 16
        %v4680 = vrot.slane %v4678, 5
        %v4681 = vor.u32 %v4677, %v4680
        %v4682 = vrot.slane %v4681, 4
        %v4684 = vshll.u32 %v4359, 16
        %v4686 = vrot.slane %v4684, 5
        %v4687 = vsel %vm2677, %v4682, %v4686
        %v4688 = vshrl.u32 %v4359, 16
        %v4690 = vrot.slane %v4688, 4
        %v4691 = vor.u32 %v4690, %v4686
        %v4692 = vrot.slane %v4691, 4
        %v4694 = vshll.u32 %v4412, 16
        %v4696 = vrot.slane %v4694, 5
        %v4697 = vsel %vm2677, %v4692, %v4696
        %v4699 = vshrl.u32 %v4360, 16
        %v4701 = vrot.slane %v4699, 4
        %v4702 = vshll.u32 %v4360, 16
        %v4704 = vrot.slane %v4702, 5
        %v4705 = vor.u32 %v4701, %v4704
        %v4706 = vrot.slane %v4705, 4
        %v4708 = vshll.u32 %v4361, 16
        %v4710 = vrot.slane %v4708, 5
        %v4711 = vsel %vm2677, %v4706, %v4710
        %v4712 = vshrl.u32 %v4361, 16
        %v4714 = vrot.slane %v4712, 4
        %v4715 = vor.u32 %v4714, %v4710
        %v4716 = vrot.slane %v4715, 4
        %v4718 = vshll.u32 %v4413, 16
        %v4720 = vrot.slane %v4718, 5
        %v4721 = vsel %vm2677, %v4716, %v4720
        %v4723 = vshrl.u32 %v4362, 16
        %v4725 = vrot.slane %v4723, 4
        %v4726 = vshll.u32 %v4362, 16
        %v4728 = vrot.slane %v4726, 5
        %v4729 = vor.u32 %v4725, %v4728
        %v4730 = vrot.slane %v4729, 4
        %v4732 = vshll.u32 %v4363, 16
        %v4734 = vrot.slane %v4732, 5
        %v4735 = vsel %vm2677, %v4730, %v4734
        %v4736 = vshrl.u32 %v4363, 16
        %v4738 = vrot.slane %v4736, 4
        %v4739 = vor.u32 %v4738, %v4734
        %v4740 = vrot.slane %v4739, 4
        %v4742 = vshll.u32 %v4414, 16
        %v4744 = vrot.slane %v4742, 5
        %v4745 = vsel %vm2677, %v4740, %v4744
        %v4747 = vshrl.u32 %v4364, 16
        %v4749 = vrot.slane %v4747, 4
        %v4750 = vshll.u32 %v4364, 16
        %v4752 = vrot.slane %v4750, 5
        %v4753 = vor.u32 %v4749, %v4752
        %v4754 = vrot.slane %v4753, 4
        %v4756 = vshll.u32 %v4365, 16
        %v4758 = vrot.slane %v4756, 5
        %v4759 = vsel %vm2677, %v4754, %v4758
        %v4760 = vshrl.u32 %v4365, 16
        %v4762 = vrot.slane %v4760, 4
        %v4763 = vor.u32 %v4762, %v4758
        %v4764 = vrot.slane %v4763, 4
        %v4766 = vshll.u32 %v4415, 16
        %v4768 = vrot.slane %v4766, 5
        %v4769 = vsel %vm2677, %v4764, %v4768
        %v4771 = vshrl.u32 %v4366, 16
        %v4773 = vrot.slane %v4771, 4
        %v4774 = vshll.u32 %v4366, 16
        %v4776 = vrot.slane %v4774, 5
        %v4777 = vor.u32 %v4773, %v4776
        %v4778 = vrot.slane %v4777, 4
        %v4780 = vshll.u32 %v4367, 16
        %v4782 = vrot.slane %v4780, 5
        %v4783 = vsel %vm2677, %v4778, %v4782
        %v4784 = vshrl.u32 %v4367, 16
        %v4786 = vrot.slane %v4784, 4
        %v4787 = vor.u32 %v4786, %v4782
        %v4788 = vrot.slane %v4787, 4
        %v4790 = vshll.u32 %v4416, 16
        %v4792 = vrot.slane %v4790, 5
        %v4793 = vsel %vm2677, %v4788, %v4792
        %v4795 = vshrl.u32 %v4368, 16
        %v4797 = vrot.slane %v4795, 4
        %v4798 = vshll.u32 %v4368, 16
        %v4800 = vrot.slane %v4798, 5
        %v4801 = vor.u32 %v4797, %v4800
        %v4802 = vrot.slane %v4801, 4
        %v4804 = vshll.u32 %v4369, 16
        %v4806 = vrot.slane %v4804, 5
        %v4807 = vsel %vm2677, %v4802, %v4806
        %v4808 = vshrl.u32 %v4369, 16
        %v4810 = vrot.slane %v4808, 4
        %v4811 = vor.u32 %v4810, %v4806
        %v4812 = vrot.slane %v4811, 4
        %v4814 = vshll.u32 %v4417, 16
        %v4816 = vrot.slane %v4814, 5
        %v4817 = vsel %vm2677, %v4812, %v4816
        %v4819 = vshrl.u32 %v4370, 16
        %v4821 = vrot.slane %v4819, 4
        %v4822 = vshll.u32 %v4370, 16
        %v4824 = vrot.slane %v4822, 5
        %v4825 = vor.u32 %v4821, %v4824
        %v4826 = vrot.slane %v4825, 4
        %v4828 = vshll.u32 %v4371, 16
        %v4830 = vrot.slane %v4828, 5
        %v4831 = vsel %vm2677, %v4826, %v4830
        %v4832 = vshrl.u32 %v4371, 16
        %v4834 = vrot.slane %v4832, 4
        %v4835 = vor.u32 %v4834, %v4830
        %v4836 = vrot.slane %v4835, 4
        %v4838 = vshll.u32 %v4418, 16
        %v4840 = vrot.slane %v4838, 5
        %v4841 = vsel %vm2677, %v4836, %v4840
        %v4843 = vshrl.u32 %v4372, 16
        %v4845 = vrot.slane %v4843, 4
        %v4846 = vshll.u32 %v4372, 16
        %v4848 = vrot.slane %v4846, 5
        %v4849 = vor.u32 %v4845, %v4848
        %v4850 = vrot.slane %v4849, 4
        %v4852 = vshll.u32 %v4373, 16
        %v4854 = vrot.slane %v4852, 5
        %v4855 = vsel %vm2677, %v4850, %v4854
        %v4856 = vshrl.u32 %v4373, 16
        %v4858 = vrot.slane %v4856, 4
        %v4859 = vor.u32 %v4858, %v4854
        %v4860 = vrot.slane %v4859, 4
        %v4862 = vshll.u32 %v4419, 16
        %v4864 = vrot.slane %v4862, 5
        %v4865 = vsel %vm2677, %v4860, %v4864
        %v4867 = vshrl.u32 %v4374, 16
        %v4869 = vrot.slane %v4867, 4
        %v4870 = vshll.u32 %v4374, 16
        %v4872 = vrot.slane %v4870, 5
        %v4873 = vor.u32 %v4869, %v4872
        %v4874 = vrot.slane %v4873, 4
        %v4876 = vshll.u32 %v4375, 16
        %v4878 = vrot.slane %v4876, 5
        %v4879 = vsel %vm2677, %v4874, %v4878
        %v4880 = vshrl.u32 %v4375, 16
        %v4882 = vrot.slane %v4880, 4
        %v4883 = vor.u32 %v4882, %v4878
        %v4884 = vrot.slane %v4883, 4
        %v4886 = vshll.u32 %v4420, 16
        %v4888 = vrot.slane %v4886, 5
        %v4889 = vsel %vm2677, %v4884, %v4888
        %v4891 = vshrl.u32 %v4376, 16
        %v4893 = vrot.slane %v4891, 4
        %v4894 = vshll.u32 %v4376, 16
        %v4896 = vrot.slane %v4894, 5
        %v4897 = vor.u32 %v4893, %v4896
        %v4898 = vrot.slane %v4897, 4
        %v4900 = vshll.u32 %v4377, 16
        %v4902 = vrot.slane %v4900, 5
        %v4903 = vsel %vm2677, %v4898, %v4902
        %v4904 = vshrl.u32 %v4377, 16
        %v4906 = vrot.slane %v4904, 4
        %v4907 = vor.u32 %v4906, %v4902
        %v4908 = vrot.slane %v4907, 4
        %v4910 = vshll.u32 %v4421, 16
        %v4912 = vrot.slane %v4910, 5
        %v4913 = vsel %vm2677, %v4908, %v4912
        %v4915 = vshrl.u32 %v4378, 16
        %v4917 = vrot.slane %v4915, 4
        %v4918 = vshll.u32 %v4378, 16
        %v4920 = vrot.slane %v4918, 5
        %v4921 = vor.u32 %v4917, %v4920
        %v4922 = vrot.slane %v4921, 4
        %v4924 = vshll.u32 %v4379, 16
        %v4926 = vrot.slane %v4924, 5
        %v4927 = vsel %vm2677, %v4922, %v4926
        %v4928 = vshrl.u32 %v4379, 16
        %v4930 = vrot.slane %v4928, 4
        %v4931 = vor.u32 %v4930, %v4926
        %v4932 = vrot.slane %v4931, 4
        %v4934 = vshll.u32 %v4422, 16
        %v4936 = vrot.slane %v4934, 5
        %v4937 = vsel %vm2677, %v4932, %v4936
        %v4939 = vshrl.u32 %v4380, 16
        %v4941 = vrot.slane %v4939, 4
        %v4942 = vshll.u32 %v4380, 16
        %v4944 = vrot.slane %v4942, 5
        %v4945 = vor.u32 %v4941, %v4944
        %v4946 = vrot.slane %v4945, 4
        %v4948 = vshll.u32 %v4381, 16
        %v4950 = vrot.slane %v4948, 5
        %v4951 = vsel %vm2677, %v4946, %v4950
        %v4952 = vshrl.u32 %v4381, 16
        %v4954 = vrot.slane %v4952, 4
        %v4955 = vor.u32 %v4954, %v4950
        %v4956 = vrot.slane %v4955, 4
        %v4958 = vshll.u32 %v4423, 16
        %v4960 = vrot.slane %v4958, 5
        %v4961 = vsel %vm2677, %v4956, %v4960
        %v4963 = vshrl.u32 %v4382, 16
        %v4965 = vrot.slane %v4963, 4
        %v4966 = vshll.u32 %v4382, 16
        %v4968 = vrot.slane %v4966, 5
        %v4969 = vor.u32 %v4965, %v4968
        %v4970 = vrot.slane %v4969, 4
        %v4972 = vshll.u32 %v4383, 16
        %v4974 = vrot.slane %v4972, 5
        %v4975 = vsel %vm2677, %v4970, %v4974
        %v4976 = vshrl.u32 %v4383, 16
        %v4978 = vrot.slane %v4976, 4
        %v4979 = vor.u32 %v4978, %v4974
        %v4980 = vrot.slane %v4979, 4
        %v4982 = vshll.u32 %v4424, 16
        %v4984 = vrot.slane %v4982, 5
        %v4985 = vsel %vm2677, %v4980, %v4984
        %v4987 = vshrl.u32 %v4384, 16
        %v4989 = vrot.slane %v4987, 4
        %v4990 = vshll.u32 %v4384, 16
        %v4992 = vrot.slane %v4990, 5
        %v4993 = vor.u32 %v4989, %v4992
        %v4994 = vrot.slane %v4993, 4
        %v4996 = vshll.u32 %v4385, 16
        %v4998 = vrot.slane %v4996, 5
        %v4999 = vsel %vm2677, %v4994, %v4998
        %v5000 = vshrl.u32 %v4385, 16
        %v5002 = vrot.slane %v5000, 4
        %v5003 = vor.u32 %v5002, %v4998
        %v5004 = vrot.slane %v5003, 4
        %v5006 = vshll.u32 %v4425, 16
        %v5008 = vrot.slane %v5006, 5
        %v5009 = vsel %vm2677, %v5004, %v5008
        %v5011 = vshrl.u32 %v4386, 16
        %v5013 = vrot.slane %v5011, 4
        %v5014 = vshll.u32 %v4386, 16
        %v5016 = vrot.slane %v5014, 5
        %v5017 = vor.u32 %v5013, %v5016
        %v5018 = vrot.slane %v5017, 4
        %v5020 = vshll.u32 %v4387, 16
        %v5022 = vrot.slane %v5020, 5
        %v5023 = vsel %vm2677, %v5018, %v5022
        %v5024 = vshrl.u32 %v4387, 16
        %v5026 = vrot.slane %v5024, 4
        %v5027 = vor.u32 %v5026, %v5022
        %v5028 = vrot.slane %v5027, 4
        %v5030 = vshll.u32 %v4426, 16
        %v5032 = vrot.slane %v5030, 5
        %v5033 = vsel %vm2677, %v5028, %v5032
        %v5035 = vshrl.u32 %v4388, 16
        %v5037 = vrot.slane %v5035, 4
        %v5038 = vshll.u32 %v4388, 16
        %v5040 = vrot.slane %v5038, 5
        %v5041 = vor.u32 %v5037, %v5040
        %v5042 = vrot.slane %v5041, 4
        %v5044 = vshll.u32 %v4389, 16
        %v5046 = vrot.slane %v5044, 5
        %v5047 = vsel %vm2677, %v5042, %v5046
        %v5048 = vshrl.u32 %v4389, 16
        %v5050 = vrot.slane %v5048, 4
        %v5051 = vor.u32 %v5050, %v5046
        %v5052 = vrot.slane %v5051, 4
        %v5054 = vshll.u32 %v4427, 16
        %v5056 = vrot.slane %v5054, 5
        %v5057 = vsel %vm2677, %v5052, %v5056
        %v5059 = vshrl.u32 %v4390, 16
        %v5061 = vrot.slane %v5059, 4
        %v5062 = vshll.u32 %v4390, 16
        %v5064 = vrot.slane %v5062, 5
        %v5065 = vor.u32 %v5061, %v5064
        %v5066 = vrot.slane %v5065, 4
        %v5068 = vshll.u32 %v4391, 16
        %v5070 = vrot.slane %v5068, 5
        %v5071 = vsel %vm2677, %v5066, %v5070
        %v5072 = vshrl.u32 %v4391, 16
        %v5074 = vrot.slane %v5072, 4
        %v5075 = vor.u32 %v5074, %v5070
        %v5076 = vrot.slane %v5075, 4
        %v5078 = vshll.u32 %v4428, 16
        %v5080 = vrot.slane %v5078, 5
        %v5081 = vsel %vm2677, %v5076, %v5080
        %v5083 = vshrl.u32 %v4392, 16
        %v5085 = vrot.slane %v5083, 4
        %v5086 = vshll.u32 %v4392, 16
        %v5088 = vrot.slane %v5086, 5
        %v5089 = vor.u32 %v5085, %v5088
        %v5090 = vrot.slane %v5089, 4
        %v5092 = vshll.u32 %v4393, 16
        %v5094 = vrot.slane %v5092, 5
        %v5095 = vsel %vm2677, %v5090, %v5094
        %v5096 = vshrl.u32 %v4393, 16
        %v5098 = vrot.slane %v5096, 4
        %v5099 = vor.u32 %v5098, %v5094
        %v5100 = vrot.slane %v5099, 4
        %v5102 = vshll.u32 %v4429, 16
        %v5104 = vrot.slane %v5102, 5
        %v5105 = vsel %vm2677, %v5100, %v5104
        %v5107 = vshrl.u32 %v4394, 16
        %v5109 = vrot.slane %v5107, 4
        %v5110 = vshll.u32 %v4394, 16
        %v5112 = vrot.slane %v5110, 5
        %v5113 = vor.u32 %v5109, %v5112
        %v5114 = vrot.slane %v5113, 4
        %v5116 = vshll.u32 %v4395, 16
        %v5118 = vrot.slane %v5116, 5
        %v5119 = vsel %vm2677, %v5114, %v5118
        %v5120 = vshrl.u32 %v4395, 16
        %v5122 = vrot.slane %v5120, 4
        %v5123 = vor.u32 %v5122, %v5118
        %v5124 = vrot.slane %v5123, 4
        %v5126 = vshll.u32 %v4430, 16
        %v5128 = vrot.slane %v5126, 5
        %v5129 = vsel %vm2677, %v5124, %v5128
        %v5131 = vshrl.u32 %v4396, 16
        %v5133 = vrot.slane %v5131, 4
        %v5134 = vshll.u32 %v4396, 16
        %v5136 = vrot.slane %v5134, 5
        %v5137 = vor.u32 %v5133, %v5136
        %v5138 = vrot.slane %v5137, 4
        %v5140 = vshll.u32 %v4397, 16
        %v5142 = vrot.slane %v5140, 5
        %v5143 = vsel %vm2677, %v5138, %v5142
        %v5144 = vshrl.u32 %v4397, 16
        %v5146 = vrot.slane %v5144, 4
        %v5147 = vor.u32 %v5146, %v5142
        %v5148 = vrot.slane %v5147, 4
        %v5150 = vshll.u32 %v4431, 16
        %v5152 = vrot.slane %v5150, 5
        %v5153 = vsel %vm2677, %v5148, %v5152
        %v5155 = vshrl.u32 %v4398, 16
        %v5157 = vrot.slane %v5155, 4
        %v5158 = vshll.u32 %v4398, 16
        %v5160 = vrot.slane %v5158, 5
        %v5161 = vor.u32 %v5157, %v5160
        %v5162 = vrot.slane %v5161, 4
        %v5164 = vshll.u32 %v4399, 16
        %v5166 = vrot.slane %v5164, 5
        %v5167 = vsel %vm2677, %v5162, %v5166
        %v5168 = vshrl.u32 %v4399, 16
        %v5170 = vrot.slane %v5168, 4
        %v5171 = vor.u32 %v5170, %v5166
        %v5172 = vrot.slane %v5171, 4
        %v5174 = vshll.u32 %v4432, 16
        %v5176 = vrot.slane %v5174, 5
        %v5177 = vsel %vm2677, %v5172, %v5176
        %v5179 = vshrl.u32 %v4400, 16
        %v5181 = vrot.slane %v5179, 4
        %v5182 = vshll.u32 %v4400, 16
        %v5184 = vrot.slane %v5182, 5
        %v5185 = vor.u32 %v5181, %v5184
        %v5186 = vrot.slane %v5185, 4
        %v5188 = vshll.u32 %v4401, 16
        %v5190 = vrot.slane %v5188, 5
        %v5191 = vsel %vm2677, %v5186, %v5190
        %v5192 = vshrl.u32 %v4401, 16
        %v5194 = vrot.slane %v5192, 4
        %v5195 = vor.u32 %v5194, %v5190
        %v5196 = vrot.slane %v5195, 4
        %v5198 = vshll.u32 %v4433, 16
        %v5200 = vrot.slane %v5198, 5
        %v5201 = vsel %vm2677, %v5196, %v5200
        %v5202 = vld [vmem:[%s1449] sm:$0xe]
        %v5203 = vld [vmem:[%s1449 + $0xc] sm:$0xe]
        %v5204 = vld [vmem:[%s1449 + $0x18] sm:$0xe]
        %v5205 = vld [vmem:[%s1449 + $0x24] sm:$0xe]
        %v5206 = vld [vmem:[%s1449 + $0x30] sm:$0xe]
        %v5207 = vld [vmem:[%s1449 + $0x3c] sm:$0xe]
        %v5208 = vld [vmem:[%s1449 + $0x48] sm:$0xe]
        %v5209 = vld [vmem:[%s1449 + $0x54] sm:$0xe]
        %v5210 = vld [vmem:[%s1449 + $0x60] sm:$0xe]
        %v5211 = vld [vmem:[%s1449 + $0x6c] sm:$0xe]
        %v5212 = vld [vmem:[%s1449 + $0x78] sm:$0xe]
        %v5213 = vld [vmem:[%s1449 + $0x84] sm:$0xe]
        %v5214 = vld [vmem:[%s1449 + $0x90] sm:$0xe]
        %v5215 = vld [vmem:[%s1449 + $0x9c] sm:$0xe]
        %v5216 = vld [vmem:[%s1449 + $0xa8] sm:$0xe]
        %v5217 = vld [vmem:[%s1449 + $0xb4] sm:$0xe]
        %v5218 = vld [vmem:[%s1449 + $0xd8] sm:$0xe]
        %v5219 = vld [vmem:[%s1449 + $0xe4] sm:$0xe]
        %v5220 = vld [vmem:[%s1449 + $0xf0] sm:$0xe]
        %v5221 = vld [vmem:[%s1449 + $0xfc] sm:$0xe]
        %v5222 = vld [vmem:[%s1449 + $0x108] sm:$0xe]
        %v5223 = vld [vmem:[%s1449 + $0x114] sm:$0xe]
        %v5224 = vld [vmem:[%s1449 + $0x120] sm:$0xe]
        %v5225 = vld [vmem:[%s1449 + $0x12c] sm:$0xe]
        %v5226 = vld [vmem:[%s1449 + $0x138] sm:$0xe]
        %v5227 = vld [vmem:[%s1449 + $0x144] sm:$0xe]
        %v5228 = vld [vmem:[%s1449 + $0x150] sm:$0xe]
        %v5229 = vld [vmem:[%s1449 + $0x15c] sm:$0xe]
        %v5230 = vld [vmem:[%s1449 + $0x168] sm:$0xe]
        %v5231 = vld [vmem:[%s1449 + $0x174] sm:$0xe]
        %v5232 = vld [vmem:[%s1449 + $0x180] sm:$0xe]
        %v5233 = vld [vmem:[%s1449 + $0x18c] sm:$0xe]
        %v5330 = vrot.slane %v5202, 5
        %v5331 = vrot.slane %v5330, 4
        %v5332 = vrot.slane %v4339, 5
        %v5333 = vsel %vm3576, %v5331, %v5332
        %v5334 = vrot.slane %v5332, 4
        %v5335 = vrot.slane %v4402, 5
        %v5336 = vsel %vm3576, %v5334, %v5335
        %v5337 = vrot.slane %v5203, 5
        %v5338 = vrot.slane %v5337, 4
        %v5339 = vrot.slane %v4341, 5
        %v5340 = vsel %vm3576, %v5338, %v5339
        %v5341 = vrot.slane %v5339, 4
        %v5342 = vrot.slane %v4403, 5
        %v5343 = vsel %vm3576, %v5341, %v5342
        %v5344 = vrot.slane %v5204, 5
        %v5345 = vrot.slane %v5344, 4
        %v5346 = vrot.slane %v4343, 5
        %v5347 = vsel %vm3576, %v5345, %v5346
        %v5348 = vrot.slane %v5346, 4
        %v5349 = vrot.slane %v4404, 5
        %v5350 = vsel %vm3576, %v5348, %v5349
        %v5351 = vrot.slane %v5205, 5
        %v5352 = vrot.slane %v5351, 4
        %v5353 = vrot.slane %v4345, 5
        %v5354 = vsel %vm3576, %v5352, %v5353
        %v5355 = vrot.slane %v5353, 4
        %v5356 = vrot.slane %v4405, 5
        %v5357 = vsel %vm3576, %v5355, %v5356
        %v5358 = vrot.slane %v5206, 5
        %v5359 = vrot.slane %v5358, 4
        %v5360 = vrot.slane %v4347, 5
        %v5361 = vsel %vm3576, %v5359, %v5360
        %v5362 = vrot.slane %v5360, 4
        %v5363 = vrot.slane %v4406, 5
        %v5364 = vsel %vm3576, %v5362, %v5363
        %v5365 = vrot.slane %v5207, 5
        %v5366 = vrot.slane %v5365, 4
        %v5367 = vrot.slane %v4349, 5
        %v5368 = vsel %vm3576, %v5366, %v5367
        %v5369 = vrot.slane %v5367, 4
        %v5370 = vrot.slane %v4407, 5
        %v5371 = vsel %vm3576, %v5369, %v5370
        %v5372 = vrot.slane %v5208, 5
        %v5373 = vrot.slane %v5372, 4
        %v5374 = vrot.slane %v4351, 5
        %v5375 = vsel %vm3576, %v5373, %v5374
        %v5376 = vrot.slane %v5374, 4
        %v5377 = vrot.slane %v4408, 5
        %v5378 = vsel %vm3576, %v5376, %v5377
        %v5379 = vrot.slane %v5209, 5
        %v5380 = vrot.slane %v5379, 4
        %v5381 = vrot.slane %v4353, 5
        %v5382 = vsel %vm3576, %v5380, %v5381
        %v5383 = vrot.slane %v5381, 4
        %v5384 = vrot.slane %v4409, 5
        %v5385 = vsel %vm3576, %v5383, %v5384
        %v5386 = vrot.slane %v5210, 5
        %v5387 = vrot.slane %v5386, 4
        %v5388 = vrot.slane %v4355, 5
        %v5389 = vsel %vm3576, %v5387, %v5388
        %v5390 = vrot.slane %v5388, 4
        %v5391 = vrot.slane %v4410, 5
        %v5392 = vsel %vm3576, %v5390, %v5391
        %v5393 = vrot.slane %v5211, 5
        %v5394 = vrot.slane %v5393, 4
        %v5395 = vrot.slane %v4357, 5
        %v5396 = vsel %vm3576, %v5394, %v5395
        %v5397 = vrot.slane %v5395, 4
        %v5398 = vrot.slane %v4411, 5
        %v5399 = vsel %vm3576, %v5397, %v5398
        %v5400 = vrot.slane %v5212, 5
        %v5401 = vrot.slane %v5400, 4
        %v5402 = vrot.slane %v4359, 5
        %v5403 = vsel %vm3576, %v5401, %v5402
        %v5404 = vrot.slane %v5402, 4
        %v5405 = vrot.slane %v4412, 5
        %v5406 = vsel %vm3576, %v5404, %v5405
        %v5407 = vrot.slane %v5213, 5
        %v5408 = vrot.slane %v5407, 4
        %v5409 = vrot.slane %v4361, 5
        %v5410 = vsel %vm3576, %v5408, %v5409
        %v5411 = vrot.slane %v5409, 4
        %v5412 = vrot.slane %v4413, 5
        %v5413 = vsel %vm3576, %v5411, %v5412
        %v5414 = vrot.slane %v5214, 5
        %v5415 = vrot.slane %v5414, 4
        %v5416 = vrot.slane %v4363, 5
        %v5417 = vsel %vm3576, %v5415, %v5416
        %v5418 = vrot.slane %v5416, 4
        %v5419 = vrot.slane %v4414, 5
        %v5420 = vsel %vm3576, %v5418, %v5419
        %v5421 = vrot.slane %v5215, 5
        %v5422 = vrot.slane %v5421, 4
        %v5423 = vrot.slane %v4365, 5
        %v5424 = vsel %vm3576, %v5422, %v5423
        %v5425 = vrot.slane %v5423, 4
        %v5426 = vrot.slane %v4415, 5
        %v5427 = vsel %vm3576, %v5425, %v5426
        %v5428 = vrot.slane %v5216, 5
        %v5429 = vrot.slane %v5428, 4
        %v5430 = vrot.slane %v4367, 5
        %v5431 = vsel %vm3576, %v5429, %v5430
        %v5432 = vrot.slane %v5430, 4
        %v5433 = vrot.slane %v4416, 5
        %v5434 = vsel %vm3576, %v5432, %v5433
        %v5435 = vrot.slane %v5217, 5
        %v5436 = vrot.slane %v5435, 4
        %v5437 = vrot.slane %v4369, 5
        %v5438 = vsel %vm3576, %v5436, %v5437
        %v5439 = vrot.slane %v5437, 4
        %v5440 = vrot.slane %v4417, 5
        %v5441 = vsel %vm3576, %v5439, %v5440
        %v5442 = vrot.slane %v5218, 5
        %v5443 = vrot.slane %v5442, 4
        %v5444 = vrot.slane %v4371, 5
        %v5445 = vsel %vm3576, %v5443, %v5444
        %v5446 = vrot.slane %v5444, 4
        %v5447 = vrot.slane %v4418, 5
        %v5448 = vsel %vm3576, %v5446, %v5447
        %v5449 = vrot.slane %v5219, 5
        %v5450 = vrot.slane %v5449, 4
        %v5451 = vrot.slane %v4373, 5
        %v5452 = vsel %vm3576, %v5450, %v5451
        %v5453 = vrot.slane %v5451, 4
        %v5454 = vrot.slane %v4419, 5
        %v5455 = vsel %vm3576, %v5453, %v5454
        %v5456 = vrot.slane %v5220, 5
        %v5457 = vrot.slane %v5456, 4
        %v5458 = vrot.slane %v4375, 5
        %v5459 = vsel %vm3576, %v5457, %v5458
        %v5460 = vrot.slane %v5458, 4
        %v5461 = vrot.slane %v4420, 5
        %v5462 = vsel %vm3576, %v5460, %v5461
        %v5463 = vrot.slane %v5221, 5
        %v5464 = vrot.slane %v5463, 4
        %v5465 = vrot.slane %v4377, 5
        %v5466 = vsel %vm3576, %v5464, %v5465
        %v5467 = vrot.slane %v5465, 4
        %v5468 = vrot.slane %v4421, 5
        %v5469 = vsel %vm3576, %v5467, %v5468
        %v5470 = vrot.slane %v5222, 5
        %v5471 = vrot.slane %v5470, 4
        %v5472 = vrot.slane %v4379, 5
        %v5473 = vsel %vm3576, %v5471, %v5472
        %v5474 = vrot.slane %v5472, 4
        %v5475 = vrot.slane %v4422, 5
        %v5476 = vsel %vm3576, %v5474, %v5475
        %v5477 = vrot.slane %v5223, 5
        %v5478 = vrot.slane %v5477, 4
        %v5479 = vrot.slane %v4381, 5
        %v5480 = vsel %vm3576, %v5478, %v5479
        %v5481 = vrot.slane %v5479, 4
        %v5482 = vrot.slane %v4423, 5
        %v5483 = vsel %vm3576, %v5481, %v5482
        %v5484 = vrot.slane %v5224, 5
        %v5485 = vrot.slane %v5484, 4
        %v5486 = vrot.slane %v4383, 5
        %v5487 = vsel %vm3576, %v5485, %v5486
        %v5488 = vrot.slane %v5486, 4
        %v5489 = vrot.slane %v4424, 5
        %v5490 = vsel %vm3576, %v5488, %v5489
        %v5491 = vrot.slane %v5225, 5
        %v5492 = vrot.slane %v5491, 4
        %v5493 = vrot.slane %v4385, 5
        %v5494 = vsel %vm3576, %v5492, %v5493
        %v5495 = vrot.slane %v5493, 4
        %v5496 = vrot.slane %v4425, 5
        %v5497 = vsel %vm3576, %v5495, %v5496
        %v5498 = vrot.slane %v5226, 5
        %v5499 = vrot.slane %v5498, 4
        %v5500 = vrot.slane %v4387, 5
        %v5501 = vsel %vm3576, %v5499, %v5500
        %v5502 = vrot.slane %v5500, 4
        %v5503 = vrot.slane %v4426, 5
        %v5504 = vsel %vm3576, %v5502, %v5503
        %v5505 = vrot.slane %v5227, 5
        %v5506 = vrot.slane %v5505, 4
        %v5507 = vrot.slane %v4389, 5
        %v5508 = vsel %vm3576, %v5506, %v5507
        %v5509 = vrot.slane %v5507, 4
        %v5510 = vrot.slane %v4427, 5
        %v5511 = vsel %vm3576, %v5509, %v5510
        %v5512 = vrot.slane %v5228, 5
        %v5513 = vrot.slane %v5512, 4
        %v5514 = vrot.slane %v4391, 5
        %v5515 = vsel %vm3576, %v5513, %v5514
        %v5516 = vrot.slane %v5514, 4
        %v5517 = vrot.slane %v4428, 5
        %v5518 = vsel %vm3576, %v5516, %v5517
        %v5519 = vrot.slane %v5229, 5
        %v5520 = vrot.slane %v5519, 4
        %v5521 = vrot.slane %v4393, 5
        %v5522 = vsel %vm3576, %v5520, %v5521
        %v5523 = vrot.slane %v5521, 4
        %v5524 = vrot.slane %v4429, 5
        %v5525 = vsel %vm3576, %v5523, %v5524
        %v5526 = vrot.slane %v5230, 5
        %v5527 = vrot.slane %v5526, 4
        %v5528 = vrot.slane %v4395, 5
        %v5529 = vsel %vm3576, %v5527, %v5528
        %v5530 = vrot.slane %v5528, 4
        %v5531 = vrot.slane %v4430, 5
        %v5532 = vsel %vm3576, %v5530, %v5531
        %v5533 = vrot.slane %v5231, 5
        %v5534 = vrot.slane %v5533, 4
        %v5535 = vrot.slane %v4397, 5
        %v5536 = vsel %vm3576, %v5534, %v5535
        %v5537 = vrot.slane %v5535, 4
        %v5538 = vrot.slane %v4431, 5
        %v5539 = vsel %vm3576, %v5537, %v5538
        %v5540 = vrot.slane %v5232, 5
        %v5541 = vrot.slane %v5540, 4
        %v5542 = vrot.slane %v4399, 5
        %v5543 = vsel %vm3576, %v5541, %v5542
        %v5544 = vrot.slane %v5542, 4
        %v5545 = vrot.slane %v4432, 5
        %v5546 = vsel %vm3576, %v5544, %v5545
        %v5547 = vrot.slane %v5233, 5
        %v5548 = vrot.slane %v5547, 4
        %v5549 = vrot.slane %v4401, 5
        %v5550 = vsel %vm3576, %v5548, %v5549
        %v5551 = vrot.slane %v5549, 4
        %v5552 = vrot.slane %v4433, 5
        %v5553 = vsel %vm3576, %v5551, %v5552
        %v5586 = vunpack.c.l.b16 %v4338
        %v5587 = vunpack.c.l.b16 %v4339
        %v5588 = vunpack.c.l.b16 %v4340
        %v5589 = vunpack.c.l.b16 %v4341
        %v5590 = vunpack.c.l.b16 %v4342
        %v5591 = vunpack.c.l.b16 %v4343
        %v5592 = vunpack.c.l.b16 %v4344
        %v5593 = vunpack.c.l.b16 %v4345
        %v5594 = vunpack.c.l.b16 %v4346
        %v5595 = vunpack.c.l.b16 %v4347
        %v5596 = vunpack.c.l.b16 %v4348
        %v5597 = vunpack.c.l.b16 %v4349
        %v5598 = vunpack.c.l.b16 %v4350
        %v5599 = vunpack.c.l.b16 %v4351
        %v5600 = vunpack.c.l.b16 %v4352
        %v5601 = vunpack.c.l.b16 %v4353
        %v5602 = vunpack.c.l.b16 %v4354
        %v5603 = vunpack.c.l.b16 %v4355
        %v5604 = vunpack.c.l.b16 %v4356
        %v5605 = vunpack.c.l.b16 %v4357
        %v5606 = vunpack.c.l.b16 %v4358
        %v5607 = vunpack.c.l.b16 %v4359
        %v5608 = vunpack.c.l.b16 %v4360
        %v5609 = vunpack.c.l.b16 %v4361
        %v5610 = vunpack.c.l.b16 %v4362
        %v5611 = vunpack.c.l.b16 %v4363
        %v5612 = vunpack.c.l.b16 %v4364
        %v5613 = vunpack.c.l.b16 %v4365
        %v5614 = vunpack.c.l.b16 %v4366
        %v5615 = vunpack.c.l.b16 %v4367
        %v5616 = vunpack.c.l.b16 %v4368
        %v5617 = vunpack.c.l.b16 %v4369
        %v5618 = vunpack.c.l.b16 %v4370
        %v5619 = vunpack.c.l.b16 %v4371
        %v5620 = vunpack.c.l.b16 %v4372
        %v5621 = vunpack.c.l.b16 %v4373
        %v5622 = vunpack.c.l.b16 %v4374
        %v5623 = vunpack.c.l.b16 %v4375
        %v5624 = vunpack.c.l.b16 %v4376
        %v5625 = vunpack.c.l.b16 %v4377
        %v5626 = vunpack.c.l.b16 %v4378
        %v5627 = vunpack.c.l.b16 %v4379
        %v5628 = vunpack.c.l.b16 %v4380
        %v5629 = vunpack.c.l.b16 %v4381
        %v5630 = vunpack.c.l.b16 %v4382
        %v5631 = vunpack.c.l.b16 %v4383
        %v5632 = vunpack.c.l.b16 %v4384
        %v5633 = vunpack.c.l.b16 %v4385
        %v5634 = vunpack.c.l.b16 %v4386
        %v5635 = vunpack.c.l.b16 %v4387
        %v5636 = vunpack.c.l.b16 %v4388
        %v5637 = vunpack.c.l.b16 %v4389
        %v5638 = vunpack.c.l.b16 %v4390
        %v5639 = vunpack.c.l.b16 %v4391
        %v5640 = vunpack.c.l.b16 %v4392
        %v5641 = vunpack.c.l.b16 %v4393
        %v5642 = vunpack.c.l.b16 %v4394
        %v5643 = vunpack.c.l.b16 %v4395
        %v5644 = vunpack.c.l.b16 %v4396
        %v5645 = vunpack.c.l.b16 %v4397
        %v5646 = vunpack.c.l.b16 %v4398
        %v5647 = vunpack.c.l.b16 %v4399
        %v5648 = vunpack.c.l.b16 %v4400
        %v5649 = vunpack.c.l.b16 %v4401
        %v5650 = vpack.c.b16 %v5587, %v5586
        %v5651 = vpack.c.b16 %v5589, %v5588
        %v5652 = vpack.c.b16 %v5591, %v5590
        %v5653 = vpack.c.b16 %v5593, %v5592
        %v5654 = vpack.c.b16 %v5595, %v5594
        %v5655 = vpack.c.b16 %v5597, %v5596
        %v5656 = vpack.c.b16 %v5599, %v5598
        %v5657 = vpack.c.b16 %v5601, %v5600
        %v5658 = vpack.c.b16 %v5603, %v5602
        %v5659 = vpack.c.b16 %v5605, %v5604
        %v5660 = vpack.c.b16 %v5607, %v5606
        %v5661 = vpack.c.b16 %v5609, %v5608
        %v5662 = vpack.c.b16 %v5611, %v5610
        %v5663 = vpack.c.b16 %v5613, %v5612
        %v5664 = vpack.c.b16 %v5615, %v5614
        %v5665 = vpack.c.b16 %v5617, %v5616
        %v5666 = vpack.c.b16 %v5619, %v5618
        %v5667 = vpack.c.b16 %v5621, %v5620
        %v5668 = vpack.c.b16 %v5623, %v5622
        %v5669 = vpack.c.b16 %v5625, %v5624
        %v5670 = vpack.c.b16 %v5627, %v5626
        %v5671 = vpack.c.b16 %v5629, %v5628
        %v5672 = vpack.c.b16 %v5631, %v5630
        %v5673 = vpack.c.b16 %v5633, %v5632
        %v5674 = vpack.c.b16 %v5635, %v5634
        %v5675 = vpack.c.b16 %v5637, %v5636
        %v5676 = vpack.c.b16 %v5639, %v5638
        %v5677 = vpack.c.b16 %v5641, %v5640
        %v5678 = vpack.c.b16 %v5643, %v5642
        %v5679 = vpack.c.b16 %v5645, %v5644
        %v5680 = vpack.c.b16 %v5647, %v5646
        %v5681 = vpack.c.b16 %v5649, %v5648
        %v5682 = vunpack.c.l.b16 %v4447
        %v5683 = vunpack.c.l.b16 %v4457
        %v5684 = vunpack.c.l.b16 %v4471
        %v5685 = vunpack.c.l.b16 %v4481
        %v5686 = vunpack.c.l.b16 %v4495
        %v5687 = vunpack.c.l.b16 %v4505
        %v5688 = vunpack.c.l.b16 %v4519
        %v5689 = vunpack.c.l.b16 %v4529
        %v5690 = vunpack.c.l.b16 %v4543
        %v5691 = vunpack.c.l.b16 %v4553
        %v5692 = vunpack.c.l.b16 %v4567
        %v5693 = vunpack.c.l.b16 %v4577
        %v5694 = vunpack.c.l.b16 %v4591
        %v5695 = vunpack.c.l.b16 %v4601
        %v5696 = vunpack.c.l.b16 %v4615
        %v5697 = vunpack.c.l.b16 %v4625
        %v5698 = vunpack.c.l.b16 %v4639
        %v5699 = vunpack.c.l.b16 %v4649
        %v5700 = vunpack.c.l.b16 %v4663
        %v5701 = vunpack.c.l.b16 %v4673
        %v5702 = vunpack.c.l.b16 %v4687
        %v5703 = vunpack.c.l.b16 %v4697
        %v5704 = vunpack.c.l.b16 %v4711
        %v5705 = vunpack.c.l.b16 %v4721
        %v5706 = vunpack.c.l.b16 %v4735
        %v5707 = vunpack.c.l.b16 %v4745
        %v5708 = vunpack.c.l.b16 %v4759
        %v5709 = vunpack.c.l.b16 %v4769
        %v5710 = vunpack.c.l.b16 %v4783
        %v5711 = vunpack.c.l.b16 %v4793
        %v5712 = vunpack.c.l.b16 %v4807
        %v5713 = vunpack.c.l.b16 %v4817
        %v5714 = vunpack.c.l.b16 %v4831
        %v5715 = vunpack.c.l.b16 %v4841
        %v5716 = vunpack.c.l.b16 %v4855
        %v5717 = vunpack.c.l.b16 %v4865
        %v5718 = vunpack.c.l.b16 %v4879
        %v5719 = vunpack.c.l.b16 %v4889
        %v5720 = vunpack.c.l.b16 %v4903
        %v5721 = vunpack.c.l.b16 %v4913
        %v5722 = vunpack.c.l.b16 %v4927
        %v5723 = vunpack.c.l.b16 %v4937
        %v5724 = vunpack.c.l.b16 %v4951
        %v5725 = vunpack.c.l.b16 %v4961
        %v5726 = vunpack.c.l.b16 %v4975
        %v5727 = vunpack.c.l.b16 %v4985
        %v5728 = vunpack.c.l.b16 %v4999
        %v5729 = vunpack.c.l.b16 %v5009
        %v5730 = vunpack.c.l.b16 %v5023
        %v5731 = vunpack.c.l.b16 %v5033
        %v5732 = vunpack.c.l.b16 %v5047
        %v5733 = vunpack.c.l.b16 %v5057
        %v5734 = vunpack.c.l.b16 %v5071
        %v5735 = vunpack.c.l.b16 %v5081
        %v5736 = vunpack.c.l.b16 %v5095
        %v5737 = vunpack.c.l.b16 %v5105
        %v5738 = vunpack.c.l.b16 %v5119
        %v5739 = vunpack.c.l.b16 %v5129
        %v5740 = vunpack.c.l.b16 %v5143
        %v5741 = vunpack.c.l.b16 %v5153
        %v5742 = vunpack.c.l.b16 %v5167
        %v5743 = vunpack.c.l.b16 %v5177
        %v5744 = vunpack.c.l.b16 %v5191
        %v5745 = vunpack.c.l.b16 %v5201
        %v5746 = vpack.c.b16 %v5683, %v5682
        %v5747 = vpack.c.b16 %v5685, %v5684
        %v5748 = vpack.c.b16 %v5687, %v5686
        %v5749 = vpack.c.b16 %v5689, %v5688
        %v5750 = vpack.c.b16 %v5691, %v5690
        %v5751 = vpack.c.b16 %v5693, %v5692
        %v5752 = vpack.c.b16 %v5695, %v5694
        %v5753 = vpack.c.b16 %v5697, %v5696
        %v5754 = vpack.c.b16 %v5699, %v5698
        %v5755 = vpack.c.b16 %v5701, %v5700
        %v5756 = vpack.c.b16 %v5703, %v5702
        %v5757 = vpack.c.b16 %v5705, %v5704
        %v5758 = vpack.c.b16 %v5707, %v5706
        %v5759 = vpack.c.b16 %v5709, %v5708
        %v5760 = vpack.c.b16 %v5711, %v5710
        %v5761 = vpack.c.b16 %v5713, %v5712
        %v5762 = vpack.c.b16 %v5715, %v5714
        %v5763 = vpack.c.b16 %v5717, %v5716
        %v5764 = vpack.c.b16 %v5719, %v5718
        %v5765 = vpack.c.b16 %v5721, %v5720
        %v5766 = vpack.c.b16 %v5723, %v5722
        %v5767 = vpack.c.b16 %v5725, %v5724
        %v5768 = vpack.c.b16 %v5727, %v5726
        %v5769 = vpack.c.b16 %v5729, %v5728
        %v5770 = vpack.c.b16 %v5731, %v5730
        %v5771 = vpack.c.b16 %v5733, %v5732
        %v5772 = vpack.c.b16 %v5735, %v5734
        %v5773 = vpack.c.b16 %v5737, %v5736
        %v5774 = vpack.c.b16 %v5739, %v5738
        %v5775 = vpack.c.b16 %v5741, %v5740
        %v5776 = vpack.c.b16 %v5743, %v5742
        %v5777 = vpack.c.b16 %v5745, %v5744
        %5778 = vrot.lane.b32.xlu0 %v5746, 64
        %v5779 = vpop.permute.xlu0 %5778
        %5780 = vrot.lane.b32.xlu0 %v5747, 64
        %v5781 = vpop.permute.xlu0 %5780
        %5782 = vrot.lane.b32.xlu0 %v5748, 64
        %v5783 = vpop.permute.xlu0 %5782
        %5784 = vrot.lane.b32.xlu0 %v5749, 64
        %v5785 = vpop.permute.xlu0 %5784
        %5786 = vrot.lane.b32.xlu0 %v5750, 64
        %v5787 = vpop.permute.xlu0 %5786
        %5788 = vrot.lane.b32.xlu0 %v5751, 64
        %v5789 = vpop.permute.xlu0 %5788
        %5790 = vrot.lane.b32.xlu0 %v5752, 64
        %v5791 = vpop.permute.xlu0 %5790
        %5792 = vrot.lane.b32.xlu0 %v5753, 64
        %v5793 = vpop.permute.xlu0 %5792
        %5794 = vrot.lane.b32.xlu0 %v5754, 64
        %v5795 = vpop.permute.xlu0 %5794
        %5796 = vrot.lane.b32.xlu0 %v5755, 64
        %v5797 = vpop.permute.xlu0 %5796
        %5798 = vrot.lane.b32.xlu0 %v5756, 64
        %v5799 = vpop.permute.xlu0 %5798
        %5800 = vrot.lane.b32.xlu0 %v5757, 64
        %v5801 = vpop.permute.xlu0 %5800
        %5802 = vrot.lane.b32.xlu0 %v5758, 64
        %v5803 = vpop.permute.xlu0 %5802
        %5804 = vrot.lane.b32.xlu0 %v5759, 64
        %v5805 = vpop.permute.xlu0 %5804
        %5806 = vrot.lane.b32.xlu0 %v5760, 64
        %v5807 = vpop.permute.xlu0 %5806
        %5808 = vrot.lane.b32.xlu0 %v5761, 64
        %v5809 = vpop.permute.xlu0 %5808
        %5810 = vrot.lane.b32.xlu0 %v5762, 64
        %v5811 = vpop.permute.xlu0 %5810
        %5812 = vrot.lane.b32.xlu0 %v5763, 64
        %v5813 = vpop.permute.xlu0 %5812
        %5814 = vrot.lane.b32.xlu0 %v5764, 64
        %v5815 = vpop.permute.xlu0 %5814
        %5816 = vrot.lane.b32.xlu0 %v5765, 64
        %v5817 = vpop.permute.xlu0 %5816
        %5818 = vrot.lane.b32.xlu0 %v5766, 64
        %v5819 = vpop.permute.xlu0 %5818
        %5820 = vrot.lane.b32.xlu0 %v5767, 64
        %v5821 = vpop.permute.xlu0 %5820
        %5822 = vrot.lane.b32.xlu0 %v5768, 64
        %v5823 = vpop.permute.xlu0 %5822
        %5824 = vrot.lane.b32.xlu0 %v5769, 64
        %v5825 = vpop.permute.xlu0 %5824
        %5826 = vrot.lane.b32.xlu0 %v5770, 64
        %v5827 = vpop.permute.xlu0 %5826
        %5828 = vrot.lane.b32.xlu0 %v5771, 64
        %v5829 = vpop.permute.xlu0 %5828
        %5830 = vrot.lane.b32.xlu0 %v5772, 64
        %v5831 = vpop.permute.xlu0 %5830
        %5832 = vrot.lane.b32.xlu0 %v5773, 64
        %v5833 = vpop.permute.xlu0 %5832
        %5834 = vrot.lane.b32.xlu0 %v5774, 64
        %v5835 = vpop.permute.xlu0 %5834
        %5836 = vrot.lane.b32.xlu0 %v5775, 64
        %v5837 = vpop.permute.xlu0 %5836
        %5838 = vrot.lane.b32.xlu0 %v5776, 64
        %v5839 = vpop.permute.xlu0 %5838
        %5840 = vrot.lane.b32.xlu0 %v5777, 64
        %v5841 = vpop.permute.xlu0 %5840
        %v5842 = vunpack.c.l.b16 %v5333
        %v5843 = vunpack.c.l.b16 %v5336
        %v5844 = vunpack.c.l.b16 %v5340
        %v5845 = vunpack.c.l.b16 %v5343
        %v5846 = vunpack.c.l.b16 %v5347
        %v5847 = vunpack.c.l.b16 %v5350
        %v5848 = vunpack.c.l.b16 %v5354
        %v5849 = vunpack.c.l.b16 %v5357
        %v5850 = vunpack.c.l.b16 %v5361
        %v5851 = vunpack.c.l.b16 %v5364
        %v5852 = vunpack.c.l.b16 %v5368
        %v5853 = vunpack.c.l.b16 %v5371
        %v5854 = vunpack.c.l.b16 %v5375
        %v5855 = vunpack.c.l.b16 %v5378
        %v5856 = vunpack.c.l.b16 %v5382
        %v5857 = vunpack.c.l.b16 %v5385
        %v5858 = vunpack.c.l.b16 %v5389
        %v5859 = vunpack.c.l.b16 %v5392
        %v5860 = vunpack.c.l.b16 %v5396
        %v5861 = vunpack.c.l.b16 %v5399
        %v5862 = vunpack.c.l.b16 %v5403
        %v5863 = vunpack.c.l.b16 %v5406
        %v5864 = vunpack.c.l.b16 %v5410
        %v5865 = vunpack.c.l.b16 %v5413
        %v5866 = vunpack.c.l.b16 %v5417
        %v5867 = vunpack.c.l.b16 %v5420
        %v5868 = vunpack.c.l.b16 %v5424
        %v5869 = vunpack.c.l.b16 %v5427
        %v5870 = vunpack.c.l.b16 %v5431
        %v5871 = vunpack.c.l.b16 %v5434
        %v5872 = vunpack.c.l.b16 %v5438
        %v5873 = vunpack.c.l.b16 %v5441
        %v5874 = vunpack.c.l.b16 %v5445
        %v5875 = vunpack.c.l.b16 %v5448
        %v5876 = vunpack.c.l.b16 %v5452
        %v5877 = vunpack.c.l.b16 %v5455
        %v5878 = vunpack.c.l.b16 %v5459
        %v5879 = vunpack.c.l.b16 %v5462
        %v5880 = vunpack.c.l.b16 %v5466
        %v5881 = vunpack.c.l.b16 %v5469
        %v5882 = vunpack.c.l.b16 %v5473
        %v5883 = vunpack.c.l.b16 %v5476
        %v5884 = vunpack.c.l.b16 %v5480
        %v5885 = vunpack.c.l.b16 %v5483
        %v5886 = vunpack.c.l.b16 %v5487
        %v5887 = vunpack.c.l.b16 %v5490
        %v5888 = vunpack.c.l.b16 %v5494
        %v5889 = vunpack.c.l.b16 %v5497
        %v5890 = vunpack.c.l.b16 %v5501
        %v5891 = vunpack.c.l.b16 %v5504
        %v5892 = vunpack.c.l.b16 %v5508
        %v5893 = vunpack.c.l.b16 %v5511
        %v5894 = vunpack.c.l.b16 %v5515
        %v5895 = vunpack.c.l.b16 %v5518
        %v5896 = vunpack.c.l.b16 %v5522
        %v5897 = vunpack.c.l.b16 %v5525
        %v5898 = vunpack.c.l.b16 %v5529
        %v5899 = vunpack.c.l.b16 %v5532
        %v5900 = vunpack.c.l.b16 %v5536
        %v5901 = vunpack.c.l.b16 %v5539
        %v5902 = vunpack.c.l.b16 %v5543
        %v5903 = vunpack.c.l.b16 %v5546
        %v5904 = vunpack.c.l.b16 %v5550
        %v5905 = vunpack.c.l.b16 %v5553
        %v5906 = vpack.c.b16 %v5843, %v5842
        %v5907 = vpack.c.b16 %v5845, %v5844
        %v5908 = vpack.c.b16 %v5847, %v5846
        %v5909 = vpack.c.b16 %v5849, %v5848
        %v5910 = vpack.c.b16 %v5851, %v5850
        %v5911 = vpack.c.b16 %v5853, %v5852
        %v5912 = vpack.c.b16 %v5855, %v5854
        %v5913 = vpack.c.b16 %v5857, %v5856
        %v5914 = vpack.c.b16 %v5859, %v5858
        %v5915 = vpack.c.b16 %v5861, %v5860
        %v5916 = vpack.c.b16 %v5863, %v5862
        %v5917 = vpack.c.b16 %v5865, %v5864
        %v5918 = vpack.c.b16 %v5867, %v5866
        %v5919 = vpack.c.b16 %v5869, %v5868
        %v5920 = vpack.c.b16 %v5871, %v5870
        %v5921 = vpack.c.b16 %v5873, %v5872
        %v5922 = vpack.c.b16 %v5875, %v5874
        %v5923 = vpack.c.b16 %v5877, %v5876
        %v5924 = vpack.c.b16 %v5879, %v5878
        %v5925 = vpack.c.b16 %v5881, %v5880
        %v5926 = vpack.c.b16 %v5883, %v5882
        %v5927 = vpack.c.b16 %v5885, %v5884
        %v5928 = vpack.c.b16 %v5887, %v5886
        %v5929 = vpack.c.b16 %v5889, %v5888
        %v5930 = vpack.c.b16 %v5891, %v5890
        %v5931 = vpack.c.b16 %v5893, %v5892
        %v5932 = vpack.c.b16 %v5895, %v5894
        %v5933 = vpack.c.b16 %v5897, %v5896
        %v5934 = vpack.c.b16 %v5899, %v5898
        %v5935 = vpack.c.b16 %v5901, %v5900
        %v5936 = vpack.c.b16 %v5903, %v5902
        %v5937 = vpack.c.b16 %v5905, %v5904
        %v5940 = vsel %vm4185, %v5650, %v5779
        %v5944 = vsel %vm4185, %v5651, %v5781
        %v5948 = vsel %vm4185, %v5652, %v5783
        %v5952 = vsel %vm4185, %v5653, %v5785
        %v5956 = vsel %vm4185, %v5654, %v5787
        %v5960 = vsel %vm4185, %v5655, %v5789
        %v5964 = vsel %vm4185, %v5656, %v5791
        %v5968 = vsel %vm4185, %v5657, %v5793
        %v5972 = vsel %vm4185, %v5658, %v5795
        %v5976 = vsel %vm4185, %v5659, %v5797
        %v5980 = vsel %vm4185, %v5660, %v5799
        %v5984 = vsel %vm4185, %v5661, %v5801
        %v5988 = vsel %vm4185, %v5662, %v5803
        %v5992 = vsel %vm4185, %v5663, %v5805
        %v5996 = vsel %vm4185, %v5664, %v5807
        %v6000 = vsel %vm4185, %v5665, %v5809
        %v6004 = vsel %vm4185, %v5666, %v5811
        %v6008 = vsel %vm4185, %v5667, %v5813
        %v6012 = vsel %vm4185, %v5668, %v5815
        %v6016 = vsel %vm4185, %v5669, %v5817
        %v6020 = vsel %vm4185, %v5670, %v5819
        %v6024 = vsel %vm4185, %v5671, %v5821
        %v6028 = vsel %vm4185, %v5672, %v5823
        %v6032 = vsel %vm4185, %v5673, %v5825
        %v6036 = vsel %vm4185, %v5674, %v5827
        %v6040 = vsel %vm4185, %v5675, %v5829
        %v6044 = vsel %vm4185, %v5676, %v5831
        %v6048 = vsel %vm4185, %v5677, %v5833
        %v6052 = vsel %vm4185, %v5678, %v5835
        %v6056 = vsel %vm4185, %v5679, %v5837
        %v6060 = vsel %vm4185, %v5680, %v5839
        %v6064 = vsel %vm4185, %v5681, %v5841
        %s6066 = scalar_lea.vmem %s4, 96
        %v6067 = vld [vmem:[%s6066] sm:$0xf]
        %v6068 = vld [vmem:[%s6066 + $0x4] sm:$0xf]
        %v6069 = vld [vmem:[%s6066 + $0x8] sm:$0xf]
        %v6070 = vld [vmem:[%s6066 + $0xc] sm:$0xf]
        %v6071 = vld [vmem:[%s6066 + $0x10] sm:$0xf]
        %v6072 = vld [vmem:[%s6066 + $0x14] sm:$0xf]
        %v6073 = vld [vmem:[%s6066 + $0x18] sm:$0xf]
        %v6074 = vld [vmem:[%s6066 + $0x1c] sm:$0xf]
        %v6075 = vld [vmem:[%s6066 + $0x20] sm:$0xf]
        %v6076 = vld [vmem:[%s6066 + $0x24] sm:$0xf]
        %v6077 = vld [vmem:[%s6066 + $0x28] sm:$0xf]
        %v6078 = vld [vmem:[%s6066 + $0x2c] sm:$0xf]
        %v6079 = vld [vmem:[%s6066 + $0x30] sm:$0xf]
        %v6080 = vld [vmem:[%s6066 + $0x34] sm:$0xf]
        %v6081 = vld [vmem:[%s6066 + $0x38] sm:$0xf]
        %v6082 = vld [vmem:[%s6066 + $0x3c] sm:$0xf]
        %v6083 = vld [vmem:[%s6066 + $0x40] sm:$0xf]
        %v6084 = vld [vmem:[%s6066 + $0x44] sm:$0xf]
        %v6085 = vld [vmem:[%s6066 + $0x48] sm:$0xf]
        %v6086 = vld [vmem:[%s6066 + $0x4c] sm:$0xf]
        %v6087 = vld [vmem:[%s6066 + $0x50] sm:$0xf]
        %v6088 = vld [vmem:[%s6066 + $0x54] sm:$0xf]
        %v6089 = vld [vmem:[%s6066 + $0x58] sm:$0xf]
        %v6090 = vld [vmem:[%s6066 + $0x5c] sm:$0xf]
        %v6115 = vunpack.c.l.b16 %v6067
        %v6116 = vunpack.c.l.b16 %v6068
        %v6117 = vunpack.c.l.b16 %v6069
        %v6118 = vunpack.c.l.b16 %v6070
        %v6119 = vunpack.c.l.b16 %v6071
        %v6120 = vunpack.c.l.b16 %v6072
        %v6121 = vunpack.c.l.b16 %v6073
        %v6122 = vunpack.c.l.b16 %v6074
        %v6123 = vunpack.c.l.b16 %v6075
        %v6124 = vunpack.c.l.b16 %v6076
        %v6125 = vunpack.c.l.b16 %v6077
        %v6126 = vunpack.c.l.b16 %v6078
        %v6127 = vunpack.c.l.b16 %v6079
        %v6128 = vunpack.c.l.b16 %v6080
        %v6129 = vunpack.c.l.b16 %v6081
        %v6130 = vunpack.c.l.b16 %v6082
        %v6131 = vunpack.c.l.b16 %v6083
        %v6132 = vunpack.c.l.b16 %v6084
        %v6133 = vunpack.c.l.b16 %v6085
        %v6134 = vunpack.c.l.b16 %v6086
        %v6135 = vunpack.c.l.b16 %v6087
        %v6136 = vunpack.c.l.b16 %v6088
        %v6137 = vunpack.c.l.b16 %v6089
        %v6138 = vunpack.c.l.b16 %v6090
        %v6139 = vpack.c.b16 %v6116, %v6115
        %v6140 = vpack.c.b16 %v6118, %v6117
        %v6141 = vpack.c.b16 %v6120, %v6119
        %v6142 = vpack.c.b16 %v6122, %v6121
        %v6143 = vpack.c.b16 %v6124, %v6123
        %v6144 = vpack.c.b16 %v6126, %v6125
        %v6145 = vpack.c.b16 %v6128, %v6127
        %v6146 = vpack.c.b16 %v6130, %v6129
        %v6147 = vpack.c.b16 %v6132, %v6131
        %v6148 = vpack.c.b16 %v6134, %v6133
        %v6149 = vpack.c.b16 %v6136, %v6135
        %v6150 = vpack.c.b16 %v6138, %v6137
        %v6164 = vsel %vm4185, %v5906, 0
        %v6167 = vsel %vm4185, %v5907, 0
        %v6170 = vsel %vm4185, %v5908, 0
        %v6173 = vsel %vm4185, %v5909, 0
        %v6176 = vsel %vm4185, %v5910, 0
        %v6179 = vsel %vm4185, %v5911, 0
        %v6182 = vsel %vm4185, %v5912, 0
        %v6185 = vsel %vm4185, %v5913, 0
        %v6188 = vsel %vm4185, %v5914, 0
        %v6191 = vsel %vm4185, %v5915, 0
        %v6194 = vsel %vm4185, %v5916, 0
        %v6197 = vsel %vm4185, %v5917, 0
        %v6200 = vsel %vm4185, %v5918, 0
        %v6203 = vsel %vm4185, %v5919, 0
        %v6206 = vsel %vm4185, %v5920, 0
        %v6209 = vsel %vm4185, %v5921, 0
        %v6212 = vsel %vm4185, %v5922, 0
        %v6215 = vsel %vm4185, %v5923, 0
        %v6218 = vsel %vm4185, %v5924, 0
        %v6221 = vsel %vm4185, %v5925, 0
        %v6224 = vsel %vm4185, %v5926, 0
        %v6227 = vsel %vm4185, %v5927, 0
        %v6230 = vsel %vm4185, %v5928, 0
        %v6233 = vsel %vm4185, %v5929, 0
        %v6236 = vsel %vm4185, %v5930, 0
        %v6239 = vsel %vm4185, %v5931, 0
        %v6242 = vsel %vm4185, %v5932, 0
        %v6245 = vsel %vm4185, %v5933, 0
        %v6248 = vsel %vm4185, %v5934, 0
        %v6251 = vsel %vm4185, %v5935, 0
        %v6254 = vsel %vm4185, %v5936, 0
        %v6257 = vsel %vm4185, %v5937, 0
        %6259 = vmatpush.bf16.msra.mxu0 %v6146
        %6260 = vmatpush.bf16.msra.mxu0 %v6145
        %6261 = vmatpush.bf16.msra.mxu0 %v6144
        %6262 = vmatpush.bf16.msra.mxu0 %v6143
        %6263 = vmatpush.bf16.msra.mxu0 %v6142
        %6264 = vmatpush.bf16.msra.mxu0 %v6141
        %6265 = vmatpush.bf16.msra.mxu0 %v6140
        %6266 = vmatpush.bf16.msra.mxu0 %v6139
        %6267 = vmatmul.bf16.gmra.mxu0 %v5940
        %v6268 = vpop.f32.mrf.mxu0
        %v6269 = vadd.f32 0.0, %v6268
        %v6270 = vpop.f32.mrf.mxu0
        %v6271 = vadd.f32 0.0, %v6270
        %6272 = vmatmul.bf16.gmra.mxu0 %v5944
        %v6273 = vpop.f32.mrf.mxu0
        %v6274 = vadd.f32 0.0, %v6273
        %v6275 = vpop.f32.mrf.mxu0
        %v6276 = vadd.f32 0.0, %v6275
        %6277 = vmatmul.bf16.gmra.mxu0 %v5948
        %v6278 = vpop.f32.mrf.mxu0
        %v6279 = vadd.f32 0.0, %v6278
        %v6280 = vpop.f32.mrf.mxu0
        %v6281 = vadd.f32 0.0, %v6280
        %6282 = vmatmul.bf16.gmra.mxu0 %v5952
        %v6283 = vpop.f32.mrf.mxu0
        %v6284 = vadd.f32 0.0, %v6283
        %v6285 = vpop.f32.mrf.mxu0
        %v6286 = vadd.f32 0.0, %v6285
        %6287 = vmatmul.bf16.gmra.mxu0 %v5956
        %v6288 = vpop.f32.mrf.mxu0
        %v6289 = vadd.f32 0.0, %v6288
        %v6290 = vpop.f32.mrf.mxu0
        %v6291 = vadd.f32 0.0, %v6290
        %6292 = vmatmul.bf16.gmra.mxu0 %v5960
        %v6293 = vpop.f32.mrf.mxu0
        %v6294 = vadd.f32 0.0, %v6293
        %v6295 = vpop.f32.mrf.mxu0
        %v6296 = vadd.f32 0.0, %v6295
        %6297 = vmatmul.bf16.gmra.mxu0 %v5964
        %v6298 = vpop.f32.mrf.mxu0
        %v6299 = vadd.f32 0.0, %v6298
        %v6300 = vpop.f32.mrf.mxu0
        %v6301 = vadd.f32 0.0, %v6300
        %6302 = vmatmul.bf16.gmra.mxu0 %v5968
        %v6303 = vpop.f32.mrf.mxu0
        %v6304 = vadd.f32 0.0, %v6303
        %v6305 = vpop.f32.mrf.mxu0
        %v6306 = vadd.f32 0.0, %v6305
        %6307 = vmatmul.bf16.gmra.mxu0 %v5972
        %v6308 = vpop.f32.mrf.mxu0
        %v6309 = vadd.f32 0.0, %v6308
        %v6310 = vpop.f32.mrf.mxu0
        %v6311 = vadd.f32 0.0, %v6310
        %6312 = vmatmul.bf16.gmra.mxu0 %v5976
        %v6313 = vpop.f32.mrf.mxu0
        %v6314 = vadd.f32 0.0, %v6313
        %v6315 = vpop.f32.mrf.mxu0
        %v6316 = vadd.f32 0.0, %v6315
        %6317 = vmatmul.bf16.gmra.mxu0 %v5980
        %v6318 = vpop.f32.mrf.mxu0
        %v6319 = vadd.f32 0.0, %v6318
        %v6320 = vpop.f32.mrf.mxu0
        %v6321 = vadd.f32 0.0, %v6320
        %6322 = vmatmul.bf16.gmra.mxu0 %v5984
        %v6323 = vpop.f32.mrf.mxu0
        %v6324 = vadd.f32 0.0, %v6323
        %v6325 = vpop.f32.mrf.mxu0
        %v6326 = vadd.f32 0.0, %v6325
        %6327 = vmatmul.bf16.gmra.mxu0 %v5988
        %v6328 = vpop.f32.mrf.mxu0
        %v6329 = vadd.f32 0.0, %v6328
        %v6330 = vpop.f32.mrf.mxu0
        %v6331 = vadd.f32 0.0, %v6330
        %6332 = vmatmul.bf16.gmra.mxu0 %v5992
        %v6333 = vpop.f32.mrf.mxu0
        %v6334 = vadd.f32 0.0, %v6333
        %v6335 = vpop.f32.mrf.mxu0
        %v6336 = vadd.f32 0.0, %v6335
        %6337 = vmatmul.bf16.gmra.mxu0 %v5996
        %v6338 = vpop.f32.mrf.mxu0
        %v6339 = vadd.f32 0.0, %v6338
        %v6340 = vpop.f32.mrf.mxu0
        %v6341 = vadd.f32 0.0, %v6340
        %6342 = vmatmul.bf16.gmra.mxu0 %v6000
        %v6343 = vpop.f32.mrf.mxu0
        %v6344 = vadd.f32 0.0, %v6343
        %v6345 = vpop.f32.mrf.mxu0
        %v6346 = vadd.f32 0.0, %v6345
        %6347 = vmatmul.bf16.gmra.mxu0 %v6004
        %v6348 = vpop.f32.mrf.mxu0
        %v6349 = vadd.f32 0.0, %v6348
        %v6350 = vpop.f32.mrf.mxu0
        %v6351 = vadd.f32 0.0, %v6350
        %6352 = vmatmul.bf16.gmra.mxu0 %v6008
        %v6353 = vpop.f32.mrf.mxu0
        %v6354 = vadd.f32 0.0, %v6353
        %v6355 = vpop.f32.mrf.mxu0
        %v6356 = vadd.f32 0.0, %v6355
        %6357 = vmatmul.bf16.gmra.mxu0 %v6012
        %v6358 = vpop.f32.mrf.mxu0
        %v6359 = vadd.f32 0.0, %v6358
        %v6360 = vpop.f32.mrf.mxu0
        %v6361 = vadd.f32 0.0, %v6360
        %6362 = vmatmul.bf16.gmra.mxu0 %v6016
        %v6363 = vpop.f32.mrf.mxu0
        %v6364 = vadd.f32 0.0, %v6363
        %v6365 = vpop.f32.mrf.mxu0
        %v6366 = vadd.f32 0.0, %v6365
        %6367 = vmatmul.bf16.gmra.mxu0 %v6020
        %v6368 = vpop.f32.mrf.mxu0
        %v6369 = vadd.f32 0.0, %v6368
        %v6370 = vpop.f32.mrf.mxu0
        %v6371 = vadd.f32 0.0, %v6370
        %6372 = vmatmul.bf16.gmra.mxu0 %v6024
        %v6373 = vpop.f32.mrf.mxu0
        %v6374 = vadd.f32 0.0, %v6373
        %v6375 = vpop.f32.mrf.mxu0
        %v6376 = vadd.f32 0.0, %v6375
        %6377 = vmatmul.bf16.gmra.mxu0 %v6028
        %v6378 = vpop.f32.mrf.mxu0
        %v6379 = vadd.f32 0.0, %v6378
        %v6380 = vpop.f32.mrf.mxu0
        %v6381 = vadd.f32 0.0, %v6380
        %6382 = vmatmul.bf16.gmra.mxu0 %v6032
        %v6383 = vpop.f32.mrf.mxu0
        %v6384 = vadd.f32 0.0, %v6383
        %v6385 = vpop.f32.mrf.mxu0
        %v6386 = vadd.f32 0.0, %v6385
        %6387 = vmatmul.bf16.gmra.mxu0 %v6036
        %v6388 = vpop.f32.mrf.mxu0
        %v6389 = vadd.f32 0.0, %v6388
        %v6390 = vpop.f32.mrf.mxu0
        %v6391 = vadd.f32 0.0, %v6390
        %6392 = vmatmul.bf16.gmra.mxu0 %v6040
        %v6393 = vpop.f32.mrf.mxu0
        %v6394 = vadd.f32 0.0, %v6393
        %v6395 = vpop.f32.mrf.mxu0
        %v6396 = vadd.f32 0.0, %v6395
        %6397 = vmatmul.bf16.gmra.mxu0 %v6044
        %v6398 = vpop.f32.mrf.mxu0
        %v6399 = vadd.f32 0.0, %v6398
        %v6400 = vpop.f32.mrf.mxu0
        %v6401 = vadd.f32 0.0, %v6400
        %6402 = vmatmul.bf16.gmra.mxu0 %v6048
        %v6403 = vpop.f32.mrf.mxu0
        %v6404 = vadd.f32 0.0, %v6403
        %v6405 = vpop.f32.mrf.mxu0
        %v6406 = vadd.f32 0.0, %v6405
        %6407 = vmatmul.bf16.gmra.mxu0 %v6052
        %v6408 = vpop.f32.mrf.mxu0
        %v6409 = vadd.f32 0.0, %v6408
        %v6410 = vpop.f32.mrf.mxu0
        %v6411 = vadd.f32 0.0, %v6410
        %6412 = vmatmul.bf16.gmra.mxu0 %v6056
        %v6413 = vpop.f32.mrf.mxu0
        %v6414 = vadd.f32 0.0, %v6413
        %v6415 = vpop.f32.mrf.mxu0
        %v6416 = vadd.f32 0.0, %v6415
        %6417 = vmatmul.bf16.gmra.mxu0 %v6060
        %v6418 = vpop.f32.mrf.mxu0
        %v6419 = vadd.f32 0.0, %v6418
        %v6420 = vpop.f32.mrf.mxu0
        %v6421 = vadd.f32 0.0, %v6420
        %6422 = vmatmul.bf16.gmra.mxu0 %v6064
        %v6423 = vpop.f32.mrf.mxu0
        %v6424 = vadd.f32 0.0, %v6423
        %v6425 = vpop.f32.mrf.mxu0
        %v6426 = vadd.f32 0.0, %v6425
        %6427 = vdwg.mxu0
        %6428 = vmatpush.bf16.msra.mxu0 0
        %6429 = vmatpush.bf16.msra.mxu0 0
        %6430 = vmatpush.bf16.msra.mxu0 0
        %6431 = vmatpush.bf16.msra.mxu0 0
        %6432 = vmatpush.bf16.msra.mxu0 %v6150
        %6433 = vmatpush.bf16.msra.mxu0 %v6149
        %6434 = vmatpush.bf16.msra.mxu0 %v6148
        %6435 = vmatpush.bf16.msra.mxu0 %v6147
        %6436 = vmatmul.bf16.gmra.mxu0 %v6164
        %v6437 = vpop.f32.mrf.mxu0
        %v6438 = vadd.f32 %v6269, %v6437
        %v6439 = vpop.f32.mrf.mxu0
        %v6440 = vadd.f32 %v6271, %v6439
        %6441 = vmatmul.bf16.gmra.mxu0 %v6167
        %v6442 = vpop.f32.mrf.mxu0
        %v6443 = vadd.f32 %v6274, %v6442
        %v6444 = vpop.f32.mrf.mxu0
        %v6445 = vadd.f32 %v6276, %v6444
        %6446 = vmatmul.bf16.gmra.mxu0 %v6170
        %v6447 = vpop.f32.mrf.mxu0
        %v6448 = vadd.f32 %v6279, %v6447
        %v6449 = vpop.f32.mrf.mxu0
        %v6450 = vadd.f32 %v6281, %v6449
        %6451 = vmatmul.bf16.gmra.mxu0 %v6173
        %v6452 = vpop.f32.mrf.mxu0
        %v6453 = vadd.f32 %v6284, %v6452
        %v6454 = vpop.f32.mrf.mxu0
        %v6455 = vadd.f32 %v6286, %v6454
        %6456 = vmatmul.bf16.gmra.mxu0 %v6176
        %v6457 = vpop.f32.mrf.mxu0
        %v6458 = vadd.f32 %v6289, %v6457
        %v6459 = vpop.f32.mrf.mxu0
        %v6460 = vadd.f32 %v6291, %v6459
        %6461 = vmatmul.bf16.gmra.mxu0 %v6179
        %v6462 = vpop.f32.mrf.mxu0
        %v6463 = vadd.f32 %v6294, %v6462
        %v6464 = vpop.f32.mrf.mxu0
        %v6465 = vadd.f32 %v6296, %v6464
        %6466 = vmatmul.bf16.gmra.mxu0 %v6182
        %v6467 = vpop.f32.mrf.mxu0
        %v6468 = vadd.f32 %v6299, %v6467
        %v6469 = vpop.f32.mrf.mxu0
        %v6470 = vadd.f32 %v6301, %v6469
        %6471 = vmatmul.bf16.gmra.mxu0 %v6185
        %v6472 = vpop.f32.mrf.mxu0
        %v6473 = vadd.f32 %v6304, %v6472
        %v6474 = vpop.f32.mrf.mxu0
        %v6475 = vadd.f32 %v6306, %v6474
        %6476 = vmatmul.bf16.gmra.mxu0 %v6188
        %v6477 = vpop.f32.mrf.mxu0
        %v6478 = vadd.f32 %v6309, %v6477
        %v6479 = vpop.f32.mrf.mxu0
        %v6480 = vadd.f32 %v6311, %v6479
        %6481 = vmatmul.bf16.gmra.mxu0 %v6191
        %v6482 = vpop.f32.mrf.mxu0
        %v6483 = vadd.f32 %v6314, %v6482
        %v6484 = vpop.f32.mrf.mxu0
        %v6485 = vadd.f32 %v6316, %v6484
        %6486 = vmatmul.bf16.gmra.mxu0 %v6194
        %v6487 = vpop.f32.mrf.mxu0
        %v6488 = vadd.f32 %v6319, %v6487
        %v6489 = vpop.f32.mrf.mxu0
        %v6490 = vadd.f32 %v6321, %v6489
        %6491 = vmatmul.bf16.gmra.mxu0 %v6197
        %v6492 = vpop.f32.mrf.mxu0
        %v6493 = vadd.f32 %v6324, %v6492
        %v6494 = vpop.f32.mrf.mxu0
        %v6495 = vadd.f32 %v6326, %v6494
        %6496 = vmatmul.bf16.gmra.mxu0 %v6200
        %v6497 = vpop.f32.mrf.mxu0
        %v6498 = vadd.f32 %v6329, %v6497
        %v6499 = vpop.f32.mrf.mxu0
        %v6500 = vadd.f32 %v6331, %v6499
        %6501 = vmatmul.bf16.gmra.mxu0 %v6203
        %v6502 = vpop.f32.mrf.mxu0
        %v6503 = vadd.f32 %v6334, %v6502
        %v6504 = vpop.f32.mrf.mxu0
        %v6505 = vadd.f32 %v6336, %v6504
        %6506 = vmatmul.bf16.gmra.mxu0 %v6206
        %v6507 = vpop.f32.mrf.mxu0
        %v6508 = vadd.f32 %v6339, %v6507
        %v6509 = vpop.f32.mrf.mxu0
        %v6510 = vadd.f32 %v6341, %v6509
        %6511 = vmatmul.bf16.gmra.mxu0 %v6209
        %v6512 = vpop.f32.mrf.mxu0
        %v6513 = vadd.f32 %v6344, %v6512
        %v6514 = vpop.f32.mrf.mxu0
        %v6515 = vadd.f32 %v6346, %v6514
        %6516 = vmatmul.bf16.gmra.mxu0 %v6212
        %v6517 = vpop.f32.mrf.mxu0
        %v6518 = vadd.f32 %v6349, %v6517
        %v6519 = vpop.f32.mrf.mxu0
        %v6520 = vadd.f32 %v6351, %v6519
        %6521 = vmatmul.bf16.gmra.mxu0 %v6215
        %v6522 = vpop.f32.mrf.mxu0
        %v6523 = vadd.f32 %v6354, %v6522
        %v6524 = vpop.f32.mrf.mxu0
        %v6525 = vadd.f32 %v6356, %v6524
        %6526 = vmatmul.bf16.gmra.mxu0 %v6218
        %v6527 = vpop.f32.mrf.mxu0
        %v6528 = vadd.f32 %v6359, %v6527
        %v6529 = vpop.f32.mrf.mxu0
        %v6530 = vadd.f32 %v6361, %v6529
        %6531 = vmatmul.bf16.gmra.mxu0 %v6221
        %v6532 = vpop.f32.mrf.mxu0
        %v6533 = vadd.f32 %v6364, %v6532
        %v6534 = vpop.f32.mrf.mxu0
        %v6535 = vadd.f32 %v6366, %v6534
        %6536 = vmatmul.bf16.gmra.mxu0 %v6224
        %v6537 = vpop.f32.mrf.mxu0
        %v6538 = vadd.f32 %v6369, %v6537
        %v6539 = vpop.f32.mrf.mxu0
        %v6540 = vadd.f32 %v6371, %v6539
        %6541 = vmatmul.bf16.gmra.mxu0 %v6227
        %v6542 = vpop.f32.mrf.mxu0
        %v6543 = vadd.f32 %v6374, %v6542
        %v6544 = vpop.f32.mrf.mxu0
        %v6545 = vadd.f32 %v6376, %v6544
        %6546 = vmatmul.bf16.gmra.mxu0 %v6230
        %v6547 = vpop.f32.mrf.mxu0
        %v6548 = vadd.f32 %v6379, %v6547
        %v6549 = vpop.f32.mrf.mxu0
        %v6550 = vadd.f32 %v6381, %v6549
        %6551 = vmatmul.bf16.gmra.mxu0 %v6233
        %v6552 = vpop.f32.mrf.mxu0
        %v6553 = vadd.f32 %v6384, %v6552
        %v6554 = vpop.f32.mrf.mxu0
        %v6555 = vadd.f32 %v6386, %v6554
        %6556 = vmatmul.bf16.gmra.mxu0 %v6236
        %v6557 = vpop.f32.mrf.mxu0
        %v6558 = vadd.f32 %v6389, %v6557
        %v6559 = vpop.f32.mrf.mxu0
        %v6560 = vadd.f32 %v6391, %v6559
        %6561 = vmatmul.bf16.gmra.mxu0 %v6239
        %v6562 = vpop.f32.mrf.mxu0
        %v6563 = vadd.f32 %v6394, %v6562
        %v6564 = vpop.f32.mrf.mxu0
        %v6565 = vadd.f32 %v6396, %v6564
        %6566 = vmatmul.bf16.gmra.mxu0 %v6242
        %v6567 = vpop.f32.mrf.mxu0
        %v6568 = vadd.f32 %v6399, %v6567
        %v6569 = vpop.f32.mrf.mxu0
        %v6570 = vadd.f32 %v6401, %v6569
        %6571 = vmatmul.bf16.gmra.mxu0 %v6245
        %v6572 = vpop.f32.mrf.mxu0
        %v6573 = vadd.f32 %v6404, %v6572
        %v6574 = vpop.f32.mrf.mxu0
        %v6575 = vadd.f32 %v6406, %v6574
        %6576 = vmatmul.bf16.gmra.mxu0 %v6248
        %v6577 = vpop.f32.mrf.mxu0
        %v6578 = vadd.f32 %v6409, %v6577
        %v6579 = vpop.f32.mrf.mxu0
        %v6580 = vadd.f32 %v6411, %v6579
        %6581 = vmatmul.bf16.gmra.mxu0 %v6251
        %v6582 = vpop.f32.mrf.mxu0
        %v6583 = vadd.f32 %v6414, %v6582
        %v6584 = vpop.f32.mrf.mxu0
        %v6585 = vadd.f32 %v6416, %v6584
        %6586 = vmatmul.bf16.gmra.mxu0 %v6254
        %v6587 = vpop.f32.mrf.mxu0
        %v6588 = vadd.f32 %v6419, %v6587
        %v6589 = vpop.f32.mrf.mxu0
        %v6590 = vadd.f32 %v6421, %v6589
        %6591 = vmatmul.bf16.gmra.mxu0 %v6257
        %v6592 = vpop.f32.mrf.mxu0
        %v6593 = vadd.f32 %v6424, %v6592
        %v6594 = vpop.f32.mrf.mxu0
        %v6595 = vadd.f32 %v6426, %v6594
        %6596 = vdwg.mxu0
        %v6621 = vunpack.c.l.b16 %v4314
        %v6622 = vunpack.c.l.b16 %v4315
        %v6623 = vunpack.c.l.b16 %v4316
        %v6624 = vunpack.c.l.b16 %v4317
        %v6625 = vunpack.c.l.b16 %v4318
        %v6626 = vunpack.c.l.b16 %v4319
        %v6627 = vunpack.c.l.b16 %v4320
        %v6628 = vunpack.c.l.b16 %v4321
        %v6629 = vunpack.c.l.b16 %v4322
        %v6630 = vunpack.c.l.b16 %v4323
        %v6631 = vunpack.c.l.b16 %v4324
        %v6632 = vunpack.c.l.b16 %v4325
        %v6633 = vunpack.c.l.b16 %v4326
        %v6634 = vunpack.c.l.b16 %v4327
        %v6635 = vunpack.c.l.b16 %v4328
        %v6636 = vunpack.c.l.b16 %v4329
        %v6637 = vunpack.c.l.b16 %v4330
        %v6638 = vunpack.c.l.b16 %v4331
        %v6639 = vunpack.c.l.b16 %v4332
        %v6640 = vunpack.c.l.b16 %v4333
        %v6641 = vunpack.c.l.b16 %v4334
        %v6642 = vunpack.c.l.b16 %v4335
        %v6643 = vunpack.c.l.b16 %v4336
        %v6644 = vunpack.c.l.b16 %v4337
        %v6645 = vpack.c.b16 %v6622, %v6621
        %v6646 = vpack.c.b16 %v6624, %v6623
        %v6647 = vpack.c.b16 %v6626, %v6625
        %v6648 = vpack.c.b16 %v6628, %v6627
        %v6649 = vpack.c.b16 %v6630, %v6629
        %v6650 = vpack.c.b16 %v6632, %v6631
        %v6651 = vpack.c.b16 %v6634, %v6633
        %v6652 = vpack.c.b16 %v6636, %v6635
        %v6653 = vpack.c.b16 %v6638, %v6637
        %v6654 = vpack.c.b16 %v6640, %v6639
        %v6655 = vpack.c.b16 %v6642, %v6641
        %v6656 = vpack.c.b16 %v6644, %v6643
        %v6670 = vsel %vm4185, %v4153, 0
        %v6673 = vsel %vm4185, %v4154, 0
        %v6676 = vsel %vm4185, %v4155, 0
        %v6679 = vsel %vm4185, %v4156, 0
        %v6682 = vsel %vm4185, %v4157, 0
        %v6685 = vsel %vm4185, %v4158, 0
        %v6688 = vsel %vm4185, %v4159, 0
        %v6691 = vsel %vm4185, %v4160, 0
        %v6694 = vsel %vm4185, %v4161, 0
        %v6697 = vsel %vm4185, %v4162, 0
        %v6700 = vsel %vm4185, %v4163, 0
        %v6703 = vsel %vm4185, %v4164, 0
        %v6706 = vsel %vm4185, %v4165, 0
        %v6709 = vsel %vm4185, %v4166, 0
        %v6712 = vsel %vm4185, %v4167, 0
        %v6715 = vsel %vm4185, %v4168, 0
        %v6718 = vsel %vm4185, %v4169, 0
        %v6721 = vsel %vm4185, %v4170, 0
        %v6724 = vsel %vm4185, %v4171, 0
        %v6727 = vsel %vm4185, %v4172, 0
        %v6730 = vsel %vm4185, %v4173, 0
        %v6733 = vsel %vm4185, %v4174, 0
        %v6736 = vsel %vm4185, %v4175, 0
        %v6739 = vsel %vm4185, %v4176, 0
        %v6742 = vsel %vm4185, %v4177, 0
        %v6745 = vsel %vm4185, %v4178, 0
        %v6748 = vsel %vm4185, %v4179, 0
        %v6751 = vsel %vm4185, %v4180, 0
        %v6754 = vsel %vm4185, %v4181, 0
        %v6757 = vsel %vm4185, %v4182, 0
        %v6760 = vsel %vm4185, %v4183, 0
        %v6763 = vsel %vm4185, %v4184, 0
        %6765 = vmatpush.bf16.msra.mxu0 %v6652
        %6766 = vmatpush.bf16.msra.mxu0 %v6651
        %6767 = vmatpush.bf16.msra.mxu0 %v6650
        %6768 = vmatpush.bf16.msra.mxu0 %v6649
        %6769 = vmatpush.bf16.msra.mxu0 %v6648
        %6770 = vmatpush.bf16.msra.mxu0 %v6647
        %6771 = vmatpush.bf16.msra.mxu0 %v6646
        %6772 = vmatpush.bf16.msra.mxu0 %v6645
        %6773 = vmatmul.bf16.gmra.mxu0 %v4188
        %v6774 = vpop.f32.mrf.mxu0
        %v6775 = vadd.f32 %v6438, %v6774
        %v6776 = vpop.f32.mrf.mxu0
        %v6777 = vadd.f32 %v6440, %v6776
        %6778 = vmatmul.bf16.gmra.mxu0 %v4192
        %v6779 = vpop.f32.mrf.mxu0
        %v6780 = vadd.f32 %v6443, %v6779
        %v6781 = vpop.f32.mrf.mxu0
        %v6782 = vadd.f32 %v6445, %v6781
        %6783 = vmatmul.bf16.gmra.mxu0 %v4196
        %v6784 = vpop.f32.mrf.mxu0
        %v6785 = vadd.f32 %v6448, %v6784
        %v6786 = vpop.f32.mrf.mxu0
        %v6787 = vadd.f32 %v6450, %v6786
        %6788 = vmatmul.bf16.gmra.mxu0 %v4200
        %v6789 = vpop.f32.mrf.mxu0
        %v6790 = vadd.f32 %v6453, %v6789
        %v6791 = vpop.f32.mrf.mxu0
        %v6792 = vadd.f32 %v6455, %v6791
        %6793 = vmatmul.bf16.gmra.mxu0 %v4204
        %v6794 = vpop.f32.mrf.mxu0
        %v6795 = vadd.f32 %v6458, %v6794
        %v6796 = vpop.f32.mrf.mxu0
        %v6797 = vadd.f32 %v6460, %v6796
        %6798 = vmatmul.bf16.gmra.mxu0 %v4208
        %v6799 = vpop.f32.mrf.mxu0
        %v6800 = vadd.f32 %v6463, %v6799
        %v6801 = vpop.f32.mrf.mxu0
        %v6802 = vadd.f32 %v6465, %v6801
        %6803 = vmatmul.bf16.gmra.mxu0 %v4212
        %v6804 = vpop.f32.mrf.mxu0
        %v6805 = vadd.f32 %v6468, %v6804
        %v6806 = vpop.f32.mrf.mxu0
        %v6807 = vadd.f32 %v6470, %v6806
        %6808 = vmatmul.bf16.gmra.mxu0 %v4216
        %v6809 = vpop.f32.mrf.mxu0
        %v6810 = vadd.f32 %v6473, %v6809
        %v6811 = vpop.f32.mrf.mxu0
        %v6812 = vadd.f32 %v6475, %v6811
        %6813 = vmatmul.bf16.gmra.mxu0 %v4220
        %v6814 = vpop.f32.mrf.mxu0
        %v6815 = vadd.f32 %v6478, %v6814
        %v6816 = vpop.f32.mrf.mxu0
        %v6817 = vadd.f32 %v6480, %v6816
        %6818 = vmatmul.bf16.gmra.mxu0 %v4224
        %v6819 = vpop.f32.mrf.mxu0
        %v6820 = vadd.f32 %v6483, %v6819
        %v6821 = vpop.f32.mrf.mxu0
        %v6822 = vadd.f32 %v6485, %v6821
        %6823 = vmatmul.bf16.gmra.mxu0 %v4228
        %v6824 = vpop.f32.mrf.mxu0
        %v6825 = vadd.f32 %v6488, %v6824
        %v6826 = vpop.f32.mrf.mxu0
        %v6827 = vadd.f32 %v6490, %v6826
        %6828 = vmatmul.bf16.gmra.mxu0 %v4232
        %v6829 = vpop.f32.mrf.mxu0
        %v6830 = vadd.f32 %v6493, %v6829
        %v6831 = vpop.f32.mrf.mxu0
        %v6832 = vadd.f32 %v6495, %v6831
        %6833 = vmatmul.bf16.gmra.mxu0 %v4236
        %v6834 = vpop.f32.mrf.mxu0
        %v6835 = vadd.f32 %v6498, %v6834
        %v6836 = vpop.f32.mrf.mxu0
        %v6837 = vadd.f32 %v6500, %v6836
        %6838 = vmatmul.bf16.gmra.mxu0 %v4240
        %v6839 = vpop.f32.mrf.mxu0
        %v6840 = vadd.f32 %v6503, %v6839
        %v6841 = vpop.f32.mrf.mxu0
        %v6842 = vadd.f32 %v6505, %v6841
        %6843 = vmatmul.bf16.gmra.mxu0 %v4244
        %v6844 = vpop.f32.mrf.mxu0
        %v6845 = vadd.f32 %v6508, %v6844
        %v6846 = vpop.f32.mrf.mxu0
        %v6847 = vadd.f32 %v6510, %v6846
        %6848 = vmatmul.bf16.gmra.mxu0 %v4248
        %v6849 = vpop.f32.mrf.mxu0
        %v6850 = vadd.f32 %v6513, %v6849
        %v6851 = vpop.f32.mrf.mxu0
        %v6852 = vadd.f32 %v6515, %v6851
        %6853 = vmatmul.bf16.gmra.mxu0 %v4252
        %v6854 = vpop.f32.mrf.mxu0
        %v6855 = vadd.f32 %v6518, %v6854
        %v6856 = vpop.f32.mrf.mxu0
        %v6857 = vadd.f32 %v6520, %v6856
        %6858 = vmatmul.bf16.gmra.mxu0 %v4256
        %v6859 = vpop.f32.mrf.mxu0
        %v6860 = vadd.f32 %v6523, %v6859
        %v6861 = vpop.f32.mrf.mxu0
        %v6862 = vadd.f32 %v6525, %v6861
        %6863 = vmatmul.bf16.gmra.mxu0 %v4260
        %v6864 = vpop.f32.mrf.mxu0
        %v6865 = vadd.f32 %v6528, %v6864
        %v6866 = vpop.f32.mrf.mxu0
        %v6867 = vadd.f32 %v6530, %v6866
        %6868 = vmatmul.bf16.gmra.mxu0 %v4264
        %v6869 = vpop.f32.mrf.mxu0
        %v6870 = vadd.f32 %v6533, %v6869
        %v6871 = vpop.f32.mrf.mxu0
        %v6872 = vadd.f32 %v6535, %v6871
        %6873 = vmatmul.bf16.gmra.mxu0 %v4268
        %v6874 = vpop.f32.mrf.mxu0
        %v6875 = vadd.f32 %v6538, %v6874
        %v6876 = vpop.f32.mrf.mxu0
        %v6877 = vadd.f32 %v6540, %v6876
        %6878 = vmatmul.bf16.gmra.mxu0 %v4272
        %v6879 = vpop.f32.mrf.mxu0
        %v6880 = vadd.f32 %v6543, %v6879
        %v6881 = vpop.f32.mrf.mxu0
        %v6882 = vadd.f32 %v6545, %v6881
        %6883 = vmatmul.bf16.gmra.mxu0 %v4276
        %v6884 = vpop.f32.mrf.mxu0
        %v6885 = vadd.f32 %v6548, %v6884
        %v6886 = vpop.f32.mrf.mxu0
        %v6887 = vadd.f32 %v6550, %v6886
        %6888 = vmatmul.bf16.gmra.mxu0 %v4280
        %v6889 = vpop.f32.mrf.mxu0
        %v6890 = vadd.f32 %v6553, %v6889
        %v6891 = vpop.f32.mrf.mxu0
        %v6892 = vadd.f32 %v6555, %v6891
        %6893 = vmatmul.bf16.gmra.mxu0 %v4284
        %v6894 = vpop.f32.mrf.mxu0
        %v6895 = vadd.f32 %v6558, %v6894
        %v6896 = vpop.f32.mrf.mxu0
        %v6897 = vadd.f32 %v6560, %v6896
        %6898 = vmatmul.bf16.gmra.mxu0 %v4288
        %v6899 = vpop.f32.mrf.mxu0
        %v6900 = vadd.f32 %v6563, %v6899
        %v6901 = vpop.f32.mrf.mxu0
        %v6902 = vadd.f32 %v6565, %v6901
        %6903 = vmatmul.bf16.gmra.mxu0 %v4292
        %v6904 = vpop.f32.mrf.mxu0
        %v6905 = vadd.f32 %v6568, %v6904
        %v6906 = vpop.f32.mrf.mxu0
        %v6907 = vadd.f32 %v6570, %v6906
        %6908 = vmatmul.bf16.gmra.mxu0 %v4296
        %v6909 = vpop.f32.mrf.mxu0
        %v6910 = vadd.f32 %v6573, %v6909
        %v6911 = vpop.f32.mrf.mxu0
        %v6912 = vadd.f32 %v6575, %v6911
        %6913 = vmatmul.bf16.gmra.mxu0 %v4300
        %v6914 = vpop.f32.mrf.mxu0
        %v6915 = vadd.f32 %v6578, %v6914
        %v6916 = vpop.f32.mrf.mxu0
        %v6917 = vadd.f32 %v6580, %v6916
        %6918 = vmatmul.bf16.gmra.mxu0 %v4304
        %v6919 = vpop.f32.mrf.mxu0
        %v6920 = vadd.f32 %v6583, %v6919
        %v6921 = vpop.f32.mrf.mxu0
        %v6922 = vadd.f32 %v6585, %v6921
        %6923 = vmatmul.bf16.gmra.mxu0 %v4308
        %v6924 = vpop.f32.mrf.mxu0
        %v6925 = vadd.f32 %v6588, %v6924
        %v6926 = vpop.f32.mrf.mxu0
        %v6927 = vadd.f32 %v6590, %v6926
        %6928 = vmatmul.bf16.gmra.mxu0 %v4312
        %v6929 = vpop.f32.mrf.mxu0
        %v6930 = vadd.f32 %v6593, %v6929
        %v6931 = vpop.f32.mrf.mxu0
        %v6932 = vadd.f32 %v6595, %v6931
        %6933 = vdwg.mxu0
        %6934 = vmatpush.bf16.msra.mxu0 0
        %6935 = vmatpush.bf16.msra.mxu0 0
        %6936 = vmatpush.bf16.msra.mxu0 0
        %6937 = vmatpush.bf16.msra.mxu0 0
        %6938 = vmatpush.bf16.msra.mxu0 %v6656
        %6939 = vmatpush.bf16.msra.mxu0 %v6655
        %6940 = vmatpush.bf16.msra.mxu0 %v6654
        %6941 = vmatpush.bf16.msra.mxu0 %v6653
        %6942 = vmatmul.bf16.gmra.mxu0 %v6670
        %v6943 = vpop.f32.mrf.mxu0
        %v6944 = vadd.f32 %v6775, %v6943
        %v6945 = vpop.f32.mrf.mxu0
        %v6946 = vadd.f32 %v6777, %v6945
        %6947 = vmatmul.bf16.gmra.mxu0 %v6673
        %v6948 = vpop.f32.mrf.mxu0
        %v6949 = vadd.f32 %v6780, %v6948
        %v6950 = vpop.f32.mrf.mxu0
        %v6951 = vadd.f32 %v6782, %v6950
        %6952 = vmatmul.bf16.gmra.mxu0 %v6676
        %v6953 = vpop.f32.mrf.mxu0
        %v6954 = vadd.f32 %v6785, %v6953
        %v6955 = vpop.f32.mrf.mxu0
        %v6956 = vadd.f32 %v6787, %v6955
        %6957 = vmatmul.bf16.gmra.mxu0 %v6679
        %v6958 = vpop.f32.mrf.mxu0
        %v6959 = vadd.f32 %v6790, %v6958
        %v6960 = vpop.f32.mrf.mxu0
        %v6961 = vadd.f32 %v6792, %v6960
        %6962 = vmatmul.bf16.gmra.mxu0 %v6682
        %v6963 = vpop.f32.mrf.mxu0
        %v6964 = vadd.f32 %v6795, %v6963
        %v6965 = vpop.f32.mrf.mxu0
        %v6966 = vadd.f32 %v6797, %v6965
        %6967 = vmatmul.bf16.gmra.mxu0 %v6685
        %v6968 = vpop.f32.mrf.mxu0
        %v6969 = vadd.f32 %v6800, %v6968
        %v6970 = vpop.f32.mrf.mxu0
        %v6971 = vadd.f32 %v6802, %v6970
        %6972 = vmatmul.bf16.gmra.mxu0 %v6688
        %v6973 = vpop.f32.mrf.mxu0
        %v6974 = vadd.f32 %v6805, %v6973
        %v6975 = vpop.f32.mrf.mxu0
        %v6976 = vadd.f32 %v6807, %v6975
        %6977 = vmatmul.bf16.gmra.mxu0 %v6691
        %v6978 = vpop.f32.mrf.mxu0
        %v6979 = vadd.f32 %v6810, %v6978
        %v6980 = vpop.f32.mrf.mxu0
        %v6981 = vadd.f32 %v6812, %v6980
        %6982 = vmatmul.bf16.gmra.mxu0 %v6694
        %v6983 = vpop.f32.mrf.mxu0
        %v6984 = vadd.f32 %v6815, %v6983
        %v6985 = vpop.f32.mrf.mxu0
        %v6986 = vadd.f32 %v6817, %v6985
        %6987 = vmatmul.bf16.gmra.mxu0 %v6697
        %v6988 = vpop.f32.mrf.mxu0
        %v6989 = vadd.f32 %v6820, %v6988
        %v6990 = vpop.f32.mrf.mxu0
        %v6991 = vadd.f32 %v6822, %v6990
        %6992 = vmatmul.bf16.gmra.mxu0 %v6700
        %v6993 = vpop.f32.mrf.mxu0
        %v6994 = vadd.f32 %v6825, %v6993
        %v6995 = vpop.f32.mrf.mxu0
        %v6996 = vadd.f32 %v6827, %v6995
        %6997 = vmatmul.bf16.gmra.mxu0 %v6703
        %v6998 = vpop.f32.mrf.mxu0
        %v6999 = vadd.f32 %v6830, %v6998
        %v7000 = vpop.f32.mrf.mxu0
        %v7001 = vadd.f32 %v6832, %v7000
        %7002 = vmatmul.bf16.gmra.mxu0 %v6706
        %v7003 = vpop.f32.mrf.mxu0
        %v7004 = vadd.f32 %v6835, %v7003
        %v7005 = vpop.f32.mrf.mxu0
        %v7006 = vadd.f32 %v6837, %v7005
        %7007 = vmatmul.bf16.gmra.mxu0 %v6709
        %v7008 = vpop.f32.mrf.mxu0
        %v7009 = vadd.f32 %v6840, %v7008
        %v7010 = vpop.f32.mrf.mxu0
        %v7011 = vadd.f32 %v6842, %v7010
        %7012 = vmatmul.bf16.gmra.mxu0 %v6712
        %v7013 = vpop.f32.mrf.mxu0
        %v7014 = vadd.f32 %v6845, %v7013
        %v7015 = vpop.f32.mrf.mxu0
        %v7016 = vadd.f32 %v6847, %v7015
        %7017 = vmatmul.bf16.gmra.mxu0 %v6715
        %v7018 = vpop.f32.mrf.mxu0
        %v7019 = vadd.f32 %v6850, %v7018
        %v7020 = vpop.f32.mrf.mxu0
        %v7021 = vadd.f32 %v6852, %v7020
        %7022 = vmatmul.bf16.gmra.mxu0 %v6718
        %v7023 = vpop.f32.mrf.mxu0
        %v7024 = vadd.f32 %v6855, %v7023
        %v7025 = vpop.f32.mrf.mxu0
        %v7026 = vadd.f32 %v6857, %v7025
        %7027 = vmatmul.bf16.gmra.mxu0 %v6721
        %v7028 = vpop.f32.mrf.mxu0
        %v7029 = vadd.f32 %v6860, %v7028
        %v7030 = vpop.f32.mrf.mxu0
        %v7031 = vadd.f32 %v6862, %v7030
        %7032 = vmatmul.bf16.gmra.mxu0 %v6724
        %v7033 = vpop.f32.mrf.mxu0
        %v7034 = vadd.f32 %v6865, %v7033
        %v7035 = vpop.f32.mrf.mxu0
        %v7036 = vadd.f32 %v6867, %v7035
        %7037 = vmatmul.bf16.gmra.mxu0 %v6727
        %v7038 = vpop.f32.mrf.mxu0
        %v7039 = vadd.f32 %v6870, %v7038
        %v7040 = vpop.f32.mrf.mxu0
        %v7041 = vadd.f32 %v6872, %v7040
        %7042 = vmatmul.bf16.gmra.mxu0 %v6730
        %v7043 = vpop.f32.mrf.mxu0
        %v7044 = vadd.f32 %v6875, %v7043
        %v7045 = vpop.f32.mrf.mxu0
        %v7046 = vadd.f32 %v6877, %v7045
        %7047 = vmatmul.bf16.gmra.mxu0 %v6733
        %v7048 = vpop.f32.mrf.mxu0
        %v7049 = vadd.f32 %v6880, %v7048
        %v7050 = vpop.f32.mrf.mxu0
        %v7051 = vadd.f32 %v6882, %v7050
        %7052 = vmatmul.bf16.gmra.mxu0 %v6736
        %v7053 = vpop.f32.mrf.mxu0
        %v7054 = vadd.f32 %v6885, %v7053
        %v7055 = vpop.f32.mrf.mxu0
        %v7056 = vadd.f32 %v6887, %v7055
        %7057 = vmatmul.bf16.gmra.mxu0 %v6739
        %v7058 = vpop.f32.mrf.mxu0
        %v7059 = vadd.f32 %v6890, %v7058
        %v7060 = vpop.f32.mrf.mxu0
        %v7061 = vadd.f32 %v6892, %v7060
        %7062 = vmatmul.bf16.gmra.mxu0 %v6742
        %v7063 = vpop.f32.mrf.mxu0
        %v7064 = vadd.f32 %v6895, %v7063
        %v7065 = vpop.f32.mrf.mxu0
        %v7066 = vadd.f32 %v6897, %v7065
        %7067 = vmatmul.bf16.gmra.mxu0 %v6745
        %v7068 = vpop.f32.mrf.mxu0
        %v7069 = vadd.f32 %v6900, %v7068
        %v7070 = vpop.f32.mrf.mxu0
        %v7071 = vadd.f32 %v6902, %v7070
        %7072 = vmatmul.bf16.gmra.mxu0 %v6748
        %v7073 = vpop.f32.mrf.mxu0
        %v7074 = vadd.f32 %v6905, %v7073
        %v7075 = vpop.f32.mrf.mxu0
        %v7076 = vadd.f32 %v6907, %v7075
        %7077 = vmatmul.bf16.gmra.mxu0 %v6751
        %v7078 = vpop.f32.mrf.mxu0
        %v7079 = vadd.f32 %v6910, %v7078
        %v7080 = vpop.f32.mrf.mxu0
        %v7081 = vadd.f32 %v6912, %v7080
        %7082 = vmatmul.bf16.gmra.mxu0 %v6754
        %v7083 = vpop.f32.mrf.mxu0
        %v7084 = vadd.f32 %v6915, %v7083
        %v7085 = vpop.f32.mrf.mxu0
        %v7086 = vadd.f32 %v6917, %v7085
        %7087 = vmatmul.bf16.gmra.mxu0 %v6757
        %v7088 = vpop.f32.mrf.mxu0
        %v7089 = vadd.f32 %v6920, %v7088
        %v7090 = vpop.f32.mrf.mxu0
        %v7091 = vadd.f32 %v6922, %v7090
        %7092 = vmatmul.bf16.gmra.mxu0 %v6760
        %v7093 = vpop.f32.mrf.mxu0
        %v7094 = vadd.f32 %v6925, %v7093
        %v7095 = vpop.f32.mrf.mxu0
        %v7096 = vadd.f32 %v6927, %v7095
        %7097 = vmatmul.bf16.gmra.mxu0 %v6763
        %v7098 = vpop.f32.mrf.mxu0
        %v7099 = vadd.f32 %v6930, %v7098
        %v7100 = vpop.f32.mrf.mxu0
        %v7101 = vadd.f32 %v6932, %v7100
        %7102 = vdwg.mxu0
        %s7103 = scalar_lea.vmem [#allocation2], 24
        %v7104 = vld [vmem:[%s7103] sm:$0xf]
        %v7105 = vld [vmem:[%s7103 + $0x4] sm:$0xf]
        %v7106 = vld [vmem:[%s7103 + $0xc] sm:$0xf]
        %v7107 = vld [vmem:[%s7103 + $0x10] sm:$0xf]
        %v7108 = vld [vmem:[%s7103 + $0x18] sm:$0xf]
        %v7109 = vld [vmem:[%s7103 + $0x1c] sm:$0xf]
        %v7110 = vld [vmem:[%s7103 + $0x24] sm:$0xf]
        %v7111 = vld [vmem:[%s7103 + $0x28] sm:$0xf]
        %v7112 = vld [vmem:[%s7103 + $0x30] sm:$0xf]
        %v7113 = vld [vmem:[%s7103 + $0x34] sm:$0xf]
        %v7114 = vld [vmem:[%s7103 + $0x3c] sm:$0xf]
        %v7115 = vld [vmem:[%s7103 + $0x40] sm:$0xf]
        %v7116 = vld [vmem:[%s7103 + $0x48] sm:$0xf]
        %v7117 = vld [vmem:[%s7103 + $0x4c] sm:$0xf]
        %v7118 = vld [vmem:[%s7103 + $0x54] sm:$0xf]
        %v7119 = vld [vmem:[%s7103 + $0x58] sm:$0xf]
        %v7120 = vld [vmem:[%s7103 + $0x60] sm:$0xf]
        %v7121 = vld [vmem:[%s7103 + $0x64] sm:$0xf]
        %v7122 = vld [vmem:[%s7103 + $0x6c] sm:$0xf]
        %v7123 = vld [vmem:[%s7103 + $0x70] sm:$0xf]
        %v7124 = vld [vmem:[%s7103 + $0x78] sm:$0xf]
        %v7125 = vld [vmem:[%s7103 + $0x7c] sm:$0xf]
        %v7126 = vld [vmem:[%s7103 + $0x84] sm:$0xf]
        %v7127 = vld [vmem:[%s7103 + $0x88] sm:$0xf]
        %v7128 = vld [vmem:[%s7103 + $0x90] sm:$0xf]
        %v7129 = vld [vmem:[%s7103 + $0x94] sm:$0xf]
        %v7130 = vld [vmem:[%s7103 + $0x9c] sm:$0xf]
        %v7131 = vld [vmem:[%s7103 + $0xa0] sm:$0xf]
        %v7132 = vld [vmem:[%s7103 + $0xa8] sm:$0xf]
        %v7133 = vld [vmem:[%s7103 + $0xac] sm:$0xf]
        %v7134 = vld [vmem:[%s7103 + $0xb4] sm:$0xf]
        %v7135 = vld [vmem:[%s7103 + $0xb8] sm:$0xf]
        %v7136 = vld [vmem:[%s7103 + $0xd8] sm:$0xf]
        %v7137 = vld [vmem:[%s7103 + $0xdc] sm:$0xf]
        %v7138 = vld [vmem:[%s7103 + $0xe4] sm:$0xf]
        %v7139 = vld [vmem:[%s7103 + $0xe8] sm:$0xf]
        %v7140 = vld [vmem:[%s7103 + $0xf0] sm:$0xf]
        %v7141 = vld [vmem:[%s7103 + $0xf4] sm:$0xf]
        %v7142 = vld [vmem:[%s7103 + $0xfc] sm:$0xf]
        %v7143 = vld [vmem:[%s7103 + $0x100] sm:$0xf]
        %v7144 = vld [vmem:[%s7103 + $0x108] sm:$0xf]
        %v7145 = vld [vmem:[%s7103 + $0x10c] sm:$0xf]
        %v7146 = vld [vmem:[%s7103 + $0x114] sm:$0xf]
        %v7147 = vld [vmem:[%s7103 + $0x118] sm:$0xf]
        %v7148 = vld [vmem:[%s7103 + $0x120] sm:$0xf]
        %v7149 = vld [vmem:[%s7103 + $0x124] sm:$0xf]
        %v7150 = vld [vmem:[%s7103 + $0x12c] sm:$0xf]
        %v7151 = vld [vmem:[%s7103 + $0x130] sm:$0xf]
        %v7152 = vld [vmem:[%s7103 + $0x138] sm:$0xf]
        %v7153 = vld [vmem:[%s7103 + $0x13c] sm:$0xf]
        %v7154 = vld [vmem:[%s7103 + $0x144] sm:$0xf]
        %v7155 = vld [vmem:[%s7103 + $0x148] sm:$0xf]
        %v7156 = vld [vmem:[%s7103 + $0x150] sm:$0xf]
        %v7157 = vld [vmem:[%s7103 + $0x154] sm:$0xf]
        %v7158 = vld [vmem:[%s7103 + $0x15c] sm:$0xf]
        %v7159 = vld [vmem:[%s7103 + $0x160] sm:$0xf]
        %v7160 = vld [vmem:[%s7103 + $0x168] sm:$0xf]
        %v7161 = vld [vmem:[%s7103 + $0x16c] sm:$0xf]
        %v7162 = vld [vmem:[%s7103 + $0x174] sm:$0xf]
        %v7163 = vld [vmem:[%s7103 + $0x178] sm:$0xf]
        %v7164 = vld [vmem:[%s7103 + $0x180] sm:$0xf]
        %v7165 = vld [vmem:[%s7103 + $0x184] sm:$0xf]
        %v7166 = vld [vmem:[%s7103 + $0x18c] sm:$0xf]
        %v7167 = vld [vmem:[%s7103 + $0x190] sm:$0xf]
        %v7168 = vld [vmem:[%s7103 + $0x8] sm:$0x1]
        %v7169 = vld [vmem:[%s7103 + $0x14] sm:$0x1]
        %v7170 = vld [vmem:[%s7103 + $0x20] sm:$0x1]
        %v7171 = vld [vmem:[%s7103 + $0x2c] sm:$0x1]
        %v7172 = vld [vmem:[%s7103 + $0x38] sm:$0x1]
        %v7173 = vld [vmem:[%s7103 + $0x44] sm:$0x1]
        %v7174 = vld [vmem:[%s7103 + $0x50] sm:$0x1]
        %v7175 = vld [vmem:[%s7103 + $0x5c] sm:$0x1]
        %v7176 = vld [vmem:[%s7103 + $0x68] sm:$0x1]
        %v7177 = vld [vmem:[%s7103 + $0x74] sm:$0x1]
        %v7178 = vld [vmem:[%s7103 + $0x80] sm:$0x1]
        %v7179 = vld [vmem:[%s7103 + $0x8c] sm:$0x1]
        %v7180 = vld [vmem:[%s7103 + $0x98] sm:$0x1]
        %v7181 = vld [vmem:[%s7103 + $0xa4] sm:$0x1]
        %v7182 = vld [vmem:[%s7103 + $0xb0] sm:$0x1]
        %v7183 = vld [vmem:[%s7103 + $0xbc] sm:$0x1]
        %v7184 = vld [vmem:[%s7103 + $0xe0] sm:$0x1]
        %v7185 = vld [vmem:[%s7103 + $0xec] sm:$0x1]
        %v7186 = vld [vmem:[%s7103 + $0xf8] sm:$0x1]
        %v7187 = vld [vmem:[%s7103 + $0x104] sm:$0x1]
        %v7188 = vld [vmem:[%s7103 + $0x110] sm:$0x1]
        %v7189 = vld [vmem:[%s7103 + $0x11c] sm:$0x1]
        %v7190 = vld [vmem:[%s7103 + $0x128] sm:$0x1]
        %v7191 = vld [vmem:[%s7103 + $0x134] sm:$0x1]
        %v7192 = vld [vmem:[%s7103 + $0x140] sm:$0x1]
        %v7193 = vld [vmem:[%s7103 + $0x14c] sm:$0x1]
        %v7194 = vld [vmem:[%s7103 + $0x158] sm:$0x1]
        %v7195 = vld [vmem:[%s7103 + $0x164] sm:$0x1]
        %v7196 = vld [vmem:[%s7103 + $0x170] sm:$0x1]
        %v7197 = vld [vmem:[%s7103 + $0x17c] sm:$0x1]
        %v7198 = vld [vmem:[%s7103 + $0x188] sm:$0x1]
        %v7199 = vld [vmem:[%s7103 + $0x194] sm:$0x1]
        %v7201 = vshrl.u32 %v7104, 16
        %v7203 = vrot.slane %v7201, 4
        %v7204 = vshll.u32 %v7104, 16
        %v7206 = vrot.slane %v7204, 5
        %v7207 = vor.u32 %v7203, %v7206
        %v7208 = vrot.slane %v7207, 4
        %v7210 = vshll.u32 %v7105, 16
        %v7212 = vrot.slane %v7210, 5
        %v7213 = vsel %vm2677, %v7208, %v7212
        %v7214 = vshrl.u32 %v7105, 16
        %v7216 = vrot.slane %v7214, 4
        %v7217 = vor.u32 %v7216, %v7212
        %v7218 = vrot.slane %v7217, 4
        %v7220 = vshll.u32 %v7168, 16
        %v7222 = vrot.slane %v7220, 5
        %v7223 = vsel %vm2677, %v7218, %v7222
        %v7225 = vshrl.u32 %v7106, 16
        %v7227 = vrot.slane %v7225, 4
        %v7228 = vshll.u32 %v7106, 16
        %v7230 = vrot.slane %v7228, 5
        %v7231 = vor.u32 %v7227, %v7230
        %v7232 = vrot.slane %v7231, 4
        %v7234 = vshll.u32 %v7107, 16
        %v7236 = vrot.slane %v7234, 5
        %v7237 = vsel %vm2677, %v7232, %v7236
        %v7238 = vshrl.u32 %v7107, 16
        %v7240 = vrot.slane %v7238, 4
        %v7241 = vor.u32 %v7240, %v7236
        %v7242 = vrot.slane %v7241, 4
        %v7244 = vshll.u32 %v7169, 16
        %v7246 = vrot.slane %v7244, 5
        %v7247 = vsel %vm2677, %v7242, %v7246
        %v7249 = vshrl.u32 %v7108, 16
        %v7251 = vrot.slane %v7249, 4
        %v7252 = vshll.u32 %v7108, 16
        %v7254 = vrot.slane %v7252, 5
        %v7255 = vor.u32 %v7251, %v7254
        %v7256 = vrot.slane %v7255, 4
        %v7258 = vshll.u32 %v7109, 16
        %v7260 = vrot.slane %v7258, 5
        %v7261 = vsel %vm2677, %v7256, %v7260
        %v7262 = vshrl.u32 %v7109, 16
        %v7264 = vrot.slane %v7262, 4
        %v7265 = vor.u32 %v7264, %v7260
        %v7266 = vrot.slane %v7265, 4
        %v7268 = vshll.u32 %v7170, 16
        %v7270 = vrot.slane %v7268, 5
        %v7271 = vsel %vm2677, %v7266, %v7270
        %v7273 = vshrl.u32 %v7110, 16
        %v7275 = vrot.slane %v7273, 4
        %v7276 = vshll.u32 %v7110, 16
        %v7278 = vrot.slane %v7276, 5
        %v7279 = vor.u32 %v7275, %v7278
        %v7280 = vrot.slane %v7279, 4
        %v7282 = vshll.u32 %v7111, 16
        %v7284 = vrot.slane %v7282, 5
        %v7285 = vsel %vm2677, %v7280, %v7284
        %v7286 = vshrl.u32 %v7111, 16
        %v7288 = vrot.slane %v7286, 4
        %v7289 = vor.u32 %v7288, %v7284
        %v7290 = vrot.slane %v7289, 4
        %v7292 = vshll.u32 %v7171, 16
        %v7294 = vrot.slane %v7292, 5
        %v7295 = vsel %vm2677, %v7290, %v7294
        %v7297 = vshrl.u32 %v7112, 16
        %v7299 = vrot.slane %v7297, 4
        %v7300 = vshll.u32 %v7112, 16
        %v7302 = vrot.slane %v7300, 5
        %v7303 = vor.u32 %v7299, %v7302
        %v7304 = vrot.slane %v7303, 4
        %v7306 = vshll.u32 %v7113, 16
        %v7308 = vrot.slane %v7306, 5
        %v7309 = vsel %vm2677, %v7304, %v7308
        %v7310 = vshrl.u32 %v7113, 16
        %v7312 = vrot.slane %v7310, 4
        %v7313 = vor.u32 %v7312, %v7308
        %v7314 = vrot.slane %v7313, 4
        %v7316 = vshll.u32 %v7172, 16
        %v7318 = vrot.slane %v7316, 5
        %v7319 = vsel %vm2677, %v7314, %v7318
        %v7321 = vshrl.u32 %v7114, 16
        %v7323 = vrot.slane %v7321, 4
        %v7324 = vshll.u32 %v7114, 16
        %v7326 = vrot.slane %v7324, 5
        %v7327 = vor.u32 %v7323, %v7326
        %v7328 = vrot.slane %v7327, 4
        %v7330 = vshll.u32 %v7115, 16
        %v7332 = vrot.slane %v7330, 5
        %v7333 = vsel %vm2677, %v7328, %v7332
        %v7334 = vshrl.u32 %v7115, 16
        %v7336 = vrot.slane %v7334, 4
        %v7337 = vor.u32 %v7336, %v7332
        %v7338 = vrot.slane %v7337, 4
        %v7340 = vshll.u32 %v7173, 16
        %v7342 = vrot.slane %v7340, 5
        %v7343 = vsel %vm2677, %v7338, %v7342
        %v7345 = vshrl.u32 %v7116, 16
        %v7347 = vrot.slane %v7345, 4
        %v7348 = vshll.u32 %v7116, 16
        %v7350 = vrot.slane %v7348, 5
        %v7351 = vor.u32 %v7347, %v7350
        %v7352 = vrot.slane %v7351, 4
        %v7354 = vshll.u32 %v7117, 16
        %v7356 = vrot.slane %v7354, 5
        %v7357 = vsel %vm2677, %v7352, %v7356
        %v7358 = vshrl.u32 %v7117, 16
        %v7360 = vrot.slane %v7358, 4
        %v7361 = vor.u32 %v7360, %v7356
        %v7362 = vrot.slane %v7361, 4
        %v7364 = vshll.u32 %v7174, 16
        %v7366 = vrot.slane %v7364, 5
        %v7367 = vsel %vm2677, %v7362, %v7366
        %v7369 = vshrl.u32 %v7118, 16
        %v7371 = vrot.slane %v7369, 4
        %v7372 = vshll.u32 %v7118, 16
        %v7374 = vrot.slane %v7372, 5
        %v7375 = vor.u32 %v7371, %v7374
        %v7376 = vrot.slane %v7375, 4
        %v7378 = vshll.u32 %v7119, 16
        %v7380 = vrot.slane %v7378, 5
        %v7381 = vsel %vm2677, %v7376, %v7380
        %v7382 = vshrl.u32 %v7119, 16
        %v7384 = vrot.slane %v7382, 4
        %v7385 = vor.u32 %v7384, %v7380
        %v7386 = vrot.slane %v7385, 4
        %v7388 = vshll.u32 %v7175, 16
        %v7390 = vrot.slane %v7388, 5
        %v7391 = vsel %vm2677, %v7386, %v7390
        %v7393 = vshrl.u32 %v7120, 16
        %v7395 = vrot.slane %v7393, 4
        %v7396 = vshll.u32 %v7120, 16
        %v7398 = vrot.slane %v7396, 5
        %v7399 = vor.u32 %v7395, %v7398
        %v7400 = vrot.slane %v7399, 4
        %v7402 = vshll.u32 %v7121, 16
        %v7404 = vrot.slane %v7402, 5
        %v7405 = vsel %vm2677, %v7400, %v7404
        %v7406 = vshrl.u32 %v7121, 16
        %v7408 = vrot.slane %v7406, 4
        %v7409 = vor.u32 %v7408, %v7404
        %v7410 = vrot.slane %v7409, 4
        %v7412 = vshll.u32 %v7176, 16
        %v7414 = vrot.slane %v7412, 5
        %v7415 = vsel %vm2677, %v7410, %v7414
        %v7417 = vshrl.u32 %v7122, 16
        %v7419 = vrot.slane %v7417, 4
        %v7420 = vshll.u32 %v7122, 16
        %v7422 = vrot.slane %v7420, 5
        %v7423 = vor.u32 %v7419, %v7422
        %v7424 = vrot.slane %v7423, 4
        %v7426 = vshll.u32 %v7123, 16
        %v7428 = vrot.slane %v7426, 5
        %v7429 = vsel %vm2677, %v7424, %v7428
        %v7430 = vshrl.u32 %v7123, 16
        %v7432 = vrot.slane %v7430, 4
        %v7433 = vor.u32 %v7432, %v7428
        %v7434 = vrot.slane %v7433, 4
        %v7436 = vshll.u32 %v7177, 16
        %v7438 = vrot.slane %v7436, 5
        %v7439 = vsel %vm2677, %v7434, %v7438
        %v7441 = vshrl.u32 %v7124, 16
        %v7443 = vrot.slane %v7441, 4
        %v7444 = vshll.u32 %v7124, 16
        %v7446 = vrot.slane %v7444, 5
        %v7447 = vor.u32 %v7443, %v7446
        %v7448 = vrot.slane %v7447, 4
        %v7450 = vshll.u32 %v7125, 16
        %v7452 = vrot.slane %v7450, 5
        %v7453 = vsel %vm2677, %v7448, %v7452
        %v7454 = vshrl.u32 %v7125, 16
        %v7456 = vrot.slane %v7454, 4
        %v7457 = vor.u32 %v7456, %v7452
        %v7458 = vrot.slane %v7457, 4
        %v7460 = vshll.u32 %v7178, 16
        %v7462 = vrot.slane %v7460, 5
        %v7463 = vsel %vm2677, %v7458, %v7462
        %v7465 = vshrl.u32 %v7126, 16
        %v7467 = vrot.slane %v7465, 4
        %v7468 = vshll.u32 %v7126, 16
        %v7470 = vrot.slane %v7468, 5
        %v7471 = vor.u32 %v7467, %v7470
        %v7472 = vrot.slane %v7471, 4
        %v7474 = vshll.u32 %v7127, 16
        %v7476 = vrot.slane %v7474, 5
        %v7477 = vsel %vm2677, %v7472, %v7476
        %v7478 = vshrl.u32 %v7127, 16
        %v7480 = vrot.slane %v7478, 4
        %v7481 = vor.u32 %v7480, %v7476
        %v7482 = vrot.slane %v7481, 4
        %v7484 = vshll.u32 %v7179, 16
        %v7486 = vrot.slane %v7484, 5
        %v7487 = vsel %vm2677, %v7482, %v7486
        %v7489 = vshrl.u32 %v7128, 16
        %v7491 = vrot.slane %v7489, 4
        %v7492 = vshll.u32 %v7128, 16
        %v7494 = vrot.slane %v7492, 5
        %v7495 = vor.u32 %v7491, %v7494
        %v7496 = vrot.slane %v7495, 4
        %v7498 = vshll.u32 %v7129, 16
        %v7500 = vrot.slane %v7498, 5
        %v7501 = vsel %vm2677, %v7496, %v7500
        %v7502 = vshrl.u32 %v7129, 16
        %v7504 = vrot.slane %v7502, 4
        %v7505 = vor.u32 %v7504, %v7500
        %v7506 = vrot.slane %v7505, 4
        %v7508 = vshll.u32 %v7180, 16
        %v7510 = vrot.slane %v7508, 5
        %v7511 = vsel %vm2677, %v7506, %v7510
        %v7513 = vshrl.u32 %v7130, 16
        %v7515 = vrot.slane %v7513, 4
        %v7516 = vshll.u32 %v7130, 16
        %v7518 = vrot.slane %v7516, 5
        %v7519 = vor.u32 %v7515, %v7518
        %v7520 = vrot.slane %v7519, 4
        %v7522 = vshll.u32 %v7131, 16
        %v7524 = vrot.slane %v7522, 5
        %v7525 = vsel %vm2677, %v7520, %v7524
        %v7526 = vshrl.u32 %v7131, 16
        %v7528 = vrot.slane %v7526, 4
        %v7529 = vor.u32 %v7528, %v7524
        %v7530 = vrot.slane %v7529, 4
        %v7532 = vshll.u32 %v7181, 16
        %v7534 = vrot.slane %v7532, 5
        %v7535 = vsel %vm2677, %v7530, %v7534
        %v7537 = vshrl.u32 %v7132, 16
        %v7539 = vrot.slane %v7537, 4
        %v7540 = vshll.u32 %v7132, 16
        %v7542 = vrot.slane %v7540, 5
        %v7543 = vor.u32 %v7539, %v7542
        %v7544 = vrot.slane %v7543, 4
        %v7546 = vshll.u32 %v7133, 16
        %v7548 = vrot.slane %v7546, 5
        %v7549 = vsel %vm2677, %v7544, %v7548
        %v7550 = vshrl.u32 %v7133, 16
        %v7552 = vrot.slane %v7550, 4
        %v7553 = vor.u32 %v7552, %v7548
        %v7554 = vrot.slane %v7553, 4
        %v7556 = vshll.u32 %v7182, 16
        %v7558 = vrot.slane %v7556, 5
        %v7559 = vsel %vm2677, %v7554, %v7558
        %v7561 = vshrl.u32 %v7134, 16
        %v7563 = vrot.slane %v7561, 4
        %v7564 = vshll.u32 %v7134, 16
        %v7566 = vrot.slane %v7564, 5
        %v7567 = vor.u32 %v7563, %v7566
        %v7568 = vrot.slane %v7567, 4
        %v7570 = vshll.u32 %v7135, 16
        %v7572 = vrot.slane %v7570, 5
        %v7573 = vsel %vm2677, %v7568, %v7572
        %v7574 = vshrl.u32 %v7135, 16
        %v7576 = vrot.slane %v7574, 4
        %v7577 = vor.u32 %v7576, %v7572
        %v7578 = vrot.slane %v7577, 4
        %v7580 = vshll.u32 %v7183, 16
        %v7582 = vrot.slane %v7580, 5
        %v7583 = vsel %vm2677, %v7578, %v7582
        %v7585 = vshrl.u32 %v7136, 16
        %v7587 = vrot.slane %v7585, 4
        %v7588 = vshll.u32 %v7136, 16
        %v7590 = vrot.slane %v7588, 5
        %v7591 = vor.u32 %v7587, %v7590
        %v7592 = vrot.slane %v7591, 4
        %v7594 = vshll.u32 %v7137, 16
        %v7596 = vrot.slane %v7594, 5
        %v7597 = vsel %vm2677, %v7592, %v7596
        %v7598 = vshrl.u32 %v7137, 16
        %v7600 = vrot.slane %v7598, 4
        %v7601 = vor.u32 %v7600, %v7596
        %v7602 = vrot.slane %v7601, 4
        %v7604 = vshll.u32 %v7184, 16
        %v7606 = vrot.slane %v7604, 5
        %v7607 = vsel %vm2677, %v7602, %v7606
        %v7609 = vshrl.u32 %v7138, 16
        %v7611 = vrot.slane %v7609, 4
        %v7612 = vshll.u32 %v7138, 16
        %v7614 = vrot.slane %v7612, 5
        %v7615 = vor.u32 %v7611, %v7614
        %v7616 = vrot.slane %v7615, 4
        %v7618 = vshll.u32 %v7139, 16
        %v7620 = vrot.slane %v7618, 5
        %v7621 = vsel %vm2677, %v7616, %v7620
        %v7622 = vshrl.u32 %v7139, 16
        %v7624 = vrot.slane %v7622, 4
        %v7625 = vor.u32 %v7624, %v7620
        %v7626 = vrot.slane %v7625, 4
        %v7628 = vshll.u32 %v7185, 16
        %v7630 = vrot.slane %v7628, 5
        %v7631 = vsel %vm2677, %v7626, %v7630
        %v7633 = vshrl.u32 %v7140, 16
        %v7635 = vrot.slane %v7633, 4
        %v7636 = vshll.u32 %v7140, 16
        %v7638 = vrot.slane %v7636, 5
        %v7639 = vor.u32 %v7635, %v7638
        %v7640 = vrot.slane %v7639, 4
        %v7642 = vshll.u32 %v7141, 16
        %v7644 = vrot.slane %v7642, 5
        %v7645 = vsel %vm2677, %v7640, %v7644
        %v7646 = vshrl.u32 %v7141, 16
        %v7648 = vrot.slane %v7646, 4
        %v7649 = vor.u32 %v7648, %v7644
        %v7650 = vrot.slane %v7649, 4
        %v7652 = vshll.u32 %v7186, 16
        %v7654 = vrot.slane %v7652, 5
        %v7655 = vsel %vm2677, %v7650, %v7654
        %v7657 = vshrl.u32 %v7142, 16
        %v7659 = vrot.slane %v7657, 4
        %v7660 = vshll.u32 %v7142, 16
        %v7662 = vrot.slane %v7660, 5
        %v7663 = vor.u32 %v7659, %v7662
        %v7664 = vrot.slane %v7663, 4
        %v7666 = vshll.u32 %v7143, 16
        %v7668 = vrot.slane %v7666, 5
        %v7669 = vsel %vm2677, %v7664, %v7668
        %v7670 = vshrl.u32 %v7143, 16
        %v7672 = vrot.slane %v7670, 4
        %v7673 = vor.u32 %v7672, %v7668
        %v7674 = vrot.slane %v7673, 4
        %v7676 = vshll.u32 %v7187, 16
        %v7678 = vrot.slane %v7676, 5
        %v7679 = vsel %vm2677, %v7674, %v7678
        %v7681 = vshrl.u32 %v7144, 16
        %v7683 = vrot.slane %v7681, 4
        %v7684 = vshll.u32 %v7144, 16
        %v7686 = vrot.slane %v7684, 5
        %v7687 = vor.u32 %v7683, %v7686
        %v7688 = vrot.slane %v7687, 4
        %v7690 = vshll.u32 %v7145, 16
        %v7692 = vrot.slane %v7690, 5
        %v7693 = vsel %vm2677, %v7688, %v7692
        %v7694 = vshrl.u32 %v7145, 16
        %v7696 = vrot.slane %v7694, 4
        %v7697 = vor.u32 %v7696, %v7692
        %v7698 = vrot.slane %v7697, 4
        %v7700 = vshll.u32 %v7188, 16
        %v7702 = vrot.slane %v7700, 5
        %v7703 = vsel %vm2677, %v7698, %v7702
        %v7705 = vshrl.u32 %v7146, 16
        %v7707 = vrot.slane %v7705, 4
        %v7708 = vshll.u32 %v7146, 16
        %v7710 = vrot.slane %v7708, 5
        %v7711 = vor.u32 %v7707, %v7710
        %v7712 = vrot.slane %v7711, 4
        %v7714 = vshll.u32 %v7147, 16
        %v7716 = vrot.slane %v7714, 5
        %v7717 = vsel %vm2677, %v7712, %v7716
        %v7718 = vshrl.u32 %v7147, 16
        %v7720 = vrot.slane %v7718, 4
        %v7721 = vor.u32 %v7720, %v7716
        %v7722 = vrot.slane %v7721, 4
        %v7724 = vshll.u32 %v7189, 16
        %v7726 = vrot.slane %v7724, 5
        %v7727 = vsel %vm2677, %v7722, %v7726
        %v7729 = vshrl.u32 %v7148, 16
        %v7731 = vrot.slane %v7729, 4
        %v7732 = vshll.u32 %v7148, 16
        %v7734 = vrot.slane %v7732, 5
        %v7735 = vor.u32 %v7731, %v7734
        %v7736 = vrot.slane %v7735, 4
        %v7738 = vshll.u32 %v7149, 16
        %v7740 = vrot.slane %v7738, 5
        %v7741 = vsel %vm2677, %v7736, %v7740
        %v7742 = vshrl.u32 %v7149, 16
        %v7744 = vrot.slane %v7742, 4
        %v7745 = vor.u32 %v7744, %v7740
        %v7746 = vrot.slane %v7745, 4
        %v7748 = vshll.u32 %v7190, 16
        %v7750 = vrot.slane %v7748, 5
        %v7751 = vsel %vm2677, %v7746, %v7750
        %v7753 = vshrl.u32 %v7150, 16
        %v7755 = vrot.slane %v7753, 4
        %v7756 = vshll.u32 %v7150, 16
        %v7758 = vrot.slane %v7756, 5
        %v7759 = vor.u32 %v7755, %v7758
        %v7760 = vrot.slane %v7759, 4
        %v7762 = vshll.u32 %v7151, 16
        %v7764 = vrot.slane %v7762, 5
        %v7765 = vsel %vm2677, %v7760, %v7764
        %v7766 = vshrl.u32 %v7151, 16
        %v7768 = vrot.slane %v7766, 4
        %v7769 = vor.u32 %v7768, %v7764
        %v7770 = vrot.slane %v7769, 4
        %v7772 = vshll.u32 %v7191, 16
        %v7774 = vrot.slane %v7772, 5
        %v7775 = vsel %vm2677, %v7770, %v7774
        %v7777 = vshrl.u32 %v7152, 16
        %v7779 = vrot.slane %v7777, 4
        %v7780 = vshll.u32 %v7152, 16
        %v7782 = vrot.slane %v7780, 5
        %v7783 = vor.u32 %v7779, %v7782
        %v7784 = vrot.slane %v7783, 4
        %v7786 = vshll.u32 %v7153, 16
        %v7788 = vrot.slane %v7786, 5
        %v7789 = vsel %vm2677, %v7784, %v7788
        %v7790 = vshrl.u32 %v7153, 16
        %v7792 = vrot.slane %v7790, 4
        %v7793 = vor.u32 %v7792, %v7788
        %v7794 = vrot.slane %v7793, 4
        %v7796 = vshll.u32 %v7192, 16
        %v7798 = vrot.slane %v7796, 5
        %v7799 = vsel %vm2677, %v7794, %v7798
        %v7801 = vshrl.u32 %v7154, 16
        %v7803 = vrot.slane %v7801, 4
        %v7804 = vshll.u32 %v7154, 16
        %v7806 = vrot.slane %v7804, 5
        %v7807 = vor.u32 %v7803, %v7806
        %v7808 = vrot.slane %v7807, 4
        %v7810 = vshll.u32 %v7155, 16
        %v7812 = vrot.slane %v7810, 5
        %v7813 = vsel %vm2677, %v7808, %v7812
        %v7814 = vshrl.u32 %v7155, 16
        %v7816 = vrot.slane %v7814, 4
        %v7817 = vor.u32 %v7816, %v7812
        %v7818 = vrot.slane %v7817, 4
        %v7820 = vshll.u32 %v7193, 16
        %v7822 = vrot.slane %v7820, 5
        %v7823 = vsel %vm2677, %v7818, %v7822
        %v7825 = vshrl.u32 %v7156, 16
        %v7827 = vrot.slane %v7825, 4
        %v7828 = vshll.u32 %v7156, 16
        %v7830 = vrot.slane %v7828, 5
        %v7831 = vor.u32 %v7827, %v7830
        %v7832 = vrot.slane %v7831, 4
        %v7834 = vshll.u32 %v7157, 16
        %v7836 = vrot.slane %v7834, 5
        %v7837 = vsel %vm2677, %v7832, %v7836
        %v7838 = vshrl.u32 %v7157, 16
        %v7840 = vrot.slane %v7838, 4
        %v7841 = vor.u32 %v7840, %v7836
        %v7842 = vrot.slane %v7841, 4
        %v7844 = vshll.u32 %v7194, 16
        %v7846 = vrot.slane %v7844, 5
        %v7847 = vsel %vm2677, %v7842, %v7846
        %v7849 = vshrl.u32 %v7158, 16
        %v7851 = vrot.slane %v7849, 4
        %v7852 = vshll.u32 %v7158, 16
        %v7854 = vrot.slane %v7852, 5
        %v7855 = vor.u32 %v7851, %v7854
        %v7856 = vrot.slane %v7855, 4
        %v7858 = vshll.u32 %v7159, 16
        %v7860 = vrot.slane %v7858, 5
        %v7861 = vsel %vm2677, %v7856, %v7860
        %v7862 = vshrl.u32 %v7159, 16
        %v7864 = vrot.slane %v7862, 4
        %v7865 = vor.u32 %v7864, %v7860
        %v7866 = vrot.slane %v7865, 4
        %v7868 = vshll.u32 %v7195, 16
        %v7870 = vrot.slane %v7868, 5
        %v7871 = vsel %vm2677, %v7866, %v7870
        %v7873 = vshrl.u32 %v7160, 16
        %v7875 = vrot.slane %v7873, 4
        %v7876 = vshll.u32 %v7160, 16
        %v7878 = vrot.slane %v7876, 5
        %v7879 = vor.u32 %v7875, %v7878
        %v7880 = vrot.slane %v7879, 4
        %v7882 = vshll.u32 %v7161, 16
        %v7884 = vrot.slane %v7882, 5
        %v7885 = vsel %vm2677, %v7880, %v7884
        %v7886 = vshrl.u32 %v7161, 16
        %v7888 = vrot.slane %v7886, 4
        %v7889 = vor.u32 %v7888, %v7884
        %v7890 = vrot.slane %v7889, 4
        %v7892 = vshll.u32 %v7196, 16
        %v7894 = vrot.slane %v7892, 5
        %v7895 = vsel %vm2677, %v7890, %v7894
        %v7897 = vshrl.u32 %v7162, 16
        %v7899 = vrot.slane %v7897, 4
        %v7900 = vshll.u32 %v7162, 16
        %v7902 = vrot.slane %v7900, 5
        %v7903 = vor.u32 %v7899, %v7902
        %v7904 = vrot.slane %v7903, 4
        %v7906 = vshll.u32 %v7163, 16
        %v7908 = vrot.slane %v7906, 5
        %v7909 = vsel %vm2677, %v7904, %v7908
        %v7910 = vshrl.u32 %v7163, 16
        %v7912 = vrot.slane %v7910, 4
        %v7913 = vor.u32 %v7912, %v7908
        %v7914 = vrot.slane %v7913, 4
        %v7916 = vshll.u32 %v7197, 16
        %v7918 = vrot.slane %v7916, 5
        %v7919 = vsel %vm2677, %v7914, %v7918
        %v7921 = vshrl.u32 %v7164, 16
        %v7923 = vrot.slane %v7921, 4
        %v7924 = vshll.u32 %v7164, 16
        %v7926 = vrot.slane %v7924, 5
        %v7927 = vor.u32 %v7923, %v7926
        %v7928 = vrot.slane %v7927, 4
        %v7930 = vshll.u32 %v7165, 16
        %v7932 = vrot.slane %v7930, 5
        %v7933 = vsel %vm2677, %v7928, %v7932
        %v7934 = vshrl.u32 %v7165, 16
        %v7936 = vrot.slane %v7934, 4
        %v7937 = vor.u32 %v7936, %v7932
        %v7938 = vrot.slane %v7937, 4
        %v7940 = vshll.u32 %v7198, 16
        %v7942 = vrot.slane %v7940, 5
        %v7943 = vsel %vm2677, %v7938, %v7942
        %v7945 = vshrl.u32 %v7166, 16
        %v7947 = vrot.slane %v7945, 4
        %v7948 = vshll.u32 %v7166, 16
        %v7950 = vrot.slane %v7948, 5
        %v7951 = vor.u32 %v7947, %v7950
        %v7952 = vrot.slane %v7951, 4
        %v7954 = vshll.u32 %v7167, 16
        %v7956 = vrot.slane %v7954, 5
        %v7957 = vsel %vm2677, %v7952, %v7956
        %v7958 = vshrl.u32 %v7167, 16
        %v7960 = vrot.slane %v7958, 4
        %v7961 = vor.u32 %v7960, %v7956
        %v7962 = vrot.slane %v7961, 4
        %v7964 = vshll.u32 %v7199, 16
        %v7966 = vrot.slane %v7964, 5
        %v7967 = vsel %vm2677, %v7962, %v7966
        %v7968 = vld [vmem:[%s7103] sm:$0xe]
        %v7969 = vld [vmem:[%s7103 + $0xc] sm:$0xe]
        %v7970 = vld [vmem:[%s7103 + $0x18] sm:$0xe]
        %v7971 = vld [vmem:[%s7103 + $0x24] sm:$0xe]
        %v7972 = vld [vmem:[%s7103 + $0x30] sm:$0xe]
        %v7973 = vld [vmem:[%s7103 + $0x3c] sm:$0xe]
        %v7974 = vld [vmem:[%s7103 + $0x48] sm:$0xe]
        %v7975 = vld [vmem:[%s7103 + $0x54] sm:$0xe]
        %v7976 = vld [vmem:[%s7103 + $0x60] sm:$0xe]
        %v7977 = vld [vmem:[%s7103 + $0x6c] sm:$0xe]
        %v7978 = vld [vmem:[%s7103 + $0x78] sm:$0xe]
        %v7979 = vld [vmem:[%s7103 + $0x84] sm:$0xe]
        %v7980 = vld [vmem:[%s7103 + $0x90] sm:$0xe]
        %v7981 = vld [vmem:[%s7103 + $0x9c] sm:$0xe]
        %v7982 = vld [vmem:[%s7103 + $0xa8] sm:$0xe]
        %v7983 = vld [vmem:[%s7103 + $0xb4] sm:$0xe]
        %v7984 = vld [vmem:[%s7103 + $0xd8] sm:$0xe]
        %v7985 = vld [vmem:[%s7103 + $0xe4] sm:$0xe]
        %v7986 = vld [vmem:[%s7103 + $0xf0] sm:$0xe]
        %v7987 = vld [vmem:[%s7103 + $0xfc] sm:$0xe]
        %v7988 = vld [vmem:[%s7103 + $0x108] sm:$0xe]
        %v7989 = vld [vmem:[%s7103 + $0x114] sm:$0xe]
        %v7990 = vld [vmem:[%s7103 + $0x120] sm:$0xe]
        %v7991 = vld [vmem:[%s7103 + $0x12c] sm:$0xe]
        %v7992 = vld [vmem:[%s7103 + $0x138] sm:$0xe]
        %v7993 = vld [vmem:[%s7103 + $0x144] sm:$0xe]
        %v7994 = vld [vmem:[%s7103 + $0x150] sm:$0xe]
        %v7995 = vld [vmem:[%s7103 + $0x15c] sm:$0xe]
        %v7996 = vld [vmem:[%s7103 + $0x168] sm:$0xe]
        %v7997 = vld [vmem:[%s7103 + $0x174] sm:$0xe]
        %v7998 = vld [vmem:[%s7103 + $0x180] sm:$0xe]
        %v7999 = vld [vmem:[%s7103 + $0x18c] sm:$0xe]
        %v8096 = vrot.slane %v7968, 5
        %v8097 = vrot.slane %v8096, 4
        %v8098 = vrot.slane %v7105, 5
        %v8099 = vsel %vm3576, %v8097, %v8098
        %v8100 = vrot.slane %v8098, 4
        %v8101 = vrot.slane %v7168, 5
        %v8102 = vsel %vm3576, %v8100, %v8101
        %v8103 = vrot.slane %v7969, 5
        %v8104 = vrot.slane %v8103, 4
        %v8105 = vrot.slane %v7107, 5
        %v8106 = vsel %vm3576, %v8104, %v8105
        %v8107 = vrot.slane %v8105, 4
        %v8108 = vrot.slane %v7169, 5
        %v8109 = vsel %vm3576, %v8107, %v8108
        %v8110 = vrot.slane %v7970, 5
        %v8111 = vrot.slane %v8110, 4
        %v8112 = vrot.slane %v7109, 5
        %v8113 = vsel %vm3576, %v8111, %v8112
        %v8114 = vrot.slane %v8112, 4
        %v8115 = vrot.slane %v7170, 5
        %v8116 = vsel %vm3576, %v8114, %v8115
        %v8117 = vrot.slane %v7971, 5
        %v8118 = vrot.slane %v8117, 4
        %v8119 = vrot.slane %v7111, 5
        %v8120 = vsel %vm3576, %v8118, %v8119
        %v8121 = vrot.slane %v8119, 4
        %v8122 = vrot.slane %v7171, 5
        %v8123 = vsel %vm3576, %v8121, %v8122
        %v8124 = vrot.slane %v7972, 5
        %v8125 = vrot.slane %v8124, 4
        %v8126 = vrot.slane %v7113, 5
        %v8127 = vsel %vm3576, %v8125, %v8126
        %v8128 = vrot.slane %v8126, 4
        %v8129 = vrot.slane %v7172, 5
        %v8130 = vsel %vm3576, %v8128, %v8129
        %v8131 = vrot.slane %v7973, 5
        %v8132 = vrot.slane %v8131, 4
        %v8133 = vrot.slane %v7115, 5
        %v8134 = vsel %vm3576, %v8132, %v8133
        %v8135 = vrot.slane %v8133, 4
        %v8136 = vrot.slane %v7173, 5
        %v8137 = vsel %vm3576, %v8135, %v8136
        %v8138 = vrot.slane %v7974, 5
        %v8139 = vrot.slane %v8138, 4
        %v8140 = vrot.slane %v7117, 5
        %v8141 = vsel %vm3576, %v8139, %v8140
        %v8142 = vrot.slane %v8140, 4
        %v8143 = vrot.slane %v7174, 5
        %v8144 = vsel %vm3576, %v8142, %v8143
        %v8145 = vrot.slane %v7975, 5
        %v8146 = vrot.slane %v8145, 4
        %v8147 = vrot.slane %v7119, 5
        %v8148 = vsel %vm3576, %v8146, %v8147
        %v8149 = vrot.slane %v8147, 4
        %v8150 = vrot.slane %v7175, 5
        %v8151 = vsel %vm3576, %v8149, %v8150
        %v8152 = vrot.slane %v7976, 5
        %v8153 = vrot.slane %v8152, 4
        %v8154 = vrot.slane %v7121, 5
        %v8155 = vsel %vm3576, %v8153, %v8154
        %v8156 = vrot.slane %v8154, 4
        %v8157 = vrot.slane %v7176, 5
        %v8158 = vsel %vm3576, %v8156, %v8157
        %v8159 = vrot.slane %v7977, 5
        %v8160 = vrot.slane %v8159, 4
        %v8161 = vrot.slane %v7123, 5
        %v8162 = vsel %vm3576, %v8160, %v8161
        %v8163 = vrot.slane %v8161, 4
        %v8164 = vrot.slane %v7177, 5
        %v8165 = vsel %vm3576, %v8163, %v8164
        %v8166 = vrot.slane %v7978, 5
        %v8167 = vrot.slane %v8166, 4
        %v8168 = vrot.slane %v7125, 5
        %v8169 = vsel %vm3576, %v8167, %v8168
        %v8170 = vrot.slane %v8168, 4
        %v8171 = vrot.slane %v7178, 5
        %v8172 = vsel %vm3576, %v8170, %v8171
        %v8173 = vrot.slane %v7979, 5
        %v8174 = vrot.slane %v8173, 4
        %v8175 = vrot.slane %v7127, 5
        %v8176 = vsel %vm3576, %v8174, %v8175
        %v8177 = vrot.slane %v8175, 4
        %v8178 = vrot.slane %v7179, 5
        %v8179 = vsel %vm3576, %v8177, %v8178
        %v8180 = vrot.slane %v7980, 5
        %v8181 = vrot.slane %v8180, 4
        %v8182 = vrot.slane %v7129, 5
        %v8183 = vsel %vm3576, %v8181, %v8182
        %v8184 = vrot.slane %v8182, 4
        %v8185 = vrot.slane %v7180, 5
        %v8186 = vsel %vm3576, %v8184, %v8185
        %v8187 = vrot.slane %v7981, 5
        %v8188 = vrot.slane %v8187, 4
        %v8189 = vrot.slane %v7131, 5
        %v8190 = vsel %vm3576, %v8188, %v8189
        %v8191 = vrot.slane %v8189, 4
        %v8192 = vrot.slane %v7181, 5
        %v8193 = vsel %vm3576, %v8191, %v8192
        %v8194 = vrot.slane %v7982, 5
        %v8195 = vrot.slane %v8194, 4
        %v8196 = vrot.slane %v7133, 5
        %v8197 = vsel %vm3576, %v8195, %v8196
        %v8198 = vrot.slane %v8196, 4
        %v8199 = vrot.slane %v7182, 5
        %v8200 = vsel %vm3576, %v8198, %v8199
        %v8201 = vrot.slane %v7983, 5
        %v8202 = vrot.slane %v8201, 4
        %v8203 = vrot.slane %v7135, 5
        %v8204 = vsel %vm3576, %v8202, %v8203
        %v8205 = vrot.slane %v8203, 4
        %v8206 = vrot.slane %v7183, 5
        %v8207 = vsel %vm3576, %v8205, %v8206
        %v8208 = vrot.slane %v7984, 5
        %v8209 = vrot.slane %v8208, 4
        %v8210 = vrot.slane %v7137, 5
        %v8211 = vsel %vm3576, %v8209, %v8210
        %v8212 = vrot.slane %v8210, 4
        %v8213 = vrot.slane %v7184, 5
        %v8214 = vsel %vm3576, %v8212, %v8213
        %v8215 = vrot.slane %v7985, 5
        %v8216 = vrot.slane %v8215, 4
        %v8217 = vrot.slane %v7139, 5
        %v8218 = vsel %vm3576, %v8216, %v8217
        %v8219 = vrot.slane %v8217, 4
        %v8220 = vrot.slane %v7185, 5
        %v8221 = vsel %vm3576, %v8219, %v8220
        %v8222 = vrot.slane %v7986, 5
        %v8223 = vrot.slane %v8222, 4
        %v8224 = vrot.slane %v7141, 5
        %v8225 = vsel %vm3576, %v8223, %v8224
        %v8226 = vrot.slane %v8224, 4
        %v8227 = vrot.slane %v7186, 5
        %v8228 = vsel %vm3576, %v8226, %v8227
        %v8229 = vrot.slane %v7987, 5
        %v8230 = vrot.slane %v8229, 4
        %v8231 = vrot.slane %v7143, 5
        %v8232 = vsel %vm3576, %v8230, %v8231
        %v8233 = vrot.slane %v8231, 4
        %v8234 = vrot.slane %v7187, 5
        %v8235 = vsel %vm3576, %v8233, %v8234
        %v8236 = vrot.slane %v7988, 5
        %v8237 = vrot.slane %v8236, 4
        %v8238 = vrot.slane %v7145, 5
        %v8239 = vsel %vm3576, %v8237, %v8238
        %v8240 = vrot.slane %v8238, 4
        %v8241 = vrot.slane %v7188, 5
        %v8242 = vsel %vm3576, %v8240, %v8241
        %v8243 = vrot.slane %v7989, 5
        %v8244 = vrot.slane %v8243, 4
        %v8245 = vrot.slane %v7147, 5
        %v8246 = vsel %vm3576, %v8244, %v8245
        %v8247 = vrot.slane %v8245, 4
        %v8248 = vrot.slane %v7189, 5
        %v8249 = vsel %vm3576, %v8247, %v8248
        %v8250 = vrot.slane %v7990, 5
        %v8251 = vrot.slane %v8250, 4
        %v8252 = vrot.slane %v7149, 5
        %v8253 = vsel %vm3576, %v8251, %v8252
        %v8254 = vrot.slane %v8252, 4
        %v8255 = vrot.slane %v7190, 5
        %v8256 = vsel %vm3576, %v8254, %v8255
        %v8257 = vrot.slane %v7991, 5
        %v8258 = vrot.slane %v8257, 4
        %v8259 = vrot.slane %v7151, 5
        %v8260 = vsel %vm3576, %v8258, %v8259
        %v8261 = vrot.slane %v8259, 4
        %v8262 = vrot.slane %v7191, 5
        %v8263 = vsel %vm3576, %v8261, %v8262
        %v8264 = vrot.slane %v7992, 5
        %v8265 = vrot.slane %v8264, 4
        %v8266 = vrot.slane %v7153, 5
        %v8267 = vsel %vm3576, %v8265, %v8266
        %v8268 = vrot.slane %v8266, 4
        %v8269 = vrot.slane %v7192, 5
        %v8270 = vsel %vm3576, %v8268, %v8269
        %v8271 = vrot.slane %v7993, 5
        %v8272 = vrot.slane %v8271, 4
        %v8273 = vrot.slane %v7155, 5
        %v8274 = vsel %vm3576, %v8272, %v8273
        %v8275 = vrot.slane %v8273, 4
        %v8276 = vrot.slane %v7193, 5
        %v8277 = vsel %vm3576, %v8275, %v8276
        %v8278 = vrot.slane %v7994, 5
        %v8279 = vrot.slane %v8278, 4
        %v8280 = vrot.slane %v7157, 5
        %v8281 = vsel %vm3576, %v8279, %v8280
        %v8282 = vrot.slane %v8280, 4
        %v8283 = vrot.slane %v7194, 5
        %v8284 = vsel %vm3576, %v8282, %v8283
        %v8285 = vrot.slane %v7995, 5
        %v8286 = vrot.slane %v8285, 4
        %v8287 = vrot.slane %v7159, 5
        %v8288 = vsel %vm3576, %v8286, %v8287
        %v8289 = vrot.slane %v8287, 4
        %v8290 = vrot.slane %v7195, 5
        %v8291 = vsel %vm3576, %v8289, %v8290
        %v8292 = vrot.slane %v7996, 5
        %v8293 = vrot.slane %v8292, 4
        %v8294 = vrot.slane %v7161, 5
        %v8295 = vsel %vm3576, %v8293, %v8294
        %v8296 = vrot.slane %v8294, 4
        %v8297 = vrot.slane %v7196, 5
        %v8298 = vsel %vm3576, %v8296, %v8297
        %v8299 = vrot.slane %v7997, 5
        %v8300 = vrot.slane %v8299, 4
        %v8301 = vrot.slane %v7163, 5
        %v8302 = vsel %vm3576, %v8300, %v8301
        %v8303 = vrot.slane %v8301, 4
        %v8304 = vrot.slane %v7197, 5
        %v8305 = vsel %vm3576, %v8303, %v8304
        %v8306 = vrot.slane %v7998, 5
        %v8307 = vrot.slane %v8306, 4
        %v8308 = vrot.slane %v7165, 5
        %v8309 = vsel %vm3576, %v8307, %v8308
        %v8310 = vrot.slane %v8308, 4
        %v8311 = vrot.slane %v7198, 5
        %v8312 = vsel %vm3576, %v8310, %v8311
        %v8313 = vrot.slane %v7999, 5
        %v8314 = vrot.slane %v8313, 4
        %v8315 = vrot.slane %v7167, 5
        %v8316 = vsel %vm3576, %v8314, %v8315
        %v8317 = vrot.slane %v8315, 4
        %v8318 = vrot.slane %v7199, 5
        %v8319 = vsel %vm3576, %v8317, %v8318
        %v8352 = vunpack.c.l.b16 %v7104
        %v8353 = vunpack.c.l.b16 %v7105
        %v8354 = vunpack.c.l.b16 %v7106
        %v8355 = vunpack.c.l.b16 %v7107
        %v8356 = vunpack.c.l.b16 %v7108
        %v8357 = vunpack.c.l.b16 %v7109
        %v8358 = vunpack.c.l.b16 %v7110
        %v8359 = vunpack.c.l.b16 %v7111
        %v8360 = vunpack.c.l.b16 %v7112
        %v8361 = vunpack.c.l.b16 %v7113
        %v8362 = vunpack.c.l.b16 %v7114
        %v8363 = vunpack.c.l.b16 %v7115
        %v8364 = vunpack.c.l.b16 %v7116
        %v8365 = vunpack.c.l.b16 %v7117
        %v8366 = vunpack.c.l.b16 %v7118
        %v8367 = vunpack.c.l.b16 %v7119
        %v8368 = vunpack.c.l.b16 %v7120
        %v8369 = vunpack.c.l.b16 %v7121
        %v8370 = vunpack.c.l.b16 %v7122
        %v8371 = vunpack.c.l.b16 %v7123
        %v8372 = vunpack.c.l.b16 %v7124
        %v8373 = vunpack.c.l.b16 %v7125
        %v8374 = vunpack.c.l.b16 %v7126
        %v8375 = vunpack.c.l.b16 %v7127
        %v8376 = vunpack.c.l.b16 %v7128
        %v8377 = vunpack.c.l.b16 %v7129
        %v8378 = vunpack.c.l.b16 %v7130
        %v8379 = vunpack.c.l.b16 %v7131
        %v8380 = vunpack.c.l.b16 %v7132
        %v8381 = vunpack.c.l.b16 %v7133
        %v8382 = vunpack.c.l.b16 %v7134
        %v8383 = vunpack.c.l.b16 %v7135
        %v8384 = vunpack.c.l.b16 %v7136
        %v8385 = vunpack.c.l.b16 %v7137
        %v8386 = vunpack.c.l.b16 %v7138
        %v8387 = vunpack.c.l.b16 %v7139
        %v8388 = vunpack.c.l.b16 %v7140
        %v8389 = vunpack.c.l.b16 %v7141
        %v8390 = vunpack.c.l.b16 %v7142
        %v8391 = vunpack.c.l.b16 %v7143
        %v8392 = vunpack.c.l.b16 %v7144
        %v8393 = vunpack.c.l.b16 %v7145
        %v8394 = vunpack.c.l.b16 %v7146
        %v8395 = vunpack.c.l.b16 %v7147
        %v8396 = vunpack.c.l.b16 %v7148
        %v8397 = vunpack.c.l.b16 %v7149
        %v8398 = vunpack.c.l.b16 %v7150
        %v8399 = vunpack.c.l.b16 %v7151
        %v8400 = vunpack.c.l.b16 %v7152
        %v8401 = vunpack.c.l.b16 %v7153
        %v8402 = vunpack.c.l.b16 %v7154
        %v8403 = vunpack.c.l.b16 %v7155
        %v8404 = vunpack.c.l.b16 %v7156
        %v8405 = vunpack.c.l.b16 %v7157
        %v8406 = vunpack.c.l.b16 %v7158
        %v8407 = vunpack.c.l.b16 %v7159
        %v8408 = vunpack.c.l.b16 %v7160
        %v8409 = vunpack.c.l.b16 %v7161
        %v8410 = vunpack.c.l.b16 %v7162
        %v8411 = vunpack.c.l.b16 %v7163
        %v8412 = vunpack.c.l.b16 %v7164
        %v8413 = vunpack.c.l.b16 %v7165
        %v8414 = vunpack.c.l.b16 %v7166
        %v8415 = vunpack.c.l.b16 %v7167
        %v8416 = vpack.c.b16 %v8353, %v8352
        %v8417 = vpack.c.b16 %v8355, %v8354
        %v8418 = vpack.c.b16 %v8357, %v8356
        %v8419 = vpack.c.b16 %v8359, %v8358
        %v8420 = vpack.c.b16 %v8361, %v8360
        %v8421 = vpack.c.b16 %v8363, %v8362
        %v8422 = vpack.c.b16 %v8365, %v8364
        %v8423 = vpack.c.b16 %v8367, %v8366
        %v8424 = vpack.c.b16 %v8369, %v8368
        %v8425 = vpack.c.b16 %v8371, %v8370
        %v8426 = vpack.c.b16 %v8373, %v8372
        %v8427 = vpack.c.b16 %v8375, %v8374
        %v8428 = vpack.c.b16 %v8377, %v8376
        %v8429 = vpack.c.b16 %v8379, %v8378
        %v8430 = vpack.c.b16 %v8381, %v8380
        %v8431 = vpack.c.b16 %v8383, %v8382
        %v8432 = vpack.c.b16 %v8385, %v8384
        %v8433 = vpack.c.b16 %v8387, %v8386
        %v8434 = vpack.c.b16 %v8389, %v8388
        %v8435 = vpack.c.b16 %v8391, %v8390
        %v8436 = vpack.c.b16 %v8393, %v8392
        %v8437 = vpack.c.b16 %v8395, %v8394
        %v8438 = vpack.c.b16 %v8397, %v8396
        %v8439 = vpack.c.b16 %v8399, %v8398
        %v8440 = vpack.c.b16 %v8401, %v8400
        %v8441 = vpack.c.b16 %v8403, %v8402
        %v8442 = vpack.c.b16 %v8405, %v8404
        %v8443 = vpack.c.b16 %v8407, %v8406
        %v8444 = vpack.c.b16 %v8409, %v8408
        %v8445 = vpack.c.b16 %v8411, %v8410
        %v8446 = vpack.c.b16 %v8413, %v8412
        %v8447 = vpack.c.b16 %v8415, %v8414
        %v8448 = vunpack.c.l.b16 %v7213
        %v8449 = vunpack.c.l.b16 %v7223
        %v8450 = vunpack.c.l.b16 %v7237
        %v8451 = vunpack.c.l.b16 %v7247
        %v8452 = vunpack.c.l.b16 %v7261
        %v8453 = vunpack.c.l.b16 %v7271
        %v8454 = vunpack.c.l.b16 %v7285
        %v8455 = vunpack.c.l.b16 %v7295
        %v8456 = vunpack.c.l.b16 %v7309
        %v8457 = vunpack.c.l.b16 %v7319
        %v8458 = vunpack.c.l.b16 %v7333
        %v8459 = vunpack.c.l.b16 %v7343
        %v8460 = vunpack.c.l.b16 %v7357
        %v8461 = vunpack.c.l.b16 %v7367
        %v8462 = vunpack.c.l.b16 %v7381
        %v8463 = vunpack.c.l.b16 %v7391
        %v8464 = vunpack.c.l.b16 %v7405
        %v8465 = vunpack.c.l.b16 %v7415
        %v8466 = vunpack.c.l.b16 %v7429
        %v8467 = vunpack.c.l.b16 %v7439
        %v8468 = vunpack.c.l.b16 %v7453
        %v8469 = vunpack.c.l.b16 %v7463
        %v8470 = vunpack.c.l.b16 %v7477
        %v8471 = vunpack.c.l.b16 %v7487
        %v8472 = vunpack.c.l.b16 %v7501
        %v8473 = vunpack.c.l.b16 %v7511
        %v8474 = vunpack.c.l.b16 %v7525
        %v8475 = vunpack.c.l.b16 %v7535
        %v8476 = vunpack.c.l.b16 %v7549
        %v8477 = vunpack.c.l.b16 %v7559
        %v8478 = vunpack.c.l.b16 %v7573
        %v8479 = vunpack.c.l.b16 %v7583
        %v8480 = vunpack.c.l.b16 %v7597
        %v8481 = vunpack.c.l.b16 %v7607
        %v8482 = vunpack.c.l.b16 %v7621
        %v8483 = vunpack.c.l.b16 %v7631
        %v8484 = vunpack.c.l.b16 %v7645
        %v8485 = vunpack.c.l.b16 %v7655
        %v8486 = vunpack.c.l.b16 %v7669
        %v8487 = vunpack.c.l.b16 %v7679
        %v8488 = vunpack.c.l.b16 %v7693
        %v8489 = vunpack.c.l.b16 %v7703
        %v8490 = vunpack.c.l.b16 %v7717
        %v8491 = vunpack.c.l.b16 %v7727
        %v8492 = vunpack.c.l.b16 %v7741
        %v8493 = vunpack.c.l.b16 %v7751
        %v8494 = vunpack.c.l.b16 %v7765
        %v8495 = vunpack.c.l.b16 %v7775
        %v8496 = vunpack.c.l.b16 %v7789
        %v8497 = vunpack.c.l.b16 %v7799
        %v8498 = vunpack.c.l.b16 %v7813
        %v8499 = vunpack.c.l.b16 %v7823
        %v8500 = vunpack.c.l.b16 %v7837
        %v8501 = vunpack.c.l.b16 %v7847
        %v8502 = vunpack.c.l.b16 %v7861
        %v8503 = vunpack.c.l.b16 %v7871
        %v8504 = vunpack.c.l.b16 %v7885
        %v8505 = vunpack.c.l.b16 %v7895
        %v8506 = vunpack.c.l.b16 %v7909
        %v8507 = vunpack.c.l.b16 %v7919
        %v8508 = vunpack.c.l.b16 %v7933
        %v8509 = vunpack.c.l.b16 %v7943
        %v8510 = vunpack.c.l.b16 %v7957
        %v8511 = vunpack.c.l.b16 %v7967
        %v8512 = vpack.c.b16 %v8449, %v8448
        %v8513 = vpack.c.b16 %v8451, %v8450
        %v8514 = vpack.c.b16 %v8453, %v8452
        %v8515 = vpack.c.b16 %v8455, %v8454
        %v8516 = vpack.c.b16 %v8457, %v8456
        %v8517 = vpack.c.b16 %v8459, %v8458
        %v8518 = vpack.c.b16 %v8461, %v8460
        %v8519 = vpack.c.b16 %v8463, %v8462
        %v8520 = vpack.c.b16 %v8465, %v8464
        %v8521 = vpack.c.b16 %v8467, %v8466
        %v8522 = vpack.c.b16 %v8469, %v8468
        %v8523 = vpack.c.b16 %v8471, %v8470
        %v8524 = vpack.c.b16 %v8473, %v8472
        %v8525 = vpack.c.b16 %v8475, %v8474
        %v8526 = vpack.c.b16 %v8477, %v8476
        %v8527 = vpack.c.b16 %v8479, %v8478
        %v8528 = vpack.c.b16 %v8481, %v8480
        %v8529 = vpack.c.b16 %v8483, %v8482
        %v8530 = vpack.c.b16 %v8485, %v8484
        %v8531 = vpack.c.b16 %v8487, %v8486
        %v8532 = vpack.c.b16 %v8489, %v8488
        %v8533 = vpack.c.b16 %v8491, %v8490
        %v8534 = vpack.c.b16 %v8493, %v8492
        %v8535 = vpack.c.b16 %v8495, %v8494
        %v8536 = vpack.c.b16 %v8497, %v8496
        %v8537 = vpack.c.b16 %v8499, %v8498
        %v8538 = vpack.c.b16 %v8501, %v8500
        %v8539 = vpack.c.b16 %v8503, %v8502
        %v8540 = vpack.c.b16 %v8505, %v8504
        %v8541 = vpack.c.b16 %v8507, %v8506
        %v8542 = vpack.c.b16 %v8509, %v8508
        %v8543 = vpack.c.b16 %v8511, %v8510
        %8544 = vrot.lane.b32.xlu0 %v8512, 64
        %v8545 = vpop.permute.xlu0 %8544
        %8546 = vrot.lane.b32.xlu0 %v8513, 64
        %v8547 = vpop.permute.xlu0 %8546
        %8548 = vrot.lane.b32.xlu0 %v8514, 64
        %v8549 = vpop.permute.xlu0 %8548
        %8550 = vrot.lane.b32.xlu0 %v8515, 64
        %v8551 = vpop.permute.xlu0 %8550
        %8552 = vrot.lane.b32.xlu0 %v8516, 64
        %v8553 = vpop.permute.xlu0 %8552
        %8554 = vrot.lane.b32.xlu0 %v8517, 64
        %v8555 = vpop.permute.xlu0 %8554
        %8556 = vrot.lane.b32.xlu0 %v8518, 64
        %v8557 = vpop.permute.xlu0 %8556
        %8558 = vrot.lane.b32.xlu0 %v8519, 64
        %v8559 = vpop.permute.xlu0 %8558
        %8560 = vrot.lane.b32.xlu0 %v8520, 64
        %v8561 = vpop.permute.xlu0 %8560
        %8562 = vrot.lane.b32.xlu0 %v8521, 64
        %v8563 = vpop.permute.xlu0 %8562
        %8564 = vrot.lane.b32.xlu0 %v8522, 64
        %v8565 = vpop.permute.xlu0 %8564
        %8566 = vrot.lane.b32.xlu0 %v8523, 64
        %v8567 = vpop.permute.xlu0 %8566
        %8568 = vrot.lane.b32.xlu0 %v8524, 64
        %v8569 = vpop.permute.xlu0 %8568
        %8570 = vrot.lane.b32.xlu0 %v8525, 64
        %v8571 = vpop.permute.xlu0 %8570
        %8572 = vrot.lane.b32.xlu0 %v8526, 64
        %v8573 = vpop.permute.xlu0 %8572
        %8574 = vrot.lane.b32.xlu0 %v8527, 64
        %v8575 = vpop.permute.xlu0 %8574
        %8576 = vrot.lane.b32.xlu0 %v8528, 64
        %v8577 = vpop.permute.xlu0 %8576
        %8578 = vrot.lane.b32.xlu0 %v8529, 64
        %v8579 = vpop.permute.xlu0 %8578
        %8580 = vrot.lane.b32.xlu0 %v8530, 64
        %v8581 = vpop.permute.xlu0 %8580
        %8582 = vrot.lane.b32.xlu0 %v8531, 64
        %v8583 = vpop.permute.xlu0 %8582
        %8584 = vrot.lane.b32.xlu0 %v8532, 64
        %v8585 = vpop.permute.xlu0 %8584
        %8586 = vrot.lane.b32.xlu0 %v8533, 64
        %v8587 = vpop.permute.xlu0 %8586
        %8588 = vrot.lane.b32.xlu0 %v8534, 64
        %v8589 = vpop.permute.xlu0 %8588
        %8590 = vrot.lane.b32.xlu0 %v8535, 64
        %v8591 = vpop.permute.xlu0 %8590
        %8592 = vrot.lane.b32.xlu0 %v8536, 64
        %v8593 = vpop.permute.xlu0 %8592
        %8594 = vrot.lane.b32.xlu0 %v8537, 64
        %v8595 = vpop.permute.xlu0 %8594
        %8596 = vrot.lane.b32.xlu0 %v8538, 64
        %v8597 = vpop.permute.xlu0 %8596
        %8598 = vrot.lane.b32.xlu0 %v8539, 64
        %v8599 = vpop.permute.xlu0 %8598
        %8600 = vrot.lane.b32.xlu0 %v8540, 64
        %v8601 = vpop.permute.xlu0 %8600
        %8602 = vrot.lane.b32.xlu0 %v8541, 64
        %v8603 = vpop.permute.xlu0 %8602
        %8604 = vrot.lane.b32.xlu0 %v8542, 64
        %v8605 = vpop.permute.xlu0 %8604
        %8606 = vrot.lane.b32.xlu0 %v8543, 64
        %v8607 = vpop.permute.xlu0 %8606
        %v8608 = vunpack.c.l.b16 %v8099
        %v8609 = vunpack.c.l.b16 %v8102
        %v8610 = vunpack.c.l.b16 %v8106
        %v8611 = vunpack.c.l.b16 %v8109
        %v8612 = vunpack.c.l.b16 %v8113
        %v8613 = vunpack.c.l.b16 %v8116
        %v8614 = vunpack.c.l.b16 %v8120
        %v8615 = vunpack.c.l.b16 %v8123
        %v8616 = vunpack.c.l.b16 %v8127
        %v8617 = vunpack.c.l.b16 %v8130
        %v8618 = vunpack.c.l.b16 %v8134
        %v8619 = vunpack.c.l.b16 %v8137
        %v8620 = vunpack.c.l.b16 %v8141
        %v8621 = vunpack.c.l.b16 %v8144
        %v8622 = vunpack.c.l.b16 %v8148
        %v8623 = vunpack.c.l.b16 %v8151
        %v8624 = vunpack.c.l.b16 %v8155
        %v8625 = vunpack.c.l.b16 %v8158
        %v8626 = vunpack.c.l.b16 %v8162
        %v8627 = vunpack.c.l.b16 %v8165
        %v8628 = vunpack.c.l.b16 %v8169
        %v8629 = vunpack.c.l.b16 %v8172
        %v8630 = vunpack.c.l.b16 %v8176
        %v8631 = vunpack.c.l.b16 %v8179
        %v8632 = vunpack.c.l.b16 %v8183
        %v8633 = vunpack.c.l.b16 %v8186
        %v8634 = vunpack.c.l.b16 %v8190
        %v8635 = vunpack.c.l.b16 %v8193
        %v8636 = vunpack.c.l.b16 %v8197
        %v8637 = vunpack.c.l.b16 %v8200
        %v8638 = vunpack.c.l.b16 %v8204
        %v8639 = vunpack.c.l.b16 %v8207
        %v8640 = vunpack.c.l.b16 %v8211
        %v8641 = vunpack.c.l.b16 %v8214
        %v8642 = vunpack.c.l.b16 %v8218
        %v8643 = vunpack.c.l.b16 %v8221
        %v8644 = vunpack.c.l.b16 %v8225
        %v8645 = vunpack.c.l.b16 %v8228
        %v8646 = vunpack.c.l.b16 %v8232
        %v8647 = vunpack.c.l.b16 %v8235
        %v8648 = vunpack.c.l.b16 %v8239
        %v8649 = vunpack.c.l.b16 %v8242
        %v8650 = vunpack.c.l.b16 %v8246
        %v8651 = vunpack.c.l.b16 %v8249
        %v8652 = vunpack.c.l.b16 %v8253
        %v8653 = vunpack.c.l.b16 %v8256
        %v8654 = vunpack.c.l.b16 %v8260
        %v8655 = vunpack.c.l.b16 %v8263
        %v8656 = vunpack.c.l.b16 %v8267
        %v8657 = vunpack.c.l.b16 %v8270
        %v8658 = vunpack.c.l.b16 %v8274
        %v8659 = vunpack.c.l.b16 %v8277
        %v8660 = vunpack.c.l.b16 %v8281
        %v8661 = vunpack.c.l.b16 %v8284
        %v8662 = vunpack.c.l.b16 %v8288
        %v8663 = vunpack.c.l.b16 %v8291
        %v8664 = vunpack.c.l.b16 %v8295
        %v8665 = vunpack.c.l.b16 %v8298
        %v8666 = vunpack.c.l.b16 %v8302
        %v8667 = vunpack.c.l.b16 %v8305
        %v8668 = vunpack.c.l.b16 %v8309
        %v8669 = vunpack.c.l.b16 %v8312
        %v8670 = vunpack.c.l.b16 %v8316
        %v8671 = vunpack.c.l.b16 %v8319
        %v8672 = vpack.c.b16 %v8609, %v8608
        %v8673 = vpack.c.b16 %v8611, %v8610
        %v8674 = vpack.c.b16 %v8613, %v8612
        %v8675 = vpack.c.b16 %v8615, %v8614
        %v8676 = vpack.c.b16 %v8617, %v8616
        %v8677 = vpack.c.b16 %v8619, %v8618
        %v8678 = vpack.c.b16 %v8621, %v8620
        %v8679 = vpack.c.b16 %v8623, %v8622
        %v8680 = vpack.c.b16 %v8625, %v8624
        %v8681 = vpack.c.b16 %v8627, %v8626
        %v8682 = vpack.c.b16 %v8629, %v8628
        %v8683 = vpack.c.b16 %v8631, %v8630
        %v8684 = vpack.c.b16 %v8633, %v8632
        %v8685 = vpack.c.b16 %v8635, %v8634
        %v8686 = vpack.c.b16 %v8637, %v8636
        %v8687 = vpack.c.b16 %v8639, %v8638
        %v8688 = vpack.c.b16 %v8641, %v8640
        %v8689 = vpack.c.b16 %v8643, %v8642
        %v8690 = vpack.c.b16 %v8645, %v8644
        %v8691 = vpack.c.b16 %v8647, %v8646
        %v8692 = vpack.c.b16 %v8649, %v8648
        %v8693 = vpack.c.b16 %v8651, %v8650
        %v8694 = vpack.c.b16 %v8653, %v8652
        %v8695 = vpack.c.b16 %v8655, %v8654
        %v8696 = vpack.c.b16 %v8657, %v8656
        %v8697 = vpack.c.b16 %v8659, %v8658
        %v8698 = vpack.c.b16 %v8661, %v8660
        %v8699 = vpack.c.b16 %v8663, %v8662
        %v8700 = vpack.c.b16 %v8665, %v8664
        %v8701 = vpack.c.b16 %v8667, %v8666
        %v8702 = vpack.c.b16 %v8669, %v8668
        %v8703 = vpack.c.b16 %v8671, %v8670
        %v8706 = vsel %vm4185, %v8416, %v8545
        %v8710 = vsel %vm4185, %v8417, %v8547
        %v8714 = vsel %vm4185, %v8418, %v8549
        %v8718 = vsel %vm4185, %v8419, %v8551
        %v8722 = vsel %vm4185, %v8420, %v8553
        %v8726 = vsel %vm4185, %v8421, %v8555
        %v8730 = vsel %vm4185, %v8422, %v8557
        %v8734 = vsel %vm4185, %v8423, %v8559
        %v8738 = vsel %vm4185, %v8424, %v8561
        %v8742 = vsel %vm4185, %v8425, %v8563
        %v8746 = vsel %vm4185, %v8426, %v8565
        %v8750 = vsel %vm4185, %v8427, %v8567
        %v8754 = vsel %vm4185, %v8428, %v8569
        %v8758 = vsel %vm4185, %v8429, %v8571
        %v8762 = vsel %vm4185, %v8430, %v8573
        %v8766 = vsel %vm4185, %v8431, %v8575
        %v8770 = vsel %vm4185, %v8432, %v8577
        %v8774 = vsel %vm4185, %v8433, %v8579
        %v8778 = vsel %vm4185, %v8434, %v8581
        %v8782 = vsel %vm4185, %v8435, %v8583
        %v8786 = vsel %vm4185, %v8436, %v8585
        %v8790 = vsel %vm4185, %v8437, %v8587
        %v8794 = vsel %vm4185, %v8438, %v8589
        %v8798 = vsel %vm4185, %v8439, %v8591
        %v8802 = vsel %vm4185, %v8440, %v8593
        %v8806 = vsel %vm4185, %v8441, %v8595
        %v8810 = vsel %vm4185, %v8442, %v8597
        %v8814 = vsel %vm4185, %v8443, %v8599
        %v8818 = vsel %vm4185, %v8444, %v8601
        %v8822 = vsel %vm4185, %v8445, %v8603
        %v8826 = vsel %vm4185, %v8446, %v8605
        %v8830 = vsel %vm4185, %v8447, %v8607
        %s8832 = scalar_lea.vmem %s4, 192
        %v8833 = vld [vmem:[%s8832] sm:$0xf]
        %v8834 = vld [vmem:[%s8832 + $0x4] sm:$0xf]
        %v8835 = vld [vmem:[%s8832 + $0x8] sm:$0xf]
        %v8836 = vld [vmem:[%s8832 + $0xc] sm:$0xf]
        %v8837 = vld [vmem:[%s8832 + $0x10] sm:$0xf]
        %v8838 = vld [vmem:[%s8832 + $0x14] sm:$0xf]
        %v8839 = vld [vmem:[%s8832 + $0x18] sm:$0xf]
        %v8840 = vld [vmem:[%s8832 + $0x1c] sm:$0xf]
        %v8841 = vld [vmem:[%s8832 + $0x20] sm:$0xf]
        %v8842 = vld [vmem:[%s8832 + $0x24] sm:$0xf]
        %v8843 = vld [vmem:[%s8832 + $0x28] sm:$0xf]
        %v8844 = vld [vmem:[%s8832 + $0x2c] sm:$0xf]
        %v8845 = vld [vmem:[%s8832 + $0x30] sm:$0xf]
        %v8846 = vld [vmem:[%s8832 + $0x34] sm:$0xf]
        %v8847 = vld [vmem:[%s8832 + $0x38] sm:$0xf]
        %v8848 = vld [vmem:[%s8832 + $0x3c] sm:$0xf]
        %v8849 = vld [vmem:[%s8832 + $0x40] sm:$0xf]
        %v8850 = vld [vmem:[%s8832 + $0x44] sm:$0xf]
        %v8851 = vld [vmem:[%s8832 + $0x48] sm:$0xf]
        %v8852 = vld [vmem:[%s8832 + $0x4c] sm:$0xf]
        %v8853 = vld [vmem:[%s8832 + $0x50] sm:$0xf]
        %v8854 = vld [vmem:[%s8832 + $0x54] sm:$0xf]
        %v8855 = vld [vmem:[%s8832 + $0x58] sm:$0xf]
        %v8856 = vld [vmem:[%s8832 + $0x5c] sm:$0xf]
        %v8881 = vunpack.c.l.b16 %v8833
        %v8882 = vunpack.c.l.b16 %v8834
        %v8883 = vunpack.c.l.b16 %v8835
        %v8884 = vunpack.c.l.b16 %v8836
        %v8885 = vunpack.c.l.b16 %v8837
        %v8886 = vunpack.c.l.b16 %v8838
        %v8887 = vunpack.c.l.b16 %v8839
        %v8888 = vunpack.c.l.b16 %v8840
        %v8889 = vunpack.c.l.b16 %v8841
        %v8890 = vunpack.c.l.b16 %v8842
        %v8891 = vunpack.c.l.b16 %v8843
        %v8892 = vunpack.c.l.b16 %v8844
        %v8893 = vunpack.c.l.b16 %v8845
        %v8894 = vunpack.c.l.b16 %v8846
        %v8895 = vunpack.c.l.b16 %v8847
        %v8896 = vunpack.c.l.b16 %v8848
        %v8897 = vunpack.c.l.b16 %v8849
        %v8898 = vunpack.c.l.b16 %v8850
        %v8899 = vunpack.c.l.b16 %v8851
        %v8900 = vunpack.c.l.b16 %v8852
        %v8901 = vunpack.c.l.b16 %v8853
        %v8902 = vunpack.c.l.b16 %v8854
        %v8903 = vunpack.c.l.b16 %v8855
        %v8904 = vunpack.c.l.b16 %v8856
        %v8905 = vpack.c.b16 %v8882, %v8881
        %v8906 = vpack.c.b16 %v8884, %v8883
        %v8907 = vpack.c.b16 %v8886, %v8885
        %v8908 = vpack.c.b16 %v8888, %v8887
        %v8909 = vpack.c.b16 %v8890, %v8889
        %v8910 = vpack.c.b16 %v8892, %v8891
        %v8911 = vpack.c.b16 %v8894, %v8893
        %v8912 = vpack.c.b16 %v8896, %v8895
        %v8913 = vpack.c.b16 %v8898, %v8897
        %v8914 = vpack.c.b16 %v8900, %v8899
        %v8915 = vpack.c.b16 %v8902, %v8901
        %v8916 = vpack.c.b16 %v8904, %v8903
        %v8930 = vsel %vm4185, %v8672, 0
        %v8933 = vsel %vm4185, %v8673, 0
        %v8936 = vsel %vm4185, %v8674, 0
        %v8939 = vsel %vm4185, %v8675, 0
        %v8942 = vsel %vm4185, %v8676, 0
        %v8945 = vsel %vm4185, %v8677, 0
        %v8948 = vsel %vm4185, %v8678, 0
        %v8951 = vsel %vm4185, %v8679, 0
        %v8954 = vsel %vm4185, %v8680, 0
        %v8957 = vsel %vm4185, %v8681, 0
        %v8960 = vsel %vm4185, %v8682, 0
        %v8963 = vsel %vm4185, %v8683, 0
        %v8966 = vsel %vm4185, %v8684, 0
        %v8969 = vsel %vm4185, %v8685, 0
        %v8972 = vsel %vm4185, %v8686, 0
        %v8975 = vsel %vm4185, %v8687, 0
        %v8978 = vsel %vm4185, %v8688, 0
        %v8981 = vsel %vm4185, %v8689, 0
        %v8984 = vsel %vm4185, %v8690, 0
        %v8987 = vsel %vm4185, %v8691, 0
        %v8990 = vsel %vm4185, %v8692, 0
        %v8993 = vsel %vm4185, %v8693, 0
        %v8996 = vsel %vm4185, %v8694, 0
        %v8999 = vsel %vm4185, %v8695, 0
        %v9002 = vsel %vm4185, %v8696, 0
        %v9005 = vsel %vm4185, %v8697, 0
        %v9008 = vsel %vm4185, %v8698, 0
        %v9011 = vsel %vm4185, %v8699, 0
        %v9014 = vsel %vm4185, %v8700, 0
        %v9017 = vsel %vm4185, %v8701, 0
        %v9020 = vsel %vm4185, %v8702, 0
        %v9023 = vsel %vm4185, %v8703, 0
        %9025 = vmatpush.bf16.msra.mxu0 %v8912
        %9026 = vmatpush.bf16.msra.mxu0 %v8911
        %9027 = vmatpush.bf16.msra.mxu0 %v8910
        %9028 = vmatpush.bf16.msra.mxu0 %v8909
        %9029 = vmatpush.bf16.msra.mxu0 %v8908
        %9030 = vmatpush.bf16.msra.mxu0 %v8907
        %9031 = vmatpush.bf16.msra.mxu0 %v8906
        %9032 = vmatpush.bf16.msra.mxu0 %v8905
        %9033 = vmatmul.bf16.gmra.mxu0 %v8706
        %v9034 = vpop.f32.mrf.mxu0
        %v9035 = vadd.f32 0.0, %v9034
        %v9036 = vpop.f32.mrf.mxu0
        %v9037 = vadd.f32 0.0, %v9036
        %9038 = vmatmul.bf16.gmra.mxu0 %v8710
        %v9039 = vpop.f32.mrf.mxu0
        %v9040 = vadd.f32 0.0, %v9039
        %v9041 = vpop.f32.mrf.mxu0
        %v9042 = vadd.f32 0.0, %v9041
        %9043 = vmatmul.bf16.gmra.mxu0 %v8714
        %v9044 = vpop.f32.mrf.mxu0
        %v9045 = vadd.f32 0.0, %v9044
        %v9046 = vpop.f32.mrf.mxu0
        %v9047 = vadd.f32 0.0, %v9046
        %9048 = vmatmul.bf16.gmra.mxu0 %v8718
        %v9049 = vpop.f32.mrf.mxu0
        %v9050 = vadd.f32 0.0, %v9049
        %v9051 = vpop.f32.mrf.mxu0
        %v9052 = vadd.f32 0.0, %v9051
        %9053 = vmatmul.bf16.gmra.mxu0 %v8722
        %v9054 = vpop.f32.mrf.mxu0
        %v9055 = vadd.f32 0.0, %v9054
        %v9056 = vpop.f32.mrf.mxu0
        %v9057 = vadd.f32 0.0, %v9056
        %9058 = vmatmul.bf16.gmra.mxu0 %v8726
        %v9059 = vpop.f32.mrf.mxu0
        %v9060 = vadd.f32 0.0, %v9059
        %v9061 = vpop.f32.mrf.mxu0
        %v9062 = vadd.f32 0.0, %v9061
        %9063 = vmatmul.bf16.gmra.mxu0 %v8730
        %v9064 = vpop.f32.mrf.mxu0
        %v9065 = vadd.f32 0.0, %v9064
        %v9066 = vpop.f32.mrf.mxu0
        %v9067 = vadd.f32 0.0, %v9066
        %9068 = vmatmul.bf16.gmra.mxu0 %v8734
        %v9069 = vpop.f32.mrf.mxu0
        %v9070 = vadd.f32 0.0, %v9069
        %v9071 = vpop.f32.mrf.mxu0
        %v9072 = vadd.f32 0.0, %v9071
        %9073 = vmatmul.bf16.gmra.mxu0 %v8738
        %v9074 = vpop.f32.mrf.mxu0
        %v9075 = vadd.f32 0.0, %v9074
        %v9076 = vpop.f32.mrf.mxu0
        %v9077 = vadd.f32 0.0, %v9076
        %9078 = vmatmul.bf16.gmra.mxu0 %v8742
        %v9079 = vpop.f32.mrf.mxu0
        %v9080 = vadd.f32 0.0, %v9079
        %v9081 = vpop.f32.mrf.mxu0
        %v9082 = vadd.f32 0.0, %v9081
        %9083 = vmatmul.bf16.gmra.mxu0 %v8746
        %v9084 = vpop.f32.mrf.mxu0
        %v9085 = vadd.f32 0.0, %v9084
        %v9086 = vpop.f32.mrf.mxu0
        %v9087 = vadd.f32 0.0, %v9086
        %9088 = vmatmul.bf16.gmra.mxu0 %v8750
        %v9089 = vpop.f32.mrf.mxu0
        %v9090 = vadd.f32 0.0, %v9089
        %v9091 = vpop.f32.mrf.mxu0
        %v9092 = vadd.f32 0.0, %v9091
        %9093 = vmatmul.bf16.gmra.mxu0 %v8754
        %v9094 = vpop.f32.mrf.mxu0
        %v9095 = vadd.f32 0.0, %v9094
        %v9096 = vpop.f32.mrf.mxu0
        %v9097 = vadd.f32 0.0, %v9096
        %9098 = vmatmul.bf16.gmra.mxu0 %v8758
        %v9099 = vpop.f32.mrf.mxu0
        %v9100 = vadd.f32 0.0, %v9099
        %v9101 = vpop.f32.mrf.mxu0
        %v9102 = vadd.f32 0.0, %v9101
        %9103 = vmatmul.bf16.gmra.mxu0 %v8762
        %v9104 = vpop.f32.mrf.mxu0
        %v9105 = vadd.f32 0.0, %v9104
        %v9106 = vpop.f32.mrf.mxu0
        %v9107 = vadd.f32 0.0, %v9106
        %9108 = vmatmul.bf16.gmra.mxu0 %v8766
        %v9109 = vpop.f32.mrf.mxu0
        %v9110 = vadd.f32 0.0, %v9109
        %v9111 = vpop.f32.mrf.mxu0
        %v9112 = vadd.f32 0.0, %v9111
        %9113 = vmatmul.bf16.gmra.mxu0 %v8770
        %v9114 = vpop.f32.mrf.mxu0
        %v9115 = vadd.f32 0.0, %v9114
        %v9116 = vpop.f32.mrf.mxu0
        %v9117 = vadd.f32 0.0, %v9116
        %9118 = vmatmul.bf16.gmra.mxu0 %v8774
        %v9119 = vpop.f32.mrf.mxu0
        %v9120 = vadd.f32 0.0, %v9119
        %v9121 = vpop.f32.mrf.mxu0
        %v9122 = vadd.f32 0.0, %v9121
        %9123 = vmatmul.bf16.gmra.mxu0 %v8778
        %v9124 = vpop.f32.mrf.mxu0
        %v9125 = vadd.f32 0.0, %v9124
        %v9126 = vpop.f32.mrf.mxu0
        %v9127 = vadd.f32 0.0, %v9126
        %9128 = vmatmul.bf16.gmra.mxu0 %v8782
        %v9129 = vpop.f32.mrf.mxu0
        %v9130 = vadd.f32 0.0, %v9129
        %v9131 = vpop.f32.mrf.mxu0
        %v9132 = vadd.f32 0.0, %v9131
        %9133 = vmatmul.bf16.gmra.mxu0 %v8786
        %v9134 = vpop.f32.mrf.mxu0
        %v9135 = vadd.f32 0.0, %v9134
        %v9136 = vpop.f32.mrf.mxu0
        %v9137 = vadd.f32 0.0, %v9136
        %9138 = vmatmul.bf16.gmra.mxu0 %v8790
        %v9139 = vpop.f32.mrf.mxu0
        %v9140 = vadd.f32 0.0, %v9139
        %v9141 = vpop.f32.mrf.mxu0
        %v9142 = vadd.f32 0.0, %v9141
        %9143 = vmatmul.bf16.gmra.mxu0 %v8794
        %v9144 = vpop.f32.mrf.mxu0
        %v9145 = vadd.f32 0.0, %v9144
        %v9146 = vpop.f32.mrf.mxu0
        %v9147 = vadd.f32 0.0, %v9146
        %9148 = vmatmul.bf16.gmra.mxu0 %v8798
        %v9149 = vpop.f32.mrf.mxu0
        %v9150 = vadd.f32 0.0, %v9149
        %v9151 = vpop.f32.mrf.mxu0
        %v9152 = vadd.f32 0.0, %v9151
        %9153 = vmatmul.bf16.gmra.mxu0 %v8802
        %v9154 = vpop.f32.mrf.mxu0
        %v9155 = vadd.f32 0.0, %v9154
        %v9156 = vpop.f32.mrf.mxu0
        %v9157 = vadd.f32 0.0, %v9156
        %9158 = vmatmul.bf16.gmra.mxu0 %v8806
        %v9159 = vpop.f32.mrf.mxu0
        %v9160 = vadd.f32 0.0, %v9159
        %v9161 = vpop.f32.mrf.mxu0
        %v9162 = vadd.f32 0.0, %v9161
        %9163 = vmatmul.bf16.gmra.mxu0 %v8810
        %v9164 = vpop.f32.mrf.mxu0
        %v9165 = vadd.f32 0.0, %v9164
        %v9166 = vpop.f32.mrf.mxu0
        %v9167 = vadd.f32 0.0, %v9166
        %9168 = vmatmul.bf16.gmra.mxu0 %v8814
        %v9169 = vpop.f32.mrf.mxu0
        %v9170 = vadd.f32 0.0, %v9169
        %v9171 = vpop.f32.mrf.mxu0
        %v9172 = vadd.f32 0.0, %v9171
        %9173 = vmatmul.bf16.gmra.mxu0 %v8818
        %v9174 = vpop.f32.mrf.mxu0
        %v9175 = vadd.f32 0.0, %v9174
        %v9176 = vpop.f32.mrf.mxu0
        %v9177 = vadd.f32 0.0, %v9176
        %9178 = vmatmul.bf16.gmra.mxu0 %v8822
        %v9179 = vpop.f32.mrf.mxu0
        %v9180 = vadd.f32 0.0, %v9179
        %v9181 = vpop.f32.mrf.mxu0
        %v9182 = vadd.f32 0.0, %v9181
        %9183 = vmatmul.bf16.gmra.mxu0 %v8826
        %v9184 = vpop.f32.mrf.mxu0
        %v9185 = vadd.f32 0.0, %v9184
        %v9186 = vpop.f32.mrf.mxu0
        %v9187 = vadd.f32 0.0, %v9186
        %9188 = vmatmul.bf16.gmra.mxu0 %v8830
        %v9189 = vpop.f32.mrf.mxu0
        %v9190 = vadd.f32 0.0, %v9189
        %v9191 = vpop.f32.mrf.mxu0
        %v9192 = vadd.f32 0.0, %v9191
        %9193 = vdwg.mxu0
        %9194 = vmatpush.bf16.msra.mxu0 0
        %9195 = vmatpush.bf16.msra.mxu0 0
        %9196 = vmatpush.bf16.msra.mxu0 0
        %9197 = vmatpush.bf16.msra.mxu0 0
        %9198 = vmatpush.bf16.msra.mxu0 %v8916
        %9199 = vmatpush.bf16.msra.mxu0 %v8915
        %9200 = vmatpush.bf16.msra.mxu0 %v8914
        %9201 = vmatpush.bf16.msra.mxu0 %v8913
        %9202 = vmatmul.bf16.gmra.mxu0 %v8930
        %v9203 = vpop.f32.mrf.mxu0
        %v9204 = vadd.f32 %v9035, %v9203
        %v9205 = vpop.f32.mrf.mxu0
        %v9206 = vadd.f32 %v9037, %v9205
        %9207 = vmatmul.bf16.gmra.mxu0 %v8933
        %v9208 = vpop.f32.mrf.mxu0
        %v9209 = vadd.f32 %v9040, %v9208
        %v9210 = vpop.f32.mrf.mxu0
        %v9211 = vadd.f32 %v9042, %v9210
        %9212 = vmatmul.bf16.gmra.mxu0 %v8936
        %v9213 = vpop.f32.mrf.mxu0
        %v9214 = vadd.f32 %v9045, %v9213
        %v9215 = vpop.f32.mrf.mxu0
        %v9216 = vadd.f32 %v9047, %v9215
        %9217 = vmatmul.bf16.gmra.mxu0 %v8939
        %v9218 = vpop.f32.mrf.mxu0
        %v9219 = vadd.f32 %v9050, %v9218
        %v9220 = vpop.f32.mrf.mxu0
        %v9221 = vadd.f32 %v9052, %v9220
        %9222 = vmatmul.bf16.gmra.mxu0 %v8942
        %v9223 = vpop.f32.mrf.mxu0
        %v9224 = vadd.f32 %v9055, %v9223
        %v9225 = vpop.f32.mrf.mxu0
        %v9226 = vadd.f32 %v9057, %v9225
        %9227 = vmatmul.bf16.gmra.mxu0 %v8945
        %v9228 = vpop.f32.mrf.mxu0
        %v9229 = vadd.f32 %v9060, %v9228
        %v9230 = vpop.f32.mrf.mxu0
        %v9231 = vadd.f32 %v9062, %v9230
        %9232 = vmatmul.bf16.gmra.mxu0 %v8948
        %v9233 = vpop.f32.mrf.mxu0
        %v9234 = vadd.f32 %v9065, %v9233
        %v9235 = vpop.f32.mrf.mxu0
        %v9236 = vadd.f32 %v9067, %v9235
        %9237 = vmatmul.bf16.gmra.mxu0 %v8951
        %v9238 = vpop.f32.mrf.mxu0
        %v9239 = vadd.f32 %v9070, %v9238
        %v9240 = vpop.f32.mrf.mxu0
        %v9241 = vadd.f32 %v9072, %v9240
        %9242 = vmatmul.bf16.gmra.mxu0 %v8954
        %v9243 = vpop.f32.mrf.mxu0
        %v9244 = vadd.f32 %v9075, %v9243
        %v9245 = vpop.f32.mrf.mxu0
        %v9246 = vadd.f32 %v9077, %v9245
        %9247 = vmatmul.bf16.gmra.mxu0 %v8957
        %v9248 = vpop.f32.mrf.mxu0
        %v9249 = vadd.f32 %v9080, %v9248
        %v9250 = vpop.f32.mrf.mxu0
        %v9251 = vadd.f32 %v9082, %v9250
        %9252 = vmatmul.bf16.gmra.mxu0 %v8960
        %v9253 = vpop.f32.mrf.mxu0
        %v9254 = vadd.f32 %v9085, %v9253
        %v9255 = vpop.f32.mrf.mxu0
        %v9256 = vadd.f32 %v9087, %v9255
        %9257 = vmatmul.bf16.gmra.mxu0 %v8963
        %v9258 = vpop.f32.mrf.mxu0
        %v9259 = vadd.f32 %v9090, %v9258
        %v9260 = vpop.f32.mrf.mxu0
        %v9261 = vadd.f32 %v9092, %v9260
        %9262 = vmatmul.bf16.gmra.mxu0 %v8966
        %v9263 = vpop.f32.mrf.mxu0
        %v9264 = vadd.f32 %v9095, %v9263
        %v9265 = vpop.f32.mrf.mxu0
        %v9266 = vadd.f32 %v9097, %v9265
        %9267 = vmatmul.bf16.gmra.mxu0 %v8969
        %v9268 = vpop.f32.mrf.mxu0
        %v9269 = vadd.f32 %v9100, %v9268
        %v9270 = vpop.f32.mrf.mxu0
        %v9271 = vadd.f32 %v9102, %v9270
        %9272 = vmatmul.bf16.gmra.mxu0 %v8972
        %v9273 = vpop.f32.mrf.mxu0
        %v9274 = vadd.f32 %v9105, %v9273
        %v9275 = vpop.f32.mrf.mxu0
        %v9276 = vadd.f32 %v9107, %v9275
        %9277 = vmatmul.bf16.gmra.mxu0 %v8975
        %v9278 = vpop.f32.mrf.mxu0
        %v9279 = vadd.f32 %v9110, %v9278
        %v9280 = vpop.f32.mrf.mxu0
        %v9281 = vadd.f32 %v9112, %v9280
        %9282 = vmatmul.bf16.gmra.mxu0 %v8978
        %v9283 = vpop.f32.mrf.mxu0
        %v9284 = vadd.f32 %v9115, %v9283
        %v9285 = vpop.f32.mrf.mxu0
        %v9286 = vadd.f32 %v9117, %v9285
        %9287 = vmatmul.bf16.gmra.mxu0 %v8981
        %v9288 = vpop.f32.mrf.mxu0
        %v9289 = vadd.f32 %v9120, %v9288
        %v9290 = vpop.f32.mrf.mxu0
        %v9291 = vadd.f32 %v9122, %v9290
        %9292 = vmatmul.bf16.gmra.mxu0 %v8984
        %v9293 = vpop.f32.mrf.mxu0
        %v9294 = vadd.f32 %v9125, %v9293
        %v9295 = vpop.f32.mrf.mxu0
        %v9296 = vadd.f32 %v9127, %v9295
        %9297 = vmatmul.bf16.gmra.mxu0 %v8987
        %v9298 = vpop.f32.mrf.mxu0
        %v9299 = vadd.f32 %v9130, %v9298
        %v9300 = vpop.f32.mrf.mxu0
        %v9301 = vadd.f32 %v9132, %v9300
        %9302 = vmatmul.bf16.gmra.mxu0 %v8990
        %v9303 = vpop.f32.mrf.mxu0
        %v9304 = vadd.f32 %v9135, %v9303
        %v9305 = vpop.f32.mrf.mxu0
        %v9306 = vadd.f32 %v9137, %v9305
        %9307 = vmatmul.bf16.gmra.mxu0 %v8993
        %v9308 = vpop.f32.mrf.mxu0
        %v9309 = vadd.f32 %v9140, %v9308
        %v9310 = vpop.f32.mrf.mxu0
        %v9311 = vadd.f32 %v9142, %v9310
        %9312 = vmatmul.bf16.gmra.mxu0 %v8996
        %v9313 = vpop.f32.mrf.mxu0
        %v9314 = vadd.f32 %v9145, %v9313
        %v9315 = vpop.f32.mrf.mxu0
        %v9316 = vadd.f32 %v9147, %v9315
        %9317 = vmatmul.bf16.gmra.mxu0 %v8999
        %v9318 = vpop.f32.mrf.mxu0
        %v9319 = vadd.f32 %v9150, %v9318
        %v9320 = vpop.f32.mrf.mxu0
        %v9321 = vadd.f32 %v9152, %v9320
        %9322 = vmatmul.bf16.gmra.mxu0 %v9002
        %v9323 = vpop.f32.mrf.mxu0
        %v9324 = vadd.f32 %v9155, %v9323
        %v9325 = vpop.f32.mrf.mxu0
        %v9326 = vadd.f32 %v9157, %v9325
        %9327 = vmatmul.bf16.gmra.mxu0 %v9005
        %v9328 = vpop.f32.mrf.mxu0
        %v9329 = vadd.f32 %v9160, %v9328
        %v9330 = vpop.f32.mrf.mxu0
        %v9331 = vadd.f32 %v9162, %v9330
        %9332 = vmatmul.bf16.gmra.mxu0 %v9008
        %v9333 = vpop.f32.mrf.mxu0
        %v9334 = vadd.f32 %v9165, %v9333
        %v9335 = vpop.f32.mrf.mxu0
        %v9336 = vadd.f32 %v9167, %v9335
        %9337 = vmatmul.bf16.gmra.mxu0 %v9011
        %v9338 = vpop.f32.mrf.mxu0
        %v9339 = vadd.f32 %v9170, %v9338
        %v9340 = vpop.f32.mrf.mxu0
        %v9341 = vadd.f32 %v9172, %v9340
        %9342 = vmatmul.bf16.gmra.mxu0 %v9014
        %v9343 = vpop.f32.mrf.mxu0
        %v9344 = vadd.f32 %v9175, %v9343
        %v9345 = vpop.f32.mrf.mxu0
        %v9346 = vadd.f32 %v9177, %v9345
        %9347 = vmatmul.bf16.gmra.mxu0 %v9017
        %v9348 = vpop.f32.mrf.mxu0
        %v9349 = vadd.f32 %v9180, %v9348
        %v9350 = vpop.f32.mrf.mxu0
        %v9351 = vadd.f32 %v9182, %v9350
        %9352 = vmatmul.bf16.gmra.mxu0 %v9020
        %v9353 = vpop.f32.mrf.mxu0
        %v9354 = vadd.f32 %v9185, %v9353
        %v9355 = vpop.f32.mrf.mxu0
        %v9356 = vadd.f32 %v9187, %v9355
        %9357 = vmatmul.bf16.gmra.mxu0 %v9023
        %v9358 = vpop.f32.mrf.mxu0
        %v9359 = vadd.f32 %v9190, %v9358
        %v9360 = vpop.f32.mrf.mxu0
        %v9361 = vadd.f32 %v9192, %v9360
        %9362 = vdwg.mxu0
        %v9363 = vadd.f32 %v6944, %v9204
        %v9364 = vadd.f32 %v6946, %v9206
        %v9365 = vadd.f32 %v6949, %v9209
        %v9366 = vadd.f32 %v6951, %v9211
        %v9367 = vadd.f32 %v6954, %v9214
        %v9368 = vadd.f32 %v6956, %v9216
        %v9369 = vadd.f32 %v6959, %v9219
        %v9370 = vadd.f32 %v6961, %v9221
        %v9371 = vadd.f32 %v6964, %v9224
        %v9372 = vadd.f32 %v6966, %v9226
        %v9373 = vadd.f32 %v6969, %v9229
        %v9374 = vadd.f32 %v6971, %v9231
        %v9375 = vadd.f32 %v6974, %v9234
        %v9376 = vadd.f32 %v6976, %v9236
        %v9377 = vadd.f32 %v6979, %v9239
        %v9378 = vadd.f32 %v6981, %v9241
        %v9379 = vadd.f32 %v6984, %v9244
        %v9380 = vadd.f32 %v6986, %v9246
        %v9381 = vadd.f32 %v6989, %v9249
        %v9382 = vadd.f32 %v6991, %v9251
        %v9383 = vadd.f32 %v6994, %v9254
        %v9384 = vadd.f32 %v6996, %v9256
        %v9385 = vadd.f32 %v6999, %v9259
        %v9386 = vadd.f32 %v7001, %v9261
        %v9387 = vadd.f32 %v7004, %v9264
        %v9388 = vadd.f32 %v7006, %v9266
        %v9389 = vadd.f32 %v7009, %v9269
        %v9390 = vadd.f32 %v7011, %v9271
        %v9391 = vadd.f32 %v7014, %v9274
        %v9392 = vadd.f32 %v7016, %v9276
        %v9393 = vadd.f32 %v7019, %v9279
        %v9394 = vadd.f32 %v7021, %v9281
        %v9395 = vadd.f32 %v7024, %v9284
        %v9396 = vadd.f32 %v7026, %v9286
        %v9397 = vadd.f32 %v7029, %v9289
        %v9398 = vadd.f32 %v7031, %v9291
        %v9399 = vadd.f32 %v7034, %v9294
        %v9400 = vadd.f32 %v7036, %v9296
        %v9401 = vadd.f32 %v7039, %v9299
        %v9402 = vadd.f32 %v7041, %v9301
        %v9403 = vadd.f32 %v7044, %v9304
        %v9404 = vadd.f32 %v7046, %v9306
        %v9405 = vadd.f32 %v7049, %v9309
        %v9406 = vadd.f32 %v7051, %v9311
        %v9407 = vadd.f32 %v7054, %v9314
        %v9408 = vadd.f32 %v7056, %v9316
        %v9409 = vadd.f32 %v7059, %v9319
        %v9410 = vadd.f32 %v7061, %v9321
        %v9411 = vadd.f32 %v7064, %v9324
        %v9412 = vadd.f32 %v7066, %v9326
        %v9413 = vadd.f32 %v7069, %v9329
        %v9414 = vadd.f32 %v7071, %v9331
        %v9415 = vadd.f32 %v7074, %v9334
        %v9416 = vadd.f32 %v7076, %v9336
        %v9417 = vadd.f32 %v7079, %v9339
        %v9418 = vadd.f32 %v7081, %v9341
        %v9419 = vadd.f32 %v7084, %v9344
        %v9420 = vadd.f32 %v7086, %v9346
        %v9421 = vadd.f32 %v7089, %v9349
        %v9422 = vadd.f32 %v7091, %v9351
        %v9423 = vadd.f32 %v7094, %v9354
        %v9424 = vadd.f32 %v7096, %v9356
        %v9425 = vadd.f32 %v7099, %v9359
        %v9426 = vadd.f32 %v7101, %v9361
        %v9427 = vld [vmem:[%s5] sm:$0x1]
        %v9429 = vperm.slane %v9427, 0
        %v9431 = vmul.f32 %v9363, %v9429
        %v9432 = vmul.f32 %v9364, %v9429
        %v9433 = vmul.f32 %v9365, %v9429
        %v9434 = vmul.f32 %v9366, %v9429
        %v9435 = vmul.f32 %v9367, %v9429
        %v9436 = vmul.f32 %v9368, %v9429
        %v9437 = vmul.f32 %v9369, %v9429
        %v9438 = vmul.f32 %v9370, %v9429
        %v9439 = vmul.f32 %v9371, %v9429
        %v9440 = vmul.f32 %v9372, %v9429
        %v9441 = vmul.f32 %v9373, %v9429
        %v9442 = vmul.f32 %v9374, %v9429
        %v9443 = vmul.f32 %v9375, %v9429
        %v9444 = vmul.f32 %v9376, %v9429
        %v9445 = vmul.f32 %v9377, %v9429
        %v9446 = vmul.f32 %v9378, %v9429
        %v9447 = vmul.f32 %v9379, %v9429
        %v9448 = vmul.f32 %v9380, %v9429
        %v9449 = vmul.f32 %v9381, %v9429
        %v9450 = vmul.f32 %v9382, %v9429
        %v9451 = vmul.f32 %v9383, %v9429
        %v9452 = vmul.f32 %v9384, %v9429
        %v9453 = vmul.f32 %v9385, %v9429
        %v9454 = vmul.f32 %v9386, %v9429
        %v9455 = vmul.f32 %v9387, %v9429
        %v9456 = vmul.f32 %v9388, %v9429
        %v9457 = vmul.f32 %v9389, %v9429
        %v9458 = vmul.f32 %v9390, %v9429
        %v9459 = vmul.f32 %v9391, %v9429
        %v9460 = vmul.f32 %v9392, %v9429
        %v9461 = vmul.f32 %v9393, %v9429
        %v9462 = vmul.f32 %v9394, %v9429
        %v9463 = vmul.f32 %v9395, %v9429
        %v9464 = vmul.f32 %v9396, %v9429
        %v9465 = vmul.f32 %v9397, %v9429
        %v9466 = vmul.f32 %v9398, %v9429
        %v9467 = vmul.f32 %v9399, %v9429
        %v9468 = vmul.f32 %v9400, %v9429
        %v9469 = vmul.f32 %v9401, %v9429
        %v9470 = vmul.f32 %v9402, %v9429
        %v9471 = vmul.f32 %v9403, %v9429
        %v9472 = vmul.f32 %v9404, %v9429
        %v9473 = vmul.f32 %v9405, %v9429
        %v9474 = vmul.f32 %v9406, %v9429
        %v9475 = vmul.f32 %v9407, %v9429
        %v9476 = vmul.f32 %v9408, %v9429
        %v9477 = vmul.f32 %v9409, %v9429
        %v9478 = vmul.f32 %v9410, %v9429
        %v9479 = vmul.f32 %v9411, %v9429
        %v9480 = vmul.f32 %v9412, %v9429
        %v9481 = vmul.f32 %v9413, %v9429
        %v9482 = vmul.f32 %v9414, %v9429
        %v9483 = vmul.f32 %v9415, %v9429
        %v9484 = vmul.f32 %v9416, %v9429
        %v9485 = vmul.f32 %v9417, %v9429
        %v9486 = vmul.f32 %v9418, %v9429
        %v9487 = vmul.f32 %v9419, %v9429
        %v9488 = vmul.f32 %v9420, %v9429
        %v9489 = vmul.f32 %v9421, %v9429
        %v9490 = vmul.f32 %v9422, %v9429
        %v9491 = vmul.f32 %v9423, %v9429
        %v9492 = vmul.f32 %v9424, %v9429
        %v9493 = vmul.f32 %v9425, %v9429
        %v9494 = vmul.f32 %v9426, %v9429
        %v9495 = vld [vmem:[%s6] sm:$0x1]
        %v9497 = vperm.slane %v9495, 0
        %v9499 = vadd.f32 %v9431, %v9497
        %v9500 = vadd.f32 %v9432, %v9497
        %v9501 = vadd.f32 %v9433, %v9497
        %v9502 = vadd.f32 %v9434, %v9497
        %v9503 = vadd.f32 %v9435, %v9497
        %v9504 = vadd.f32 %v9436, %v9497
        %v9505 = vadd.f32 %v9437, %v9497
        %v9506 = vadd.f32 %v9438, %v9497
        %v9507 = vadd.f32 %v9439, %v9497
        %v9508 = vadd.f32 %v9440, %v9497
        %v9509 = vadd.f32 %v9441, %v9497
        %v9510 = vadd.f32 %v9442, %v9497
        %v9511 = vadd.f32 %v9443, %v9497
        %v9512 = vadd.f32 %v9444, %v9497
        %v9513 = vadd.f32 %v9445, %v9497
        %v9514 = vadd.f32 %v9446, %v9497
        %v9515 = vadd.f32 %v9447, %v9497
        %v9516 = vadd.f32 %v9448, %v9497
        %v9517 = vadd.f32 %v9449, %v9497
        %v9518 = vadd.f32 %v9450, %v9497
        %v9519 = vadd.f32 %v9451, %v9497
        %v9520 = vadd.f32 %v9452, %v9497
        %v9521 = vadd.f32 %v9453, %v9497
        %v9522 = vadd.f32 %v9454, %v9497
        %v9523 = vadd.f32 %v9455, %v9497
        %v9524 = vadd.f32 %v9456, %v9497
        %v9525 = vadd.f32 %v9457, %v9497
        %v9526 = vadd.f32 %v9458, %v9497
        %v9527 = vadd.f32 %v9459, %v9497
        %v9528 = vadd.f32 %v9460, %v9497
        %v9529 = vadd.f32 %v9461, %v9497
        %v9530 = vadd.f32 %v9462, %v9497
        %v9531 = vadd.f32 %v9463, %v9497
        %v9532 = vadd.f32 %v9464, %v9497
        %v9533 = vadd.f32 %v9465, %v9497
        %v9534 = vadd.f32 %v9466, %v9497
        %v9535 = vadd.f32 %v9467, %v9497
        %v9536 = vadd.f32 %v9468, %v9497
        %v9537 = vadd.f32 %v9469, %v9497
        %v9538 = vadd.f32 %v9470, %v9497
        %v9539 = vadd.f32 %v9471, %v9497
        %v9540 = vadd.f32 %v9472, %v9497
        %v9541 = vadd.f32 %v9473, %v9497
        %v9542 = vadd.f32 %v9474, %v9497
        %v9543 = vadd.f32 %v9475, %v9497
        %v9544 = vadd.f32 %v9476, %v9497
        %v9545 = vadd.f32 %v9477, %v9497
        %v9546 = vadd.f32 %v9478, %v9497
        %v9547 = vadd.f32 %v9479, %v9497
        %v9548 = vadd.f32 %v9480, %v9497
        %v9549 = vadd.f32 %v9481, %v9497
        %v9550 = vadd.f32 %v9482, %v9497
        %v9551 = vadd.f32 %v9483, %v9497
        %v9552 = vadd.f32 %v9484, %v9497
        %v9553 = vadd.f32 %v9485, %v9497
        %v9554 = vadd.f32 %v9486, %v9497
        %v9555 = vadd.f32 %v9487, %v9497
        %v9556 = vadd.f32 %v9488, %v9497
        %v9557 = vadd.f32 %v9489, %v9497
        %v9558 = vadd.f32 %v9490, %v9497
        %v9559 = vadd.f32 %v9491, %v9497
        %v9560 = vadd.f32 %v9492, %v9497
        %v9561 = vadd.f32 %v9493, %v9497
        %v9562 = vadd.f32 %v9494, %v9497
        %v9563 = vmax.f32 %v9499, 0.0
        %v9564 = vmax.f32 %v9500, 0.0
        %v9565 = vmax.f32 %v9501, 0.0
        %v9566 = vmax.f32 %v9502, 0.0
        %v9567 = vmax.f32 %v9503, 0.0
        %v9568 = vmax.f32 %v9504, 0.0
        %v9569 = vmax.f32 %v9505, 0.0
        %v9570 = vmax.f32 %v9506, 0.0
        %v9571 = vmax.f32 %v9507, 0.0
        %v9572 = vmax.f32 %v9508, 0.0
        %v9573 = vmax.f32 %v9509, 0.0
        %v9574 = vmax.f32 %v9510, 0.0
        %v9575 = vmax.f32 %v9511, 0.0
        %v9576 = vmax.f32 %v9512, 0.0
        %v9577 = vmax.f32 %v9513, 0.0
        %v9578 = vmax.f32 %v9514, 0.0
        %v9579 = vmax.f32 %v9515, 0.0
        %v9580 = vmax.f32 %v9516, 0.0
        %v9581 = vmax.f32 %v9517, 0.0
        %v9582 = vmax.f32 %v9518, 0.0
        %v9583 = vmax.f32 %v9519, 0.0
        %v9584 = vmax.f32 %v9520, 0.0
        %v9585 = vmax.f32 %v9521, 0.0
        %v9586 = vmax.f32 %v9522, 0.0
        %v9587 = vmax.f32 %v9523, 0.0
        %v9588 = vmax.f32 %v9524, 0.0
        %v9589 = vmax.f32 %v9525, 0.0
        %v9590 = vmax.f32 %v9526, 0.0
        %v9591 = vmax.f32 %v9527, 0.0
        %v9592 = vmax.f32 %v9528, 0.0
        %v9593 = vmax.f32 %v9529, 0.0
        %v9594 = vmax.f32 %v9530, 0.0
        %v9595 = vmax.f32 %v9531, 0.0
        %v9596 = vmax.f32 %v9532, 0.0
        %v9597 = vmax.f32 %v9533, 0.0
        %v9598 = vmax.f32 %v9534, 0.0
        %v9599 = vmax.f32 %v9535, 0.0
        %v9600 = vmax.f32 %v9536, 0.0
        %v9601 = vmax.f32 %v9537, 0.0
        %v9602 = vmax.f32 %v9538, 0.0
        %v9603 = vmax.f32 %v9539, 0.0
        %v9604 = vmax.f32 %v9540, 0.0
        %v9605 = vmax.f32 %v9541, 0.0
        %v9606 = vmax.f32 %v9542, 0.0
        %v9607 = vmax.f32 %v9543, 0.0
        %v9608 = vmax.f32 %v9544, 0.0
        %v9609 = vmax.f32 %v9545, 0.0
        %v9610 = vmax.f32 %v9546, 0.0
        %v9611 = vmax.f32 %v9547, 0.0
        %v9612 = vmax.f32 %v9548, 0.0
        %v9613 = vmax.f32 %v9549, 0.0
        %v9614 = vmax.f32 %v9550, 0.0
        %v9615 = vmax.f32 %v9551, 0.0
        %v9616 = vmax.f32 %v9552, 0.0
        %v9617 = vmax.f32 %v9553, 0.0
        %v9618 = vmax.f32 %v9554, 0.0
        %v9619 = vmax.f32 %v9555, 0.0
        %v9620 = vmax.f32 %v9556, 0.0
        %v9621 = vmax.f32 %v9557, 0.0
        %v9622 = vmax.f32 %v9558, 0.0
        %v9623 = vmax.f32 %v9559, 0.0
        %v9624 = vmax.f32 %v9560, 0.0
        %v9625 = vmax.f32 %v9561, 0.0
        %v9626 = vmax.f32 %v9562, 0.0
        %v9627 = vpack.c.bf16 %v9564, %v9563
        %v9628 = vpack.c.bf16 %v9566, %v9565
        %v9629 = vpack.c.bf16 %v9568, %v9567
        %v9630 = vpack.c.bf16 %v9570, %v9569
        %v9631 = vpack.c.bf16 %v9572, %v9571
        %v9632 = vpack.c.bf16 %v9574, %v9573
        %v9633 = vpack.c.bf16 %v9576, %v9575
        %v9634 = vpack.c.bf16 %v9578, %v9577
        %v9635 = vpack.c.bf16 %v9580, %v9579
        %v9636 = vpack.c.bf16 %v9582, %v9581
        %v9637 = vpack.c.bf16 %v9584, %v9583
        %v9638 = vpack.c.bf16 %v9586, %v9585
        %v9639 = vpack.c.bf16 %v9588, %v9587
        %v9640 = vpack.c.bf16 %v9590, %v9589
        %v9641 = vpack.c.bf16 %v9592, %v9591
        %v9642 = vpack.c.bf16 %v9594, %v9593
        %v9643 = vpack.c.bf16 %v9596, %v9595
        %v9644 = vpack.c.bf16 %v9598, %v9597
        %v9645 = vpack.c.bf16 %v9600, %v9599
        %v9646 = vpack.c.bf16 %v9602, %v9601
        %v9647 = vpack.c.bf16 %v9604, %v9603
        %v9648 = vpack.c.bf16 %v9606, %v9605
        %v9649 = vpack.c.bf16 %v9608, %v9607
        %v9650 = vpack.c.bf16 %v9610, %v9609
        %v9651 = vpack.c.bf16 %v9612, %v9611
        %v9652 = vpack.c.bf16 %v9614, %v9613
        %v9653 = vpack.c.bf16 %v9616, %v9615
        %v9654 = vpack.c.bf16 %v9618, %v9617
        %v9655 = vpack.c.bf16 %v9620, %v9619
        %v9656 = vpack.c.bf16 %v9622, %v9621
        %v9657 = vpack.c.bf16 %v9624, %v9623
        %v9658 = vpack.c.bf16 %v9626, %v9625
        %v9659 = vld [vmem:[%s7] sm:$0xff]
        %v9660 = vld [vmem:[%s7 + $0x8] sm:$0xff]
        %v9661 = vld [vmem:[%s7 + $0x10] sm:$0xff]
        %v9662 = vld [vmem:[%s7 + $0x18] sm:$0xff]
        %v9663 = vld [vmem:[%s7 + $0x20] sm:$0xff]
        %v9664 = vld [vmem:[%s7 + $0x28] sm:$0xff]
        %v9665 = vld [vmem:[%s7 + $0x30] sm:$0xff]
        %v9666 = vld [vmem:[%s7 + $0x38] sm:$0xff]
        %v9675 = vunpack.c.l.b16 %v9659
        %v9676 = vunpack.c.h.b16 %v9659
        %v9677 = vunpack.c.l.b16 %v9660
        %v9678 = vunpack.c.h.b16 %v9660
        %v9679 = vunpack.c.l.b16 %v9661
        %v9680 = vunpack.c.h.b16 %v9661
        %v9681 = vunpack.c.l.b16 %v9662
        %v9682 = vunpack.c.h.b16 %v9662
        %v9683 = vunpack.c.l.b16 %v9663
        %v9684 = vunpack.c.h.b16 %v9663
        %v9685 = vunpack.c.l.b16 %v9664
        %v9686 = vunpack.c.h.b16 %v9664
        %v9687 = vunpack.c.l.b16 %v9665
        %v9688 = vunpack.c.h.b16 %v9665
        %v9689 = vunpack.c.l.b16 %v9666
        %v9690 = vunpack.c.h.b16 %v9666
        %v9691 = vpack.c.b16 %v9677, %v9675
        %v9692 = vpack.c.b16 %v9678, %v9676
        %v9693 = vpack.c.b16 %v9681, %v9679
        %v9694 = vpack.c.b16 %v9682, %v9680
        %v9695 = vpack.c.b16 %v9685, %v9683
        %v9696 = vpack.c.b16 %v9686, %v9684
        %v9697 = vpack.c.b16 %v9689, %v9687
        %v9698 = vpack.c.b16 %v9690, %v9688
        %v9708 = vsel %vm4185, %v9627, 0
        %v9711 = vsel %vm4185, %v9628, 0
        %v9714 = vsel %vm4185, %v9629, 0
        %v9717 = vsel %vm4185, %v9630, 0
        %v9720 = vsel %vm4185, %v9631, 0
        %v9723 = vsel %vm4185, %v9632, 0
        %v9726 = vsel %vm4185, %v9633, 0
        %v9729 = vsel %vm4185, %v9634, 0
        %v9732 = vsel %vm4185, %v9635, 0
        %v9735 = vsel %vm4185, %v9636, 0
        %v9738 = vsel %vm4185, %v9637, 0
        %v9741 = vsel %vm4185, %v9638, 0
        %v9744 = vsel %vm4185, %v9639, 0
        %v9747 = vsel %vm4185, %v9640, 0
        %v9750 = vsel %vm4185, %v9641, 0
        %v9753 = vsel %vm4185, %v9642, 0
        %v9756 = vsel %vm4185, %v9643, 0
        %v9759 = vsel %vm4185, %v9644, 0
        %v9762 = vsel %vm4185, %v9645, 0
        %v9765 = vsel %vm4185, %v9646, 0
        %v9768 = vsel %vm4185, %v9647, 0
        %v9771 = vsel %vm4185, %v9648, 0
        %v9774 = vsel %vm4185, %v9649, 0
        %v9777 = vsel %vm4185, %v9650, 0
        %v9780 = vsel %vm4185, %v9651, 0
        %v9783 = vsel %vm4185, %v9652, 0
        %v9786 = vsel %vm4185, %v9653, 0
        %v9789 = vsel %vm4185, %v9654, 0
        %v9792 = vsel %vm4185, %v9655, 0
        %v9795 = vsel %vm4185, %v9656, 0
        %v9798 = vsel %vm4185, %v9657, 0
        %v9801 = vsel %vm4185, %v9658, 0
        %9803 = vmatpush.bf16.msra.mxu0 0
        %9804 = vmatpush.bf16.msra.mxu0 0
        %9805 = vmatpush.bf16.msra.mxu0 0
        %9806 = vmatpush.bf16.msra.mxu0 0
        %9807 = vmatpush.bf16.msra.mxu0 %v9697
        %9808 = vmatpush.bf16.msra.mxu0 %v9695
        %9809 = vmatpush.bf16.msra.mxu0 %v9693
        %9810 = vmatpush.bf16.msra.mxu0 %v9691
        %9811 = vmatmul.bf16.gmra.mxu0 %v9708
        %v9812 = vpop.f32.mrf.mxu0
        %v9813 = vadd.f32 0.0, %v9812
        %v9814 = vpop.f32.mrf.mxu0
        %v9815 = vadd.f32 0.0, %v9814
        %9816 = vmatmul.bf16.gmra.mxu0 %v9711
        %v9817 = vpop.f32.mrf.mxu0
        %v9818 = vadd.f32 0.0, %v9817
        %v9819 = vpop.f32.mrf.mxu0
        %v9820 = vadd.f32 0.0, %v9819
        %9821 = vmatmul.bf16.gmra.mxu0 %v9714
        %v9822 = vpop.f32.mrf.mxu0
        %v9823 = vadd.f32 0.0, %v9822
        %v9824 = vpop.f32.mrf.mxu0
        %v9825 = vadd.f32 0.0, %v9824
        %9826 = vmatmul.bf16.gmra.mxu0 %v9717
        %v9827 = vpop.f32.mrf.mxu0
        %v9828 = vadd.f32 0.0, %v9827
        %v9829 = vpop.f32.mrf.mxu0
        %v9830 = vadd.f32 0.0, %v9829
        %9831 = vmatmul.bf16.gmra.mxu0 %v9720
        %v9832 = vpop.f32.mrf.mxu0
        %v9833 = vadd.f32 0.0, %v9832
        %v9834 = vpop.f32.mrf.mxu0
        %v9835 = vadd.f32 0.0, %v9834
        %9836 = vmatmul.bf16.gmra.mxu0 %v9723
        %v9837 = vpop.f32.mrf.mxu0
        %v9838 = vadd.f32 0.0, %v9837
        %v9839 = vpop.f32.mrf.mxu0
        %v9840 = vadd.f32 0.0, %v9839
        %9841 = vmatmul.bf16.gmra.mxu0 %v9726
        %v9842 = vpop.f32.mrf.mxu0
        %v9843 = vadd.f32 0.0, %v9842
        %v9844 = vpop.f32.mrf.mxu0
        %v9845 = vadd.f32 0.0, %v9844
        %9846 = vmatmul.bf16.gmra.mxu0 %v9729
        %v9847 = vpop.f32.mrf.mxu0
        %v9848 = vadd.f32 0.0, %v9847
        %v9849 = vpop.f32.mrf.mxu0
        %v9850 = vadd.f32 0.0, %v9849
        %9851 = vmatmul.bf16.gmra.mxu0 %v9732
        %v9852 = vpop.f32.mrf.mxu0
        %v9853 = vadd.f32 0.0, %v9852
        %v9854 = vpop.f32.mrf.mxu0
        %v9855 = vadd.f32 0.0, %v9854
        %9856 = vmatmul.bf16.gmra.mxu0 %v9735
        %v9857 = vpop.f32.mrf.mxu0
        %v9858 = vadd.f32 0.0, %v9857
        %v9859 = vpop.f32.mrf.mxu0
        %v9860 = vadd.f32 0.0, %v9859
        %9861 = vmatmul.bf16.gmra.mxu0 %v9738
        %v9862 = vpop.f32.mrf.mxu0
        %v9863 = vadd.f32 0.0, %v9862
        %v9864 = vpop.f32.mrf.mxu0
        %v9865 = vadd.f32 0.0, %v9864
        %9866 = vmatmul.bf16.gmra.mxu0 %v9741
        %v9867 = vpop.f32.mrf.mxu0
        %v9868 = vadd.f32 0.0, %v9867
        %v9869 = vpop.f32.mrf.mxu0
        %v9870 = vadd.f32 0.0, %v9869
        %9871 = vmatmul.bf16.gmra.mxu0 %v9744
        %v9872 = vpop.f32.mrf.mxu0
        %v9873 = vadd.f32 0.0, %v9872
        %v9874 = vpop.f32.mrf.mxu0
        %v9875 = vadd.f32 0.0, %v9874
        %9876 = vmatmul.bf16.gmra.mxu0 %v9747
        %v9877 = vpop.f32.mrf.mxu0
        %v9878 = vadd.f32 0.0, %v9877
        %v9879 = vpop.f32.mrf.mxu0
        %v9880 = vadd.f32 0.0, %v9879
        %9881 = vmatmul.bf16.gmra.mxu0 %v9750
        %v9882 = vpop.f32.mrf.mxu0
        %v9883 = vadd.f32 0.0, %v9882
        %v9884 = vpop.f32.mrf.mxu0
        %v9885 = vadd.f32 0.0, %v9884
        %9886 = vmatmul.bf16.gmra.mxu0 %v9753
        %v9887 = vpop.f32.mrf.mxu0
        %v9888 = vadd.f32 0.0, %v9887
        %v9889 = vpop.f32.mrf.mxu0
        %v9890 = vadd.f32 0.0, %v9889
        %9891 = vmatmul.bf16.gmra.mxu0 %v9756
        %v9892 = vpop.f32.mrf.mxu0
        %v9893 = vadd.f32 0.0, %v9892
        %v9894 = vpop.f32.mrf.mxu0
        %v9895 = vadd.f32 0.0, %v9894
        %9896 = vmatmul.bf16.gmra.mxu0 %v9759
        %v9897 = vpop.f32.mrf.mxu0
        %v9898 = vadd.f32 0.0, %v9897
        %v9899 = vpop.f32.mrf.mxu0
        %v9900 = vadd.f32 0.0, %v9899
        %9901 = vmatmul.bf16.gmra.mxu0 %v9762
        %v9902 = vpop.f32.mrf.mxu0
        %v9903 = vadd.f32 0.0, %v9902
        %v9904 = vpop.f32.mrf.mxu0
        %v9905 = vadd.f32 0.0, %v9904
        %9906 = vmatmul.bf16.gmra.mxu0 %v9765
        %v9907 = vpop.f32.mrf.mxu0
        %v9908 = vadd.f32 0.0, %v9907
        %v9909 = vpop.f32.mrf.mxu0
        %v9910 = vadd.f32 0.0, %v9909
        %9911 = vmatmul.bf16.gmra.mxu0 %v9768
        %v9912 = vpop.f32.mrf.mxu0
        %v9913 = vadd.f32 0.0, %v9912
        %v9914 = vpop.f32.mrf.mxu0
        %v9915 = vadd.f32 0.0, %v9914
        %9916 = vmatmul.bf16.gmra.mxu0 %v9771
        %v9917 = vpop.f32.mrf.mxu0
        %v9918 = vadd.f32 0.0, %v9917
        %v9919 = vpop.f32.mrf.mxu0
        %v9920 = vadd.f32 0.0, %v9919
        %9921 = vmatmul.bf16.gmra.mxu0 %v9774
        %v9922 = vpop.f32.mrf.mxu0
        %v9923 = vadd.f32 0.0, %v9922
        %v9924 = vpop.f32.mrf.mxu0
        %v9925 = vadd.f32 0.0, %v9924
        %9926 = vmatmul.bf16.gmra.mxu0 %v9777
        %v9927 = vpop.f32.mrf.mxu0
        %v9928 = vadd.f32 0.0, %v9927
        %v9929 = vpop.f32.mrf.mxu0
        %v9930 = vadd.f32 0.0, %v9929
        %9931 = vmatmul.bf16.gmra.mxu0 %v9780
        %v9932 = vpop.f32.mrf.mxu0
        %v9933 = vadd.f32 0.0, %v9932
        %v9934 = vpop.f32.mrf.mxu0
        %v9935 = vadd.f32 0.0, %v9934
        %9936 = vmatmul.bf16.gmra.mxu0 %v9783
        %v9937 = vpop.f32.mrf.mxu0
        %v9938 = vadd.f32 0.0, %v9937
        %v9939 = vpop.f32.mrf.mxu0
        %v9940 = vadd.f32 0.0, %v9939
        %9941 = vmatmul.bf16.gmra.mxu0 %v9786
        %v9942 = vpop.f32.mrf.mxu0
        %v9943 = vadd.f32 0.0, %v9942
        %v9944 = vpop.f32.mrf.mxu0
        %v9945 = vadd.f32 0.0, %v9944
        %9946 = vmatmul.bf16.gmra.mxu0 %v9789
        %v9947 = vpop.f32.mrf.mxu0
        %v9948 = vadd.f32 0.0, %v9947
        %v9949 = vpop.f32.mrf.mxu0
        %v9950 = vadd.f32 0.0, %v9949
        %9951 = vmatmul.bf16.gmra.mxu0 %v9792
        %v9952 = vpop.f32.mrf.mxu0
        %v9953 = vadd.f32 0.0, %v9952
        %v9954 = vpop.f32.mrf.mxu0
        %v9955 = vadd.f32 0.0, %v9954
        %9956 = vmatmul.bf16.gmra.mxu0 %v9795
        %v9957 = vpop.f32.mrf.mxu0
        %v9958 = vadd.f32 0.0, %v9957
        %v9959 = vpop.f32.mrf.mxu0
        %v9960 = vadd.f32 0.0, %v9959
        %9961 = vmatmul.bf16.gmra.mxu0 %v9798
        %v9962 = vpop.f32.mrf.mxu0
        %v9963 = vadd.f32 0.0, %v9962
        %v9964 = vpop.f32.mrf.mxu0
        %v9965 = vadd.f32 0.0, %v9964
        %9966 = vmatmul.bf16.gmra.mxu0 %v9801
        %v9967 = vpop.f32.mrf.mxu0
        %v9968 = vadd.f32 0.0, %v9967
        %v9969 = vpop.f32.mrf.mxu0
        %v9970 = vadd.f32 0.0, %v9969
        %9971 = vdwg.mxu0
        %9972 = vmatpush.bf16.msra.mxu0 0
        %9973 = vmatpush.bf16.msra.mxu0 0
        %9974 = vmatpush.bf16.msra.mxu0 0
        %9975 = vmatpush.bf16.msra.mxu0 0
        %9976 = vmatpush.bf16.msra.mxu0 %v9698
        %9977 = vmatpush.bf16.msra.mxu0 %v9696
        %9978 = vmatpush.bf16.msra.mxu0 %v9694
        %9979 = vmatpush.bf16.msra.mxu0 %v9692
        %9980 = vmatmul.bf16.gmra.mxu0 %v9708
        %v9981 = vpop.f32.mrf.mxu0
        %v9982 = vadd.f32 0.0, %v9981
        %v9983 = vpop.f32.mrf.mxu0
        %v9984 = vadd.f32 0.0, %v9983
        %9985 = vmatmul.bf16.gmra.mxu0 %v9711
        %v9986 = vpop.f32.mrf.mxu0
        %v9987 = vadd.f32 0.0, %v9986
        %v9988 = vpop.f32.mrf.mxu0
        %v9989 = vadd.f32 0.0, %v9988
        %9990 = vmatmul.bf16.gmra.mxu0 %v9714
        %v9991 = vpop.f32.mrf.mxu0
        %v9992 = vadd.f32 0.0, %v9991
        %v9993 = vpop.f32.mrf.mxu0
        %v9994 = vadd.f32 0.0, %v9993
        %9995 = vmatmul.bf16.gmra.mxu0 %v9717
        %v9996 = vpop.f32.mrf.mxu0
        %v9997 = vadd.f32 0.0, %v9996
        %v9998 = vpop.f32.mrf.mxu0
        %v9999 = vadd.f32 0.0, %v9998
        %10000 = vmatmul.bf16.gmra.mxu0 %v9720
        %v10001 = vpop.f32.mrf.mxu0
        %v10002 = vadd.f32 0.0, %v10001
        %v10003 = vpop.f32.mrf.mxu0
        %v10004 = vadd.f32 0.0, %v10003
        %10005 = vmatmul.bf16.gmra.mxu0 %v9723
        %v10006 = vpop.f32.mrf.mxu0
        %v10007 = vadd.f32 0.0, %v10006
        %v10008 = vpop.f32.mrf.mxu0
        %v10009 = vadd.f32 0.0, %v10008
        %10010 = vmatmul.bf16.gmra.mxu0 %v9726
        %v10011 = vpop.f32.mrf.mxu0
        %v10012 = vadd.f32 0.0, %v10011
        %v10013 = vpop.f32.mrf.mxu0
        %v10014 = vadd.f32 0.0, %v10013
        %10015 = vmatmul.bf16.gmra.mxu0 %v9729
        %v10016 = vpop.f32.mrf.mxu0
        %v10017 = vadd.f32 0.0, %v10016
        %v10018 = vpop.f32.mrf.mxu0
        %v10019 = vadd.f32 0.0, %v10018
        %10020 = vmatmul.bf16.gmra.mxu0 %v9732
        %v10021 = vpop.f32.mrf.mxu0
        %v10022 = vadd.f32 0.0, %v10021
        %v10023 = vpop.f32.mrf.mxu0
        %v10024 = vadd.f32 0.0, %v10023
        %10025 = vmatmul.bf16.gmra.mxu0 %v9735
        %v10026 = vpop.f32.mrf.mxu0
        %v10027 = vadd.f32 0.0, %v10026
        %v10028 = vpop.f32.mrf.mxu0
        %v10029 = vadd.f32 0.0, %v10028
        %10030 = vmatmul.bf16.gmra.mxu0 %v9738
        %v10031 = vpop.f32.mrf.mxu0
        %v10032 = vadd.f32 0.0, %v10031
        %v10033 = vpop.f32.mrf.mxu0
        %v10034 = vadd.f32 0.0, %v10033
        %10035 = vmatmul.bf16.gmra.mxu0 %v9741
        %v10036 = vpop.f32.mrf.mxu0
        %v10037 = vadd.f32 0.0, %v10036
        %v10038 = vpop.f32.mrf.mxu0
        %v10039 = vadd.f32 0.0, %v10038
        %10040 = vmatmul.bf16.gmra.mxu0 %v9744
        %v10041 = vpop.f32.mrf.mxu0
        %v10042 = vadd.f32 0.0, %v10041
        %v10043 = vpop.f32.mrf.mxu0
        %v10044 = vadd.f32 0.0, %v10043
        %10045 = vmatmul.bf16.gmra.mxu0 %v9747
        %v10046 = vpop.f32.mrf.mxu0
        %v10047 = vadd.f32 0.0, %v10046
        %v10048 = vpop.f32.mrf.mxu0
        %v10049 = vadd.f32 0.0, %v10048
        %10050 = vmatmul.bf16.gmra.mxu0 %v9750
        %v10051 = vpop.f32.mrf.mxu0
        %v10052 = vadd.f32 0.0, %v10051
        %v10053 = vpop.f32.mrf.mxu0
        %v10054 = vadd.f32 0.0, %v10053
        %10055 = vmatmul.bf16.gmra.mxu0 %v9753
        %v10056 = vpop.f32.mrf.mxu0
        %v10057 = vadd.f32 0.0, %v10056
        %v10058 = vpop.f32.mrf.mxu0
        %v10059 = vadd.f32 0.0, %v10058
        %10060 = vmatmul.bf16.gmra.mxu0 %v9756
        %v10061 = vpop.f32.mrf.mxu0
        %v10062 = vadd.f32 0.0, %v10061
        %v10063 = vpop.f32.mrf.mxu0
        %v10064 = vadd.f32 0.0, %v10063
        %10065 = vmatmul.bf16.gmra.mxu0 %v9759
        %v10066 = vpop.f32.mrf.mxu0
        %v10067 = vadd.f32 0.0, %v10066
        %v10068 = vpop.f32.mrf.mxu0
        %v10069 = vadd.f32 0.0, %v10068
        %10070 = vmatmul.bf16.gmra.mxu0 %v9762
        %v10071 = vpop.f32.mrf.mxu0
        %v10072 = vadd.f32 0.0, %v10071
        %v10073 = vpop.f32.mrf.mxu0
        %v10074 = vadd.f32 0.0, %v10073
        %10075 = vmatmul.bf16.gmra.mxu0 %v9765
        %v10076 = vpop.f32.mrf.mxu0
        %v10077 = vadd.f32 0.0, %v10076
        %v10078 = vpop.f32.mrf.mxu0
        %v10079 = vadd.f32 0.0, %v10078
        %10080 = vmatmul.bf16.gmra.mxu0 %v9768
        %v10081 = vpop.f32.mrf.mxu0
        %v10082 = vadd.f32 0.0, %v10081
        %v10083 = vpop.f32.mrf.mxu0
        %v10084 = vadd.f32 0.0, %v10083
        %10085 = vmatmul.bf16.gmra.mxu0 %v9771
        %v10086 = vpop.f32.mrf.mxu0
        %v10087 = vadd.f32 0.0, %v10086
        %v10088 = vpop.f32.mrf.mxu0
        %v10089 = vadd.f32 0.0, %v10088
        %10090 = vmatmul.bf16.gmra.mxu0 %v9774
        %v10091 = vpop.f32.mrf.mxu0
        %v10092 = vadd.f32 0.0, %v10091
        %v10093 = vpop.f32.mrf.mxu0
        %v10094 = vadd.f32 0.0, %v10093
        %10095 = vmatmul.bf16.gmra.mxu0 %v9777
        %v10096 = vpop.f32.mrf.mxu0
        %v10097 = vadd.f32 0.0, %v10096
        %v10098 = vpop.f32.mrf.mxu0
        %v10099 = vadd.f32 0.0, %v10098
        %10100 = vmatmul.bf16.gmra.mxu0 %v9780
        %v10101 = vpop.f32.mrf.mxu0
        %v10102 = vadd.f32 0.0, %v10101
        %v10103 = vpop.f32.mrf.mxu0
        %v10104 = vadd.f32 0.0, %v10103
        %10105 = vmatmul.bf16.gmra.mxu0 %v9783
        %v10106 = vpop.f32.mrf.mxu0
        %v10107 = vadd.f32 0.0, %v10106
        %v10108 = vpop.f32.mrf.mxu0
        %v10109 = vadd.f32 0.0, %v10108
        %10110 = vmatmul.bf16.gmra.mxu0 %v9786
        %v10111 = vpop.f32.mrf.mxu0
        %v10112 = vadd.f32 0.0, %v10111
        %v10113 = vpop.f32.mrf.mxu0
        %v10114 = vadd.f32 0.0, %v10113
        %10115 = vmatmul.bf16.gmra.mxu0 %v9789
        %v10116 = vpop.f32.mrf.mxu0
        %v10117 = vadd.f32 0.0, %v10116
        %v10118 = vpop.f32.mrf.mxu0
        %v10119 = vadd.f32 0.0, %v10118
        %10120 = vmatmul.bf16.gmra.mxu0 %v9792
        %v10121 = vpop.f32.mrf.mxu0
        %v10122 = vadd.f32 0.0, %v10121
        %v10123 = vpop.f32.mrf.mxu0
        %v10124 = vadd.f32 0.0, %v10123
        %10125 = vmatmul.bf16.gmra.mxu0 %v9795
        %v10126 = vpop.f32.mrf.mxu0
        %v10127 = vadd.f32 0.0, %v10126
        %v10128 = vpop.f32.mrf.mxu0
        %v10129 = vadd.f32 0.0, %v10128
        %10130 = vmatmul.bf16.gmra.mxu0 %v9798
        %v10131 = vpop.f32.mrf.mxu0
        %v10132 = vadd.f32 0.0, %v10131
        %v10133 = vpop.f32.mrf.mxu0
        %v10134 = vadd.f32 0.0, %v10133
        %10135 = vmatmul.bf16.gmra.mxu0 %v9801
        %v10136 = vpop.f32.mrf.mxu0
        %v10137 = vadd.f32 0.0, %v10136
        %v10138 = vpop.f32.mrf.mxu0
        %v10139 = vadd.f32 0.0, %v10138
        %10140 = vdwg.mxu0
        %v10141 = vld [vmem:[%s8] sm:$0x3]
        %v10143 = vperm.slane %v10141, 0
        %v10144 = vperm.slane %v10141, 1
        %v10147 = vmul.f32 %v9813, %v10143
        %v10148 = vmul.f32 %v9982, %v10144
        %v10149 = vmul.f32 %v9815, %v10143
        %v10150 = vmul.f32 %v9984, %v10144
        %v10151 = vmul.f32 %v9818, %v10143
        %v10152 = vmul.f32 %v9987, %v10144
        %v10153 = vmul.f32 %v9820, %v10143
        %v10154 = vmul.f32 %v9989, %v10144
        %v10155 = vmul.f32 %v9823, %v10143
        %v10156 = vmul.f32 %v9992, %v10144
        %v10157 = vmul.f32 %v9825, %v10143
        %v10158 = vmul.f32 %v9994, %v10144
        %v10159 = vmul.f32 %v9828, %v10143
        %v10160 = vmul.f32 %v9997, %v10144
        %v10161 = vmul.f32 %v9830, %v10143
        %v10162 = vmul.f32 %v9999, %v10144
        %v10163 = vmul.f32 %v9833, %v10143
        %v10164 = vmul.f32 %v10002, %v10144
        %v10165 = vmul.f32 %v9835, %v10143
        %v10166 = vmul.f32 %v10004, %v10144
        %v10167 = vmul.f32 %v9838, %v10143
        %v10168 = vmul.f32 %v10007, %v10144
        %v10169 = vmul.f32 %v9840, %v10143
        %v10170 = vmul.f32 %v10009, %v10144
        %v10171 = vmul.f32 %v9843, %v10143
        %v10172 = vmul.f32 %v10012, %v10144
        %v10173 = vmul.f32 %v9845, %v10143
        %v10174 = vmul.f32 %v10014, %v10144
        %v10175 = vmul.f32 %v9848, %v10143
        %v10176 = vmul.f32 %v10017, %v10144
        %v10177 = vmul.f32 %v9850, %v10143
        %v10178 = vmul.f32 %v10019, %v10144
        %v10179 = vmul.f32 %v9853, %v10143
        %v10180 = vmul.f32 %v10022, %v10144
        %v10181 = vmul.f32 %v9855, %v10143
        %v10182 = vmul.f32 %v10024, %v10144
        %v10183 = vmul.f32 %v9858, %v10143
        %v10184 = vmul.f32 %v10027, %v10144
        %v10185 = vmul.f32 %v9860, %v10143
        %v10186 = vmul.f32 %v10029, %v10144
        %v10187 = vmul.f32 %v9863, %v10143
        %v10188 = vmul.f32 %v10032, %v10144
        %v10189 = vmul.f32 %v9865, %v10143
        %v10190 = vmul.f32 %v10034, %v10144
        %v10191 = vmul.f32 %v9868, %v10143
        %v10192 = vmul.f32 %v10037, %v10144
        %v10193 = vmul.f32 %v9870, %v10143
        %v10194 = vmul.f32 %v10039, %v10144
        %v10195 = vmul.f32 %v9873, %v10143
        %v10196 = vmul.f32 %v10042, %v10144
        %v10197 = vmul.f32 %v9875, %v10143
        %v10198 = vmul.f32 %v10044, %v10144
        %v10199 = vmul.f32 %v9878, %v10143
        %v10200 = vmul.f32 %v10047, %v10144
        %v10201 = vmul.f32 %v9880, %v10143
        %v10202 = vmul.f32 %v10049, %v10144
        %v10203 = vmul.f32 %v9883, %v10143
        %v10204 = vmul.f32 %v10052, %v10144
        %v10205 = vmul.f32 %v9885, %v10143
        %v10206 = vmul.f32 %v10054, %v10144
        %v10207 = vmul.f32 %v9888, %v10143
        %v10208 = vmul.f32 %v10057, %v10144
        %v10209 = vmul.f32 %v9890, %v10143
        %v10210 = vmul.f32 %v10059, %v10144
        %v10211 = vmul.f32 %v9893, %v10143
        %v10212 = vmul.f32 %v10062, %v10144
        %v10213 = vmul.f32 %v9895, %v10143
        %v10214 = vmul.f32 %v10064, %v10144
        %v10215 = vmul.f32 %v9898, %v10143
        %v10216 = vmul.f32 %v10067, %v10144
        %v10217 = vmul.f32 %v9900, %v10143
        %v10218 = vmul.f32 %v10069, %v10144
        %v10219 = vmul.f32 %v9903, %v10143
        %v10220 = vmul.f32 %v10072, %v10144
        %v10221 = vmul.f32 %v9905, %v10143
        %v10222 = vmul.f32 %v10074, %v10144
        %v10223 = vmul.f32 %v9908, %v10143
        %v10224 = vmul.f32 %v10077, %v10144
        %v10225 = vmul.f32 %v9910, %v10143
        %v10226 = vmul.f32 %v10079, %v10144
        %v10227 = vmul.f32 %v9913, %v10143
        %v10228 = vmul.f32 %v10082, %v10144
        %v10229 = vmul.f32 %v9915, %v10143
        %v10230 = vmul.f32 %v10084, %v10144
        %v10231 = vmul.f32 %v9918, %v10143
        %v10232 = vmul.f32 %v10087, %v10144
        %v10233 = vmul.f32 %v9920, %v10143
        %v10234 = vmul.f32 %v10089, %v10144
        %v10235 = vmul.f32 %v9923, %v10143
        %v10236 = vmul.f32 %v10092, %v10144
        %v10237 = vmul.f32 %v9925, %v10143
        %v10238 = vmul.f32 %v10094, %v10144
        %v10239 = vmul.f32 %v9928, %v10143
        %v10240 = vmul.f32 %v10097, %v10144
        %v10241 = vmul.f32 %v9930, %v10143
        %v10242 = vmul.f32 %v10099, %v10144
        %v10243 = vmul.f32 %v9933, %v10143
        %v10244 = vmul.f32 %v10102, %v10144
        %v10245 = vmul.f32 %v9935, %v10143
        %v10246 = vmul.f32 %v10104, %v10144
        %v10247 = vmul.f32 %v9938, %v10143
        %v10248 = vmul.f32 %v10107, %v10144
        %v10249 = vmul.f32 %v9940, %v10143
        %v10250 = vmul.f32 %v10109, %v10144
        %v10251 = vmul.f32 %v9943, %v10143
        %v10252 = vmul.f32 %v10112, %v10144
        %v10253 = vmul.f32 %v9945, %v10143
        %v10254 = vmul.f32 %v10114, %v10144
        %v10255 = vmul.f32 %v9948, %v10143
        %v10256 = vmul.f32 %v10117, %v10144
        %v10257 = vmul.f32 %v9950, %v10143
        %v10258 = vmul.f32 %v10119, %v10144
        %v10259 = vmul.f32 %v9953, %v10143
        %v10260 = vmul.f32 %v10122, %v10144
        %v10261 = vmul.f32 %v9955, %v10143
        %v10262 = vmul.f32 %v10124, %v10144
        %v10263 = vmul.f32 %v9958, %v10143
        %v10264 = vmul.f32 %v10127, %v10144
        %v10265 = vmul.f32 %v9960, %v10143
        %v10266 = vmul.f32 %v10129, %v10144
        %v10267 = vmul.f32 %v9963, %v10143
        %v10268 = vmul.f32 %v10132, %v10144
        %v10269 = vmul.f32 %v9965, %v10143
        %v10270 = vmul.f32 %v10134, %v10144
        %v10271 = vmul.f32 %v9968, %v10143
        %v10272 = vmul.f32 %v10137, %v10144
        %v10273 = vmul.f32 %v9970, %v10143
        %v10274 = vmul.f32 %v10139, %v10144
        %v10275 = vld [vmem:[%s9] sm:$0x3]
        %v10277 = vperm.slane %v10275, 0
        %v10278 = vperm.slane %v10275, 1
        %v10281 = vadd.f32 %v10147, %v10277
        %v10282 = vadd.f32 %v10148, %v10278
        %v10283 = vadd.f32 %v10149, %v10277
        %v10284 = vadd.f32 %v10150, %v10278
        %v10285 = vadd.f32 %v10151, %v10277
        %v10286 = vadd.f32 %v10152, %v10278
        %v10287 = vadd.f32 %v10153, %v10277
        %v10288 = vadd.f32 %v10154, %v10278
        %v10289 = vadd.f32 %v10155, %v10277
        %v10290 = vadd.f32 %v10156, %v10278
        %v10291 = vadd.f32 %v10157, %v10277
        %v10292 = vadd.f32 %v10158, %v10278
        %v10293 = vadd.f32 %v10159, %v10277
        %v10294 = vadd.f32 %v10160, %v10278
        %v10295 = vadd.f32 %v10161, %v10277
        %v10296 = vadd.f32 %v10162, %v10278
        %v10297 = vadd.f32 %v10163, %v10277
        %v10298 = vadd.f32 %v10164, %v10278
        %v10299 = vadd.f32 %v10165, %v10277
        %v10300 = vadd.f32 %v10166, %v10278
        %v10301 = vadd.f32 %v10167, %v10277
        %v10302 = vadd.f32 %v10168, %v10278
        %v10303 = vadd.f32 %v10169, %v10277
        %v10304 = vadd.f32 %v10170, %v10278
        %v10305 = vadd.f32 %v10171, %v10277
        %v10306 = vadd.f32 %v10172, %v10278
        %v10307 = vadd.f32 %v10173, %v10277
        %v10308 = vadd.f32 %v10174, %v10278
        %v10309 = vadd.f32 %v10175, %v10277
        %v10310 = vadd.f32 %v10176, %v10278
        %v10311 = vadd.f32 %v10177, %v10277
        %v10312 = vadd.f32 %v10178, %v10278
        %v10313 = vadd.f32 %v10179, %v10277
        %v10314 = vadd.f32 %v10180, %v10278
        %v10315 = vadd.f32 %v10181, %v10277
        %v10316 = vadd.f32 %v10182, %v10278
        %v10317 = vadd.f32 %v10183, %v10277
        %v10318 = vadd.f32 %v10184, %v10278
        %v10319 = vadd.f32 %v10185, %v10277
        %v10320 = vadd.f32 %v10186, %v10278
        %v10321 = vadd.f32 %v10187, %v10277
        %v10322 = vadd.f32 %v10188, %v10278
        %v10323 = vadd.f32 %v10189, %v10277
        %v10324 = vadd.f32 %v10190, %v10278
        %v10325 = vadd.f32 %v10191, %v10277
        %v10326 = vadd.f32 %v10192, %v10278
        %v10327 = vadd.f32 %v10193, %v10277
        %v10328 = vadd.f32 %v10194, %v10278
        %v10329 = vadd.f32 %v10195, %v10277
        %v10330 = vadd.f32 %v10196, %v10278
        %v10331 = vadd.f32 %v10197, %v10277
        %v10332 = vadd.f32 %v10198, %v10278
        %v10333 = vadd.f32 %v10199, %v10277
        %v10334 = vadd.f32 %v10200, %v10278
        %v10335 = vadd.f32 %v10201, %v10277
        %v10336 = vadd.f32 %v10202, %v10278
        %v10337 = vadd.f32 %v10203, %v10277
        %v10338 = vadd.f32 %v10204, %v10278
        %v10339 = vadd.f32 %v10205, %v10277
        %v10340 = vadd.f32 %v10206, %v10278
        %v10341 = vadd.f32 %v10207, %v10277
        %v10342 = vadd.f32 %v10208, %v10278
        %v10343 = vadd.f32 %v10209, %v10277
        %v10344 = vadd.f32 %v10210, %v10278
        %v10345 = vadd.f32 %v10211, %v10277
        %v10346 = vadd.f32 %v10212, %v10278
        %v10347 = vadd.f32 %v10213, %v10277
        %v10348 = vadd.f32 %v10214, %v10278
        %v10349 = vadd.f32 %v10215, %v10277
        %v10350 = vadd.f32 %v10216, %v10278
        %v10351 = vadd.f32 %v10217, %v10277
        %v10352 = vadd.f32 %v10218, %v10278
        %v10353 = vadd.f32 %v10219, %v10277
        %v10354 = vadd.f32 %v10220, %v10278
        %v10355 = vadd.f32 %v10221, %v10277
        %v10356 = vadd.f32 %v10222, %v10278
        %v10357 = vadd.f32 %v10223, %v10277
        %v10358 = vadd.f32 %v10224, %v10278
        %v10359 = vadd.f32 %v10225, %v10277
        %v10360 = vadd.f32 %v10226, %v10278
        %v10361 = vadd.f32 %v10227, %v10277
        %v10362 = vadd.f32 %v10228, %v10278
        %v10363 = vadd.f32 %v10229, %v10277
        %v10364 = vadd.f32 %v10230, %v10278
        %v10365 = vadd.f32 %v10231, %v10277
        %v10366 = vadd.f32 %v10232, %v10278
        %v10367 = vadd.f32 %v10233, %v10277
        %v10368 = vadd.f32 %v10234, %v10278
        %v10369 = vadd.f32 %v10235, %v10277
        %v10370 = vadd.f32 %v10236, %v10278
        %v10371 = vadd.f32 %v10237, %v10277
        %v10372 = vadd.f32 %v10238, %v10278
        %v10373 = vadd.f32 %v10239, %v10277
        %v10374 = vadd.f32 %v10240, %v10278
        %v10375 = vadd.f32 %v10241, %v10277
        %v10376 = vadd.f32 %v10242, %v10278
        %v10377 = vadd.f32 %v10243, %v10277
        %v10378 = vadd.f32 %v10244, %v10278
        %v10379 = vadd.f32 %v10245, %v10277
        %v10380 = vadd.f32 %v10246, %v10278
        %v10381 = vadd.f32 %v10247, %v10277
        %v10382 = vadd.f32 %v10248, %v10278
        %v10383 = vadd.f32 %v10249, %v10277
        %v10384 = vadd.f32 %v10250, %v10278
        %v10385 = vadd.f32 %v10251, %v10277
        %v10386 = vadd.f32 %v10252, %v10278
        %v10387 = vadd.f32 %v10253, %v10277
        %v10388 = vadd.f32 %v10254, %v10278
        %v10389 = vadd.f32 %v10255, %v10277
        %v10390 = vadd.f32 %v10256, %v10278
        %v10391 = vadd.f32 %v10257, %v10277
        %v10392 = vadd.f32 %v10258, %v10278
        %v10393 = vadd.f32 %v10259, %v10277
        %v10394 = vadd.f32 %v10260, %v10278
        %v10395 = vadd.f32 %v10261, %v10277
        %v10396 = vadd.f32 %v10262, %v10278
        %v10397 = vadd.f32 %v10263, %v10277
        %v10398 = vadd.f32 %v10264, %v10278
        %v10399 = vadd.f32 %v10265, %v10277
        %v10400 = vadd.f32 %v10266, %v10278
        %v10401 = vadd.f32 %v10267, %v10277
        %v10402 = vadd.f32 %v10268, %v10278
        %v10403 = vadd.f32 %v10269, %v10277
        %v10404 = vadd.f32 %v10270, %v10278
        %v10405 = vadd.f32 %v10271, %v10277
        %v10406 = vadd.f32 %v10272, %v10278
        %v10407 = vadd.f32 %v10273, %v10277
        %v10408 = vadd.f32 %v10274, %v10278
        %v10409 = vld [vmem:[%s343] sm:$0xff]
        %v10410 = vld [vmem:[%s343 + $0x8] sm:$0xff]
        %v10411 = vld [vmem:[%s343 + $0x10] sm:$0xff]
        %v10412 = vld [vmem:[%s343 + $0x18] sm:$0xff]
        %v10413 = vld [vmem:[%s343 + $0x20] sm:$0xff]
        %v10414 = vld [vmem:[%s343 + $0x28] sm:$0xff]
        %v10415 = vld [vmem:[%s343 + $0x30] sm:$0xff]
        %v10416 = vld [vmem:[%s343 + $0x38] sm:$0xff]
        %v10417 = vld [vmem:[%s343 + $0x40] sm:$0xff]
        %v10418 = vld [vmem:[%s343 + $0x48] sm:$0xff]
        %v10419 = vld [vmem:[%s343 + $0x50] sm:$0xff]
        %v10420 = vld [vmem:[%s343 + $0x58] sm:$0xff]
        %v10421 = vld [vmem:[%s343 + $0x60] sm:$0xff]
        %v10422 = vld [vmem:[%s343 + $0x68] sm:$0xff]
        %v10423 = vld [vmem:[%s343 + $0x70] sm:$0xff]
        %v10424 = vld [vmem:[%s343 + $0x78] sm:$0xff]
        %v10425 = vld [vmem:[%s343 + $0x80] sm:$0xff]
        %v10426 = vld [vmem:[%s343 + $0x88] sm:$0xff]
        %v10427 = vld [vmem:[%s343 + $0x90] sm:$0xff]
        %v10428 = vld [vmem:[%s343 + $0x98] sm:$0xff]
        %v10429 = vld [vmem:[%s343 + $0xa0] sm:$0xff]
        %v10430 = vld [vmem:[%s343 + $0xa8] sm:$0xff]
        %v10431 = vld [vmem:[%s343 + $0xb0] sm:$0xff]
        %v10432 = vld [vmem:[%s343 + $0xb8] sm:$0xff]
        %v10433 = vld [vmem:[%s343 + $0xc0] sm:$0xff]
        %v10434 = vld [vmem:[%s343 + $0xc8] sm:$0xff]
        %v10435 = vld [vmem:[%s343 + $0xd0] sm:$0xff]
        %v10436 = vld [vmem:[%s343 + $0xd8] sm:$0xff]
        %v10437 = vld [vmem:[%s343 + $0xe0] sm:$0xff]
        %v10438 = vld [vmem:[%s343 + $0xe8] sm:$0xff]
        %v10439 = vld [vmem:[%s343 + $0xf0] sm:$0xff]
        %v10440 = vld [vmem:[%s343 + $0xf8] sm:$0xff]
        %v10441 = vld [vmem:[%s343 + $0x100] sm:$0xff]
        %v10442 = vld [vmem:[%s343 + $0x108] sm:$0xff]
        %v10443 = vld [vmem:[%s343 + $0x110] sm:$0xff]
        %v10444 = vld [vmem:[%s343 + $0x118] sm:$0xff]
        %v10445 = vld [vmem:[%s343 + $0x120] sm:$0xff]
        %v10446 = vld [vmem:[%s343 + $0x128] sm:$0xff]
        %v10447 = vld [vmem:[%s343 + $0x130] sm:$0xff]
        %v10448 = vld [vmem:[%s343 + $0x138] sm:$0xff]
        %v10449 = vld [vmem:[%s343 + $0x140] sm:$0xff]
        %v10450 = vld [vmem:[%s343 + $0x148] sm:$0xff]
        %v10451 = vld [vmem:[%s343 + $0x150] sm:$0xff]
        %v10452 = vld [vmem:[%s343 + $0x158] sm:$0xff]
        %v10453 = vld [vmem:[%s343 + $0x160] sm:$0xff]
        %v10454 = vld [vmem:[%s343 + $0x168] sm:$0xff]
        %v10455 = vld [vmem:[%s343 + $0x170] sm:$0xff]
        %v10456 = vld [vmem:[%s343 + $0x178] sm:$0xff]
        %v10457 = vld [vmem:[%s343 + $0x180] sm:$0xff]
        %v10458 = vld [vmem:[%s343 + $0x188] sm:$0xff]
        %v10459 = vld [vmem:[%s343 + $0x190] sm:$0xff]
        %v10460 = vld [vmem:[%s343 + $0x198] sm:$0xff]
        %v10461 = vld [vmem:[%s343 + $0x1a0] sm:$0xff]
        %v10462 = vld [vmem:[%s343 + $0x1a8] sm:$0xff]
        %v10463 = vld [vmem:[%s343 + $0x1b0] sm:$0xff]
        %v10464 = vld [vmem:[%s343 + $0x1b8] sm:$0xff]
        %v10465 = vld [vmem:[%s343 + $0x1c0] sm:$0xff]
        %v10466 = vld [vmem:[%s343 + $0x1c8] sm:$0xff]
        %v10467 = vld [vmem:[%s343 + $0x1d0] sm:$0xff]
        %v10468 = vld [vmem:[%s343 + $0x1d8] sm:$0xff]
        %v10469 = vld [vmem:[%s343 + $0x1e0] sm:$0xff]
        %v10470 = vld [vmem:[%s343 + $0x1e8] sm:$0xff]
        %v10471 = vld [vmem:[%s343 + $0x1f0] sm:$0xff]
        %v10472 = vld [vmem:[%s343 + $0x1f8] sm:$0xff]
        %v10473 = vunpack.c.l.bf16 %v10409
        %v10474 = vunpack.c.h.bf16 %v10409
        %v10475 = vunpack.c.l.bf16 %v10410
        %v10476 = vunpack.c.h.bf16 %v10410
        %v10477 = vunpack.c.l.bf16 %v10411
        %v10478 = vunpack.c.h.bf16 %v10411
        %v10479 = vunpack.c.l.bf16 %v10412
        %v10480 = vunpack.c.h.bf16 %v10412
        %v10481 = vunpack.c.l.bf16 %v10413
        %v10482 = vunpack.c.h.bf16 %v10413
        %v10483 = vunpack.c.l.bf16 %v10414
        %v10484 = vunpack.c.h.bf16 %v10414
        %v10485 = vunpack.c.l.bf16 %v10415
        %v10486 = vunpack.c.h.bf16 %v10415
        %v10487 = vunpack.c.l.bf16 %v10416
        %v10488 = vunpack.c.h.bf16 %v10416
        %v10489 = vunpack.c.l.bf16 %v10417
        %v10490 = vunpack.c.h.bf16 %v10417
        %v10491 = vunpack.c.l.bf16 %v10418
        %v10492 = vunpack.c.h.bf16 %v10418
        %v10493 = vunpack.c.l.bf16 %v10419
        %v10494 = vunpack.c.h.bf16 %v10419
        %v10495 = vunpack.c.l.bf16 %v10420
        %v10496 = vunpack.c.h.bf16 %v10420
        %v10497 = vunpack.c.l.bf16 %v10421
        %v10498 = vunpack.c.h.bf16 %v10421
        %v10499 = vunpack.c.l.bf16 %v10422
        %v10500 = vunpack.c.h.bf16 %v10422
        %v10501 = vunpack.c.l.bf16 %v10423
        %v10502 = vunpack.c.h.bf16 %v10423
        %v10503 = vunpack.c.l.bf16 %v10424
        %v10504 = vunpack.c.h.bf16 %v10424
        %v10505 = vunpack.c.l.bf16 %v10425
        %v10506 = vunpack.c.h.bf16 %v10425
        %v10507 = vunpack.c.l.bf16 %v10426
        %v10508 = vunpack.c.h.bf16 %v10426
        %v10509 = vunpack.c.l.bf16 %v10427
        %v10510 = vunpack.c.h.bf16 %v10427
        %v10511 = vunpack.c.l.bf16 %v10428
        %v10512 = vunpack.c.h.bf16 %v10428
        %v10513 = vunpack.c.l.bf16 %v10429
        %v10514 = vunpack.c.h.bf16 %v10429
        %v10515 = vunpack.c.l.bf16 %v10430
        %v10516 = vunpack.c.h.bf16 %v10430
        %v10517 = vunpack.c.l.bf16 %v10431
        %v10518 = vunpack.c.h.bf16 %v10431
        %v10519 = vunpack.c.l.bf16 %v10432
        %v10520 = vunpack.c.h.bf16 %v10432
        %v10521 = vunpack.c.l.bf16 %v10433
        %v10522 = vunpack.c.h.bf16 %v10433
        %v10523 = vunpack.c.l.bf16 %v10434
        %v10524 = vunpack.c.h.bf16 %v10434
        %v10525 = vunpack.c.l.bf16 %v10435
        %v10526 = vunpack.c.h.bf16 %v10435
        %v10527 = vunpack.c.l.bf16 %v10436
        %v10528 = vunpack.c.h.bf16 %v10436
        %v10529 = vunpack.c.l.bf16 %v10437
        %v10530 = vunpack.c.h.bf16 %v10437
        %v10531 = vunpack.c.l.bf16 %v10438
        %v10532 = vunpack.c.h.bf16 %v10438
        %v10533 = vunpack.c.l.bf16 %v10439
        %v10534 = vunpack.c.h.bf16 %v10439
        %v10535 = vunpack.c.l.bf16 %v10440
        %v10536 = vunpack.c.h.bf16 %v10440
        %v10537 = vunpack.c.l.bf16 %v10441
        %v10538 = vunpack.c.h.bf16 %v10441
        %v10539 = vunpack.c.l.bf16 %v10442
        %v10540 = vunpack.c.h.bf16 %v10442
        %v10541 = vunpack.c.l.bf16 %v10443
        %v10542 = vunpack.c.h.bf16 %v10443
        %v10543 = vunpack.c.l.bf16 %v10444
        %v10544 = vunpack.c.h.bf16 %v10444
        %v10545 = vunpack.c.l.bf16 %v10445
        %v10546 = vunpack.c.h.bf16 %v10445
        %v10547 = vunpack.c.l.bf16 %v10446
        %v10548 = vunpack.c.h.bf16 %v10446
        %v10549 = vunpack.c.l.bf16 %v10447
        %v10550 = vunpack.c.h.bf16 %v10447
        %v10551 = vunpack.c.l.bf16 %v10448
        %v10552 = vunpack.c.h.bf16 %v10448
        %v10553 = vunpack.c.l.bf16 %v10449
        %v10554 = vunpack.c.h.bf16 %v10449
        %v10555 = vunpack.c.l.bf16 %v10450
        %v10556 = vunpack.c.h.bf16 %v10450
        %v10557 = vunpack.c.l.bf16 %v10451
        %v10558 = vunpack.c.h.bf16 %v10451
        %v10559 = vunpack.c.l.bf16 %v10452
        %v10560 = vunpack.c.h.bf16 %v10452
        %v10561 = vunpack.c.l.bf16 %v10453
        %v10562 = vunpack.c.h.bf16 %v10453
        %v10563 = vunpack.c.l.bf16 %v10454
        %v10564 = vunpack.c.h.bf16 %v10454
        %v10565 = vunpack.c.l.bf16 %v10455
        %v10566 = vunpack.c.h.bf16 %v10455
        %v10567 = vunpack.c.l.bf16 %v10456
        %v10568 = vunpack.c.h.bf16 %v10456
        %v10569 = vunpack.c.l.bf16 %v10457
        %v10570 = vunpack.c.h.bf16 %v10457
        %v10571 = vunpack.c.l.bf16 %v10458
        %v10572 = vunpack.c.h.bf16 %v10458
        %v10573 = vunpack.c.l.bf16 %v10459
        %v10574 = vunpack.c.h.bf16 %v10459
        %v10575 = vunpack.c.l.bf16 %v10460
        %v10576 = vunpack.c.h.bf16 %v10460
        %v10577 = vunpack.c.l.bf16 %v10461
        %v10578 = vunpack.c.h.bf16 %v10461
        %v10579 = vunpack.c.l.bf16 %v10462
        %v10580 = vunpack.c.h.bf16 %v10462
        %v10581 = vunpack.c.l.bf16 %v10463
        %v10582 = vunpack.c.h.bf16 %v10463
        %v10583 = vunpack.c.l.bf16 %v10464
        %v10584 = vunpack.c.h.bf16 %v10464
        %v10585 = vunpack.c.l.bf16 %v10465
        %v10586 = vunpack.c.h.bf16 %v10465
        %v10587 = vunpack.c.l.bf16 %v10466
        %v10588 = vunpack.c.h.bf16 %v10466
        %v10589 = vunpack.c.l.bf16 %v10467
        %v10590 = vunpack.c.h.bf16 %v10467
        %v10591 = vunpack.c.l.bf16 %v10468
        %v10592 = vunpack.c.h.bf16 %v10468
        %v10593 = vunpack.c.l.bf16 %v10469
        %v10594 = vunpack.c.h.bf16 %v10469
        %v10595 = vunpack.c.l.bf16 %v10470
        %v10596 = vunpack.c.h.bf16 %v10470
        %v10597 = vunpack.c.l.bf16 %v10471
        %v10598 = vunpack.c.h.bf16 %v10471
        %v10599 = vunpack.c.l.bf16 %v10472
        %v10600 = vunpack.c.h.bf16 %v10472
        %v10601 = vadd.f32 %v10281, %v10473
        %v10602 = vadd.f32 %v10282, %v10474
        %v10603 = vadd.f32 %v10283, %v10475
        %v10604 = vadd.f32 %v10284, %v10476
        %v10605 = vadd.f32 %v10285, %v10477
        %v10606 = vadd.f32 %v10286, %v10478
        %v10607 = vadd.f32 %v10287, %v10479
        %v10608 = vadd.f32 %v10288, %v10480
        %v10609 = vadd.f32 %v10289, %v10481
        %v10610 = vadd.f32 %v10290, %v10482
        %v10611 = vadd.f32 %v10291, %v10483
        %v10612 = vadd.f32 %v10292, %v10484
        %v10613 = vadd.f32 %v10293, %v10485
        %v10614 = vadd.f32 %v10294, %v10486
        %v10615 = vadd.f32 %v10295, %v10487
        %v10616 = vadd.f32 %v10296, %v10488
        %v10617 = vadd.f32 %v10297, %v10489
        %v10618 = vadd.f32 %v10298, %v10490
        %v10619 = vadd.f32 %v10299, %v10491
        %v10620 = vadd.f32 %v10300, %v10492
        %v10621 = vadd.f32 %v10301, %v10493
        %v10622 = vadd.f32 %v10302, %v10494
        %v10623 = vadd.f32 %v10303, %v10495
        %v10624 = vadd.f32 %v10304, %v10496
        %v10625 = vadd.f32 %v10305, %v10497
        %v10626 = vadd.f32 %v10306, %v10498
        %v10627 = vadd.f32 %v10307, %v10499
        %v10628 = vadd.f32 %v10308, %v10500
        %v10629 = vadd.f32 %v10309, %v10501
        %v10630 = vadd.f32 %v10310, %v10502
        %v10631 = vadd.f32 %v10311, %v10503
        %v10632 = vadd.f32 %v10312, %v10504
        %v10633 = vadd.f32 %v10313, %v10505
        %v10634 = vadd.f32 %v10314, %v10506
        %v10635 = vadd.f32 %v10315, %v10507
        %v10636 = vadd.f32 %v10316, %v10508
        %v10637 = vadd.f32 %v10317, %v10509
        %v10638 = vadd.f32 %v10318, %v10510
        %v10639 = vadd.f32 %v10319, %v10511
        %v10640 = vadd.f32 %v10320, %v10512
        %v10641 = vadd.f32 %v10321, %v10513
        %v10642 = vadd.f32 %v10322, %v10514
        %v10643 = vadd.f32 %v10323, %v10515
        %v10644 = vadd.f32 %v10324, %v10516
        %v10645 = vadd.f32 %v10325, %v10517
        %v10646 = vadd.f32 %v10326, %v10518
        %v10647 = vadd.f32 %v10327, %v10519
        %v10648 = vadd.f32 %v10328, %v10520
        %v10649 = vadd.f32 %v10329, %v10521
        %v10650 = vadd.f32 %v10330, %v10522
        %v10651 = vadd.f32 %v10331, %v10523
        %v10652 = vadd.f32 %v10332, %v10524
        %v10653 = vadd.f32 %v10333, %v10525
        %v10654 = vadd.f32 %v10334, %v10526
        %v10655 = vadd.f32 %v10335, %v10527
        %v10656 = vadd.f32 %v10336, %v10528
        %v10657 = vadd.f32 %v10337, %v10529
        %v10658 = vadd.f32 %v10338, %v10530
        %v10659 = vadd.f32 %v10339, %v10531
        %v10660 = vadd.f32 %v10340, %v10532
        %v10661 = vadd.f32 %v10341, %v10533
        %v10662 = vadd.f32 %v10342, %v10534
        %v10663 = vadd.f32 %v10343, %v10535
        %v10664 = vadd.f32 %v10344, %v10536
        %v10665 = vadd.f32 %v10345, %v10537
        %v10666 = vadd.f32 %v10346, %v10538
        %v10667 = vadd.f32 %v10347, %v10539
        %v10668 = vadd.f32 %v10348, %v10540
        %v10669 = vadd.f32 %v10349, %v10541
        %v10670 = vadd.f32 %v10350, %v10542
        %v10671 = vadd.f32 %v10351, %v10543
        %v10672 = vadd.f32 %v10352, %v10544
        %v10673 = vadd.f32 %v10353, %v10545
        %v10674 = vadd.f32 %v10354, %v10546
        %v10675 = vadd.f32 %v10355, %v10547
        %v10676 = vadd.f32 %v10356, %v10548
        %v10677 = vadd.f32 %v10357, %v10549
        %v10678 = vadd.f32 %v10358, %v10550
        %v10679 = vadd.f32 %v10359, %v10551
        %v10680 = vadd.f32 %v10360, %v10552
        %v10681 = vadd.f32 %v10361, %v10553
        %v10682 = vadd.f32 %v10362, %v10554
        %v10683 = vadd.f32 %v10363, %v10555
        %v10684 = vadd.f32 %v10364, %v10556
        %v10685 = vadd.f32 %v10365, %v10557
        %v10686 = vadd.f32 %v10366, %v10558
        %v10687 = vadd.f32 %v10367, %v10559
        %v10688 = vadd.f32 %v10368, %v10560
        %v10689 = vadd.f32 %v10369, %v10561
        %v10690 = vadd.f32 %v10370, %v10562
        %v10691 = vadd.f32 %v10371, %v10563
        %v10692 = vadd.f32 %v10372, %v10564
        %v10693 = vadd.f32 %v10373, %v10565
        %v10694 = vadd.f32 %v10374, %v10566
        %v10695 = vadd.f32 %v10375, %v10567
        %v10696 = vadd.f32 %v10376, %v10568
        %v10697 = vadd.f32 %v10377, %v10569
        %v10698 = vadd.f32 %v10378, %v10570
        %v10699 = vadd.f32 %v10379, %v10571
        %v10700 = vadd.f32 %v10380, %v10572
        %v10701 = vadd.f32 %v10381, %v10573
        %v10702 = vadd.f32 %v10382, %v10574
        %v10703 = vadd.f32 %v10383, %v10575
        %v10704 = vadd.f32 %v10384, %v10576
        %v10705 = vadd.f32 %v10385, %v10577
        %v10706 = vadd.f32 %v10386, %v10578
        %v10707 = vadd.f32 %v10387, %v10579
        %v10708 = vadd.f32 %v10388, %v10580
        %v10709 = vadd.f32 %v10389, %v10581
        %v10710 = vadd.f32 %v10390, %v10582
        %v10711 = vadd.f32 %v10391, %v10583
        %v10712 = vadd.f32 %v10392, %v10584
        %v10713 = vadd.f32 %v10393, %v10585
        %v10714 = vadd.f32 %v10394, %v10586
        %v10715 = vadd.f32 %v10395, %v10587
        %v10716 = vadd.f32 %v10396, %v10588
        %v10717 = vadd.f32 %v10397, %v10589
        %v10718 = vadd.f32 %v10398, %v10590
        %v10719 = vadd.f32 %v10399, %v10591
        %v10720 = vadd.f32 %v10400, %v10592
        %v10721 = vadd.f32 %v10401, %v10593
        %v10722 = vadd.f32 %v10402, %v10594
        %v10723 = vadd.f32 %v10403, %v10595
        %v10724 = vadd.f32 %v10404, %v10596
        %v10725 = vadd.f32 %v10405, %v10597
        %v10726 = vadd.f32 %v10406, %v10598
        %v10727 = vadd.f32 %v10407, %v10599
        %v10728 = vadd.f32 %v10408, %v10600
        %v10729 = vmax.f32 %v10601, 0.0
        %v10730 = vmax.f32 %v10602, 0.0
        %v10731 = vmax.f32 %v10603, 0.0
        %v10732 = vmax.f32 %v10604, 0.0
        %v10733 = vmax.f32 %v10605, 0.0
        %v10734 = vmax.f32 %v10606, 0.0
        %v10735 = vmax.f32 %v10607, 0.0
        %v10736 = vmax.f32 %v10608, 0.0
        %v10737 = vmax.f32 %v10609, 0.0
        %v10738 = vmax.f32 %v10610, 0.0
        %v10739 = vmax.f32 %v10611, 0.0
        %v10740 = vmax.f32 %v10612, 0.0
        %v10741 = vmax.f32 %v10613, 0.0
        %v10742 = vmax.f32 %v10614, 0.0
        %v10743 = vmax.f32 %v10615, 0.0
        %v10744 = vmax.f32 %v10616, 0.0
        %v10745 = vmax.f32 %v10617, 0.0
        %v10746 = vmax.f32 %v10618, 0.0
        %v10747 = vmax.f32 %v10619, 0.0
        %v10748 = vmax.f32 %v10620, 0.0
        %v10749 = vmax.f32 %v10621, 0.0
        %v10750 = vmax.f32 %v10622, 0.0
        %v10751 = vmax.f32 %v10623, 0.0
        %v10752 = vmax.f32 %v10624, 0.0
        %v10753 = vmax.f32 %v10625, 0.0
        %v10754 = vmax.f32 %v10626, 0.0
        %v10755 = vmax.f32 %v10627, 0.0
        %v10756 = vmax.f32 %v10628, 0.0
        %v10757 = vmax.f32 %v10629, 0.0
        %v10758 = vmax.f32 %v10630, 0.0
        %v10759 = vmax.f32 %v10631, 0.0
        %v10760 = vmax.f32 %v10632, 0.0
        %v10761 = vmax.f32 %v10633, 0.0
        %v10762 = vmax.f32 %v10634, 0.0
        %v10763 = vmax.f32 %v10635, 0.0
        %v10764 = vmax.f32 %v10636, 0.0
        %v10765 = vmax.f32 %v10637, 0.0
        %v10766 = vmax.f32 %v10638, 0.0
        %v10767 = vmax.f32 %v10639, 0.0
        %v10768 = vmax.f32 %v10640, 0.0
        %v10769 = vmax.f32 %v10641, 0.0
        %v10770 = vmax.f32 %v10642, 0.0
        %v10771 = vmax.f32 %v10643, 0.0
        %v10772 = vmax.f32 %v10644, 0.0
        %v10773 = vmax.f32 %v10645, 0.0
        %v10774 = vmax.f32 %v10646, 0.0
        %v10775 = vmax.f32 %v10647, 0.0
        %v10776 = vmax.f32 %v10648, 0.0
        %v10777 = vmax.f32 %v10649, 0.0
        %v10778 = vmax.f32 %v10650, 0.0
        %v10779 = vmax.f32 %v10651, 0.0
        %v10780 = vmax.f32 %v10652, 0.0
        %v10781 = vmax.f32 %v10653, 0.0
        %v10782 = vmax.f32 %v10654, 0.0
        %v10783 = vmax.f32 %v10655, 0.0
        %v10784 = vmax.f32 %v10656, 0.0
        %v10785 = vmax.f32 %v10657, 0.0
        %v10786 = vmax.f32 %v10658, 0.0
        %v10787 = vmax.f32 %v10659, 0.0
        %v10788 = vmax.f32 %v10660, 0.0
        %v10789 = vmax.f32 %v10661, 0.0
        %v10790 = vmax.f32 %v10662, 0.0
        %v10791 = vmax.f32 %v10663, 0.0
        %v10792 = vmax.f32 %v10664, 0.0
        %v10793 = vmax.f32 %v10665, 0.0
        %v10794 = vmax.f32 %v10666, 0.0
        %v10795 = vmax.f32 %v10667, 0.0
        %v10796 = vmax.f32 %v10668, 0.0
        %v10797 = vmax.f32 %v10669, 0.0
        %v10798 = vmax.f32 %v10670, 0.0
        %v10799 = vmax.f32 %v10671, 0.0
        %v10800 = vmax.f32 %v10672, 0.0
        %v10801 = vmax.f32 %v10673, 0.0
        %v10802 = vmax.f32 %v10674, 0.0
        %v10803 = vmax.f32 %v10675, 0.0
        %v10804 = vmax.f32 %v10676, 0.0
        %v10805 = vmax.f32 %v10677, 0.0
        %v10806 = vmax.f32 %v10678, 0.0
        %v10807 = vmax.f32 %v10679, 0.0
        %v10808 = vmax.f32 %v10680, 0.0
        %v10809 = vmax.f32 %v10681, 0.0
        %v10810 = vmax.f32 %v10682, 0.0
        %v10811 = vmax.f32 %v10683, 0.0
        %v10812 = vmax.f32 %v10684, 0.0
        %v10813 = vmax.f32 %v10685, 0.0
        %v10814 = vmax.f32 %v10686, 0.0
        %v10815 = vmax.f32 %v10687, 0.0
        %v10816 = vmax.f32 %v10688, 0.0
        %v10817 = vmax.f32 %v10689, 0.0
        %v10818 = vmax.f32 %v10690, 0.0
        %v10819 = vmax.f32 %v10691, 0.0
        %v10820 = vmax.f32 %v10692, 0.0
        %v10821 = vmax.f32 %v10693, 0.0
        %v10822 = vmax.f32 %v10694, 0.0
        %v10823 = vmax.f32 %v10695, 0.0
        %v10824 = vmax.f32 %v10696, 0.0
        %v10825 = vmax.f32 %v10697, 0.0
        %v10826 = vmax.f32 %v10698, 0.0
        %v10827 = vmax.f32 %v10699, 0.0
        %v10828 = vmax.f32 %v10700, 0.0
        %v10829 = vmax.f32 %v10701, 0.0
        %v10830 = vmax.f32 %v10702, 0.0
        %v10831 = vmax.f32 %v10703, 0.0
        %v10832 = vmax.f32 %v10704, 0.0
        %v10833 = vmax.f32 %v10705, 0.0
        %v10834 = vmax.f32 %v10706, 0.0
        %v10835 = vmax.f32 %v10707, 0.0
        %v10836 = vmax.f32 %v10708, 0.0
        %v10837 = vmax.f32 %v10709, 0.0
        %v10838 = vmax.f32 %v10710, 0.0
        %v10839 = vmax.f32 %v10711, 0.0
        %v10840 = vmax.f32 %v10712, 0.0
        %v10841 = vmax.f32 %v10713, 0.0
        %v10842 = vmax.f32 %v10714, 0.0
        %v10843 = vmax.f32 %v10715, 0.0
        %v10844 = vmax.f32 %v10716, 0.0
        %v10845 = vmax.f32 %v10717, 0.0
        %v10846 = vmax.f32 %v10718, 0.0
        %v10847 = vmax.f32 %v10719, 0.0
        %v10848 = vmax.f32 %v10720, 0.0
        %v10849 = vmax.f32 %v10721, 0.0
        %v10850 = vmax.f32 %v10722, 0.0
        %v10851 = vmax.f32 %v10723, 0.0
        %v10852 = vmax.f32 %v10724, 0.0
        %v10853 = vmax.f32 %v10725, 0.0
        %v10854 = vmax.f32 %v10726, 0.0
        %v10855 = vmax.f32 %v10727, 0.0
        %v10856 = vmax.f32 %v10728, 0.0
        %10857 = vst [vmem:[%s380] sm:$0xff] %v10729
        %10858 = vst [vmem:[%s380 + $0x8] sm:$0xff] %v10730
        %10859 = vst [vmem:[%s380 + $0x10] sm:$0xff] %v10731
        %10860 = vst [vmem:[%s380 + $0x18] sm:$0xff] %v10732
        %10861 = vst [vmem:[%s380 + $0x20] sm:$0xff] %v10733
        %10862 = vst [vmem:[%s380 + $0x28] sm:$0xff] %v10734
        %10863 = vst [vmem:[%s380 + $0x30] sm:$0xff] %v10735
        %10864 = vst [vmem:[%s380 + $0x38] sm:$0xff] %v10736
        %10865 = vst [vmem:[%s380 + $0x40] sm:$0xff] %v10737
        %10866 = vst [vmem:[%s380 + $0x48] sm:$0xff] %v10738
        %10867 = vst [vmem:[%s380 + $0x50] sm:$0xff] %v10739
        %10868 = vst [vmem:[%s380 + $0x58] sm:$0xff] %v10740
        %10869 = vst [vmem:[%s380 + $0x60] sm:$0xff] %v10741
        %10870 = vst [vmem:[%s380 + $0x68] sm:$0xff] %v10742
        %10871 = vst [vmem:[%s380 + $0x70] sm:$0xff] %v10743
        %10872 = vst [vmem:[%s380 + $0x78] sm:$0xff] %v10744
        %10873 = vst [vmem:[%s380 + $0x80] sm:$0xff] %v10745
        %10874 = vst [vmem:[%s380 + $0x88] sm:$0xff] %v10746
        %10875 = vst [vmem:[%s380 + $0x90] sm:$0xff] %v10747
        %10876 = vst [vmem:[%s380 + $0x98] sm:$0xff] %v10748
        %10877 = vst [vmem:[%s380 + $0xa0] sm:$0xff] %v10749
        %10878 = vst [vmem:[%s380 + $0xa8] sm:$0xff] %v10750
        %10879 = vst [vmem:[%s380 + $0xb0] sm:$0xff] %v10751
        %10880 = vst [vmem:[%s380 + $0xb8] sm:$0xff] %v10752
        %10881 = vst [vmem:[%s380 + $0xc0] sm:$0xff] %v10753
        %10882 = vst [vmem:[%s380 + $0xc8] sm:$0xff] %v10754
        %10883 = vst [vmem:[%s380 + $0xd0] sm:$0xff] %v10755
        %10884 = vst [vmem:[%s380 + $0xd8] sm:$0xff] %v10756
        %10885 = vst [vmem:[%s380 + $0xe0] sm:$0xff] %v10757
        %10886 = vst [vmem:[%s380 + $0xe8] sm:$0xff] %v10758
        %10887 = vst [vmem:[%s380 + $0xf0] sm:$0xff] %v10759
        %10888 = vst [vmem:[%s380 + $0xf8] sm:$0xff] %v10760
        %10889 = vst [vmem:[%s380 + $0x100] sm:$0xff] %v10761
        %10890 = vst [vmem:[%s380 + $0x108] sm:$0xff] %v10762
        %10891 = vst [vmem:[%s380 + $0x110] sm:$0xff] %v10763
        %10892 = vst [vmem:[%s380 + $0x118] sm:$0xff] %v10764
        %10893 = vst [vmem:[%s380 + $0x120] sm:$0xff] %v10765
        %10894 = vst [vmem:[%s380 + $0x128] sm:$0xff] %v10766
        %10895 = vst [vmem:[%s380 + $0x130] sm:$0xff] %v10767
        %10896 = vst [vmem:[%s380 + $0x138] sm:$0xff] %v10768
        %10897 = vst [vmem:[%s380 + $0x140] sm:$0xff] %v10769
        %10898 = vst [vmem:[%s380 + $0x148] sm:$0xff] %v10770
        %10899 = vst [vmem:[%s380 + $0x150] sm:$0xff] %v10771
        %10900 = vst [vmem:[%s380 + $0x158] sm:$0xff] %v10772
        %10901 = vst [vmem:[%s380 + $0x160] sm:$0xff] %v10773
        %10902 = vst [vmem:[%s380 + $0x168] sm:$0xff] %v10774
        %10903 = vst [vmem:[%s380 + $0x170] sm:$0xff] %v10775
        %10904 = vst [vmem:[%s380 + $0x178] sm:$0xff] %v10776
        %10905 = vst [vmem:[%s380 + $0x180] sm:$0xff] %v10777
        %10906 = vst [vmem:[%s380 + $0x188] sm:$0xff] %v10778
        %10907 = vst [vmem:[%s380 + $0x190] sm:$0xff] %v10779
        %10908 = vst [vmem:[%s380 + $0x198] sm:$0xff] %v10780
        %10909 = vst [vmem:[%s380 + $0x1a0] sm:$0xff] %v10781
        %10910 = vst [vmem:[%s380 + $0x1a8] sm:$0xff] %v10782
        %10911 = vst [vmem:[%s380 + $0x1b0] sm:$0xff] %v10783
        %10912 = vst [vmem:[%s380 + $0x1b8] sm:$0xff] %v10784
        %10913 = vst [vmem:[%s380 + $0x1c0] sm:$0xff] %v10785
        %10914 = vst [vmem:[%s380 + $0x1c8] sm:$0xff] %v10786
        %10915 = vst [vmem:[%s380 + $0x1d0] sm:$0xff] %v10787
        %10916 = vst [vmem:[%s380 + $0x1d8] sm:$0xff] %v10788
        %10917 = vst [vmem:[%s380 + $0x1e0] sm:$0xff] %v10789
        %10918 = vst [vmem:[%s380 + $0x1e8] sm:$0xff] %v10790
        %10919 = vst [vmem:[%s380 + $0x1f0] sm:$0xff] %v10791
        %10920 = vst [vmem:[%s380 + $0x1f8] sm:$0xff] %v10792
        %10921 = vst [vmem:[%s380 + $0x200] sm:$0xff] %v10793
        %10922 = vst [vmem:[%s380 + $0x208] sm:$0xff] %v10794
        %10923 = vst [vmem:[%s380 + $0x210] sm:$0xff] %v10795
        %10924 = vst [vmem:[%s380 + $0x218] sm:$0xff] %v10796
        %10925 = vst [vmem:[%s380 + $0x220] sm:$0xff] %v10797
        %10926 = vst [vmem:[%s380 + $0x228] sm:$0xff] %v10798
        %10927 = vst [vmem:[%s380 + $0x230] sm:$0xff] %v10799
        %10928 = vst [vmem:[%s380 + $0x238] sm:$0xff] %v10800
        %10929 = vst [vmem:[%s380 + $0x240] sm:$0xff] %v10801
        %10930 = vst [vmem:[%s380 + $0x248] sm:$0xff] %v10802
        %10931 = vst [vmem:[%s380 + $0x250] sm:$0xff] %v10803
        %10932 = vst [vmem:[%s380 + $0x258] sm:$0xff] %v10804
        %10933 = vst [vmem:[%s380 + $0x260] sm:$0xff] %v10805
        %10934 = vst [vmem:[%s380 + $0x268] sm:$0xff] %v10806
        %10935 = vst [vmem:[%s380 + $0x270] sm:$0xff] %v10807
        %10936 = vst [vmem:[%s380 + $0x278] sm:$0xff] %v10808
        %10937 = vst [vmem:[%s380 + $0x280] sm:$0xff] %v10809
        %10938 = vst [vmem:[%s380 + $0x288] sm:$0xff] %v10810
        %10939 = vst [vmem:[%s380 + $0x290] sm:$0xff] %v10811
        %10940 = vst [vmem:[%s380 + $0x298] sm:$0xff] %v10812
        %10941 = vst [vmem:[%s380 + $0x2a0] sm:$0xff] %v10813
        %10942 = vst [vmem:[%s380 + $0x2a8] sm:$0xff] %v10814
        %10943 = vst [vmem:[%s380 + $0x2b0] sm:$0xff] %v10815
        %10944 = vst [vmem:[%s380 + $0x2b8] sm:$0xff] %v10816
        %10945 = vst [vmem:[%s380 + $0x2c0] sm:$0xff] %v10817
        %10946 = vst [vmem:[%s380 + $0x2c8] sm:$0xff] %v10818
        %10947 = vst [vmem:[%s380 + $0x2d0] sm:$0xff] %v10819
        %10948 = vst [vmem:[%s380 + $0x2d8] sm:$0xff] %v10820
        %10949 = vst [vmem:[%s380 + $0x2e0] sm:$0xff] %v10821
        %10950 = vst [vmem:[%s380 + $0x2e8] sm:$0xff] %v10822
        %10951 = vst [vmem:[%s380 + $0x2f0] sm:$0xff] %v10823
        %10952 = vst [vmem:[%s380 + $0x2f8] sm:$0xff] %v10824
        %10953 = vst [vmem:[%s380 + $0x300] sm:$0xff] %v10825
        %10954 = vst [vmem:[%s380 + $0x308] sm:$0xff] %v10826
        %10955 = vst [vmem:[%s380 + $0x310] sm:$0xff] %v10827
        %10956 = vst [vmem:[%s380 + $0x318] sm:$0xff] %v10828
        %10957 = vst [vmem:[%s380 + $0x320] sm:$0xff] %v10829
        %10958 = vst [vmem:[%s380 + $0x328] sm:$0xff] %v10830
        %10959 = vst [vmem:[%s380 + $0x330] sm:$0xff] %v10831
        %10960 = vst [vmem:[%s380 + $0x338] sm:$0xff] %v10832
        %10961 = vst [vmem:[%s380 + $0x340] sm:$0xff] %v10833
        %10962 = vst [vmem:[%s380 + $0x348] sm:$0xff] %v10834
        %10963 = vst [vmem:[%s380 + $0x350] sm:$0xff] %v10835
        %10964 = vst [vmem:[%s380 + $0x358] sm:$0xff] %v10836
        %10965 = vst [vmem:[%s380 + $0x360] sm:$0xff] %v10837
        %10966 = vst [vmem:[%s380 + $0x368] sm:$0xff] %v10838
        %10967 = vst [vmem:[%s380 + $0x370] sm:$0xff] %v10839
        %10968 = vst [vmem:[%s380 + $0x378] sm:$0xff] %v10840
        %10969 = vst [vmem:[%s380 + $0x380] sm:$0xff] %v10841
        %10970 = vst [vmem:[%s380 + $0x388] sm:$0xff] %v10842
        %10971 = vst [vmem:[%s380 + $0x390] sm:$0xff] %v10843
        %10972 = vst [vmem:[%s380 + $0x398] sm:$0xff] %v10844
        %10973 = vst [vmem:[%s380 + $0x3a0] sm:$0xff] %v10845
        %10974 = vst [vmem:[%s380 + $0x3a8] sm:$0xff] %v10846
        %10975 = vst [vmem:[%s380 + $0x3b0] sm:$0xff] %v10847
        %10976 = vst [vmem:[%s380 + $0x3b8] sm:$0xff] %v10848
        %10977 = vst [vmem:[%s380 + $0x3c0] sm:$0xff] %v10849
        %10978 = vst [vmem:[%s380 + $0x3c8] sm:$0xff] %v10850
        %10979 = vst [vmem:[%s380 + $0x3d0] sm:$0xff] %v10851
        %10980 = vst [vmem:[%s380 + $0x3d8] sm:$0xff] %v10852
        %10981 = vst [vmem:[%s380 + $0x3e0] sm:$0xff] %v10853
        %10982 = vst [vmem:[%s380 + $0x3e8] sm:$0xff] %v10854
        %10983 = vst [vmem:[%s380 + $0x3f0] sm:$0xff] %v10855
        %10984 = vst [vmem:[%s380 + $0x3f8] sm:$0xff] %v10856
        %s10985 = sand.u32 %s250, 1
        %s10986 = scalar_lea.sflag [#allocation5], %s10985
        %s10987 = sand.u32 %s250, 1
        %s10988 = smul.addr %s10987, 1024
        %s10989 = scalar_lea.vmem [#allocation6], %s10988
        // Predicated region
        $region65: #{tpu_custom_call.1} parent=59 // pred_check
          %p10990 = pneg %p260
        $region66: #{tpu_custom_call.1} parent=59 // pred_check_branch
          %10992 = sbr.rel (%p10990) target = $region68
        $region67: #{tpu_custom_call.1} parent=59 // pred_region
          %s10993 = smul.u32 2, %s27
          %10995 = vsyncadd %s10986, 0
          %s10996 = smul.addr %s10993, 64
          %s10997 = smul.addr %s10996, 8
          %s10998 = scalar_lea.hbm %s10, %s10997
          %s10999 = sshll.u32 %s10989, 4
          %s11000 = int_to_ptr.vmem [resolvable:$true] %s10999
          %s11001 = sshll.u32 %s10998, 4
          %s11002 = int_to_ptr.hbm [resolvable:$true] %s11001
          %11007 = dma.vmem_to_hbm [thread:$0]  %s11000, 16384, %s11002, %s10986, 256, 256, 16
        $region68: #{tpu_custom_call.1} parent=59 // pred_fallthru
          _
      $region60: #{tpu_custom_call.1} parent=5 // pred_fallthru
        _
      %p11008 = scmp.le.s32.totalorder 2, %s22
      // Predicated region
      $region69: #{tpu_custom_call.1} parent=5 // pred_check
        %p11009 = pneg %p11008
      $region70: #{tpu_custom_call.1} parent=5 // pred_check_branch
        %11011 = sbr.rel (%p11009) target = $region72
      $region71: #{tpu_custom_call.1} parent=5 // pred_region
        %s11012 = ssub.s32 %s22, 2
        // Predicated region
        $region73: #{tpu_custom_call.1} parent=71 // pred_check
          %p11013 = pneg %p266
        $region74: #{tpu_custom_call.1} parent=71 // pred_check_branch
          %11015 = sbr.rel (%p11013) target = $region76
        $region75: #{tpu_custom_call.1} parent=71 // pred_region
          %s11016 = sand.u32 %s251, 1
          %s11017 = scalar_lea.sflag [#allocation5], %s11016
          %s11018 = sand.u32 %s251, 1
          %s11019 = smul.addr %s11018, 1024
          %s11020 = scalar_lea.vmem [#allocation6], %s11019
          %11022 = dma.done %s11017, 16384
        $region76: #{tpu_custom_call.1} parent=71 // pred_fallthru
          _
      $region72: #{tpu_custom_call.1} parent=5 // pred_fallthru
        _
    $region6: #{tpu_custom_call.1} parent=1 // loop_footer
      %s26 = sadd.s32 1, %s22
    $region7: #{tpu_custom_call.1} parent=1 // loop_footer_branch
      %21 = sbr.rel target = $region3
    $region8: #{tpu_custom_call.1} parent=1 // loop_exit
      _
    %11023 = vsyncpa [#allocation4], 1
    %s11024 = scalar_lea.sflag [#allocation4], 1
    %11025 = vsyncpa %s11024, 1
    %11026 = vsyncpa [#allocation5], 1
    %s11027 = scalar_lea.sflag [#allocation5], 1
    %11028 = vsyncpa %s11027, 1

</llo_original>
